<compile_context>
chip_gen: v7x
topology: tpu7x:2x2x1
jax: 0.10.0
libtpu: 0.0.40
codegen_flags: <defaults>
</compile_context>

<pallas_src>
import functools

import jax
import jax.numpy as jnp
from jax.experimental import pallas as pl
from jax.experimental.pallas import tpu as pltpu


_INV_SQRT2 = 0.7071067811865476  # 1/sqrt(2)


def _gelu_exact(x):
    # PyTorch nn.GELU() default = exact erf-based GELU (computed in f32).
    return 0.5 * x * (1.0 + jax.lax.erf(x * _INV_SQRT2))


def _projection_head_kernel(
    x_ref, w1_ref, b1_ref, w2_ref, b2_ref, w3_ref, b3_ref, w4_ref, b4_ref,
    o_ref, z_ref,
):
    j = pl.program_id(1)

    @pl.when(j == 0)
    def _():
        # MLP + L2-normalize runs ONCE per batch tile; result cached in VMEM
        # scratch and reused across all out_dim tiles (j axis).
        x = x_ref[...].astype(w1_ref.dtype)  # on-chip f32 -> bf16 cast

        # Linear 1 + GELU
        h = jnp.dot(x, w1_ref[...], preferred_element_type=jnp.float32) + b1_ref[...]
        h = _gelu_exact(h)

        # Linear 2 + GELU
        h = jnp.dot(h.astype(w2_ref.dtype), w2_ref[...],
                    preferred_element_type=jnp.float32) + b2_ref[...]
        h = _gelu_exact(h)

        # Linear 3 (bottleneck)
        z = jnp.dot(h.astype(w3_ref.dtype), w3_ref[...],
                    preferred_element_type=jnp.float32) + b3_ref[...]

        # L2 normalize: z / max(||z||, 1e-12) == z * rsqrt(max(ssq, 1e-24))
        ssq = jnp.sum(z * z, axis=-1, keepdims=True)
        z = z * jax.lax.rsqrt(jnp.maximum(ssq, 1e-24))
        z_ref[...] = z.astype(z_ref.dtype)

    # Last layer: streams (bottleneck, tile_n) column tiles of W4 across j.
    y = jnp.dot(z_ref[...], w4_ref[...], preferred_element_type=jnp.float32) + b4_ref[...]
    o_ref[...] = y.astype(o_ref.dtype)


def prepare_params(params, mm_dtype=jnp.bfloat16):
    """One-time conversion: weights -> bf16 MXU operands, biases -> f32.

    Do this ONCE outside the training/inference step so the jitted forward
    never re-converts weights (saves ~6 B/elem of HBM traffic per call).
    """
    out = {}
    for k, v in params.items():
        out[k] = v.astype(mm_dtype if k.startswith("w") else jnp.float32)
    return out


@functools.partial(jax.jit, static_argnames=("tile_b", "tile_n"))
def projection_head_forward(x, params, *, tile_b=512, tile_n=None):
    """x: (B, in_dim) f32. params: pre-converted via prepare_params()
    (weights bf16, shape (fan_in, fan_out); biases f32, shape (1, dim))."""
    B, in_dim = x.shape
    w1, w2, w3, w4 = params["w1"], params["w2"], params["w3"], params["w4"]
    b1, b2, b3, b4 = params["b1"], params["b2"], params["b3"], params["b4"]

    hidden = w1.shape[1]
    bottleneck = w3.shape[1]
    out_dim = w4.shape[1]
    w_bpe = jnp.dtype(w1.dtype).itemsize
    z_dtype = w4.dtype  # bottleneck activation cached as the MXU operand dtype

    assert tile_b % 16 == 0, "tile_b must be a multiple of 16 (bf16 sublane pack)"

    # ---- out_dim tiling (bounds the f32 output block for large heads) ----
    if tile_n is None:
        tile_n = out_dim
        if out_dim > 2048:
            for cand in (2048, 1024, 512, 256):
                if out_dim % cand == 0:
                    tile_n = cand
                    break
    assert out_dim % tile_n == 0, "tile_n must divide out_dim"
    assert tile_n % 128 == 0 or tile_n == out_dim, "tile_n must be lane-aligned"
    nt_n = out_dim // tile_n

    # ---- VMEM budgeting: clamp to the real per-core capacity ----
    def _vmem_bytes(tb, tn, ntn):
        resident_w = (in_dim * hidden + hidden * hidden + hidden * bottleneck) * w_bpe
        w4_bufs = 1 if ntn == 1 else 2
        w4_b = bottleneck * tn * w_bpe * w4_bufs
        biases = (2 * hidden + bottleneck) * 4 + tn * 4 * w4_bufs
        x_io = 2 * tb * in_dim * 4           # f32 x tile, double-buffered
        out_io = 2 * tb * tn * 4             # f32 out tile, double-buffered
        z_scr = tb * bottleneck * jnp.dtype(z_dtype).itemsize
        interm = 4 * tb * max(hidden, bottleneck, tn) * 4  # live f32 tiles (estimate)
        return resident_w + w4_b + biases + x_io + out_io + z_scr + interm

    try:
        vmem_cap = int(pltpu.get_tpu_info().vmem_capacity_bytes)
    except Exception:
        vmem_cap = 64 << 20  # assume the smallest (v7x per-TC) budget
    budget = int(vmem_cap * 0.9)  # leave headroom for compiler scratch

    while _vmem_bytes(tile_b, tile_n, nt_n) > budget and tile_b > 64:
        tile_b //= 2
    while (_vmem_bytes(tile_b, tile_n, nt_n) > budget
           and tile_n > 256 and tile_n % 256 == 0):
        tile_n //= 2
        nt_n = out_dim // tile_n
    vmem_limit = int(min(max(_vmem_bytes(tile_b, tile_n, nt_n) + (4 << 20), 32 << 20),
                         budget))

    # ---- batch padding (ragged batches) ----
    nt_b = pl.cdiv(B, tile_b)
    B_pad = nt_b * tile_b
    x_p = x if B_pad == B else jnp.pad(x, ((0, B_pad - B), (0, 0)))

    grid = (nt_b, nt_n)

    def inv(i, j):  # grid-invariant blocks (weights / biases)
        return (0, 0)

    def resident(shape):
        # Grid-invariant -> single buffer instead of default double buffering.
        return pl.BlockSpec(shape, inv, pipeline_mode=pl.Buffered(1))

    if nt_n == 1:
        w4_spec = resident((bottleneck, tile_n))
        b4_spec = resident((1, tile_n))
    else:
        # Streamed column tiles -> keep default double buffering.
        w4_spec = pl.BlockSpec((bottleneck, tile_n), lambda i, j: (0, j))
        b4_spec = pl.BlockSpec((1, tile_n), lambda i, j: (0, j))

    in_specs = [
        pl.BlockSpec((tile_b, in_dim), lambda i, j: (i, 0)),     # x (f32, pipelined)
        resident((in_dim, hidden)),                              # W1
        resident((1, hidden)),                                   # b1
        resident((hidden, hidden)),                              # W2
        resident((1, hidden)),                                   # b2
        resident((hidden, bottleneck)),                          # W3
        resident((1, bottleneck)),                               # b3
        w4_spec,                                                 # W4
        b4_spec,                                                 # b4
    ]
    out_spec = pl.BlockSpec((tile_b, tile_n), lambda i, j: (i, j))

    y = pl.pallas_call(
        _projection_head_kernel,
        out_shape=jax.ShapeDtypeStruct((B_pad, out_dim), jnp.float32),
        grid=grid,
        in_specs=in_specs,
        out_specs=out_spec,
        scratch_shapes=[pltpu.VMEM((tile_b, bottleneck), z_dtype)],
        compiler_params=pltpu.CompilerParams(
            # Batch axis megacore-shardable; out_dim axis must iterate
            # sequentially per batch tile (the j == 0 cache guard).
            dimension_semantics=("parallel", "arbitrary"),
            vmem_limit_bytes=vmem_limit,
        ),
    )(x_p, w1, b1, w2, b2, w3, b3, w4, b4)

    return y[:B] if B_pad != B else y


def init_params(key, in_dim, out_dim, hidden_dim, bottleneck_dim, dtype=jnp.float32):
    """Deterministic synthetic init (fan-in scaled normal), shapes match the nn.Module."""
    keys = jax.random.split(key, 8)

    def lin(kw, kb, fan_in, fan_out):
        scale = 1.0 / jnp.sqrt(jnp.asarray(fan_in, dtype))
        w = jax.random.normal(kw, (fan_in, fan_out), dtype) * scale
        b = jax.random.normal(kb, (1, fan_out), dtype) * 0.01
        return w, b

    w1, b1 = lin(keys[0], keys[1], in_dim, hidden_dim)
    w2, b2 = lin(keys[2], keys[3], hidden_dim, hidden_dim)
    w3, b3 = lin(keys[4], keys[5], hidden_dim, bottleneck_dim)
    w4, b4 = lin(keys[6], keys[7], bottleneck_dim, out_dim)
    return {"w1": w1, "b1": b1, "w2": w2, "b2": b2,
            "w3": w3, "b3": b3, "w4": w4, "b4": b4}


def reference_forward(x, p, matmul_dtype=None):
    """Plain-JAX reference mirroring the PyTorch module; optional bf16 matmul
    operands (f32 accumulation) to match the kernel's MXU precision."""
    def mm(a, w):
        if matmul_dtype is not None:
            a = a.astype(matmul_dtype)
            w = w.astype(matmul_dtype)
        return jnp.dot(a, w, preferred_element_type=jnp.float32)

    h = jax.nn.gelu(mm(x, p["w1"]) + p["b1"], approximate=False)
    h = jax.nn.gelu(mm(h, p["w2"]) + p["b2"], approximate=False)
    z = mm(h, p["w3"]) + p["b3"]
    z = z / jnp.maximum(jnp.linalg.norm(z, axis=-1, keepdims=True), 1e-12)
    return mm(z, p["w4"]) + p["b4"]


if __name__ == "__main__":
    # Lane-dense, MXU-friendly demo shapes (multiples of 256 for the 256-wide
    # v6e/v7x MXU), reduced vs. the 2048/256 MedCoSS defaults.
    # B is deliberately NOT a multiple of tile_b to exercise the padding path.
    B, IN_DIM, HIDDEN, BOTTLENECK, OUT_DIM = 500, 256, 512, 256, 256

    key = jax.random.PRNGKey(0)
    k_x, k_p, k_p2 = jax.random.split(key, 3)
    x = jax.random.normal(k_x, (B, IN_DIM), jnp.float32)

    params_f32 = init_params(k_p, IN_DIM, OUT_DIM, HIDDEN, BOTTLENECK)
    params = prepare_params(params_f32)  # ONE-TIME bf16 weight conversion

    y = projection_head_forward(x, params, tile_b=512)
    y = jax.block_until_ready(y)

    # Compare against a reference with matched (bf16-operand, f32-accum) matmuls.
    y_ref = reference_forward(x, params_f32, matmul_dtype=jnp.bfloat16)
    assert y.shape == (B, OUT_DIM)
    assert jnp.allclose(y, y_ref, atol=1e-3, rtol=1e-3), "mismatch vs bf16-matched reference"

    # Sanity check against the pure-f32 reference within bf16 tolerance.
    y_f32 = reference_forward(x, params_f32)
    assert jnp.allclose(y, y_f32, atol=3e-2, rtol=3e-2), "mismatch vs f32 reference"

    # Exercise the out_dim-tiled (2-D grid) path with a wider last layer.
    OUT_DIM2 = 512
    params2_f32 = init_params(k_p2, IN_DIM, OUT_DIM2, HIDDEN, BOTTLENECK)
    params2 = prepare_params(params2_f32)
    y2 = projection_head_forward(x, params2, tile_b=256, tile_n=256)
    y2 = jax.block_until_ready(y2)
    y2_ref = reference_forward(x, params2_f32, matmul_dtype=jnp.bfloat16)
    assert y2.shape == (B, OUT_DIM2)
    assert jnp.allclose(y2, y2_ref, atol=1e-3, rtol=1e-3), "mismatch on out_dim-tiled path"

    print("KERNEL_OK")
</pallas_src>

<mosaic_0001>
module attributes {stable_mosaic.version = 11 : i64} {
  func.func @_projection_head_kernel(%arg0: i32, %arg1: i32, %arg2: memref<512x256xf32, #tpu.memory_space<vmem>>, %arg3: memref<256x512xbf16, #tpu.memory_space<vmem>>, %arg4: memref<1x512xf32, #tpu.memory_space<vmem>>, %arg5: memref<512x512xbf16, #tpu.memory_space<vmem>>, %arg6: memref<1x512xf32, #tpu.memory_space<vmem>>, %arg7: memref<512x256xbf16, #tpu.memory_space<vmem>>, %arg8: memref<1x256xf32, #tpu.memory_space<vmem>>, %arg9: memref<256x256xbf16, #tpu.memory_space<vmem>>, %arg10: memref<1x256xf32, #tpu.memory_space<vmem>>, %arg11: memref<512x256xf32, #tpu.memory_space<vmem>>, %arg12: memref<512x256xbf16, #tpu.memory_space<vmem>>) attributes {dimension_semantics = [#tpu.dimension_semantics<parallel>, #tpu.dimension_semantics<arbitrary>], iteration_bounds = array<i64: 1, 1>, scalar_prefetch = 0 : i64, scratch_operands = 1 : i64, tpu.core_type = #tpu.core_type<tc>, window_params = [{transform_indices = @transform_0, window_bounds = array<i64: 512, 256>}, {pipeline_mode = #tpu.pipeline_mode<synchronous>, transform_indices = @transform_1, window_bounds = array<i64: 256, 512>}, {pipeline_mode = #tpu.pipeline_mode<synchronous>, transform_indices = @transform_2, window_bounds = array<i64: 1, 512>}, {pipeline_mode = #tpu.pipeline_mode<synchronous>, transform_indices = @transform_3, window_bounds = array<i64: 512, 512>}, {pipeline_mode = #tpu.pipeline_mode<synchronous>, transform_indices = @transform_4, window_bounds = array<i64: 1, 512>}, {pipeline_mode = #tpu.pipeline_mode<synchronous>, transform_indices = @transform_5, window_bounds = array<i64: 512, 256>}, {pipeline_mode = #tpu.pipeline_mode<synchronous>, transform_indices = @transform_6, window_bounds = array<i64: 1, 256>}, {pipeline_mode = #tpu.pipeline_mode<synchronous>, transform_indices = @transform_7, window_bounds = array<i64: 256, 256>}, {pipeline_mode = #tpu.pipeline_mode<synchronous>, transform_indices = @transform_8, window_bounds = array<i64: 1, 256>}, {transform_indices = @transform_9, window_bounds = array<i64: 512, 256>}]} {
    %c0_i32 = arith.constant 0 : i32
    %0 = arith.cmpi eq, %arg1, %c0_i32 : i32
    %1 = arith.extui %0 : i1 to i32
    %c0_i32_0 = arith.constant 0 : i32
    %2 = arith.cmpi ne, %1, %c0_i32_0 : i32
    scf.if %2 {
      %c0_8 = arith.constant 0 : index
      %c0_9 = arith.constant 0 : index
      %10 = vector.load %arg2[%c0_8, %c0_9] : memref<512x256xf32, #tpu.memory_space<vmem>>, vector<512x256xf32>
      %11 = arith.truncf %10 : vector<512x256xf32> to vector<512x256xbf16>
      %c0_10 = arith.constant 0 : index
      %c0_11 = arith.constant 0 : index
      %12 = vector.load %arg3[%c0_10, %c0_11] : memref<256x512xbf16, #tpu.memory_space<vmem>>, vector<256x512xbf16>
      %cst_12 = arith.constant dense<0.000000e+00> : vector<512x512xf32>
      %13 = tpu.matmul %11, %12, %cst_12 {dimension_numbers = #tpu.dot_dimension_numbers<[1], [0], [0], [1], [0, 0, 1, 1], [], []>} : vector<512x256xbf16>, vector<256x512xbf16>, vector<512x512xf32> -> vector<512x512xf32>
      %c0_13 = arith.constant 0 : index
      %c0_14 = arith.constant 0 : index
      %14 = vector.load %arg4[%c0_13, %c0_14] : memref<1x512xf32, #tpu.memory_space<vmem>>, vector<1x512xf32>
      %15 = vector.broadcast %14 : vector<1x512xf32> to vector<512x512xf32>
      %16 = arith.addf %13, %15 : vector<512x512xf32>
      %cst_15 = arith.constant 5.000000e-01 : f32
      %17 = vector.broadcast %cst_15 : f32 to vector<512x512xf32>
      %18 = arith.mulf %17, %16 : vector<512x512xf32>
      %cst_16 = arith.constant 0.707106769 : f32
      %19 = vector.broadcast %cst_16 : f32 to vector<512x512xf32>
      %20 = arith.mulf %16, %19 : vector<512x512xf32>
      %21 = math.erf %20 : vector<512x512xf32>
      %cst_17 = arith.constant 1.000000e+00 : f32
      %22 = vector.broadcast %cst_17 : f32 to vector<512x512xf32>
      %23 = arith.addf %22, %21 : vector<512x512xf32>
      %24 = arith.mulf %18, %23 : vector<512x512xf32>
      %25 = arith.truncf %24 : vector<512x512xf32> to vector<512x512xbf16>
      %c0_18 = arith.constant 0 : index
      %c0_19 = arith.constant 0 : index
      %26 = vector.load %arg5[%c0_18, %c0_19] : memref<512x512xbf16, #tpu.memory_space<vmem>>, vector<512x512xbf16>
      %cst_20 = arith.constant dense<0.000000e+00> : vector<512x512xf32>
      %27 = tpu.matmul %25, %26, %cst_20 {dimension_numbers = #tpu.dot_dimension_numbers<[1], [0], [0], [1], [0, 0, 1, 1], [], []>} : vector<512x512xbf16>, vector<512x512xbf16>, vector<512x512xf32> -> vector<512x512xf32>
      %c0_21 = arith.constant 0 : index
      %c0_22 = arith.constant 0 : index
      %28 = vector.load %arg6[%c0_21, %c0_22] : memref<1x512xf32, #tpu.memory_space<vmem>>, vector<1x512xf32>
      %29 = vector.broadcast %28 : vector<1x512xf32> to vector<512x512xf32>
      %30 = arith.addf %27, %29 : vector<512x512xf32>
      %cst_23 = arith.constant 5.000000e-01 : f32
      %31 = vector.broadcast %cst_23 : f32 to vector<512x512xf32>
      %32 = arith.mulf %31, %30 : vector<512x512xf32>
      %cst_24 = arith.constant 0.707106769 : f32
      %33 = vector.broadcast %cst_24 : f32 to vector<512x512xf32>
      %34 = arith.mulf %30, %33 : vector<512x512xf32>
      %35 = math.erf %34 : vector<512x512xf32>
      %cst_25 = arith.constant 1.000000e+00 : f32
      %36 = vector.broadcast %cst_25 : f32 to vector<512x512xf32>
      %37 = arith.addf %36, %35 : vector<512x512xf32>
      %38 = arith.mulf %32, %37 : vector<512x512xf32>
      %39 = arith.truncf %38 : vector<512x512xf32> to vector<512x512xbf16>
      %c0_26 = arith.constant 0 : index
      %c0_27 = arith.constant 0 : index
      %40 = vector.load %arg7[%c0_26, %c0_27] : memref<512x256xbf16, #tpu.memory_space<vmem>>, vector<512x256xbf16>
      %cst_28 = arith.constant dense<0.000000e+00> : vector<512x256xf32>
      %41 = tpu.matmul %39, %40, %cst_28 {dimension_numbers = #tpu.dot_dimension_numbers<[1], [0], [0], [1], [0, 0, 1, 1], [], []>} : vector<512x512xbf16>, vector<512x256xbf16>, vector<512x256xf32> -> vector<512x256xf32>
      %c0_29 = arith.constant 0 : index
      %c0_30 = arith.constant 0 : index
      %42 = vector.load %arg8[%c0_29, %c0_30] : memref<1x256xf32, #tpu.memory_space<vmem>>, vector<1x256xf32>
      %43 = vector.broadcast %42 : vector<1x256xf32> to vector<512x256xf32>
      %44 = arith.addf %41, %43 : vector<512x256xf32>
      %45 = arith.mulf %44, %44 : vector<512x256xf32>
      %cst_31 = arith.constant dense<0.000000e+00> : vector<512xf32>
      %46 = vector.multi_reduction <add>, %45, %cst_31 [1] : vector<512x256xf32> to vector<512xf32>
      %47 = vector.shape_cast %46 : vector<512xf32> to vector<512x1xf32>
      %cst_32 = arith.constant 1.000000e-24 : f32
      %48 = vector.broadcast %cst_32 : f32 to vector<512x1xf32>
      %49 = arith.maximumf %47, %48 : vector<512x1xf32>
      %50 = math.rsqrt %49 : vector<512x1xf32>
      %51 = vector.broadcast %50 : vector<512x1xf32> to vector<512x256xf32>
      %52 = arith.mulf %44, %51 : vector<512x256xf32>
      %53 = arith.truncf %52 : vector<512x256xf32> to vector<512x256xbf16>
      %c0_33 = arith.constant 0 : index
      %c0_34 = arith.constant 0 : index
      %54 = vector.load %arg12[%c0_33, %c0_34] : memref<512x256xbf16, #tpu.memory_space<vmem>>, vector<512x256xbf16>
      tpu.vector_store %arg12[%c0_33, %c0_34], %53 {strides = array<i32>} : memref<512x256xbf16, #tpu.memory_space<vmem>>, vector<512x256xbf16>,
    } else {
    }
    %c0 = arith.constant 0 : index
    %c0_1 = arith.constant 0 : index
    %3 = vector.load %arg12[%c0, %c0_1] : memref<512x256xbf16, #tpu.memory_space<vmem>>, vector<512x256xbf16>
    %c0_2 = arith.constant 0 : index
    %c0_3 = arith.constant 0 : index
    %4 = vector.load %arg9[%c0_2, %c0_3] : memref<256x256xbf16, #tpu.memory_space<vmem>>, vector<256x256xbf16>
    %cst = arith.constant dense<0.000000e+00> : vector<512x256xf32>
    %5 = tpu.matmul %3, %4, %cst {dimension_numbers = #tpu.dot_dimension_numbers<[1], [0], [0], [1], [0, 0, 1, 1], [], []>} : vector<512x256xbf16>, vector<256x256xbf16>, vector<512x256xf32> -> vector<512x256xf32>
    %c0_4 = arith.constant 0 : index
    %c0_5 = arith.constant 0 : index
    %6 = vector.load %arg10[%c0_4, %c0_5] : memref<1x256xf32, #tpu.memory_space<vmem>>, vector<1x256xf32>
    %7 = vector.broadcast %6 : vector<1x256xf32> to vector<512x256xf32>
    %8 = arith.addf %5, %7 : vector<512x256xf32>
    %c0_6 = arith.constant 0 : index
    %c0_7 = arith.constant 0 : index
    %9 = vector.load %arg11[%c0_6, %c0_7] : memref<512x256xf32, #tpu.memory_space<vmem>>, vector<512x256xf32>
    tpu.vector_store %arg11[%c0_6, %c0_7], %8 {strides = array<i32>} : memref<512x256xf32, #tpu.memory_space<vmem>>, vector<512x256xf32>,
    return
  }
  func.func @transform_0(%arg0: i32, %arg1: i32) -> (i32, i32) {
    %c0_i32 = arith.constant 0 : i32
    %c0_i32_0 = arith.constant 0 : i32
    return %arg0, %c0_i32 : i32, i32
  }
  func.func @transform_1(%arg0: i32, %arg1: i32) -> (i32, i32) {
    %c0_i32 = arith.constant 0 : i32
    %c0_i32_0 = arith.constant 0 : i32
    %c0_i32_1 = arith.constant 0 : i32
    return %c0_i32, %c0_i32_0 : i32, i32
  }
  func.func @transform_2(%arg0: i32, %arg1: i32) -> (i32, i32) {
    %c0_i32 = arith.constant 0 : i32
    %c0_i32_0 = arith.constant 0 : i32
    %c0_i32_1 = arith.constant 0 : i32
    return %c0_i32, %c0_i32_0 : i32, i32
  }
  func.func @transform_3(%arg0: i32, %arg1: i32) -> (i32, i32) {
    %c0_i32 = arith.constant 0 : i32
    %c0_i32_0 = arith.constant 0 : i32
    %c0_i32_1 = arith.constant 0 : i32
    return %c0_i32, %c0_i32_0 : i32, i32
  }
  func.func @transform_4(%arg0: i32, %arg1: i32) -> (i32, i32) {
    %c0_i32 = arith.constant 0 : i32
    %c0_i32_0 = arith.constant 0 : i32
    %c0_i32_1 = arith.constant 0 : i32
    return %c0_i32, %c0_i32_0 : i32, i32
  }
  func.func @transform_5(%arg0: i32, %arg1: i32) -> (i32, i32) {
    %c0_i32 = arith.constant 0 : i32
    %c0_i32_0 = arith.constant 0 : i32
    %c0_i32_1 = arith.constant 0 : i32
    return %c0_i32, %c0_i32_0 : i32, i32
  }
  func.func @transform_6(%arg0: i32, %arg1: i32) -> (i32, i32) {
    %c0_i32 = arith.constant 0 : i32
    %c0_i32_0 = arith.constant 0 : i32
    %c0_i32_1 = arith.constant 0 : i32
    return %c0_i32, %c0_i32_0 : i32, i32
  }
  func.func @transform_7(%arg0: i32, %arg1: i32) -> (i32, i32) {
    %c0_i32 = arith.constant 0 : i32
    %c0_i32_0 = arith.constant 0 : i32
    %c0_i32_1 = arith.constant 0 : i32
    return %c0_i32, %c0_i32_0 : i32, i32
  }
  func.func @transform_8(%arg0: i32, %arg1: i32) -> (i32, i32) {
    %c0_i32 = arith.constant 0 : i32
    %c0_i32_0 = arith.constant 0 : i32
    %c0_i32_1 = arith.constant 0 : i32
    return %c0_i32, %c0_i32_0 : i32, i32
  }
  func.func @transform_9(%arg0: i32, %arg1: i32) -> (i32, i32) {
    %c0_i32 = arith.constant 0 : i32
    return %arg0, %arg1 : i32, i32
  }
}

</mosaic_0001>

<llo_original>
// kernel: projection_head_forward.1
$region0: #{projection_head_forward.1}
  #allocation0 [shape = 'u32[]', space=smem, size = 0x4, offset = 0x4, fixed_abs, tag = 'smem constant byte address 0x4 - core index']
  #allocation1 [shape = 'u32[144,128]{1,0:T(1,128)}', space=vmem, size = 0x12000, scoped, tag = 'internal scratch']
  #allocation2 [shape = 'bf16[512,256]{1,0:T(16,128)(2,1)}', space=vmem, size = 0x40000, scoped, tag = 'scratch operand']
  %s0 = inlined_call_operand.vmem [shape: f32[512,256], index: 0, kind: input, shape index: {}]
  %s1 = inlined_call_operand.vmem [shape: bf16[256,512], index: 1, kind: input, shape index: {}]
  %s2 = inlined_call_operand.hbm [shape: f32[1,512], index: 2, kind: input, shape index: {}]
  %s3 = inlined_call_operand.vmem [shape: bf16[512,512], index: 3, kind: input, shape index: {}]
  %s4 = inlined_call_operand.hbm [shape: f32[1,512], index: 4, kind: input, shape index: {}]
  %s5 = inlined_call_operand.vmem [shape: bf16[512,256], index: 5, kind: input, shape index: {}]
  %s6 = inlined_call_operand.hbm [shape: f32[1,256], index: 6, kind: input, shape index: {}]
  %s7 = inlined_call_operand.hbm [shape: bf16[256,256], index: 7, kind: input, shape index: {}]
  %s8 = inlined_call_operand.hbm [shape: f32[1,256], index: 8, kind: input, shape index: {}]
  %s9 = inlined_call_operand.vmem [shape: f32[512,256], index: 9, kind: output, shape index: {}]
  %s10 = sld [smem:[#allocation0]]
  $region70: #{projection_head_forward.1} parent=0
    _
  %s12 = ssub.s32 1, %s10
  %s13 = scalar_select 0, %s12, %s10
  $region1: #{projection_head_forward.1} parent=0
    #allocation3 [shape = 'u8[2048]{0}', space=vmem, size = 0x800, scoped, tag = 'input window, operand 2, single buffered']
    #allocation4 [shape = 's32[1]{0}', space=sflag, size = 0x4, scoped, tag = 'scoped memory for projection_head_forward.1']
    #allocation5 [shape = 'u8[2048]{0}', space=vmem, size = 0x800, scoped, tag = 'input window, operand 4, single buffered']
    #allocation6 [shape = 's32[1]{0}', space=sflag, size = 0x4, scoped, tag = 'scoped memory for projection_head_forward.1']
    #allocation7 [shape = 'u8[1024]{0}', space=vmem, size = 0x400, scoped, tag = 'input window, operand 6, single buffered']
    #allocation8 [shape = 'u8[131072]{0}', space=vmem, size = 0x20000, scoped, tag = 'input window, operand 7, single buffered']
    #allocation9 [shape = 's32[1]{0}', space=sflag, size = 0x4, scoped, tag = 'scoped memory for projection_head_forward.1']
    #allocation10 [shape = 'u8[1024]{0}', space=vmem, size = 0x400, scoped, tag = 'input window, operand 8, single buffered']
    %14 = vsyncpa [#allocation4], 0
    %15 = vsyncpa [#allocation6], 0
    %16 = vsyncpa [#allocation9], 0
    // Predicated region
    $region2: #{projection_head_forward.1} parent=1 // pred_check
      _
    $region3: #{projection_head_forward.1} parent=1 // pred_check_branch
      %18 = sbr.rel (0) target = $region5
    $region4: #{projection_head_forward.1} parent=1 // pred_region
      _
    $region5: #{projection_head_forward.1} parent=1 // pred_fallthru
      _
    // Predicated region
    $region6: #{projection_head_forward.1} parent=1 // pred_check
      _
    $region7: #{projection_head_forward.1} parent=1 // pred_check_branch
      %20 = sbr.rel (0) target = $region9
    $region8: #{projection_head_forward.1} parent=1 // pred_region
      _
    $region9: #{projection_head_forward.1} parent=1 // pred_fallthru
      _
    // Predicated region
    $region10: #{projection_head_forward.1} parent=1 // pred_check
      _
    $region11: #{projection_head_forward.1} parent=1 // pred_check_branch
      %22 = sbr.rel (0) target = $region13
    $region12: #{projection_head_forward.1} parent=1 // pred_region
      %s24 = ssub.s32 64, 64
      %25 = vsyncadd [#allocation4], %s24
      %s27 = sshll.u32 [#allocation3], 4
      %s28 = int_to_ptr.vmem [resolvable:$true] %s27
      %30 = dma.hbm_to_vmem [thread:$0]  %s2, 64, %s28, [#allocation4]
    $region13: #{projection_head_forward.1} parent=1 // pred_fallthru
      _
    // Predicated region
    $region14: #{projection_head_forward.1} parent=1 // pred_check
      _
    $region15: #{projection_head_forward.1} parent=1 // pred_check_branch
      %32 = sbr.rel (0) target = $region17
    $region16: #{projection_head_forward.1} parent=1 // pred_region
      _
    $region17: #{projection_head_forward.1} parent=1 // pred_fallthru
      _
    // Predicated region
    $region18: #{projection_head_forward.1} parent=1 // pred_check
      _
    $region19: #{projection_head_forward.1} parent=1 // pred_check_branch
      %34 = sbr.rel (0) target = $region21
    $region20: #{projection_head_forward.1} parent=1 // pred_region
      %s36 = ssub.s32 64, 64
      %37 = vsyncadd [#allocation6], %s36
      %s39 = sshll.u32 [#allocation5], 4
      %s40 = int_to_ptr.vmem [resolvable:$true] %s39
      %42 = dma.hbm_to_vmem [thread:$0]  %s4, 64, %s40, [#allocation6]
    $region21: #{projection_head_forward.1} parent=1 // pred_fallthru
      _
    // Predicated region
    $region22: #{projection_head_forward.1} parent=1 // pred_check
      _
    $region23: #{projection_head_forward.1} parent=1 // pred_check_branch
      %44 = sbr.rel (0) target = $region25
    $region24: #{projection_head_forward.1} parent=1 // pred_region
      _
    $region25: #{projection_head_forward.1} parent=1 // pred_fallthru
      _
    // Predicated region
    $region26: #{projection_head_forward.1} parent=1 // pred_check
      _
    $region27: #{projection_head_forward.1} parent=1 // pred_check_branch
      %46 = sbr.rel (0) target = $region29
    $region28: #{projection_head_forward.1} parent=1 // pred_region
      %s48 = ssub.s32 32, 32
      %49 = vsyncadd [#allocation6], %s48
      %s51 = sshll.u32 [#allocation7], 4
      %s52 = int_to_ptr.vmem [resolvable:$true] %s51
      %54 = dma.hbm_to_vmem [thread:$0]  %s6, 32, %s52, [#allocation6]
    $region29: #{projection_head_forward.1} parent=1 // pred_fallthru
      _
    // Predicated region
    $region30: #{projection_head_forward.1} parent=1 // pred_check
      _
    $region31: #{projection_head_forward.1} parent=1 // pred_check_branch
      %56 = sbr.rel (0) target = $region33
    $region32: #{projection_head_forward.1} parent=1 // pred_region
      %s58 = ssub.s32 4096, 4096
      %59 = vsyncadd [#allocation9], %s58
      %s60 = sshll.u32 [#allocation8], 4
      %s61 = int_to_ptr.vmem [resolvable:$true] %s60
      %66 = dma.hbm_to_vmem [thread:$0]  %s7, 4096, %s61, [#allocation9], 128, 128, 8
    $region33: #{projection_head_forward.1} parent=1 // pred_fallthru
      _
    // Predicated region
    $region34: #{projection_head_forward.1} parent=1 // pred_check
      _
    $region35: #{projection_head_forward.1} parent=1 // pred_check_branch
      %68 = sbr.rel (0) target = $region37
    $region36: #{projection_head_forward.1} parent=1 // pred_region
      %s70 = ssub.s32 32, 32
      %71 = vsyncadd [#allocation9], %s70
      %s73 = sshll.u32 [#allocation10], 4
      %s74 = int_to_ptr.vmem [resolvable:$true] %s73
      %76 = dma.hbm_to_vmem [thread:$0]  %s8, 32, %s74, [#allocation9]
    $region37: #{projection_head_forward.1} parent=1 // pred_fallthru
      _
    // Predicated region
    $region38: #{projection_head_forward.1} parent=1 // pred_check
      _
    $region39: #{projection_head_forward.1} parent=1 // pred_check_branch
      %78 = sbr.rel (0) target = $region41
    $region40: #{projection_head_forward.1} parent=1 // pred_region
      %79 = dma.done [#allocation4], 64
    $region41: #{projection_head_forward.1} parent=1 // pred_fallthru
      _
    // Predicated region
    $region42: #{projection_head_forward.1} parent=1 // pred_check
      _
    $region43: #{projection_head_forward.1} parent=1 // pred_check_branch
      %81 = sbr.rel (0) target = $region45
    $region44: #{projection_head_forward.1} parent=1 // pred_region
      %82 = dma.done [#allocation6], 64
    $region45: #{projection_head_forward.1} parent=1 // pred_fallthru
      _
    // Predicated region
    $region46: #{projection_head_forward.1} parent=1 // pred_check
      _
    $region47: #{projection_head_forward.1} parent=1 // pred_check_branch
      %84 = sbr.rel (0) target = $region49
    $region48: #{projection_head_forward.1} parent=1 // pred_region
      %85 = dma.done [#allocation6], 32
    $region49: #{projection_head_forward.1} parent=1 // pred_fallthru
      _
    // Predicated region
    $region50: #{projection_head_forward.1} parent=1 // pred_check
      _
    $region51: #{projection_head_forward.1} parent=1 // pred_check_branch
      %87 = sbr.rel (0) target = $region53
    $region52: #{projection_head_forward.1} parent=1 // pred_region
      %88 = dma.done [#allocation9], 4096
    $region53: #{projection_head_forward.1} parent=1 // pred_fallthru
      _
    // Predicated region
    $region54: #{projection_head_forward.1} parent=1 // pred_check
      _
    $region55: #{projection_head_forward.1} parent=1 // pred_check_branch
      %90 = sbr.rel (0) target = $region57
    $region56: #{projection_head_forward.1} parent=1 // pred_region
      %91 = dma.done [#allocation9], 32
    $region57: #{projection_head_forward.1} parent=1 // pred_fallthru
      _
    %p92 = scmp.eq.s32.totalorder 0, 0
    // Predicated region
    $region58: #{projection_head_forward.1} parent=1 // pred_check
      %p93 = pneg %p92
    $region59: #{projection_head_forward.1} parent=1 // pred_check_branch
      %95 = sbr.rel (%p93) target = $region61
    $region60: #{projection_head_forward.1} parent=1 // pred_region
      %v96 = vld [vmem:[%s0] sm:$0xff]
      %v97 = vld [vmem:[%s0 + $0x8] sm:$0xff]
      %v98 = vld [vmem:[%s0 + $0x10] sm:$0xff]
      %v99 = vld [vmem:[%s0 + $0x18] sm:$0xff]
      %v100 = vld [vmem:[%s0 + $0x20] sm:$0xff]
      %v101 = vld [vmem:[%s0 + $0x28] sm:$0xff]
      %v102 = vld [vmem:[%s0 + $0x30] sm:$0xff]
      %v103 = vld [vmem:[%s0 + $0x38] sm:$0xff]
      %v104 = vld [vmem:[%s0 + $0x40] sm:$0xff]
      %v105 = vld [vmem:[%s0 + $0x48] sm:$0xff]
      %v106 = vld [vmem:[%s0 + $0x50] sm:$0xff]
      %v107 = vld [vmem:[%s0 + $0x58] sm:$0xff]
      %v108 = vld [vmem:[%s0 + $0x60] sm:$0xff]
      %v109 = vld [vmem:[%s0 + $0x68] sm:$0xff]
      %v110 = vld [vmem:[%s0 + $0x70] sm:$0xff]
      %v111 = vld [vmem:[%s0 + $0x78] sm:$0xff]
      %v112 = vld [vmem:[%s0 + $0x80] sm:$0xff]
      %v113 = vld [vmem:[%s0 + $0x88] sm:$0xff]
      %v114 = vld [vmem:[%s0 + $0x90] sm:$0xff]
      %v115 = vld [vmem:[%s0 + $0x98] sm:$0xff]
      %v116 = vld [vmem:[%s0 + $0xa0] sm:$0xff]
      %v117 = vld [vmem:[%s0 + $0xa8] sm:$0xff]
      %v118 = vld [vmem:[%s0 + $0xb0] sm:$0xff]
      %v119 = vld [vmem:[%s0 + $0xb8] sm:$0xff]
      %v120 = vld [vmem:[%s0 + $0xc0] sm:$0xff]
      %v121 = vld [vmem:[%s0 + $0xc8] sm:$0xff]
      %v122 = vld [vmem:[%s0 + $0xd0] sm:$0xff]
      %v123 = vld [vmem:[%s0 + $0xd8] sm:$0xff]
      %v124 = vld [vmem:[%s0 + $0xe0] sm:$0xff]
      %v125 = vld [vmem:[%s0 + $0xe8] sm:$0xff]
      %v126 = vld [vmem:[%s0 + $0xf0] sm:$0xff]
      %v127 = vld [vmem:[%s0 + $0xf8] sm:$0xff]
      %v128 = vld [vmem:[%s0 + $0x100] sm:$0xff]
      %v129 = vld [vmem:[%s0 + $0x108] sm:$0xff]
      %v130 = vld [vmem:[%s0 + $0x110] sm:$0xff]
      %v131 = vld [vmem:[%s0 + $0x118] sm:$0xff]
      %v132 = vld [vmem:[%s0 + $0x120] sm:$0xff]
      %v133 = vld [vmem:[%s0 + $0x128] sm:$0xff]
      %v134 = vld [vmem:[%s0 + $0x130] sm:$0xff]
      %v135 = vld [vmem:[%s0 + $0x138] sm:$0xff]
      %v136 = vld [vmem:[%s0 + $0x140] sm:$0xff]
      %v137 = vld [vmem:[%s0 + $0x148] sm:$0xff]
      %v138 = vld [vmem:[%s0 + $0x150] sm:$0xff]
      %v139 = vld [vmem:[%s0 + $0x158] sm:$0xff]
      %v140 = vld [vmem:[%s0 + $0x160] sm:$0xff]
      %v141 = vld [vmem:[%s0 + $0x168] sm:$0xff]
      %v142 = vld [vmem:[%s0 + $0x170] sm:$0xff]
      %v143 = vld [vmem:[%s0 + $0x178] sm:$0xff]
      %v144 = vld [vmem:[%s0 + $0x180] sm:$0xff]
      %v145 = vld [vmem:[%s0 + $0x188] sm:$0xff]
      %v146 = vld [vmem:[%s0 + $0x190] sm:$0xff]
      %v147 = vld [vmem:[%s0 + $0x198] sm:$0xff]
      %v148 = vld [vmem:[%s0 + $0x1a0] sm:$0xff]
      %v149 = vld [vmem:[%s0 + $0x1a8] sm:$0xff]
      %v150 = vld [vmem:[%s0 + $0x1b0] sm:$0xff]
      %v151 = vld [vmem:[%s0 + $0x1b8] sm:$0xff]
      %v152 = vld [vmem:[%s0 + $0x1c0] sm:$0xff]
      %v153 = vld [vmem:[%s0 + $0x1c8] sm:$0xff]
      %v154 = vld [vmem:[%s0 + $0x1d0] sm:$0xff]
      %v155 = vld [vmem:[%s0 + $0x1d8] sm:$0xff]
      %v156 = vld [vmem:[%s0 + $0x1e0] sm:$0xff]
      %v157 = vld [vmem:[%s0 + $0x1e8] sm:$0xff]
      %v158 = vld [vmem:[%s0 + $0x1f0] sm:$0xff]
      %v159 = vld [vmem:[%s0 + $0x1f8] sm:$0xff]
      %v160 = vld [vmem:[%s0 + $0x200] sm:$0xff]
      %v161 = vld [vmem:[%s0 + $0x208] sm:$0xff]
      %v162 = vld [vmem:[%s0 + $0x210] sm:$0xff]
      %v163 = vld [vmem:[%s0 + $0x218] sm:$0xff]
      %v164 = vld [vmem:[%s0 + $0x220] sm:$0xff]
      %v165 = vld [vmem:[%s0 + $0x228] sm:$0xff]
      %v166 = vld [vmem:[%s0 + $0x230] sm:$0xff]
      %v167 = vld [vmem:[%s0 + $0x238] sm:$0xff]
      %v168 = vld [vmem:[%s0 + $0x240] sm:$0xff]
      %v169 = vld [vmem:[%s0 + $0x248] sm:$0xff]
      %v170 = vld [vmem:[%s0 + $0x250] sm:$0xff]
      %v171 = vld [vmem:[%s0 + $0x258] sm:$0xff]
      %v172 = vld [vmem:[%s0 + $0x260] sm:$0xff]
      %v173 = vld [vmem:[%s0 + $0x268] sm:$0xff]
      %v174 = vld [vmem:[%s0 + $0x270] sm:$0xff]
      %v175 = vld [vmem:[%s0 + $0x278] sm:$0xff]
      %v176 = vld [vmem:[%s0 + $0x280] sm:$0xff]
      %v177 = vld [vmem:[%s0 + $0x288] sm:$0xff]
      %v178 = vld [vmem:[%s0 + $0x290] sm:$0xff]
      %v179 = vld [vmem:[%s0 + $0x298] sm:$0xff]
      %v180 = vld [vmem:[%s0 + $0x2a0] sm:$0xff]
      %v181 = vld [vmem:[%s0 + $0x2a8] sm:$0xff]
      %v182 = vld [vmem:[%s0 + $0x2b0] sm:$0xff]
      %v183 = vld [vmem:[%s0 + $0x2b8] sm:$0xff]
      %v184 = vld [vmem:[%s0 + $0x2c0] sm:$0xff]
      %v185 = vld [vmem:[%s0 + $0x2c8] sm:$0xff]
      %v186 = vld [vmem:[%s0 + $0x2d0] sm:$0xff]
      %v187 = vld [vmem:[%s0 + $0x2d8] sm:$0xff]
      %v188 = vld [vmem:[%s0 + $0x2e0] sm:$0xff]
      %v189 = vld [vmem:[%s0 + $0x2e8] sm:$0xff]
      %v190 = vld [vmem:[%s0 + $0x2f0] sm:$0xff]
      %v191 = vld [vmem:[%s0 + $0x2f8] sm:$0xff]
      %v192 = vld [vmem:[%s0 + $0x300] sm:$0xff]
      %v193 = vld [vmem:[%s0 + $0x308] sm:$0xff]
      %v194 = vld [vmem:[%s0 + $0x310] sm:$0xff]
      %v195 = vld [vmem:[%s0 + $0x318] sm:$0xff]
      %v196 = vld [vmem:[%s0 + $0x320] sm:$0xff]
      %v197 = vld [vmem:[%s0 + $0x328] sm:$0xff]
      %v198 = vld [vmem:[%s0 + $0x330] sm:$0xff]
      %v199 = vld [vmem:[%s0 + $0x338] sm:$0xff]
      %v200 = vld [vmem:[%s0 + $0x340] sm:$0xff]
      %v201 = vld [vmem:[%s0 + $0x348] sm:$0xff]
      %v202 = vld [vmem:[%s0 + $0x350] sm:$0xff]
      %v203 = vld [vmem:[%s0 + $0x358] sm:$0xff]
      %v204 = vld [vmem:[%s0 + $0x360] sm:$0xff]
      %v205 = vld [vmem:[%s0 + $0x368] sm:$0xff]
      %v206 = vld [vmem:[%s0 + $0x370] sm:$0xff]
      %v207 = vld [vmem:[%s0 + $0x378] sm:$0xff]
      %v208 = vld [vmem:[%s0 + $0x380] sm:$0xff]
      %v209 = vld [vmem:[%s0 + $0x388] sm:$0xff]
      %v210 = vld [vmem:[%s0 + $0x390] sm:$0xff]
      %v211 = vld [vmem:[%s0 + $0x398] sm:$0xff]
      %v212 = vld [vmem:[%s0 + $0x3a0] sm:$0xff]
      %v213 = vld [vmem:[%s0 + $0x3a8] sm:$0xff]
      %v214 = vld [vmem:[%s0 + $0x3b0] sm:$0xff]
      %v215 = vld [vmem:[%s0 + $0x3b8] sm:$0xff]
      %v216 = vld [vmem:[%s0 + $0x3c0] sm:$0xff]
      %v217 = vld [vmem:[%s0 + $0x3c8] sm:$0xff]
      %v218 = vld [vmem:[%s0 + $0x3d0] sm:$0xff]
      %v219 = vld [vmem:[%s0 + $0x3d8] sm:$0xff]
      %v220 = vld [vmem:[%s0 + $0x3e0] sm:$0xff]
      %v221 = vld [vmem:[%s0 + $0x3e8] sm:$0xff]
      %v222 = vld [vmem:[%s0 + $0x3f0] sm:$0xff]
      %v223 = vld [vmem:[%s0 + $0x3f8] sm:$0xff]
      %v224 = vpack.c.bf16 %v98, %v96
      %v225 = vpack.c.bf16 %v99, %v97
      %v226 = vpack.c.bf16 %v102, %v100
      %v227 = vpack.c.bf16 %v103, %v101
      %v228 = vpack.c.bf16 %v106, %v104
      %v229 = vpack.c.bf16 %v107, %v105
      %v230 = vpack.c.bf16 %v110, %v108
      %v231 = vpack.c.bf16 %v111, %v109
      %v232 = vpack.c.bf16 %v114, %v112
      %v233 = vpack.c.bf16 %v115, %v113
      %v234 = vpack.c.bf16 %v118, %v116
      %v235 = vpack.c.bf16 %v119, %v117
      %v236 = vpack.c.bf16 %v122, %v120
      %v237 = vpack.c.bf16 %v123, %v121
      %v238 = vpack.c.bf16 %v126, %v124
      %v239 = vpack.c.bf16 %v127, %v125
      %v240 = vpack.c.bf16 %v130, %v128
      %v241 = vpack.c.bf16 %v131, %v129
      %v242 = vpack.c.bf16 %v134, %v132
      %v243 = vpack.c.bf16 %v135, %v133
      %v244 = vpack.c.bf16 %v138, %v136
      %v245 = vpack.c.bf16 %v139, %v137
      %v246 = vpack.c.bf16 %v142, %v140
      %v247 = vpack.c.bf16 %v143, %v141
      %v248 = vpack.c.bf16 %v146, %v144
      %v249 = vpack.c.bf16 %v147, %v145
      %v250 = vpack.c.bf16 %v150, %v148
      %v251 = vpack.c.bf16 %v151, %v149
      %v252 = vpack.c.bf16 %v154, %v152
      %v253 = vpack.c.bf16 %v155, %v153
      %v254 = vpack.c.bf16 %v158, %v156
      %v255 = vpack.c.bf16 %v159, %v157
      %v256 = vpack.c.bf16 %v162, %v160
      %v257 = vpack.c.bf16 %v163, %v161
      %v258 = vpack.c.bf16 %v166, %v164
      %v259 = vpack.c.bf16 %v167, %v165
      %v260 = vpack.c.bf16 %v170, %v168
      %v261 = vpack.c.bf16 %v171, %v169
      %v262 = vpack.c.bf16 %v174, %v172
      %v263 = vpack.c.bf16 %v175, %v173
      %v264 = vpack.c.bf16 %v178, %v176
      %v265 = vpack.c.bf16 %v179, %v177
      %v266 = vpack.c.bf16 %v182, %v180
      %v267 = vpack.c.bf16 %v183, %v181
      %v268 = vpack.c.bf16 %v186, %v184
      %v269 = vpack.c.bf16 %v187, %v185
      %v270 = vpack.c.bf16 %v190, %v188
      %v271 = vpack.c.bf16 %v191, %v189
      %v272 = vpack.c.bf16 %v194, %v192
      %v273 = vpack.c.bf16 %v195, %v193
      %v274 = vpack.c.bf16 %v198, %v196
      %v275 = vpack.c.bf16 %v199, %v197
      %v276 = vpack.c.bf16 %v202, %v200
      %v277 = vpack.c.bf16 %v203, %v201
      %v278 = vpack.c.bf16 %v206, %v204
      %v279 = vpack.c.bf16 %v207, %v205
      %v280 = vpack.c.bf16 %v210, %v208
      %v281 = vpack.c.bf16 %v211, %v209
      %v282 = vpack.c.bf16 %v214, %v212
      %v283 = vpack.c.bf16 %v215, %v213
      %v284 = vpack.c.bf16 %v218, %v216
      %v285 = vpack.c.bf16 %v219, %v217
      %v286 = vpack.c.bf16 %v222, %v220
      %v287 = vpack.c.bf16 %v223, %v221
      %v288 = vld [vmem:[%s1] sm:$0xff]
      %v289 = vld [vmem:[%s1 + $0x8] sm:$0xff]
      %v290 = vld [vmem:[%s1 + $0x10] sm:$0xff]
      %v291 = vld [vmem:[%s1 + $0x18] sm:$0xff]
      %v292 = vld [vmem:[%s1 + $0x20] sm:$0xff]
      %v293 = vld [vmem:[%s1 + $0x28] sm:$0xff]
      %v294 = vld [vmem:[%s1 + $0x30] sm:$0xff]
      %v295 = vld [vmem:[%s1 + $0x38] sm:$0xff]
      %v296 = vld [vmem:[%s1 + $0x40] sm:$0xff]
      %v297 = vld [vmem:[%s1 + $0x48] sm:$0xff]
      %v298 = vld [vmem:[%s1 + $0x50] sm:$0xff]
      %v299 = vld [vmem:[%s1 + $0x58] sm:$0xff]
      %v300 = vld [vmem:[%s1 + $0x60] sm:$0xff]
      %v301 = vld [vmem:[%s1 + $0x68] sm:$0xff]
      %v302 = vld [vmem:[%s1 + $0x70] sm:$0xff]
      %v303 = vld [vmem:[%s1 + $0x78] sm:$0xff]
      %v304 = vld [vmem:[%s1 + $0x80] sm:$0xff]
      %v305 = vld [vmem:[%s1 + $0x88] sm:$0xff]
      %v306 = vld [vmem:[%s1 + $0x90] sm:$0xff]
      %v307 = vld [vmem:[%s1 + $0x98] sm:$0xff]
      %v308 = vld [vmem:[%s1 + $0xa0] sm:$0xff]
      %v309 = vld [vmem:[%s1 + $0xa8] sm:$0xff]
      %v310 = vld [vmem:[%s1 + $0xb0] sm:$0xff]
      %v311 = vld [vmem:[%s1 + $0xb8] sm:$0xff]
      %v312 = vld [vmem:[%s1 + $0xc0] sm:$0xff]
      %v313 = vld [vmem:[%s1 + $0xc8] sm:$0xff]
      %v314 = vld [vmem:[%s1 + $0xd0] sm:$0xff]
      %v315 = vld [vmem:[%s1 + $0xd8] sm:$0xff]
      %v316 = vld [vmem:[%s1 + $0xe0] sm:$0xff]
      %v317 = vld [vmem:[%s1 + $0xe8] sm:$0xff]
      %v318 = vld [vmem:[%s1 + $0xf0] sm:$0xff]
      %v319 = vld [vmem:[%s1 + $0xf8] sm:$0xff]
      %v320 = vld [vmem:[%s1 + $0x100] sm:$0xff]
      %v321 = vld [vmem:[%s1 + $0x108] sm:$0xff]
      %v322 = vld [vmem:[%s1 + $0x110] sm:$0xff]
      %v323 = vld [vmem:[%s1 + $0x118] sm:$0xff]
      %v324 = vld [vmem:[%s1 + $0x120] sm:$0xff]
      %v325 = vld [vmem:[%s1 + $0x128] sm:$0xff]
      %v326 = vld [vmem:[%s1 + $0x130] sm:$0xff]
      %v327 = vld [vmem:[%s1 + $0x138] sm:$0xff]
      %v328 = vld [vmem:[%s1 + $0x140] sm:$0xff]
      %v329 = vld [vmem:[%s1 + $0x148] sm:$0xff]
      %v330 = vld [vmem:[%s1 + $0x150] sm:$0xff]
      %v331 = vld [vmem:[%s1 + $0x158] sm:$0xff]
      %v332 = vld [vmem:[%s1 + $0x160] sm:$0xff]
      %v333 = vld [vmem:[%s1 + $0x168] sm:$0xff]
      %v334 = vld [vmem:[%s1 + $0x170] sm:$0xff]
      %v335 = vld [vmem:[%s1 + $0x178] sm:$0xff]
      %v336 = vld [vmem:[%s1 + $0x180] sm:$0xff]
      %v337 = vld [vmem:[%s1 + $0x188] sm:$0xff]
      %v338 = vld [vmem:[%s1 + $0x190] sm:$0xff]
      %v339 = vld [vmem:[%s1 + $0x198] sm:$0xff]
      %v340 = vld [vmem:[%s1 + $0x1a0] sm:$0xff]
      %v341 = vld [vmem:[%s1 + $0x1a8] sm:$0xff]
      %v342 = vld [vmem:[%s1 + $0x1b0] sm:$0xff]
      %v343 = vld [vmem:[%s1 + $0x1b8] sm:$0xff]
      %v344 = vld [vmem:[%s1 + $0x1c0] sm:$0xff]
      %v345 = vld [vmem:[%s1 + $0x1c8] sm:$0xff]
      %v346 = vld [vmem:[%s1 + $0x1d0] sm:$0xff]
      %v347 = vld [vmem:[%s1 + $0x1d8] sm:$0xff]
      %v348 = vld [vmem:[%s1 + $0x1e0] sm:$0xff]
      %v349 = vld [vmem:[%s1 + $0x1e8] sm:$0xff]
      %v350 = vld [vmem:[%s1 + $0x1f0] sm:$0xff]
      %v351 = vld [vmem:[%s1 + $0x1f8] sm:$0xff]
      %v352 = vld [vmem:[#allocation3] sm:$0xf]
      %v354 = vlaneseq
      %v355 = vshrl.u32 %v354, 7
      %v356 = vsub.s32 0, %v355
      %v357 = vrot.slane %v352, %v356
      %v358 = vlaneseq
      %v359 = vshrl.u32 %v358, 7
      %v360 = vsub.s32 1, %v359
      %v361 = vrot.slane %v352, %v360
      %v362 = vlaneseq
      %v363 = vshrl.u32 %v362, 7
      %v364 = vsub.s32 2, %v363
      %v365 = vrot.slane %v352, %v364
      %v366 = vlaneseq
      %v367 = vshrl.u32 %v366, 7
      %v368 = vsub.s32 3, %v367
      %v369 = vrot.slane %v352, %v368
      %v438 = vunpack.c.l.b16 %v288
      %v439 = vunpack.c.h.b16 %v288
      %v440 = vunpack.c.l.b16 %v289
      %v441 = vunpack.c.h.b16 %v289
      %v442 = vunpack.c.l.b16 %v290
      %v443 = vunpack.c.h.b16 %v290
      %v444 = vunpack.c.l.b16 %v291
      %v445 = vunpack.c.h.b16 %v291
      %v446 = vunpack.c.l.b16 %v292
      %v447 = vunpack.c.h.b16 %v292
      %v448 = vunpack.c.l.b16 %v293
      %v449 = vunpack.c.h.b16 %v293
      %v450 = vunpack.c.l.b16 %v294
      %v451 = vunpack.c.h.b16 %v294
      %v452 = vunpack.c.l.b16 %v295
      %v453 = vunpack.c.h.b16 %v295
      %v454 = vunpack.c.l.b16 %v296
      %v455 = vunpack.c.h.b16 %v296
      %v456 = vunpack.c.l.b16 %v297
      %v457 = vunpack.c.h.b16 %v297
      %v458 = vunpack.c.l.b16 %v298
      %v459 = vunpack.c.h.b16 %v298
      %v460 = vunpack.c.l.b16 %v299
      %v461 = vunpack.c.h.b16 %v299
      %v462 = vunpack.c.l.b16 %v300
      %v463 = vunpack.c.h.b16 %v300
      %v464 = vunpack.c.l.b16 %v301
      %v465 = vunpack.c.h.b16 %v301
      %v466 = vunpack.c.l.b16 %v302
      %v467 = vunpack.c.h.b16 %v302
      %v468 = vunpack.c.l.b16 %v303
      %v469 = vunpack.c.h.b16 %v303
      %v470 = vunpack.c.l.b16 %v304
      %v471 = vunpack.c.h.b16 %v304
      %v472 = vunpack.c.l.b16 %v305
      %v473 = vunpack.c.h.b16 %v305
      %v474 = vunpack.c.l.b16 %v306
      %v475 = vunpack.c.h.b16 %v306
      %v476 = vunpack.c.l.b16 %v307
      %v477 = vunpack.c.h.b16 %v307
      %v478 = vunpack.c.l.b16 %v308
      %v479 = vunpack.c.h.b16 %v308
      %v480 = vunpack.c.l.b16 %v309
      %v481 = vunpack.c.h.b16 %v309
      %v482 = vunpack.c.l.b16 %v310
      %v483 = vunpack.c.h.b16 %v310
      %v484 = vunpack.c.l.b16 %v311
      %v485 = vunpack.c.h.b16 %v311
      %v486 = vunpack.c.l.b16 %v312
      %v487 = vunpack.c.h.b16 %v312
      %v488 = vunpack.c.l.b16 %v313
      %v489 = vunpack.c.h.b16 %v313
      %v490 = vunpack.c.l.b16 %v314
      %v491 = vunpack.c.h.b16 %v314
      %v492 = vunpack.c.l.b16 %v315
      %v493 = vunpack.c.h.b16 %v315
      %v494 = vunpack.c.l.b16 %v316
      %v495 = vunpack.c.h.b16 %v316
      %v496 = vunpack.c.l.b16 %v317
      %v497 = vunpack.c.h.b16 %v317
      %v498 = vunpack.c.l.b16 %v318
      %v499 = vunpack.c.h.b16 %v318
      %v500 = vunpack.c.l.b16 %v319
      %v501 = vunpack.c.h.b16 %v319
      %v502 = vunpack.c.l.b16 %v320
      %v503 = vunpack.c.h.b16 %v320
      %v504 = vunpack.c.l.b16 %v321
      %v505 = vunpack.c.h.b16 %v321
      %v506 = vunpack.c.l.b16 %v322
      %v507 = vunpack.c.h.b16 %v322
      %v508 = vunpack.c.l.b16 %v323
      %v509 = vunpack.c.h.b16 %v323
      %v510 = vunpack.c.l.b16 %v324
      %v511 = vunpack.c.h.b16 %v324
      %v512 = vunpack.c.l.b16 %v325
      %v513 = vunpack.c.h.b16 %v325
      %v514 = vunpack.c.l.b16 %v326
      %v515 = vunpack.c.h.b16 %v326
      %v516 = vunpack.c.l.b16 %v327
      %v517 = vunpack.c.h.b16 %v327
      %v518 = vunpack.c.l.b16 %v328
      %v519 = vunpack.c.h.b16 %v328
      %v520 = vunpack.c.l.b16 %v329
      %v521 = vunpack.c.h.b16 %v329
      %v522 = vunpack.c.l.b16 %v330
      %v523 = vunpack.c.h.b16 %v330
      %v524 = vunpack.c.l.b16 %v331
      %v525 = vunpack.c.h.b16 %v331
      %v526 = vunpack.c.l.b16 %v332
      %v527 = vunpack.c.h.b16 %v332
      %v528 = vunpack.c.l.b16 %v333
      %v529 = vunpack.c.h.b16 %v333
      %v530 = vunpack.c.l.b16 %v334
      %v531 = vunpack.c.h.b16 %v334
      %v532 = vunpack.c.l.b16 %v335
      %v533 = vunpack.c.h.b16 %v335
      %v534 = vunpack.c.l.b16 %v336
      %v535 = vunpack.c.h.b16 %v336
      %v536 = vunpack.c.l.b16 %v337
      %v537 = vunpack.c.h.b16 %v337
      %v538 = vunpack.c.l.b16 %v338
      %v539 = vunpack.c.h.b16 %v338
      %v540 = vunpack.c.l.b16 %v339
      %v541 = vunpack.c.h.b16 %v339
      %v542 = vunpack.c.l.b16 %v340
      %v543 = vunpack.c.h.b16 %v340
      %v544 = vunpack.c.l.b16 %v341
      %v545 = vunpack.c.h.b16 %v341
      %v546 = vunpack.c.l.b16 %v342
      %v547 = vunpack.c.h.b16 %v342
      %v548 = vunpack.c.l.b16 %v343
      %v549 = vunpack.c.h.b16 %v343
      %v550 = vunpack.c.l.b16 %v344
      %v551 = vunpack.c.h.b16 %v344
      %v552 = vunpack.c.l.b16 %v345
      %v553 = vunpack.c.h.b16 %v345
      %v554 = vunpack.c.l.b16 %v346
      %v555 = vunpack.c.h.b16 %v346
      %v556 = vunpack.c.l.b16 %v347
      %v557 = vunpack.c.h.b16 %v347
      %v558 = vunpack.c.l.b16 %v348
      %v559 = vunpack.c.h.b16 %v348
      %v560 = vunpack.c.l.b16 %v349
      %v561 = vunpack.c.h.b16 %v349
      %v562 = vunpack.c.l.b16 %v350
      %v563 = vunpack.c.h.b16 %v350
      %v564 = vunpack.c.l.b16 %v351
      %v565 = vunpack.c.h.b16 %v351
      %v566 = vpack.c.b16 %v442, %v438
      %v567 = vpack.c.b16 %v443, %v439
      %v568 = vpack.c.b16 %v444, %v440
      %v569 = vpack.c.b16 %v445, %v441
      %v570 = vpack.c.b16 %v450, %v446
      %v571 = vpack.c.b16 %v451, %v447
      %v572 = vpack.c.b16 %v452, %v448
      %v573 = vpack.c.b16 %v453, %v449
      %v574 = vpack.c.b16 %v458, %v454
      %v575 = vpack.c.b16 %v459, %v455
      %v576 = vpack.c.b16 %v460, %v456
      %v577 = vpack.c.b16 %v461, %v457
      %v578 = vpack.c.b16 %v466, %v462
      %v579 = vpack.c.b16 %v467, %v463
      %v580 = vpack.c.b16 %v468, %v464
      %v581 = vpack.c.b16 %v469, %v465
      %v582 = vpack.c.b16 %v474, %v470
      %v583 = vpack.c.b16 %v475, %v471
      %v584 = vpack.c.b16 %v476, %v472
      %v585 = vpack.c.b16 %v477, %v473
      %v586 = vpack.c.b16 %v482, %v478
      %v587 = vpack.c.b16 %v483, %v479
      %v588 = vpack.c.b16 %v484, %v480
      %v589 = vpack.c.b16 %v485, %v481
      %v590 = vpack.c.b16 %v490, %v486
      %v591 = vpack.c.b16 %v491, %v487
      %v592 = vpack.c.b16 %v492, %v488
      %v593 = vpack.c.b16 %v493, %v489
      %v594 = vpack.c.b16 %v498, %v494
      %v595 = vpack.c.b16 %v499, %v495
      %v596 = vpack.c.b16 %v500, %v496
      %v597 = vpack.c.b16 %v501, %v497
      %v598 = vpack.c.b16 %v506, %v502
      %v599 = vpack.c.b16 %v507, %v503
      %v600 = vpack.c.b16 %v508, %v504
      %v601 = vpack.c.b16 %v509, %v505
      %v602 = vpack.c.b16 %v514, %v510
      %v603 = vpack.c.b16 %v515, %v511
      %v604 = vpack.c.b16 %v516, %v512
      %v605 = vpack.c.b16 %v517, %v513
      %v606 = vpack.c.b16 %v522, %v518
      %v607 = vpack.c.b16 %v523, %v519
      %v608 = vpack.c.b16 %v524, %v520
      %v609 = vpack.c.b16 %v525, %v521
      %v610 = vpack.c.b16 %v530, %v526
      %v611 = vpack.c.b16 %v531, %v527
      %v612 = vpack.c.b16 %v532, %v528
      %v613 = vpack.c.b16 %v533, %v529
      %v614 = vpack.c.b16 %v538, %v534
      %v615 = vpack.c.b16 %v539, %v535
      %v616 = vpack.c.b16 %v540, %v536
      %v617 = vpack.c.b16 %v541, %v537
      %v618 = vpack.c.b16 %v546, %v542
      %v619 = vpack.c.b16 %v547, %v543
      %v620 = vpack.c.b16 %v548, %v544
      %v621 = vpack.c.b16 %v549, %v545
      %v622 = vpack.c.b16 %v554, %v550
      %v623 = vpack.c.b16 %v555, %v551
      %v624 = vpack.c.b16 %v556, %v552
      %v625 = vpack.c.b16 %v557, %v553
      %v626 = vpack.c.b16 %v562, %v558
      %v627 = vpack.c.b16 %v563, %v559
      %v628 = vpack.c.b16 %v564, %v560
      %v629 = vpack.c.b16 %v565, %v561
      %694 = vmatprep.subr.bf16.mxu0 %v567
      %695 = vmatpush1.bf16.msra.mxu0 %v566
      %696 = vmatprep.subr.bf16.mxu0 %v571
      %697 = vmatpush1.bf16.msra.mxu0 %v570
      %698 = vmatprep.subr.bf16.mxu0 %v575
      %699 = vmatpush1.bf16.msra.mxu0 %v574
      %700 = vmatprep.subr.bf16.mxu0 %v579
      %701 = vmatpush1.bf16.msra.mxu0 %v578
      %702 = vmatprep.subr.bf16.mxu0 %v583
      %703 = vmatpush1.bf16.msra.mxu0 %v582
      %704 = vmatprep.subr.bf16.mxu0 %v587
      %705 = vmatpush1.bf16.msra.mxu0 %v586
      %706 = vmatprep.subr.bf16.mxu0 %v591
      %707 = vmatpush1.bf16.msra.mxu0 %v590
      %708 = vmatprep.subr.bf16.mxu0 %v595
      %709 = vmatpush1.bf16.msra.mxu0 %v594
      %710 = vmatprep.subr.bf16.mxu0 %v599
      %711 = vmatpush1.bf16.msra.mxu0 %v598
      %712 = vmatprep.subr.bf16.mxu0 %v603
      %713 = vmatpush1.bf16.msra.mxu0 %v602
      %714 = vmatprep.subr.bf16.mxu0 %v607
      %715 = vmatpush1.bf16.msra.mxu0 %v606
      %716 = vmatprep.subr.bf16.mxu0 %v611
      %717 = vmatpush1.bf16.msra.mxu0 %v610
      %718 = vmatprep.subr.bf16.mxu0 %v615
      %719 = vmatpush1.bf16.msra.mxu0 %v614
      %720 = vmatprep.subr.bf16.mxu0 %v619
      %721 = vmatpush1.bf16.msra.mxu0 %v618
      %722 = vmatprep.subr.bf16.mxu0 %v623
      %723 = vmatpush1.bf16.msra.mxu0 %v622
      %724 = vmatprep.subr.bf16.mxu0 %v627
      %725 = vmatpush1.bf16.msra.mxu0 %v626
      %726 = vmatprep.mubr.bf16.mxu0 %v225
      %727 = vmatmul.mubr.bf16.gmra.mrb[0].mxu0 %v224
      %v728 = vpop.f32.mrb[0].mxu0
      %v729 = vadd.f32 %v357, %v728
      %v730 = vpop.f32.mrb[0].mxu0
      %v731 = vadd.f32 %v361, %v730
      %v732 = vpop.f32.mrb[0].mxu0
      %v733 = vadd.f32 %v357, %v732
      %v734 = vpop.f32.mrb[0].mxu0
      %v735 = vadd.f32 %v361, %v734
      %736 = vmatprep.mubr.bf16.mxu0 %v227
      %737 = vmatmul.mubr.bf16.gmra.mrb[0].mxu0 %v226
      %v738 = vpop.f32.mrb[0].mxu0
      %v739 = vadd.f32 %v357, %v738
      %v740 = vpop.f32.mrb[0].mxu0
      %v741 = vadd.f32 %v361, %v740
      %v742 = vpop.f32.mrb[0].mxu0
      %v743 = vadd.f32 %v357, %v742
      %v744 = vpop.f32.mrb[0].mxu0
      %v745 = vadd.f32 %v361, %v744
      %746 = vmatprep.mubr.bf16.mxu0 %v229
      %747 = vmatmul.mubr.bf16.gmra.mrb[0].mxu0 %v228
      %v748 = vpop.f32.mrb[0].mxu0
      %v749 = vadd.f32 %v357, %v748
      %v750 = vpop.f32.mrb[0].mxu0
      %v751 = vadd.f32 %v361, %v750
      %v752 = vpop.f32.mrb[0].mxu0
      %v753 = vadd.f32 %v357, %v752
      %v754 = vpop.f32.mrb[0].mxu0
      %v755 = vadd.f32 %v361, %v754
      %756 = vmatprep.mubr.bf16.mxu0 %v231
      %757 = vmatmul.mubr.bf16.gmra.mrb[0].mxu0 %v230
      %v758 = vpop.f32.mrb[0].mxu0
      %v759 = vadd.f32 %v357, %v758
      %v760 = vpop.f32.mrb[0].mxu0
      %v761 = vadd.f32 %v361, %v760
      %v762 = vpop.f32.mrb[0].mxu0
      %v763 = vadd.f32 %v357, %v762
      %v764 = vpop.f32.mrb[0].mxu0
      %v765 = vadd.f32 %v361, %v764
      %766 = vmatprep.mubr.bf16.mxu0 %v233
      %767 = vmatmul.mubr.bf16.gmra.mrb[0].mxu0 %v232
      %v768 = vpop.f32.mrb[0].mxu0
      %v769 = vadd.f32 %v357, %v768
      %v770 = vpop.f32.mrb[0].mxu0
      %v771 = vadd.f32 %v361, %v770
      %v772 = vpop.f32.mrb[0].mxu0
      %v773 = vadd.f32 %v357, %v772
      %v774 = vpop.f32.mrb[0].mxu0
      %v775 = vadd.f32 %v361, %v774
      %776 = vmatprep.mubr.bf16.mxu0 %v235
      %777 = vmatmul.mubr.bf16.gmra.mrb[0].mxu0 %v234
      %v778 = vpop.f32.mrb[0].mxu0
      %v779 = vadd.f32 %v357, %v778
      %v780 = vpop.f32.mrb[0].mxu0
      %v781 = vadd.f32 %v361, %v780
      %v782 = vpop.f32.mrb[0].mxu0
      %v783 = vadd.f32 %v357, %v782
      %v784 = vpop.f32.mrb[0].mxu0
      %v785 = vadd.f32 %v361, %v784
      %786 = vmatprep.mubr.bf16.mxu0 %v237
      %787 = vmatmul.mubr.bf16.gmra.mrb[0].mxu0 %v236
      %v788 = vpop.f32.mrb[0].mxu0
      %v789 = vadd.f32 %v357, %v788
      %v790 = vpop.f32.mrb[0].mxu0
      %v791 = vadd.f32 %v361, %v790
      %v792 = vpop.f32.mrb[0].mxu0
      %v793 = vadd.f32 %v357, %v792
      %v794 = vpop.f32.mrb[0].mxu0
      %v795 = vadd.f32 %v361, %v794
      %796 = vmatprep.mubr.bf16.mxu0 %v239
      %797 = vmatmul.mubr.bf16.gmra.mrb[0].mxu0 %v238
      %v798 = vpop.f32.mrb[0].mxu0
      %v799 = vadd.f32 %v357, %v798
      %v800 = vpop.f32.mrb[0].mxu0
      %v801 = vadd.f32 %v361, %v800
      %v802 = vpop.f32.mrb[0].mxu0
      %v803 = vadd.f32 %v357, %v802
      %v804 = vpop.f32.mrb[0].mxu0
      %v805 = vadd.f32 %v361, %v804
      %806 = vmatprep.mubr.bf16.mxu0 %v241
      %807 = vmatmul.mubr.bf16.gmra.mrb[0].mxu0 %v240
      %v808 = vpop.f32.mrb[0].mxu0
      %v809 = vadd.f32 %v357, %v808
      %v810 = vpop.f32.mrb[0].mxu0
      %v811 = vadd.f32 %v361, %v810
      %v812 = vpop.f32.mrb[0].mxu0
      %v813 = vadd.f32 %v357, %v812
      %v814 = vpop.f32.mrb[0].mxu0
      %v815 = vadd.f32 %v361, %v814
      %816 = vmatprep.mubr.bf16.mxu0 %v243
      %817 = vmatmul.mubr.bf16.gmra.mrb[0].mxu0 %v242
      %v818 = vpop.f32.mrb[0].mxu0
      %v819 = vadd.f32 %v357, %v818
      %v820 = vpop.f32.mrb[0].mxu0
      %v821 = vadd.f32 %v361, %v820
      %v822 = vpop.f32.mrb[0].mxu0
      %v823 = vadd.f32 %v357, %v822
      %v824 = vpop.f32.mrb[0].mxu0
      %v825 = vadd.f32 %v361, %v824
      %826 = vmatprep.mubr.bf16.mxu0 %v245
      %827 = vmatmul.mubr.bf16.gmra.mrb[0].mxu0 %v244
      %v828 = vpop.f32.mrb[0].mxu0
      %v829 = vadd.f32 %v357, %v828
      %v830 = vpop.f32.mrb[0].mxu0
      %v831 = vadd.f32 %v361, %v830
      %v832 = vpop.f32.mrb[0].mxu0
      %v833 = vadd.f32 %v357, %v832
      %v834 = vpop.f32.mrb[0].mxu0
      %v835 = vadd.f32 %v361, %v834
      %836 = vmatprep.mubr.bf16.mxu0 %v247
      %837 = vmatmul.mubr.bf16.gmra.mrb[0].mxu0 %v246
      %v838 = vpop.f32.mrb[0].mxu0
      %v839 = vadd.f32 %v357, %v838
      %v840 = vpop.f32.mrb[0].mxu0
      %v841 = vadd.f32 %v361, %v840
      %v842 = vpop.f32.mrb[0].mxu0
      %v843 = vadd.f32 %v357, %v842
      %v844 = vpop.f32.mrb[0].mxu0
      %v845 = vadd.f32 %v361, %v844
      %846 = vmatprep.mubr.bf16.mxu0 %v249
      %847 = vmatmul.mubr.bf16.gmra.mrb[0].mxu0 %v248
      %v848 = vpop.f32.mrb[0].mxu0
      %v849 = vadd.f32 %v357, %v848
      %v850 = vpop.f32.mrb[0].mxu0
      %v851 = vadd.f32 %v361, %v850
      %v852 = vpop.f32.mrb[0].mxu0
      %v853 = vadd.f32 %v357, %v852
      %v854 = vpop.f32.mrb[0].mxu0
      %v855 = vadd.f32 %v361, %v854
      %856 = vmatprep.mubr.bf16.mxu0 %v251
      %857 = vmatmul.mubr.bf16.gmra.mrb[0].mxu0 %v250
      %v858 = vpop.f32.mrb[0].mxu0
      %v859 = vadd.f32 %v357, %v858
      %v860 = vpop.f32.mrb[0].mxu0
      %v861 = vadd.f32 %v361, %v860
      %v862 = vpop.f32.mrb[0].mxu0
      %v863 = vadd.f32 %v357, %v862
      %v864 = vpop.f32.mrb[0].mxu0
      %v865 = vadd.f32 %v361, %v864
      %866 = vmatprep.mubr.bf16.mxu0 %v253
      %867 = vmatmul.mubr.bf16.gmra.mrb[0].mxu0 %v252
      %v868 = vpop.f32.mrb[0].mxu0
      %v869 = vadd.f32 %v357, %v868
      %v870 = vpop.f32.mrb[0].mxu0
      %v871 = vadd.f32 %v361, %v870
      %v872 = vpop.f32.mrb[0].mxu0
      %v873 = vadd.f32 %v357, %v872
      %v874 = vpop.f32.mrb[0].mxu0
      %v875 = vadd.f32 %v361, %v874
      %876 = vmatprep.mubr.bf16.mxu0 %v255
      %877 = vmatmul.mubr.bf16.gmra.mrb[0].mxu0 %v254
      %v878 = vpop.f32.mrb[0].mxu0
      %v879 = vadd.f32 %v357, %v878
      %v880 = vpop.f32.mrb[0].mxu0
      %v881 = vadd.f32 %v361, %v880
      %v882 = vpop.f32.mrb[0].mxu0
      %v883 = vadd.f32 %v357, %v882
      %v884 = vpop.f32.mrb[0].mxu0
      %v885 = vadd.f32 %v361, %v884
      %886 = vmatprep.mubr.bf16.mxu0 %v257
      %887 = vmatmul.mubr.bf16.gmra.mrb[0].mxu0 %v256
      %v888 = vpop.f32.mrb[0].mxu0
      %v889 = vadd.f32 %v357, %v888
      %v890 = vpop.f32.mrb[0].mxu0
      %v891 = vadd.f32 %v361, %v890
      %v892 = vpop.f32.mrb[0].mxu0
      %v893 = vadd.f32 %v357, %v892
      %v894 = vpop.f32.mrb[0].mxu0
      %v895 = vadd.f32 %v361, %v894
      %896 = vmatprep.mubr.bf16.mxu0 %v259
      %897 = vmatmul.mubr.bf16.gmra.mrb[0].mxu0 %v258
      %v898 = vpop.f32.mrb[0].mxu0
      %v899 = vadd.f32 %v357, %v898
      %v900 = vpop.f32.mrb[0].mxu0
      %v901 = vadd.f32 %v361, %v900
      %v902 = vpop.f32.mrb[0].mxu0
      %v903 = vadd.f32 %v357, %v902
      %v904 = vpop.f32.mrb[0].mxu0
      %v905 = vadd.f32 %v361, %v904
      %906 = vmatprep.mubr.bf16.mxu0 %v261
      %907 = vmatmul.mubr.bf16.gmra.mrb[0].mxu0 %v260
      %v908 = vpop.f32.mrb[0].mxu0
      %v909 = vadd.f32 %v357, %v908
      %v910 = vpop.f32.mrb[0].mxu0
      %v911 = vadd.f32 %v361, %v910
      %v912 = vpop.f32.mrb[0].mxu0
      %v913 = vadd.f32 %v357, %v912
      %v914 = vpop.f32.mrb[0].mxu0
      %v915 = vadd.f32 %v361, %v914
      %916 = vmatprep.mubr.bf16.mxu0 %v263
      %917 = vmatmul.mubr.bf16.gmra.mrb[0].mxu0 %v262
      %v918 = vpop.f32.mrb[0].mxu0
      %v919 = vadd.f32 %v357, %v918
      %v920 = vpop.f32.mrb[0].mxu0
      %v921 = vadd.f32 %v361, %v920
      %v922 = vpop.f32.mrb[0].mxu0
      %v923 = vadd.f32 %v357, %v922
      %v924 = vpop.f32.mrb[0].mxu0
      %v925 = vadd.f32 %v361, %v924
      %926 = vmatprep.mubr.bf16.mxu0 %v265
      %927 = vmatmul.mubr.bf16.gmra.mrb[0].mxu0 %v264
      %v928 = vpop.f32.mrb[0].mxu0
      %v929 = vadd.f32 %v357, %v928
      %v930 = vpop.f32.mrb[0].mxu0
      %v931 = vadd.f32 %v361, %v930
      %v932 = vpop.f32.mrb[0].mxu0
      %v933 = vadd.f32 %v357, %v932
      %v934 = vpop.f32.mrb[0].mxu0
      %v935 = vadd.f32 %v361, %v934
      %936 = vmatprep.mubr.bf16.mxu0 %v267
      %937 = vmatmul.mubr.bf16.gmra.mrb[0].mxu0 %v266
      %v938 = vpop.f32.mrb[0].mxu0
      %v939 = vadd.f32 %v357, %v938
      %v940 = vpop.f32.mrb[0].mxu0
      %v941 = vadd.f32 %v361, %v940
      %v942 = vpop.f32.mrb[0].mxu0
      %v943 = vadd.f32 %v357, %v942
      %v944 = vpop.f32.mrb[0].mxu0
      %v945 = vadd.f32 %v361, %v944
      %946 = vmatprep.mubr.bf16.mxu0 %v269
      %947 = vmatmul.mubr.bf16.gmra.mrb[0].mxu0 %v268
      %v948 = vpop.f32.mrb[0].mxu0
      %v949 = vadd.f32 %v357, %v948
      %v950 = vpop.f32.mrb[0].mxu0
      %v951 = vadd.f32 %v361, %v950
      %v952 = vpop.f32.mrb[0].mxu0
      %v953 = vadd.f32 %v357, %v952
      %v954 = vpop.f32.mrb[0].mxu0
      %v955 = vadd.f32 %v361, %v954
      %956 = vmatprep.mubr.bf16.mxu0 %v271
      %957 = vmatmul.mubr.bf16.gmra.mrb[0].mxu0 %v270
      %v958 = vpop.f32.mrb[0].mxu0
      %v959 = vadd.f32 %v357, %v958
      %v960 = vpop.f32.mrb[0].mxu0
      %v961 = vadd.f32 %v361, %v960
      %v962 = vpop.f32.mrb[0].mxu0
      %v963 = vadd.f32 %v357, %v962
      %v964 = vpop.f32.mrb[0].mxu0
      %v965 = vadd.f32 %v361, %v964
      %966 = vmatprep.mubr.bf16.mxu0 %v273
      %967 = vmatmul.mubr.bf16.gmra.mrb[0].mxu0 %v272
      %v968 = vpop.f32.mrb[0].mxu0
      %v969 = vadd.f32 %v357, %v968
      %v970 = vpop.f32.mrb[0].mxu0
      %v971 = vadd.f32 %v361, %v970
      %v972 = vpop.f32.mrb[0].mxu0
      %v973 = vadd.f32 %v357, %v972
      %v974 = vpop.f32.mrb[0].mxu0
      %v975 = vadd.f32 %v361, %v974
      %976 = vmatprep.mubr.bf16.mxu0 %v275
      %977 = vmatmul.mubr.bf16.gmra.mrb[0].mxu0 %v274
      %v978 = vpop.f32.mrb[0].mxu0
      %v979 = vadd.f32 %v357, %v978
      %v980 = vpop.f32.mrb[0].mxu0
      %v981 = vadd.f32 %v361, %v980
      %v982 = vpop.f32.mrb[0].mxu0
      %v983 = vadd.f32 %v357, %v982
      %v984 = vpop.f32.mrb[0].mxu0
      %v985 = vadd.f32 %v361, %v984
      %986 = vmatprep.mubr.bf16.mxu0 %v277
      %987 = vmatmul.mubr.bf16.gmra.mrb[0].mxu0 %v276
      %v988 = vpop.f32.mrb[0].mxu0
      %v989 = vadd.f32 %v357, %v988
      %v990 = vpop.f32.mrb[0].mxu0
      %v991 = vadd.f32 %v361, %v990
      %v992 = vpop.f32.mrb[0].mxu0
      %v993 = vadd.f32 %v357, %v992
      %v994 = vpop.f32.mrb[0].mxu0
      %v995 = vadd.f32 %v361, %v994
      %996 = vmatprep.mubr.bf16.mxu0 %v279
      %997 = vmatmul.mubr.bf16.gmra.mrb[0].mxu0 %v278
      %v998 = vpop.f32.mrb[0].mxu0
      %v999 = vadd.f32 %v357, %v998
      %v1000 = vpop.f32.mrb[0].mxu0
      %v1001 = vadd.f32 %v361, %v1000
      %v1002 = vpop.f32.mrb[0].mxu0
      %v1003 = vadd.f32 %v357, %v1002
      %v1004 = vpop.f32.mrb[0].mxu0
      %v1005 = vadd.f32 %v361, %v1004
      %1006 = vmatprep.mubr.bf16.mxu0 %v281
      %1007 = vmatmul.mubr.bf16.gmra.mrb[0].mxu0 %v280
      %v1008 = vpop.f32.mrb[0].mxu0
      %v1009 = vadd.f32 %v357, %v1008
      %v1010 = vpop.f32.mrb[0].mxu0
      %v1011 = vadd.f32 %v361, %v1010
      %v1012 = vpop.f32.mrb[0].mxu0
      %v1013 = vadd.f32 %v357, %v1012
      %v1014 = vpop.f32.mrb[0].mxu0
      %v1015 = vadd.f32 %v361, %v1014
      %1016 = vmatprep.mubr.bf16.mxu0 %v283
      %1017 = vmatmul.mubr.bf16.gmra.mrb[0].mxu0 %v282
      %v1018 = vpop.f32.mrb[0].mxu0
      %v1019 = vadd.f32 %v357, %v1018
      %v1020 = vpop.f32.mrb[0].mxu0
      %v1021 = vadd.f32 %v361, %v1020
      %v1022 = vpop.f32.mrb[0].mxu0
      %v1023 = vadd.f32 %v357, %v1022
      %v1024 = vpop.f32.mrb[0].mxu0
      %v1025 = vadd.f32 %v361, %v1024
      %1026 = vmatprep.mubr.bf16.mxu0 %v285
      %1027 = vmatmul.mubr.bf16.gmra.mrb[0].mxu0 %v284
      %v1028 = vpop.f32.mrb[0].mxu0
      %v1029 = vadd.f32 %v357, %v1028
      %v1030 = vpop.f32.mrb[0].mxu0
      %v1031 = vadd.f32 %v361, %v1030
      %v1032 = vpop.f32.mrb[0].mxu0
      %v1033 = vadd.f32 %v357, %v1032
      %v1034 = vpop.f32.mrb[0].mxu0
      %v1035 = vadd.f32 %v361, %v1034
      %1036 = vmatprep.mubr.bf16.mxu0 %v287
      %1037 = vmatmul.mubr.bf16.gmra.mrb[0].mxu0 %v286
      %v1038 = vpop.f32.mrb[0].mxu0
      %v1039 = vadd.f32 %v357, %v1038
      %v1040 = vpop.f32.mrb[0].mxu0
      %v1041 = vadd.f32 %v361, %v1040
      %v1042 = vpop.f32.mrb[0].mxu0
      %v1043 = vadd.f32 %v357, %v1042
      %v1044 = vpop.f32.mrb[0].mxu0
      %v1045 = vadd.f32 %v361, %v1044
      %1046 = vdwg.mxu0
      %1047 = vmatprep.subr.bf16.mxu0 %v569
      %1048 = vmatpush1.bf16.msra.mxu0 %v568
      %1049 = vmatprep.subr.bf16.mxu0 %v573
      %1050 = vmatpush1.bf16.msra.mxu0 %v572
      %1051 = vmatprep.subr.bf16.mxu0 %v577
      %1052 = vmatpush1.bf16.msra.mxu0 %v576
      %1053 = vmatprep.subr.bf16.mxu0 %v581
      %1054 = vmatpush1.bf16.msra.mxu0 %v580
      %1055 = vmatprep.subr.bf16.mxu0 %v585
      %1056 = vmatpush1.bf16.msra.mxu0 %v584
      %1057 = vmatprep.subr.bf16.mxu0 %v589
      %1058 = vmatpush1.bf16.msra.mxu0 %v588
      %1059 = vmatprep.subr.bf16.mxu0 %v593
      %1060 = vmatpush1.bf16.msra.mxu0 %v592
      %1061 = vmatprep.subr.bf16.mxu0 %v597
      %1062 = vmatpush1.bf16.msra.mxu0 %v596
      %1063 = vmatprep.subr.bf16.mxu0 %v601
      %1064 = vmatpush1.bf16.msra.mxu0 %v600
      %1065 = vmatprep.subr.bf16.mxu0 %v605
      %1066 = vmatpush1.bf16.msra.mxu0 %v604
      %1067 = vmatprep.subr.bf16.mxu0 %v609
      %1068 = vmatpush1.bf16.msra.mxu0 %v608
      %1069 = vmatprep.subr.bf16.mxu0 %v613
      %1070 = vmatpush1.bf16.msra.mxu0 %v612
      %1071 = vmatprep.subr.bf16.mxu0 %v617
      %1072 = vmatpush1.bf16.msra.mxu0 %v616
      %1073 = vmatprep.subr.bf16.mxu0 %v621
      %1074 = vmatpush1.bf16.msra.mxu0 %v620
      %1075 = vmatprep.subr.bf16.mxu0 %v625
      %1076 = vmatpush1.bf16.msra.mxu0 %v624
      %1077 = vmatprep.subr.bf16.mxu0 %v629
      %1078 = vmatpush1.bf16.msra.mxu0 %v628
      %1079 = vmatprep.mubr.bf16.mxu0 %v225
      %1080 = vmatmul.mubr.bf16.gmra.mrb[0].mxu0 %v224
      %v1081 = vpop.f32.mrb[0].mxu0
      %v1082 = vadd.f32 %v365, %v1081
      %v1083 = vpop.f32.mrb[0].mxu0
      %v1084 = vadd.f32 %v369, %v1083
      %v1085 = vpop.f32.mrb[0].mxu0
      %v1086 = vadd.f32 %v365, %v1085
      %v1087 = vpop.f32.mrb[0].mxu0
      %v1088 = vadd.f32 %v369, %v1087
      %1089 = vmatprep.mubr.bf16.mxu0 %v227
      %1090 = vmatmul.mubr.bf16.gmra.mrb[0].mxu0 %v226
      %v1091 = vpop.f32.mrb[0].mxu0
      %v1092 = vadd.f32 %v365, %v1091
      %v1093 = vpop.f32.mrb[0].mxu0
      %v1094 = vadd.f32 %v369, %v1093
      %v1095 = vpop.f32.mrb[0].mxu0
      %v1096 = vadd.f32 %v365, %v1095
      %v1097 = vpop.f32.mrb[0].mxu0
      %v1098 = vadd.f32 %v369, %v1097
      %1099 = vmatprep.mubr.bf16.mxu0 %v229
      %1100 = vmatmul.mubr.bf16.gmra.mrb[0].mxu0 %v228
      %v1101 = vpop.f32.mrb[0].mxu0
      %v1102 = vadd.f32 %v365, %v1101
      %v1103 = vpop.f32.mrb[0].mxu0
      %v1104 = vadd.f32 %v369, %v1103
      %v1105 = vpop.f32.mrb[0].mxu0
      %v1106 = vadd.f32 %v365, %v1105
      %v1107 = vpop.f32.mrb[0].mxu0
      %v1108 = vadd.f32 %v369, %v1107
      %1109 = vmatprep.mubr.bf16.mxu0 %v231
      %1110 = vmatmul.mubr.bf16.gmra.mrb[0].mxu0 %v230
      %v1111 = vpop.f32.mrb[0].mxu0
      %v1112 = vadd.f32 %v365, %v1111
      %v1113 = vpop.f32.mrb[0].mxu0
      %v1114 = vadd.f32 %v369, %v1113
      %v1115 = vpop.f32.mrb[0].mxu0
      %v1116 = vadd.f32 %v365, %v1115
      %v1117 = vpop.f32.mrb[0].mxu0
      %v1118 = vadd.f32 %v369, %v1117
      %1119 = vmatprep.mubr.bf16.mxu0 %v233
      %1120 = vmatmul.mubr.bf16.gmra.mrb[0].mxu0 %v232
      %v1121 = vpop.f32.mrb[0].mxu0
      %v1122 = vadd.f32 %v365, %v1121
      %v1123 = vpop.f32.mrb[0].mxu0
      %v1124 = vadd.f32 %v369, %v1123
      %v1125 = vpop.f32.mrb[0].mxu0
      %v1126 = vadd.f32 %v365, %v1125
      %v1127 = vpop.f32.mrb[0].mxu0
      %v1128 = vadd.f32 %v369, %v1127
      %1129 = vmatprep.mubr.bf16.mxu0 %v235
      %1130 = vmatmul.mubr.bf16.gmra.mrb[0].mxu0 %v234
      %v1131 = vpop.f32.mrb[0].mxu0
      %v1132 = vadd.f32 %v365, %v1131
      %v1133 = vpop.f32.mrb[0].mxu0
      %v1134 = vadd.f32 %v369, %v1133
      %v1135 = vpop.f32.mrb[0].mxu0
      %v1136 = vadd.f32 %v365, %v1135
      %v1137 = vpop.f32.mrb[0].mxu0
      %v1138 = vadd.f32 %v369, %v1137
      %1139 = vmatprep.mubr.bf16.mxu0 %v237
      %1140 = vmatmul.mubr.bf16.gmra.mrb[0].mxu0 %v236
      %v1141 = vpop.f32.mrb[0].mxu0
      %v1142 = vadd.f32 %v365, %v1141
      %v1143 = vpop.f32.mrb[0].mxu0
      %v1144 = vadd.f32 %v369, %v1143
      %v1145 = vpop.f32.mrb[0].mxu0
      %v1146 = vadd.f32 %v365, %v1145
      %v1147 = vpop.f32.mrb[0].mxu0
      %v1148 = vadd.f32 %v369, %v1147
      %1149 = vmatprep.mubr.bf16.mxu0 %v239
      %1150 = vmatmul.mubr.bf16.gmra.mrb[0].mxu0 %v238
      %v1151 = vpop.f32.mrb[0].mxu0
      %v1152 = vadd.f32 %v365, %v1151
      %v1153 = vpop.f32.mrb[0].mxu0
      %v1154 = vadd.f32 %v369, %v1153
      %v1155 = vpop.f32.mrb[0].mxu0
      %v1156 = vadd.f32 %v365, %v1155
      %v1157 = vpop.f32.mrb[0].mxu0
      %v1158 = vadd.f32 %v369, %v1157
      %1159 = vmatprep.mubr.bf16.mxu0 %v241
      %1160 = vmatmul.mubr.bf16.gmra.mrb[0].mxu0 %v240
      %v1161 = vpop.f32.mrb[0].mxu0
      %v1162 = vadd.f32 %v365, %v1161
      %v1163 = vpop.f32.mrb[0].mxu0
      %v1164 = vadd.f32 %v369, %v1163
      %v1165 = vpop.f32.mrb[0].mxu0
      %v1166 = vadd.f32 %v365, %v1165
      %v1167 = vpop.f32.mrb[0].mxu0
      %v1168 = vadd.f32 %v369, %v1167
      %1169 = vmatprep.mubr.bf16.mxu0 %v243
      %1170 = vmatmul.mubr.bf16.gmra.mrb[0].mxu0 %v242
      %v1171 = vpop.f32.mrb[0].mxu0
      %v1172 = vadd.f32 %v365, %v1171
      %v1173 = vpop.f32.mrb[0].mxu0
      %v1174 = vadd.f32 %v369, %v1173
      %v1175 = vpop.f32.mrb[0].mxu0
      %v1176 = vadd.f32 %v365, %v1175
      %v1177 = vpop.f32.mrb[0].mxu0
      %v1178 = vadd.f32 %v369, %v1177
      %1179 = vmatprep.mubr.bf16.mxu0 %v245
      %1180 = vmatmul.mubr.bf16.gmra.mrb[0].mxu0 %v244
      %v1181 = vpop.f32.mrb[0].mxu0
      %v1182 = vadd.f32 %v365, %v1181
      %v1183 = vpop.f32.mrb[0].mxu0
      %v1184 = vadd.f32 %v369, %v1183
      %v1185 = vpop.f32.mrb[0].mxu0
      %v1186 = vadd.f32 %v365, %v1185
      %v1187 = vpop.f32.mrb[0].mxu0
      %v1188 = vadd.f32 %v369, %v1187
      %1189 = vmatprep.mubr.bf16.mxu0 %v247
      %1190 = vmatmul.mubr.bf16.gmra.mrb[0].mxu0 %v246
      %v1191 = vpop.f32.mrb[0].mxu0
      %v1192 = vadd.f32 %v365, %v1191
      %v1193 = vpop.f32.mrb[0].mxu0
      %v1194 = vadd.f32 %v369, %v1193
      %v1195 = vpop.f32.mrb[0].mxu0
      %v1196 = vadd.f32 %v365, %v1195
      %v1197 = vpop.f32.mrb[0].mxu0
      %v1198 = vadd.f32 %v369, %v1197
      %1199 = vmatprep.mubr.bf16.mxu0 %v249
      %1200 = vmatmul.mubr.bf16.gmra.mrb[0].mxu0 %v248
      %v1201 = vpop.f32.mrb[0].mxu0
      %v1202 = vadd.f32 %v365, %v1201
      %v1203 = vpop.f32.mrb[0].mxu0
      %v1204 = vadd.f32 %v369, %v1203
      %v1205 = vpop.f32.mrb[0].mxu0
      %v1206 = vadd.f32 %v365, %v1205
      %v1207 = vpop.f32.mrb[0].mxu0
      %v1208 = vadd.f32 %v369, %v1207
      %1209 = vmatprep.mubr.bf16.mxu0 %v251
      %1210 = vmatmul.mubr.bf16.gmra.mrb[0].mxu0 %v250
      %v1211 = vpop.f32.mrb[0].mxu0
      %v1212 = vadd.f32 %v365, %v1211
      %v1213 = vpop.f32.mrb[0].mxu0
      %v1214 = vadd.f32 %v369, %v1213
      %v1215 = vpop.f32.mrb[0].mxu0
      %v1216 = vadd.f32 %v365, %v1215
      %v1217 = vpop.f32.mrb[0].mxu0
      %v1218 = vadd.f32 %v369, %v1217
      %1219 = vmatprep.mubr.bf16.mxu0 %v253
      %1220 = vmatmul.mubr.bf16.gmra.mrb[0].mxu0 %v252
      %v1221 = vpop.f32.mrb[0].mxu0
      %v1222 = vadd.f32 %v365, %v1221
      %v1223 = vpop.f32.mrb[0].mxu0
      %v1224 = vadd.f32 %v369, %v1223
      %v1225 = vpop.f32.mrb[0].mxu0
      %v1226 = vadd.f32 %v365, %v1225
      %v1227 = vpop.f32.mrb[0].mxu0
      %v1228 = vadd.f32 %v369, %v1227
      %1229 = vmatprep.mubr.bf16.mxu0 %v255
      %1230 = vmatmul.mubr.bf16.gmra.mrb[0].mxu0 %v254
      %v1231 = vpop.f32.mrb[0].mxu0
      %v1232 = vadd.f32 %v365, %v1231
      %v1233 = vpop.f32.mrb[0].mxu0
      %v1234 = vadd.f32 %v369, %v1233
      %v1235 = vpop.f32.mrb[0].mxu0
      %v1236 = vadd.f32 %v365, %v1235
      %v1237 = vpop.f32.mrb[0].mxu0
      %v1238 = vadd.f32 %v369, %v1237
      %1239 = vmatprep.mubr.bf16.mxu0 %v257
      %1240 = vmatmul.mubr.bf16.gmra.mrb[0].mxu0 %v256
      %v1241 = vpop.f32.mrb[0].mxu0
      %v1242 = vadd.f32 %v365, %v1241
      %v1243 = vpop.f32.mrb[0].mxu0
      %v1244 = vadd.f32 %v369, %v1243
      %v1245 = vpop.f32.mrb[0].mxu0
      %v1246 = vadd.f32 %v365, %v1245
      %v1247 = vpop.f32.mrb[0].mxu0
      %v1248 = vadd.f32 %v369, %v1247
      %1249 = vmatprep.mubr.bf16.mxu0 %v259
      %1250 = vmatmul.mubr.bf16.gmra.mrb[0].mxu0 %v258
      %v1251 = vpop.f32.mrb[0].mxu0
      %v1252 = vadd.f32 %v365, %v1251
      %v1253 = vpop.f32.mrb[0].mxu0
      %v1254 = vadd.f32 %v369, %v1253
      %v1255 = vpop.f32.mrb[0].mxu0
      %v1256 = vadd.f32 %v365, %v1255
      %v1257 = vpop.f32.mrb[0].mxu0
      %v1258 = vadd.f32 %v369, %v1257
      %1259 = vmatprep.mubr.bf16.mxu0 %v261
      %1260 = vmatmul.mubr.bf16.gmra.mrb[0].mxu0 %v260
      %v1261 = vpop.f32.mrb[0].mxu0
      %v1262 = vadd.f32 %v365, %v1261
      %v1263 = vpop.f32.mrb[0].mxu0
      %v1264 = vadd.f32 %v369, %v1263
      %v1265 = vpop.f32.mrb[0].mxu0
      %v1266 = vadd.f32 %v365, %v1265
      %v1267 = vpop.f32.mrb[0].mxu0
      %v1268 = vadd.f32 %v369, %v1267
      %1269 = vmatprep.mubr.bf16.mxu0 %v263
      %1270 = vmatmul.mubr.bf16.gmra.mrb[0].mxu0 %v262
      %v1271 = vpop.f32.mrb[0].mxu0
      %v1272 = vadd.f32 %v365, %v1271
      %v1273 = vpop.f32.mrb[0].mxu0
      %v1274 = vadd.f32 %v369, %v1273
      %v1275 = vpop.f32.mrb[0].mxu0
      %v1276 = vadd.f32 %v365, %v1275
      %v1277 = vpop.f32.mrb[0].mxu0
      %v1278 = vadd.f32 %v369, %v1277
      %1279 = vmatprep.mubr.bf16.mxu0 %v265
      %1280 = vmatmul.mubr.bf16.gmra.mrb[0].mxu0 %v264
      %v1281 = vpop.f32.mrb[0].mxu0
      %v1282 = vadd.f32 %v365, %v1281
      %v1283 = vpop.f32.mrb[0].mxu0
      %v1284 = vadd.f32 %v369, %v1283
      %v1285 = vpop.f32.mrb[0].mxu0
      %v1286 = vadd.f32 %v365, %v1285
      %v1287 = vpop.f32.mrb[0].mxu0
      %v1288 = vadd.f32 %v369, %v1287
      %1289 = vmatprep.mubr.bf16.mxu0 %v267
      %1290 = vmatmul.mubr.bf16.gmra.mrb[0].mxu0 %v266
      %v1291 = vpop.f32.mrb[0].mxu0
      %v1292 = vadd.f32 %v365, %v1291
      %v1293 = vpop.f32.mrb[0].mxu0
      %v1294 = vadd.f32 %v369, %v1293
      %v1295 = vpop.f32.mrb[0].mxu0
      %v1296 = vadd.f32 %v365, %v1295
      %v1297 = vpop.f32.mrb[0].mxu0
      %v1298 = vadd.f32 %v369, %v1297
      %1299 = vmatprep.mubr.bf16.mxu0 %v269
      %1300 = vmatmul.mubr.bf16.gmra.mrb[0].mxu0 %v268
      %v1301 = vpop.f32.mrb[0].mxu0
      %v1302 = vadd.f32 %v365, %v1301
      %v1303 = vpop.f32.mrb[0].mxu0
      %v1304 = vadd.f32 %v369, %v1303
      %v1305 = vpop.f32.mrb[0].mxu0
      %v1306 = vadd.f32 %v365, %v1305
      %v1307 = vpop.f32.mrb[0].mxu0
      %v1308 = vadd.f32 %v369, %v1307
      %1309 = vmatprep.mubr.bf16.mxu0 %v271
      %1310 = vmatmul.mubr.bf16.gmra.mrb[0].mxu0 %v270
      %v1311 = vpop.f32.mrb[0].mxu0
      %v1312 = vadd.f32 %v365, %v1311
      %v1313 = vpop.f32.mrb[0].mxu0
      %v1314 = vadd.f32 %v369, %v1313
      %v1315 = vpop.f32.mrb[0].mxu0
      %v1316 = vadd.f32 %v365, %v1315
      %v1317 = vpop.f32.mrb[0].mxu0
      %v1318 = vadd.f32 %v369, %v1317
      %1319 = vmatprep.mubr.bf16.mxu0 %v273
      %1320 = vmatmul.mubr.bf16.gmra.mrb[0].mxu0 %v272
      %v1321 = vpop.f32.mrb[0].mxu0
      %v1322 = vadd.f32 %v365, %v1321
      %v1323 = vpop.f32.mrb[0].mxu0
      %v1324 = vadd.f32 %v369, %v1323
      %v1325 = vpop.f32.mrb[0].mxu0
      %v1326 = vadd.f32 %v365, %v1325
      %v1327 = vpop.f32.mrb[0].mxu0
      %v1328 = vadd.f32 %v369, %v1327
      %1329 = vmatprep.mubr.bf16.mxu0 %v275
      %1330 = vmatmul.mubr.bf16.gmra.mrb[0].mxu0 %v274
      %v1331 = vpop.f32.mrb[0].mxu0
      %v1332 = vadd.f32 %v365, %v1331
      %v1333 = vpop.f32.mrb[0].mxu0
      %v1334 = vadd.f32 %v369, %v1333
      %v1335 = vpop.f32.mrb[0].mxu0
      %v1336 = vadd.f32 %v365, %v1335
      %v1337 = vpop.f32.mrb[0].mxu0
      %v1338 = vadd.f32 %v369, %v1337
      %1339 = vmatprep.mubr.bf16.mxu0 %v277
      %1340 = vmatmul.mubr.bf16.gmra.mrb[0].mxu0 %v276
      %v1341 = vpop.f32.mrb[0].mxu0
      %v1342 = vadd.f32 %v365, %v1341
      %v1343 = vpop.f32.mrb[0].mxu0
      %v1344 = vadd.f32 %v369, %v1343
      %v1345 = vpop.f32.mrb[0].mxu0
      %v1346 = vadd.f32 %v365, %v1345
      %v1347 = vpop.f32.mrb[0].mxu0
      %v1348 = vadd.f32 %v369, %v1347
      %1349 = vmatprep.mubr.bf16.mxu0 %v279
      %1350 = vmatmul.mubr.bf16.gmra.mrb[0].mxu0 %v278
      %v1351 = vpop.f32.mrb[0].mxu0
      %v1352 = vadd.f32 %v365, %v1351
      %v1353 = vpop.f32.mrb[0].mxu0
      %v1354 = vadd.f32 %v369, %v1353
      %v1355 = vpop.f32.mrb[0].mxu0
      %v1356 = vadd.f32 %v365, %v1355
      %v1357 = vpop.f32.mrb[0].mxu0
      %v1358 = vadd.f32 %v369, %v1357
      %1359 = vmatprep.mubr.bf16.mxu0 %v281
      %1360 = vmatmul.mubr.bf16.gmra.mrb[0].mxu0 %v280
      %v1361 = vpop.f32.mrb[0].mxu0
      %v1362 = vadd.f32 %v365, %v1361
      %v1363 = vpop.f32.mrb[0].mxu0
      %v1364 = vadd.f32 %v369, %v1363
      %v1365 = vpop.f32.mrb[0].mxu0
      %v1366 = vadd.f32 %v365, %v1365
      %v1367 = vpop.f32.mrb[0].mxu0
      %v1368 = vadd.f32 %v369, %v1367
      %1369 = vmatprep.mubr.bf16.mxu0 %v283
      %1370 = vmatmul.mubr.bf16.gmra.mrb[0].mxu0 %v282
      %v1371 = vpop.f32.mrb[0].mxu0
      %v1372 = vadd.f32 %v365, %v1371
      %v1373 = vpop.f32.mrb[0].mxu0
      %v1374 = vadd.f32 %v369, %v1373
      %v1375 = vpop.f32.mrb[0].mxu0
      %v1376 = vadd.f32 %v365, %v1375
      %v1377 = vpop.f32.mrb[0].mxu0
      %v1378 = vadd.f32 %v369, %v1377
      %1379 = vmatprep.mubr.bf16.mxu0 %v285
      %1380 = vmatmul.mubr.bf16.gmra.mrb[0].mxu0 %v284
      %v1381 = vpop.f32.mrb[0].mxu0
      %v1382 = vadd.f32 %v365, %v1381
      %v1383 = vpop.f32.mrb[0].mxu0
      %v1384 = vadd.f32 %v369, %v1383
      %v1385 = vpop.f32.mrb[0].mxu0
      %v1386 = vadd.f32 %v365, %v1385
      %v1387 = vpop.f32.mrb[0].mxu0
      %v1388 = vadd.f32 %v369, %v1387
      %1389 = vmatprep.mubr.bf16.mxu0 %v287
      %1390 = vmatmul.mubr.bf16.gmra.mrb[0].mxu0 %v286
      %v1391 = vpop.f32.mrb[0].mxu0
      %v1392 = vadd.f32 %v365, %v1391
      %v1393 = vpop.f32.mrb[0].mxu0
      %v1394 = vadd.f32 %v369, %v1393
      %v1395 = vpop.f32.mrb[0].mxu0
      %v1396 = vadd.f32 %v365, %v1395
      %v1397 = vpop.f32.mrb[0].mxu0
      %v1398 = vadd.f32 %v369, %v1397
      %1399 = vdwg.mxu0
      %v1400 = vmul.f32 %v729, 0.5
      %v1401 = vmul.f32 %v731, 0.5
      %v1402 = vmul.f32 %v1082, 0.5
      %v1403 = vmul.f32 %v1084, 0.5
      %v1404 = vmul.f32 %v733, 0.5
      %v1405 = vmul.f32 %v735, 0.5
      %v1406 = vmul.f32 %v1086, 0.5
      %v1407 = vmul.f32 %v1088, 0.5
      %v1408 = vmul.f32 %v739, 0.5
      %v1409 = vmul.f32 %v741, 0.5
      %v1410 = vmul.f32 %v1092, 0.5
      %v1411 = vmul.f32 %v1094, 0.5
      %v1412 = vmul.f32 %v743, 0.5
      %v1413 = vmul.f32 %v745, 0.5
      %v1414 = vmul.f32 %v1096, 0.5
      %v1415 = vmul.f32 %v1098, 0.5
      %v1416 = vmul.f32 %v749, 0.5
      %v1417 = vmul.f32 %v751, 0.5
      %v1418 = vmul.f32 %v1102, 0.5
      %v1419 = vmul.f32 %v1104, 0.5
      %v1420 = vmul.f32 %v753, 0.5
      %v1421 = vmul.f32 %v755, 0.5
      %v1422 = vmul.f32 %v1106, 0.5
      %v1423 = vmul.f32 %v1108, 0.5
      %v1424 = vmul.f32 %v759, 0.5
      %v1425 = vmul.f32 %v761, 0.5
      %v1426 = vmul.f32 %v1112, 0.5
      %v1427 = vmul.f32 %v1114, 0.5
      %v1428 = vmul.f32 %v763, 0.5
      %v1429 = vmul.f32 %v765, 0.5
      %v1430 = vmul.f32 %v1116, 0.5
      %v1431 = vmul.f32 %v1118, 0.5
      %v1432 = vmul.f32 %v769, 0.5
      %v1433 = vmul.f32 %v771, 0.5
      %v1434 = vmul.f32 %v1122, 0.5
      %v1435 = vmul.f32 %v1124, 0.5
      %v1436 = vmul.f32 %v773, 0.5
      %v1437 = vmul.f32 %v775, 0.5
      %v1438 = vmul.f32 %v1126, 0.5
      %v1439 = vmul.f32 %v1128, 0.5
      %v1440 = vmul.f32 %v779, 0.5
      %v1441 = vmul.f32 %v781, 0.5
      %v1442 = vmul.f32 %v1132, 0.5
      %v1443 = vmul.f32 %v1134, 0.5
      %v1444 = vmul.f32 %v783, 0.5
      %v1445 = vmul.f32 %v785, 0.5
      %v1446 = vmul.f32 %v1136, 0.5
      %v1447 = vmul.f32 %v1138, 0.5
      %v1448 = vmul.f32 %v789, 0.5
      %v1449 = vmul.f32 %v791, 0.5
      %v1450 = vmul.f32 %v1142, 0.5
      %v1451 = vmul.f32 %v1144, 0.5
      %v1452 = vmul.f32 %v793, 0.5
      %v1453 = vmul.f32 %v795, 0.5
      %v1454 = vmul.f32 %v1146, 0.5
      %v1455 = vmul.f32 %v1148, 0.5
      %v1456 = vmul.f32 %v799, 0.5
      %v1457 = vmul.f32 %v801, 0.5
      %v1458 = vmul.f32 %v1152, 0.5
      %v1459 = vmul.f32 %v1154, 0.5
      %v1460 = vmul.f32 %v803, 0.5
      %v1461 = vmul.f32 %v805, 0.5
      %v1462 = vmul.f32 %v1156, 0.5
      %v1463 = vmul.f32 %v1158, 0.5
      %v1464 = vmul.f32 %v809, 0.5
      %v1465 = vmul.f32 %v811, 0.5
      %v1466 = vmul.f32 %v1162, 0.5
      %v1467 = vmul.f32 %v1164, 0.5
      %v1468 = vmul.f32 %v813, 0.5
      %v1469 = vmul.f32 %v815, 0.5
      %v1470 = vmul.f32 %v1166, 0.5
      %v1471 = vmul.f32 %v1168, 0.5
      %v1472 = vmul.f32 %v819, 0.5
      %v1473 = vmul.f32 %v821, 0.5
      %v1474 = vmul.f32 %v1172, 0.5
      %v1475 = vmul.f32 %v1174, 0.5
      %v1476 = vmul.f32 %v823, 0.5
      %v1477 = vmul.f32 %v825, 0.5
      %v1478 = vmul.f32 %v1176, 0.5
      %v1479 = vmul.f32 %v1178, 0.5
      %v1480 = vmul.f32 %v829, 0.5
      %v1481 = vmul.f32 %v831, 0.5
      %v1482 = vmul.f32 %v1182, 0.5
      %v1483 = vmul.f32 %v1184, 0.5
      %v1484 = vmul.f32 %v833, 0.5
      %v1485 = vmul.f32 %v835, 0.5
      %v1486 = vmul.f32 %v1186, 0.5
      %v1487 = vmul.f32 %v1188, 0.5
      %v1488 = vmul.f32 %v839, 0.5
      %v1489 = vmul.f32 %v841, 0.5
      %v1490 = vmul.f32 %v1192, 0.5
      %v1491 = vmul.f32 %v1194, 0.5
      %v1492 = vmul.f32 %v843, 0.5
      %v1493 = vmul.f32 %v845, 0.5
      %v1494 = vmul.f32 %v1196, 0.5
      %v1495 = vmul.f32 %v1198, 0.5
      %v1496 = vmul.f32 %v849, 0.5
      %v1497 = vmul.f32 %v851, 0.5
      %v1498 = vmul.f32 %v1202, 0.5
      %v1499 = vmul.f32 %v1204, 0.5
      %v1500 = vmul.f32 %v853, 0.5
      %v1501 = vmul.f32 %v855, 0.5
      %v1502 = vmul.f32 %v1206, 0.5
      %v1503 = vmul.f32 %v1208, 0.5
      %v1504 = vmul.f32 %v859, 0.5
      %v1505 = vmul.f32 %v861, 0.5
      %v1506 = vmul.f32 %v1212, 0.5
      %v1507 = vmul.f32 %v1214, 0.5
      %v1508 = vmul.f32 %v863, 0.5
      %v1509 = vmul.f32 %v865, 0.5
      %v1510 = vmul.f32 %v1216, 0.5
      %v1511 = vmul.f32 %v1218, 0.5
      %v1512 = vmul.f32 %v869, 0.5
      %v1513 = vmul.f32 %v871, 0.5
      %v1514 = vmul.f32 %v1222, 0.5
      %v1515 = vmul.f32 %v1224, 0.5
      %v1516 = vmul.f32 %v873, 0.5
      %v1517 = vmul.f32 %v875, 0.5
      %v1518 = vmul.f32 %v1226, 0.5
      %v1519 = vmul.f32 %v1228, 0.5
      %v1520 = vmul.f32 %v879, 0.5
      %v1521 = vmul.f32 %v881, 0.5
      %v1522 = vmul.f32 %v1232, 0.5
      %v1523 = vmul.f32 %v1234, 0.5
      %v1524 = vmul.f32 %v883, 0.5
      %v1525 = vmul.f32 %v885, 0.5
      %v1526 = vmul.f32 %v1236, 0.5
      %v1527 = vmul.f32 %v1238, 0.5
      %v1528 = vmul.f32 %v889, 0.5
      %v1529 = vmul.f32 %v891, 0.5
      %v1530 = vmul.f32 %v1242, 0.5
      %v1531 = vmul.f32 %v1244, 0.5
      %v1532 = vmul.f32 %v893, 0.5
      %v1533 = vmul.f32 %v895, 0.5
      %v1534 = vmul.f32 %v1246, 0.5
      %v1535 = vmul.f32 %v1248, 0.5
      %v1536 = vmul.f32 %v899, 0.5
      %v1537 = vmul.f32 %v901, 0.5
      %v1538 = vmul.f32 %v1252, 0.5
      %v1539 = vmul.f32 %v1254, 0.5
      %v1540 = vmul.f32 %v903, 0.5
      %v1541 = vmul.f32 %v905, 0.5
      %v1542 = vmul.f32 %v1256, 0.5
      %v1543 = vmul.f32 %v1258, 0.5
      %v1544 = vmul.f32 %v909, 0.5
      %v1545 = vmul.f32 %v911, 0.5
      %v1546 = vmul.f32 %v1262, 0.5
      %v1547 = vmul.f32 %v1264, 0.5
      %v1548 = vmul.f32 %v913, 0.5
      %v1549 = vmul.f32 %v915, 0.5
      %v1550 = vmul.f32 %v1266, 0.5
      %v1551 = vmul.f32 %v1268, 0.5
      %v1552 = vmul.f32 %v919, 0.5
      %v1553 = vmul.f32 %v921, 0.5
      %v1554 = vmul.f32 %v1272, 0.5
      %v1555 = vmul.f32 %v1274, 0.5
      %v1556 = vmul.f32 %v923, 0.5
      %v1557 = vmul.f32 %v925, 0.5
      %v1558 = vmul.f32 %v1276, 0.5
      %v1559 = vmul.f32 %v1278, 0.5
      %v1560 = vmul.f32 %v929, 0.5
      %v1561 = vmul.f32 %v931, 0.5
      %v1562 = vmul.f32 %v1282, 0.5
      %v1563 = vmul.f32 %v1284, 0.5
      %v1564 = vmul.f32 %v933, 0.5
      %v1565 = vmul.f32 %v935, 0.5
      %v1566 = vmul.f32 %v1286, 0.5
      %v1567 = vmul.f32 %v1288, 0.5
      %v1568 = vmul.f32 %v939, 0.5
      %v1569 = vmul.f32 %v941, 0.5
      %v1570 = vmul.f32 %v1292, 0.5
      %v1571 = vmul.f32 %v1294, 0.5
      %v1572 = vmul.f32 %v943, 0.5
      %v1573 = vmul.f32 %v945, 0.5
      %v1574 = vmul.f32 %v1296, 0.5
      %v1575 = vmul.f32 %v1298, 0.5
      %v1576 = vmul.f32 %v949, 0.5
      %v1577 = vmul.f32 %v951, 0.5
      %v1578 = vmul.f32 %v1302, 0.5
      %v1579 = vmul.f32 %v1304, 0.5
      %v1580 = vmul.f32 %v953, 0.5
      %v1581 = vmul.f32 %v955, 0.5
      %v1582 = vmul.f32 %v1306, 0.5
      %v1583 = vmul.f32 %v1308, 0.5
      %v1584 = vmul.f32 %v959, 0.5
      %v1585 = vmul.f32 %v961, 0.5
      %v1586 = vmul.f32 %v1312, 0.5
      %v1587 = vmul.f32 %v1314, 0.5
      %v1588 = vmul.f32 %v963, 0.5
      %v1589 = vmul.f32 %v965, 0.5
      %v1590 = vmul.f32 %v1316, 0.5
      %v1591 = vmul.f32 %v1318, 0.5
      %v1592 = vmul.f32 %v969, 0.5
      %v1593 = vmul.f32 %v971, 0.5
      %v1594 = vmul.f32 %v1322, 0.5
      %v1595 = vmul.f32 %v1324, 0.5
      %v1596 = vmul.f32 %v973, 0.5
      %v1597 = vmul.f32 %v975, 0.5
      %v1598 = vmul.f32 %v1326, 0.5
      %v1599 = vmul.f32 %v1328, 0.5
      %v1600 = vmul.f32 %v979, 0.5
      %v1601 = vmul.f32 %v981, 0.5
      %v1602 = vmul.f32 %v1332, 0.5
      %v1603 = vmul.f32 %v1334, 0.5
      %v1604 = vmul.f32 %v983, 0.5
      %v1605 = vmul.f32 %v985, 0.5
      %v1606 = vmul.f32 %v1336, 0.5
      %v1607 = vmul.f32 %v1338, 0.5
      %v1608 = vmul.f32 %v989, 0.5
      %v1609 = vmul.f32 %v991, 0.5
      %v1610 = vmul.f32 %v1342, 0.5
      %v1611 = vmul.f32 %v1344, 0.5
      %v1612 = vmul.f32 %v993, 0.5
      %v1613 = vmul.f32 %v995, 0.5
      %v1614 = vmul.f32 %v1346, 0.5
      %v1615 = vmul.f32 %v1348, 0.5
      %v1616 = vmul.f32 %v999, 0.5
      %v1617 = vmul.f32 %v1001, 0.5
      %v1618 = vmul.f32 %v1352, 0.5
      %v1619 = vmul.f32 %v1354, 0.5
      %v1620 = vmul.f32 %v1003, 0.5
      %v1621 = vmul.f32 %v1005, 0.5
      %v1622 = vmul.f32 %v1356, 0.5
      %v1623 = vmul.f32 %v1358, 0.5
      %v1624 = vmul.f32 %v1009, 0.5
      %v1625 = vmul.f32 %v1011, 0.5
      %v1626 = vmul.f32 %v1362, 0.5
      %v1627 = vmul.f32 %v1364, 0.5
      %v1628 = vmul.f32 %v1013, 0.5
      %v1629 = vmul.f32 %v1015, 0.5
      %v1630 = vmul.f32 %v1366, 0.5
      %v1631 = vmul.f32 %v1368, 0.5
      %v1632 = vmul.f32 %v1019, 0.5
      %v1633 = vmul.f32 %v1021, 0.5
      %v1634 = vmul.f32 %v1372, 0.5
      %v1635 = vmul.f32 %v1374, 0.5
      %v1636 = vmul.f32 %v1023, 0.5
      %v1637 = vmul.f32 %v1025, 0.5
      %v1638 = vmul.f32 %v1376, 0.5
      %v1639 = vmul.f32 %v1378, 0.5
      %v1640 = vmul.f32 %v1029, 0.5
      %v1641 = vmul.f32 %v1031, 0.5
      %v1642 = vmul.f32 %v1382, 0.5
      %v1643 = vmul.f32 %v1384, 0.5
      %v1644 = vmul.f32 %v1033, 0.5
      %v1645 = vmul.f32 %v1035, 0.5
      %v1646 = vmul.f32 %v1386, 0.5
      %v1647 = vmul.f32 %v1388, 0.5
      %v1648 = vmul.f32 %v1039, 0.5
      %v1649 = vmul.f32 %v1041, 0.5
      %v1650 = vmul.f32 %v1392, 0.5
      %v1651 = vmul.f32 %v1394, 0.5
      %v1652 = vmul.f32 %v1043, 0.5
      %v1653 = vmul.f32 %v1045, 0.5
      %v1654 = vmul.f32 %v1396, 0.5
      %v1655 = vmul.f32 %v1398, 0.5
      %v1656 = vmul.f32 %v729, 0.70710677
      %v1657 = vmul.f32 %v731, 0.70710677
      %v1658 = vmul.f32 %v1082, 0.70710677
      %v1659 = vmul.f32 %v1084, 0.70710677
      %v1660 = vmul.f32 %v733, 0.70710677
      %v1661 = vmul.f32 %v735, 0.70710677
      %v1662 = vmul.f32 %v1086, 0.70710677
      %v1663 = vmul.f32 %v1088, 0.70710677
      %v1664 = vmul.f32 %v739, 0.70710677
      %v1665 = vmul.f32 %v741, 0.70710677
      %v1666 = vmul.f32 %v1092, 0.70710677
      %v1667 = vmul.f32 %v1094, 0.70710677
      %v1668 = vmul.f32 %v743, 0.70710677
      %v1669 = vmul.f32 %v745, 0.70710677
      %v1670 = vmul.f32 %v1096, 0.70710677
      %v1671 = vmul.f32 %v1098, 0.70710677
      %v1672 = vmul.f32 %v749, 0.70710677
      %v1673 = vmul.f32 %v751, 0.70710677
      %v1674 = vmul.f32 %v1102, 0.70710677
      %v1675 = vmul.f32 %v1104, 0.70710677
      %v1676 = vmul.f32 %v753, 0.70710677
      %v1677 = vmul.f32 %v755, 0.70710677
      %v1678 = vmul.f32 %v1106, 0.70710677
      %v1679 = vmul.f32 %v1108, 0.70710677
      %v1680 = vmul.f32 %v759, 0.70710677
      %v1681 = vmul.f32 %v761, 0.70710677
      %v1682 = vmul.f32 %v1112, 0.70710677
      %v1683 = vmul.f32 %v1114, 0.70710677
      %v1684 = vmul.f32 %v763, 0.70710677
      %v1685 = vmul.f32 %v765, 0.70710677
      %v1686 = vmul.f32 %v1116, 0.70710677
      %v1687 = vmul.f32 %v1118, 0.70710677
      %v1688 = vmul.f32 %v769, 0.70710677
      %v1689 = vmul.f32 %v771, 0.70710677
      %v1690 = vmul.f32 %v1122, 0.70710677
      %v1691 = vmul.f32 %v1124, 0.70710677
      %v1692 = vmul.f32 %v773, 0.70710677
      %v1693 = vmul.f32 %v775, 0.70710677
      %v1694 = vmul.f32 %v1126, 0.70710677
      %v1695 = vmul.f32 %v1128, 0.70710677
      %v1696 = vmul.f32 %v779, 0.70710677
      %v1697 = vmul.f32 %v781, 0.70710677
      %v1698 = vmul.f32 %v1132, 0.70710677
      %v1699 = vmul.f32 %v1134, 0.70710677
      %v1700 = vmul.f32 %v783, 0.70710677
      %v1701 = vmul.f32 %v785, 0.70710677
      %v1702 = vmul.f32 %v1136, 0.70710677
      %v1703 = vmul.f32 %v1138, 0.70710677
      %v1704 = vmul.f32 %v789, 0.70710677
      %v1705 = vmul.f32 %v791, 0.70710677
      %v1706 = vmul.f32 %v1142, 0.70710677
      %v1707 = vmul.f32 %v1144, 0.70710677
      %v1708 = vmul.f32 %v793, 0.70710677
      %v1709 = vmul.f32 %v795, 0.70710677
      %v1710 = vmul.f32 %v1146, 0.70710677
      %v1711 = vmul.f32 %v1148, 0.70710677
      %v1712 = vmul.f32 %v799, 0.70710677
      %v1713 = vmul.f32 %v801, 0.70710677
      %v1714 = vmul.f32 %v1152, 0.70710677
      %v1715 = vmul.f32 %v1154, 0.70710677
      %v1716 = vmul.f32 %v803, 0.70710677
      %v1717 = vmul.f32 %v805, 0.70710677
      %v1718 = vmul.f32 %v1156, 0.70710677
      %v1719 = vmul.f32 %v1158, 0.70710677
      %v1720 = vmul.f32 %v809, 0.70710677
      %v1721 = vmul.f32 %v811, 0.70710677
      %v1722 = vmul.f32 %v1162, 0.70710677
      %v1723 = vmul.f32 %v1164, 0.70710677
      %v1724 = vmul.f32 %v813, 0.70710677
      %v1725 = vmul.f32 %v815, 0.70710677
      %v1726 = vmul.f32 %v1166, 0.70710677
      %v1727 = vmul.f32 %v1168, 0.70710677
      %v1728 = vmul.f32 %v819, 0.70710677
      %v1729 = vmul.f32 %v821, 0.70710677
      %v1730 = vmul.f32 %v1172, 0.70710677
      %v1731 = vmul.f32 %v1174, 0.70710677
      %v1732 = vmul.f32 %v823, 0.70710677
      %v1733 = vmul.f32 %v825, 0.70710677
      %v1734 = vmul.f32 %v1176, 0.70710677
      %v1735 = vmul.f32 %v1178, 0.70710677
      %v1736 = vmul.f32 %v829, 0.70710677
      %v1737 = vmul.f32 %v831, 0.70710677
      %v1738 = vmul.f32 %v1182, 0.70710677
      %v1739 = vmul.f32 %v1184, 0.70710677
      %v1740 = vmul.f32 %v833, 0.70710677
      %v1741 = vmul.f32 %v835, 0.70710677
      %v1742 = vmul.f32 %v1186, 0.70710677
      %v1743 = vmul.f32 %v1188, 0.70710677
      %v1744 = vmul.f32 %v839, 0.70710677
      %v1745 = vmul.f32 %v841, 0.70710677
      %v1746 = vmul.f32 %v1192, 0.70710677
      %v1747 = vmul.f32 %v1194, 0.70710677
      %v1748 = vmul.f32 %v843, 0.70710677
      %v1749 = vmul.f32 %v845, 0.70710677
      %v1750 = vmul.f32 %v1196, 0.70710677
      %v1751 = vmul.f32 %v1198, 0.70710677
      %v1752 = vmul.f32 %v849, 0.70710677
      %v1753 = vmul.f32 %v851, 0.70710677
      %v1754 = vmul.f32 %v1202, 0.70710677
      %v1755 = vmul.f32 %v1204, 0.70710677
      %v1756 = vmul.f32 %v853, 0.70710677
      %v1757 = vmul.f32 %v855, 0.70710677
      %v1758 = vmul.f32 %v1206, 0.70710677
      %v1759 = vmul.f32 %v1208, 0.70710677
      %v1760 = vmul.f32 %v859, 0.70710677
      %v1761 = vmul.f32 %v861, 0.70710677
      %v1762 = vmul.f32 %v1212, 0.70710677
      %v1763 = vmul.f32 %v1214, 0.70710677
      %v1764 = vmul.f32 %v863, 0.70710677
      %v1765 = vmul.f32 %v865, 0.70710677
      %v1766 = vmul.f32 %v1216, 0.70710677
      %v1767 = vmul.f32 %v1218, 0.70710677
      %v1768 = vmul.f32 %v869, 0.70710677
      %v1769 = vmul.f32 %v871, 0.70710677
      %v1770 = vmul.f32 %v1222, 0.70710677
      %v1771 = vmul.f32 %v1224, 0.70710677
      %v1772 = vmul.f32 %v873, 0.70710677
      %v1773 = vmul.f32 %v875, 0.70710677
      %v1774 = vmul.f32 %v1226, 0.70710677
      %v1775 = vmul.f32 %v1228, 0.70710677
      %v1776 = vmul.f32 %v879, 0.70710677
      %v1777 = vmul.f32 %v881, 0.70710677
      %v1778 = vmul.f32 %v1232, 0.70710677
      %v1779 = vmul.f32 %v1234, 0.70710677
      %v1780 = vmul.f32 %v883, 0.70710677
      %v1781 = vmul.f32 %v885, 0.70710677
      %v1782 = vmul.f32 %v1236, 0.70710677
      %v1783 = vmul.f32 %v1238, 0.70710677
      %v1784 = vmul.f32 %v889, 0.70710677
      %v1785 = vmul.f32 %v891, 0.70710677
      %v1786 = vmul.f32 %v1242, 0.70710677
      %v1787 = vmul.f32 %v1244, 0.70710677
      %v1788 = vmul.f32 %v893, 0.70710677
      %v1789 = vmul.f32 %v895, 0.70710677
      %v1790 = vmul.f32 %v1246, 0.70710677
      %v1791 = vmul.f32 %v1248, 0.70710677
      %v1792 = vmul.f32 %v899, 0.70710677
      %v1793 = vmul.f32 %v901, 0.70710677
      %v1794 = vmul.f32 %v1252, 0.70710677
      %v1795 = vmul.f32 %v1254, 0.70710677
      %v1796 = vmul.f32 %v903, 0.70710677
      %v1797 = vmul.f32 %v905, 0.70710677
      %v1798 = vmul.f32 %v1256, 0.70710677
      %v1799 = vmul.f32 %v1258, 0.70710677
      %v1800 = vmul.f32 %v909, 0.70710677
      %v1801 = vmul.f32 %v911, 0.70710677
      %v1802 = vmul.f32 %v1262, 0.70710677
      %v1803 = vmul.f32 %v1264, 0.70710677
      %v1804 = vmul.f32 %v913, 0.70710677
      %v1805 = vmul.f32 %v915, 0.70710677
      %v1806 = vmul.f32 %v1266, 0.70710677
      %v1807 = vmul.f32 %v1268, 0.70710677
      %v1808 = vmul.f32 %v919, 0.70710677
      %v1809 = vmul.f32 %v921, 0.70710677
      %v1810 = vmul.f32 %v1272, 0.70710677
      %v1811 = vmul.f32 %v1274, 0.70710677
      %v1812 = vmul.f32 %v923, 0.70710677
      %v1813 = vmul.f32 %v925, 0.70710677
      %v1814 = vmul.f32 %v1276, 0.70710677
      %v1815 = vmul.f32 %v1278, 0.70710677
      %v1816 = vmul.f32 %v929, 0.70710677
      %v1817 = vmul.f32 %v931, 0.70710677
      %v1818 = vmul.f32 %v1282, 0.70710677
      %v1819 = vmul.f32 %v1284, 0.70710677
      %v1820 = vmul.f32 %v933, 0.70710677
      %v1821 = vmul.f32 %v935, 0.70710677
      %v1822 = vmul.f32 %v1286, 0.70710677
      %v1823 = vmul.f32 %v1288, 0.70710677
      %v1824 = vmul.f32 %v939, 0.70710677
      %v1825 = vmul.f32 %v941, 0.70710677
      %v1826 = vmul.f32 %v1292, 0.70710677
      %v1827 = vmul.f32 %v1294, 0.70710677
      %v1828 = vmul.f32 %v943, 0.70710677
      %v1829 = vmul.f32 %v945, 0.70710677
      %v1830 = vmul.f32 %v1296, 0.70710677
      %v1831 = vmul.f32 %v1298, 0.70710677
      %v1832 = vmul.f32 %v949, 0.70710677
      %v1833 = vmul.f32 %v951, 0.70710677
      %v1834 = vmul.f32 %v1302, 0.70710677
      %v1835 = vmul.f32 %v1304, 0.70710677
      %v1836 = vmul.f32 %v953, 0.70710677
      %v1837 = vmul.f32 %v955, 0.70710677
      %v1838 = vmul.f32 %v1306, 0.70710677
      %v1839 = vmul.f32 %v1308, 0.70710677
      %v1840 = vmul.f32 %v959, 0.70710677
      %v1841 = vmul.f32 %v961, 0.70710677
      %v1842 = vmul.f32 %v1312, 0.70710677
      %v1843 = vmul.f32 %v1314, 0.70710677
      %v1844 = vmul.f32 %v963, 0.70710677
      %v1845 = vmul.f32 %v965, 0.70710677
      %v1846 = vmul.f32 %v1316, 0.70710677
      %v1847 = vmul.f32 %v1318, 0.70710677
      %v1848 = vmul.f32 %v969, 0.70710677
      %v1849 = vmul.f32 %v971, 0.70710677
      %v1850 = vmul.f32 %v1322, 0.70710677
      %v1851 = vmul.f32 %v1324, 0.70710677
      %v1852 = vmul.f32 %v973, 0.70710677
      %v1853 = vmul.f32 %v975, 0.70710677
      %v1854 = vmul.f32 %v1326, 0.70710677
      %v1855 = vmul.f32 %v1328, 0.70710677
      %v1856 = vmul.f32 %v979, 0.70710677
      %v1857 = vmul.f32 %v981, 0.70710677
      %v1858 = vmul.f32 %v1332, 0.70710677
      %v1859 = vmul.f32 %v1334, 0.70710677
      %v1860 = vmul.f32 %v983, 0.70710677
      %v1861 = vmul.f32 %v985, 0.70710677
      %v1862 = vmul.f32 %v1336, 0.70710677
      %v1863 = vmul.f32 %v1338, 0.70710677
      %v1864 = vmul.f32 %v989, 0.70710677
      %v1865 = vmul.f32 %v991, 0.70710677
      %v1866 = vmul.f32 %v1342, 0.70710677
      %v1867 = vmul.f32 %v1344, 0.70710677
      %v1868 = vmul.f32 %v993, 0.70710677
      %v1869 = vmul.f32 %v995, 0.70710677
      %v1870 = vmul.f32 %v1346, 0.70710677
      %v1871 = vmul.f32 %v1348, 0.70710677
      %v1872 = vmul.f32 %v999, 0.70710677
      %v1873 = vmul.f32 %v1001, 0.70710677
      %v1874 = vmul.f32 %v1352, 0.70710677
      %v1875 = vmul.f32 %v1354, 0.70710677
      %v1876 = vmul.f32 %v1003, 0.70710677
      %v1877 = vmul.f32 %v1005, 0.70710677
      %v1878 = vmul.f32 %v1356, 0.70710677
      %v1879 = vmul.f32 %v1358, 0.70710677
      %v1880 = vmul.f32 %v1009, 0.70710677
      %v1881 = vmul.f32 %v1011, 0.70710677
      %v1882 = vmul.f32 %v1362, 0.70710677
      %v1883 = vmul.f32 %v1364, 0.70710677
      %v1884 = vmul.f32 %v1013, 0.70710677
      %v1885 = vmul.f32 %v1015, 0.70710677
      %v1886 = vmul.f32 %v1366, 0.70710677
      %v1887 = vmul.f32 %v1368, 0.70710677
      %v1888 = vmul.f32 %v1019, 0.70710677
      %v1889 = vmul.f32 %v1021, 0.70710677
      %v1890 = vmul.f32 %v1372, 0.70710677
      %v1891 = vmul.f32 %v1374, 0.70710677
      %v1892 = vmul.f32 %v1023, 0.70710677
      %v1893 = vmul.f32 %v1025, 0.70710677
      %v1894 = vmul.f32 %v1376, 0.70710677
      %v1895 = vmul.f32 %v1378, 0.70710677
      %v1896 = vmul.f32 %v1029, 0.70710677
      %v1897 = vmul.f32 %v1031, 0.70710677
      %v1898 = vmul.f32 %v1382, 0.70710677
      %v1899 = vmul.f32 %v1384, 0.70710677
      %v1900 = vmul.f32 %v1033, 0.70710677
      %v1901 = vmul.f32 %v1035, 0.70710677
      %v1902 = vmul.f32 %v1386, 0.70710677
      %v1903 = vmul.f32 %v1388, 0.70710677
      %v1904 = vmul.f32 %v1039, 0.70710677
      %v1905 = vmul.f32 %v1041, 0.70710677
      %v1906 = vmul.f32 %v1392, 0.70710677
      %v1907 = vmul.f32 %v1394, 0.70710677
      %v1908 = vmul.f32 %v1043, 0.70710677
      %v1909 = vmul.f32 %v1045, 0.70710677
      %v1910 = vmul.f32 %v1396, 0.70710677
      %v1911 = vmul.f32 %v1398, 0.70710677
      %v1912 = verf.f32.pop %v1656
      %v1913 = verf.f32.pop %v1657
      %v1914 = verf.f32.pop %v1658
      %v1915 = verf.f32.pop %v1659
      %v1916 = verf.f32.pop %v1660
      %v1917 = verf.f32.pop %v1661
      %v1918 = verf.f32.pop %v1662
      %v1919 = verf.f32.pop %v1663
      %v1920 = verf.f32.pop %v1664
      %v1921 = verf.f32.pop %v1665
      %v1922 = verf.f32.pop %v1666
      %v1923 = verf.f32.pop %v1667
      %v1924 = verf.f32.pop %v1668
      %v1925 = verf.f32.pop %v1669
      %v1926 = verf.f32.pop %v1670
      %v1927 = verf.f32.pop %v1671
      %v1928 = verf.f32.pop %v1672
      %v1929 = verf.f32.pop %v1673
      %v1930 = verf.f32.pop %v1674
      %v1931 = verf.f32.pop %v1675
      %v1932 = verf.f32.pop %v1676
      %v1933 = verf.f32.pop %v1677
      %v1934 = verf.f32.pop %v1678
      %v1935 = verf.f32.pop %v1679
      %v1936 = verf.f32.pop %v1680
      %v1937 = verf.f32.pop %v1681
      %v1938 = verf.f32.pop %v1682
      %v1939 = verf.f32.pop %v1683
      %v1940 = verf.f32.pop %v1684
      %v1941 = verf.f32.pop %v1685
      %v1942 = verf.f32.pop %v1686
      %v1943 = verf.f32.pop %v1687
      %v1944 = verf.f32.pop %v1688
      %v1945 = verf.f32.pop %v1689
      %v1946 = verf.f32.pop %v1690
      %v1947 = verf.f32.pop %v1691
      %v1948 = verf.f32.pop %v1692
      %v1949 = verf.f32.pop %v1693
      %v1950 = verf.f32.pop %v1694
      %v1951 = verf.f32.pop %v1695
      %v1952 = verf.f32.pop %v1696
      %v1953 = verf.f32.pop %v1697
      %v1954 = verf.f32.pop %v1698
      %v1955 = verf.f32.pop %v1699
      %v1956 = verf.f32.pop %v1700
      %v1957 = verf.f32.pop %v1701
      %v1958 = verf.f32.pop %v1702
      %v1959 = verf.f32.pop %v1703
      %v1960 = verf.f32.pop %v1704
      %v1961 = verf.f32.pop %v1705
      %v1962 = verf.f32.pop %v1706
      %v1963 = verf.f32.pop %v1707
      %v1964 = verf.f32.pop %v1708
      %v1965 = verf.f32.pop %v1709
      %v1966 = verf.f32.pop %v1710
      %v1967 = verf.f32.pop %v1711
      %v1968 = verf.f32.pop %v1712
      %v1969 = verf.f32.pop %v1713
      %v1970 = verf.f32.pop %v1714
      %v1971 = verf.f32.pop %v1715
      %v1972 = verf.f32.pop %v1716
      %v1973 = verf.f32.pop %v1717
      %v1974 = verf.f32.pop %v1718
      %v1975 = verf.f32.pop %v1719
      %v1976 = verf.f32.pop %v1720
      %v1977 = verf.f32.pop %v1721
      %v1978 = verf.f32.pop %v1722
      %v1979 = verf.f32.pop %v1723
      %v1980 = verf.f32.pop %v1724
      %v1981 = verf.f32.pop %v1725
      %v1982 = verf.f32.pop %v1726
      %v1983 = verf.f32.pop %v1727
      %v1984 = verf.f32.pop %v1728
      %v1985 = verf.f32.pop %v1729
      %v1986 = verf.f32.pop %v1730
      %v1987 = verf.f32.pop %v1731
      %v1988 = verf.f32.pop %v1732
      %v1989 = verf.f32.pop %v1733
      %v1990 = verf.f32.pop %v1734
      %v1991 = verf.f32.pop %v1735
      %v1992 = verf.f32.pop %v1736
      %v1993 = verf.f32.pop %v1737
      %v1994 = verf.f32.pop %v1738
      %v1995 = verf.f32.pop %v1739
      %v1996 = verf.f32.pop %v1740
      %v1997 = verf.f32.pop %v1741
      %v1998 = verf.f32.pop %v1742
      %v1999 = verf.f32.pop %v1743
      %v2000 = verf.f32.pop %v1744
      %v2001 = verf.f32.pop %v1745
      %v2002 = verf.f32.pop %v1746
      %v2003 = verf.f32.pop %v1747
      %v2004 = verf.f32.pop %v1748
      %v2005 = verf.f32.pop %v1749
      %v2006 = verf.f32.pop %v1750
      %v2007 = verf.f32.pop %v1751
      %v2008 = verf.f32.pop %v1752
      %v2009 = verf.f32.pop %v1753
      %v2010 = verf.f32.pop %v1754
      %v2011 = verf.f32.pop %v1755
      %v2012 = verf.f32.pop %v1756
      %v2013 = verf.f32.pop %v1757
      %v2014 = verf.f32.pop %v1758
      %v2015 = verf.f32.pop %v1759
      %v2016 = verf.f32.pop %v1760
      %v2017 = verf.f32.pop %v1761
      %v2018 = verf.f32.pop %v1762
      %v2019 = verf.f32.pop %v1763
      %v2020 = verf.f32.pop %v1764
      %v2021 = verf.f32.pop %v1765
      %v2022 = verf.f32.pop %v1766
      %v2023 = verf.f32.pop %v1767
      %v2024 = verf.f32.pop %v1768
      %v2025 = verf.f32.pop %v1769
      %v2026 = verf.f32.pop %v1770
      %v2027 = verf.f32.pop %v1771
      %v2028 = verf.f32.pop %v1772
      %v2029 = verf.f32.pop %v1773
      %v2030 = verf.f32.pop %v1774
      %v2031 = verf.f32.pop %v1775
      %v2032 = verf.f32.pop %v1776
      %v2033 = verf.f32.pop %v1777
      %v2034 = verf.f32.pop %v1778
      %v2035 = verf.f32.pop %v1779
      %v2036 = verf.f32.pop %v1780
      %v2037 = verf.f32.pop %v1781
      %v2038 = verf.f32.pop %v1782
      %v2039 = verf.f32.pop %v1783
      %v2040 = verf.f32.pop %v1784
      %v2041 = verf.f32.pop %v1785
      %v2042 = verf.f32.pop %v1786
      %v2043 = verf.f32.pop %v1787
      %v2044 = verf.f32.pop %v1788
      %v2045 = verf.f32.pop %v1789
      %v2046 = verf.f32.pop %v1790
      %v2047 = verf.f32.pop %v1791
      %v2048 = verf.f32.pop %v1792
      %v2049 = verf.f32.pop %v1793
      %v2050 = verf.f32.pop %v1794
      %v2051 = verf.f32.pop %v1795
      %v2052 = verf.f32.pop %v1796
      %v2053 = verf.f32.pop %v1797
      %v2054 = verf.f32.pop %v1798
      %v2055 = verf.f32.pop %v1799
      %v2056 = verf.f32.pop %v1800
      %v2057 = verf.f32.pop %v1801
      %v2058 = verf.f32.pop %v1802
      %v2059 = verf.f32.pop %v1803
      %v2060 = verf.f32.pop %v1804
      %v2061 = verf.f32.pop %v1805
      %v2062 = verf.f32.pop %v1806
      %v2063 = verf.f32.pop %v1807
      %v2064 = verf.f32.pop %v1808
      %v2065 = verf.f32.pop %v1809
      %v2066 = verf.f32.pop %v1810
      %v2067 = verf.f32.pop %v1811
      %v2068 = verf.f32.pop %v1812
      %v2069 = verf.f32.pop %v1813
      %v2070 = verf.f32.pop %v1814
      %v2071 = verf.f32.pop %v1815
      %v2072 = verf.f32.pop %v1816
      %v2073 = verf.f32.pop %v1817
      %v2074 = verf.f32.pop %v1818
      %v2075 = verf.f32.pop %v1819
      %v2076 = verf.f32.pop %v1820
      %v2077 = verf.f32.pop %v1821
      %v2078 = verf.f32.pop %v1822
      %v2079 = verf.f32.pop %v1823
      %v2080 = verf.f32.pop %v1824
      %v2081 = verf.f32.pop %v1825
      %v2082 = verf.f32.pop %v1826
      %v2083 = verf.f32.pop %v1827
      %v2084 = verf.f32.pop %v1828
      %v2085 = verf.f32.pop %v1829
      %v2086 = verf.f32.pop %v1830
      %v2087 = verf.f32.pop %v1831
      %v2088 = verf.f32.pop %v1832
      %v2089 = verf.f32.pop %v1833
      %v2090 = verf.f32.pop %v1834
      %v2091 = verf.f32.pop %v1835
      %v2092 = verf.f32.pop %v1836
      %v2093 = verf.f32.pop %v1837
      %v2094 = verf.f32.pop %v1838
      %v2095 = verf.f32.pop %v1839
      %v2096 = verf.f32.pop %v1840
      %v2097 = verf.f32.pop %v1841
      %v2098 = verf.f32.pop %v1842
      %v2099 = verf.f32.pop %v1843
      %v2100 = verf.f32.pop %v1844
      %v2101 = verf.f32.pop %v1845
      %v2102 = verf.f32.pop %v1846
      %v2103 = verf.f32.pop %v1847
      %v2104 = verf.f32.pop %v1848
      %v2105 = verf.f32.pop %v1849
      %v2106 = verf.f32.pop %v1850
      %v2107 = verf.f32.pop %v1851
      %v2108 = verf.f32.pop %v1852
      %v2109 = verf.f32.pop %v1853
      %v2110 = verf.f32.pop %v1854
      %v2111 = verf.f32.pop %v1855
      %v2112 = verf.f32.pop %v1856
      %v2113 = verf.f32.pop %v1857
      %v2114 = verf.f32.pop %v1858
      %v2115 = verf.f32.pop %v1859
      %v2116 = verf.f32.pop %v1860
      %v2117 = verf.f32.pop %v1861
      %v2118 = verf.f32.pop %v1862
      %v2119 = verf.f32.pop %v1863
      %v2120 = verf.f32.pop %v1864
      %v2121 = verf.f32.pop %v1865
      %v2122 = verf.f32.pop %v1866
      %v2123 = verf.f32.pop %v1867
      %v2124 = verf.f32.pop %v1868
      %v2125 = verf.f32.pop %v1869
      %v2126 = verf.f32.pop %v1870
      %v2127 = verf.f32.pop %v1871
      %v2128 = verf.f32.pop %v1872
      %v2129 = verf.f32.pop %v1873
      %v2130 = verf.f32.pop %v1874
      %v2131 = verf.f32.pop %v1875
      %v2132 = verf.f32.pop %v1876
      %v2133 = verf.f32.pop %v1877
      %v2134 = verf.f32.pop %v1878
      %v2135 = verf.f32.pop %v1879
      %v2136 = verf.f32.pop %v1880
      %v2137 = verf.f32.pop %v1881
      %v2138 = verf.f32.pop %v1882
      %v2139 = verf.f32.pop %v1883
      %v2140 = verf.f32.pop %v1884
      %v2141 = verf.f32.pop %v1885
      %v2142 = verf.f32.pop %v1886
      %v2143 = verf.f32.pop %v1887
      %v2144 = verf.f32.pop %v1888
      %v2145 = verf.f32.pop %v1889
      %v2146 = verf.f32.pop %v1890
      %v2147 = verf.f32.pop %v1891
      %v2148 = verf.f32.pop %v1892
      %v2149 = verf.f32.pop %v1893
      %v2150 = verf.f32.pop %v1894
      %v2151 = verf.f32.pop %v1895
      %v2152 = verf.f32.pop %v1896
      %v2153 = verf.f32.pop %v1897
      %v2154 = verf.f32.pop %v1898
      %v2155 = verf.f32.pop %v1899
      %v2156 = verf.f32.pop %v1900
      %v2157 = verf.f32.pop %v1901
      %v2158 = verf.f32.pop %v1902
      %v2159 = verf.f32.pop %v1903
      %v2160 = verf.f32.pop %v1904
      %v2161 = verf.f32.pop %v1905
      %v2162 = verf.f32.pop %v1906
      %v2163 = verf.f32.pop %v1907
      %v2164 = verf.f32.pop %v1908
      %v2165 = verf.f32.pop %v1909
      %v2166 = verf.f32.pop %v1910
      %v2167 = verf.f32.pop %v1911
      %v2168 = vadd.f32 %v1912, 1.0
      %v2169 = vadd.f32 %v1913, 1.0
      %v2170 = vadd.f32 %v1914, 1.0
      %v2171 = vadd.f32 %v1915, 1.0
      %v2172 = vadd.f32 %v1916, 1.0
      %v2173 = vadd.f32 %v1917, 1.0
      %v2174 = vadd.f32 %v1918, 1.0
      %v2175 = vadd.f32 %v1919, 1.0
      %v2176 = vadd.f32 %v1920, 1.0
      %v2177 = vadd.f32 %v1921, 1.0
      %v2178 = vadd.f32 %v1922, 1.0
      %v2179 = vadd.f32 %v1923, 1.0
      %v2180 = vadd.f32 %v1924, 1.0
      %v2181 = vadd.f32 %v1925, 1.0
      %v2182 = vadd.f32 %v1926, 1.0
      %v2183 = vadd.f32 %v1927, 1.0
      %v2184 = vadd.f32 %v1928, 1.0
      %v2185 = vadd.f32 %v1929, 1.0
      %v2186 = vadd.f32 %v1930, 1.0
      %v2187 = vadd.f32 %v1931, 1.0
      %v2188 = vadd.f32 %v1932, 1.0
      %v2189 = vadd.f32 %v1933, 1.0
      %v2190 = vadd.f32 %v1934, 1.0
      %v2191 = vadd.f32 %v1935, 1.0
      %v2192 = vadd.f32 %v1936, 1.0
      %v2193 = vadd.f32 %v1937, 1.0
      %v2194 = vadd.f32 %v1938, 1.0
      %v2195 = vadd.f32 %v1939, 1.0
      %v2196 = vadd.f32 %v1940, 1.0
      %v2197 = vadd.f32 %v1941, 1.0
      %v2198 = vadd.f32 %v1942, 1.0
      %v2199 = vadd.f32 %v1943, 1.0
      %v2200 = vadd.f32 %v1944, 1.0
      %v2201 = vadd.f32 %v1945, 1.0
      %v2202 = vadd.f32 %v1946, 1.0
      %v2203 = vadd.f32 %v1947, 1.0
      %v2204 = vadd.f32 %v1948, 1.0
      %v2205 = vadd.f32 %v1949, 1.0
      %v2206 = vadd.f32 %v1950, 1.0
      %v2207 = vadd.f32 %v1951, 1.0
      %v2208 = vadd.f32 %v1952, 1.0
      %v2209 = vadd.f32 %v1953, 1.0
      %v2210 = vadd.f32 %v1954, 1.0
      %v2211 = vadd.f32 %v1955, 1.0
      %v2212 = vadd.f32 %v1956, 1.0
      %v2213 = vadd.f32 %v1957, 1.0
      %v2214 = vadd.f32 %v1958, 1.0
      %v2215 = vadd.f32 %v1959, 1.0
      %v2216 = vadd.f32 %v1960, 1.0
      %v2217 = vadd.f32 %v1961, 1.0
      %v2218 = vadd.f32 %v1962, 1.0
      %v2219 = vadd.f32 %v1963, 1.0
      %v2220 = vadd.f32 %v1964, 1.0
      %v2221 = vadd.f32 %v1965, 1.0
      %v2222 = vadd.f32 %v1966, 1.0
      %v2223 = vadd.f32 %v1967, 1.0
      %v2224 = vadd.f32 %v1968, 1.0
      %v2225 = vadd.f32 %v1969, 1.0
      %v2226 = vadd.f32 %v1970, 1.0
      %v2227 = vadd.f32 %v1971, 1.0
      %v2228 = vadd.f32 %v1972, 1.0
      %v2229 = vadd.f32 %v1973, 1.0
      %v2230 = vadd.f32 %v1974, 1.0
      %v2231 = vadd.f32 %v1975, 1.0
      %v2232 = vadd.f32 %v1976, 1.0
      %v2233 = vadd.f32 %v1977, 1.0
      %v2234 = vadd.f32 %v1978, 1.0
      %v2235 = vadd.f32 %v1979, 1.0
      %v2236 = vadd.f32 %v1980, 1.0
      %v2237 = vadd.f32 %v1981, 1.0
      %v2238 = vadd.f32 %v1982, 1.0
      %v2239 = vadd.f32 %v1983, 1.0
      %v2240 = vadd.f32 %v1984, 1.0
      %v2241 = vadd.f32 %v1985, 1.0
      %v2242 = vadd.f32 %v1986, 1.0
      %v2243 = vadd.f32 %v1987, 1.0
      %v2244 = vadd.f32 %v1988, 1.0
      %v2245 = vadd.f32 %v1989, 1.0
      %v2246 = vadd.f32 %v1990, 1.0
      %v2247 = vadd.f32 %v1991, 1.0
      %v2248 = vadd.f32 %v1992, 1.0
      %v2249 = vadd.f32 %v1993, 1.0
      %v2250 = vadd.f32 %v1994, 1.0
      %v2251 = vadd.f32 %v1995, 1.0
      %v2252 = vadd.f32 %v1996, 1.0
      %v2253 = vadd.f32 %v1997, 1.0
      %v2254 = vadd.f32 %v1998, 1.0
      %v2255 = vadd.f32 %v1999, 1.0
      %v2256 = vadd.f32 %v2000, 1.0
      %v2257 = vadd.f32 %v2001, 1.0
      %v2258 = vadd.f32 %v2002, 1.0
      %v2259 = vadd.f32 %v2003, 1.0
      %v2260 = vadd.f32 %v2004, 1.0
      %v2261 = vadd.f32 %v2005, 1.0
      %v2262 = vadd.f32 %v2006, 1.0
      %v2263 = vadd.f32 %v2007, 1.0
      %v2264 = vadd.f32 %v2008, 1.0
      %v2265 = vadd.f32 %v2009, 1.0
      %v2266 = vadd.f32 %v2010, 1.0
      %v2267 = vadd.f32 %v2011, 1.0
      %v2268 = vadd.f32 %v2012, 1.0
      %v2269 = vadd.f32 %v2013, 1.0
      %v2270 = vadd.f32 %v2014, 1.0
      %v2271 = vadd.f32 %v2015, 1.0
      %v2272 = vadd.f32 %v2016, 1.0
      %v2273 = vadd.f32 %v2017, 1.0
      %v2274 = vadd.f32 %v2018, 1.0
      %v2275 = vadd.f32 %v2019, 1.0
      %v2276 = vadd.f32 %v2020, 1.0
      %v2277 = vadd.f32 %v2021, 1.0
      %v2278 = vadd.f32 %v2022, 1.0
      %v2279 = vadd.f32 %v2023, 1.0
      %v2280 = vadd.f32 %v2024, 1.0
      %v2281 = vadd.f32 %v2025, 1.0
      %v2282 = vadd.f32 %v2026, 1.0
      %v2283 = vadd.f32 %v2027, 1.0
      %v2284 = vadd.f32 %v2028, 1.0
      %v2285 = vadd.f32 %v2029, 1.0
      %v2286 = vadd.f32 %v2030, 1.0
      %v2287 = vadd.f32 %v2031, 1.0
      %v2288 = vadd.f32 %v2032, 1.0
      %v2289 = vadd.f32 %v2033, 1.0
      %v2290 = vadd.f32 %v2034, 1.0
      %v2291 = vadd.f32 %v2035, 1.0
      %v2292 = vadd.f32 %v2036, 1.0
      %v2293 = vadd.f32 %v2037, 1.0
      %v2294 = vadd.f32 %v2038, 1.0
      %v2295 = vadd.f32 %v2039, 1.0
      %v2296 = vadd.f32 %v2040, 1.0
      %v2297 = vadd.f32 %v2041, 1.0
      %v2298 = vadd.f32 %v2042, 1.0
      %v2299 = vadd.f32 %v2043, 1.0
      %v2300 = vadd.f32 %v2044, 1.0
      %v2301 = vadd.f32 %v2045, 1.0
      %v2302 = vadd.f32 %v2046, 1.0
      %v2303 = vadd.f32 %v2047, 1.0
      %v2304 = vadd.f32 %v2048, 1.0
      %v2305 = vadd.f32 %v2049, 1.0
      %v2306 = vadd.f32 %v2050, 1.0
      %v2307 = vadd.f32 %v2051, 1.0
      %v2308 = vadd.f32 %v2052, 1.0
      %v2309 = vadd.f32 %v2053, 1.0
      %v2310 = vadd.f32 %v2054, 1.0
      %v2311 = vadd.f32 %v2055, 1.0
      %v2312 = vadd.f32 %v2056, 1.0
      %v2313 = vadd.f32 %v2057, 1.0
      %v2314 = vadd.f32 %v2058, 1.0
      %v2315 = vadd.f32 %v2059, 1.0
      %v2316 = vadd.f32 %v2060, 1.0
      %v2317 = vadd.f32 %v2061, 1.0
      %v2318 = vadd.f32 %v2062, 1.0
      %v2319 = vadd.f32 %v2063, 1.0
      %v2320 = vadd.f32 %v2064, 1.0
      %v2321 = vadd.f32 %v2065, 1.0
      %v2322 = vadd.f32 %v2066, 1.0
      %v2323 = vadd.f32 %v2067, 1.0
      %v2324 = vadd.f32 %v2068, 1.0
      %v2325 = vadd.f32 %v2069, 1.0
      %v2326 = vadd.f32 %v2070, 1.0
      %v2327 = vadd.f32 %v2071, 1.0
      %v2328 = vadd.f32 %v2072, 1.0
      %v2329 = vadd.f32 %v2073, 1.0
      %v2330 = vadd.f32 %v2074, 1.0
      %v2331 = vadd.f32 %v2075, 1.0
      %v2332 = vadd.f32 %v2076, 1.0
      %v2333 = vadd.f32 %v2077, 1.0
      %v2334 = vadd.f32 %v2078, 1.0
      %v2335 = vadd.f32 %v2079, 1.0
      %v2336 = vadd.f32 %v2080, 1.0
      %v2337 = vadd.f32 %v2081, 1.0
      %v2338 = vadd.f32 %v2082, 1.0
      %v2339 = vadd.f32 %v2083, 1.0
      %v2340 = vadd.f32 %v2084, 1.0
      %v2341 = vadd.f32 %v2085, 1.0
      %v2342 = vadd.f32 %v2086, 1.0
      %v2343 = vadd.f32 %v2087, 1.0
      %v2344 = vadd.f32 %v2088, 1.0
      %v2345 = vadd.f32 %v2089, 1.0
      %v2346 = vadd.f32 %v2090, 1.0
      %v2347 = vadd.f32 %v2091, 1.0
      %v2348 = vadd.f32 %v2092, 1.0
      %v2349 = vadd.f32 %v2093, 1.0
      %v2350 = vadd.f32 %v2094, 1.0
      %v2351 = vadd.f32 %v2095, 1.0
      %v2352 = vadd.f32 %v2096, 1.0
      %v2353 = vadd.f32 %v2097, 1.0
      %v2354 = vadd.f32 %v2098, 1.0
      %v2355 = vadd.f32 %v2099, 1.0
      %v2356 = vadd.f32 %v2100, 1.0
      %v2357 = vadd.f32 %v2101, 1.0
      %v2358 = vadd.f32 %v2102, 1.0
      %v2359 = vadd.f32 %v2103, 1.0
      %v2360 = vadd.f32 %v2104, 1.0
      %v2361 = vadd.f32 %v2105, 1.0
      %v2362 = vadd.f32 %v2106, 1.0
      %v2363 = vadd.f32 %v2107, 1.0
      %v2364 = vadd.f32 %v2108, 1.0
      %v2365 = vadd.f32 %v2109, 1.0
      %v2366 = vadd.f32 %v2110, 1.0
      %v2367 = vadd.f32 %v2111, 1.0
      %v2368 = vadd.f32 %v2112, 1.0
      %v2369 = vadd.f32 %v2113, 1.0
      %v2370 = vadd.f32 %v2114, 1.0
      %v2371 = vadd.f32 %v2115, 1.0
      %v2372 = vadd.f32 %v2116, 1.0
      %v2373 = vadd.f32 %v2117, 1.0
      %v2374 = vadd.f32 %v2118, 1.0
      %v2375 = vadd.f32 %v2119, 1.0
      %v2376 = vadd.f32 %v2120, 1.0
      %v2377 = vadd.f32 %v2121, 1.0
      %v2378 = vadd.f32 %v2122, 1.0
      %v2379 = vadd.f32 %v2123, 1.0
      %v2380 = vadd.f32 %v2124, 1.0
      %v2381 = vadd.f32 %v2125, 1.0
      %v2382 = vadd.f32 %v2126, 1.0
      %v2383 = vadd.f32 %v2127, 1.0
      %v2384 = vadd.f32 %v2128, 1.0
      %v2385 = vadd.f32 %v2129, 1.0
      %v2386 = vadd.f32 %v2130, 1.0
      %v2387 = vadd.f32 %v2131, 1.0
      %v2388 = vadd.f32 %v2132, 1.0
      %v2389 = vadd.f32 %v2133, 1.0
      %v2390 = vadd.f32 %v2134, 1.0
      %v2391 = vadd.f32 %v2135, 1.0
      %v2392 = vadd.f32 %v2136, 1.0
      %v2393 = vadd.f32 %v2137, 1.0
      %v2394 = vadd.f32 %v2138, 1.0
      %v2395 = vadd.f32 %v2139, 1.0
      %v2396 = vadd.f32 %v2140, 1.0
      %v2397 = vadd.f32 %v2141, 1.0
      %v2398 = vadd.f32 %v2142, 1.0
      %v2399 = vadd.f32 %v2143, 1.0
      %v2400 = vadd.f32 %v2144, 1.0
      %v2401 = vadd.f32 %v2145, 1.0
      %v2402 = vadd.f32 %v2146, 1.0
      %v2403 = vadd.f32 %v2147, 1.0
      %v2404 = vadd.f32 %v2148, 1.0
      %v2405 = vadd.f32 %v2149, 1.0
      %v2406 = vadd.f32 %v2150, 1.0
      %v2407 = vadd.f32 %v2151, 1.0
      %v2408 = vadd.f32 %v2152, 1.0
      %v2409 = vadd.f32 %v2153, 1.0
      %v2410 = vadd.f32 %v2154, 1.0
      %v2411 = vadd.f32 %v2155, 1.0
      %v2412 = vadd.f32 %v2156, 1.0
      %v2413 = vadd.f32 %v2157, 1.0
      %v2414 = vadd.f32 %v2158, 1.0
      %v2415 = vadd.f32 %v2159, 1.0
      %v2416 = vadd.f32 %v2160, 1.0
      %v2417 = vadd.f32 %v2161, 1.0
      %v2418 = vadd.f32 %v2162, 1.0
      %v2419 = vadd.f32 %v2163, 1.0
      %v2420 = vadd.f32 %v2164, 1.0
      %v2421 = vadd.f32 %v2165, 1.0
      %v2422 = vadd.f32 %v2166, 1.0
      %v2423 = vadd.f32 %v2167, 1.0
      %v2424 = vmul.f32 %v1400, %v2168
      %v2425 = vmul.f32 %v1401, %v2169
      %v2426 = vmul.f32 %v1402, %v2170
      %v2427 = vmul.f32 %v1403, %v2171
      %v2428 = vmul.f32 %v1404, %v2172
      %v2429 = vmul.f32 %v1405, %v2173
      %v2430 = vmul.f32 %v1406, %v2174
      %v2431 = vmul.f32 %v1407, %v2175
      %v2432 = vmul.f32 %v1408, %v2176
      %v2433 = vmul.f32 %v1409, %v2177
      %v2434 = vmul.f32 %v1410, %v2178
      %v2435 = vmul.f32 %v1411, %v2179
      %v2436 = vmul.f32 %v1412, %v2180
      %v2437 = vmul.f32 %v1413, %v2181
      %v2438 = vmul.f32 %v1414, %v2182
      %v2439 = vmul.f32 %v1415, %v2183
      %v2440 = vmul.f32 %v1416, %v2184
      %v2441 = vmul.f32 %v1417, %v2185
      %v2442 = vmul.f32 %v1418, %v2186
      %v2443 = vmul.f32 %v1419, %v2187
      %v2444 = vmul.f32 %v1420, %v2188
      %v2445 = vmul.f32 %v1421, %v2189
      %v2446 = vmul.f32 %v1422, %v2190
      %v2447 = vmul.f32 %v1423, %v2191
      %v2448 = vmul.f32 %v1424, %v2192
      %v2449 = vmul.f32 %v1425, %v2193
      %v2450 = vmul.f32 %v1426, %v2194
      %v2451 = vmul.f32 %v1427, %v2195
      %v2452 = vmul.f32 %v1428, %v2196
      %v2453 = vmul.f32 %v1429, %v2197
      %v2454 = vmul.f32 %v1430, %v2198
      %v2455 = vmul.f32 %v1431, %v2199
      %v2456 = vmul.f32 %v1432, %v2200
      %v2457 = vmul.f32 %v1433, %v2201
      %v2458 = vmul.f32 %v1434, %v2202
      %v2459 = vmul.f32 %v1435, %v2203
      %v2460 = vmul.f32 %v1436, %v2204
      %v2461 = vmul.f32 %v1437, %v2205
      %v2462 = vmul.f32 %v1438, %v2206
      %v2463 = vmul.f32 %v1439, %v2207
      %v2464 = vmul.f32 %v1440, %v2208
      %v2465 = vmul.f32 %v1441, %v2209
      %v2466 = vmul.f32 %v1442, %v2210
      %v2467 = vmul.f32 %v1443, %v2211
      %v2468 = vmul.f32 %v1444, %v2212
      %v2469 = vmul.f32 %v1445, %v2213
      %v2470 = vmul.f32 %v1446, %v2214
      %v2471 = vmul.f32 %v1447, %v2215
      %v2472 = vmul.f32 %v1448, %v2216
      %v2473 = vmul.f32 %v1449, %v2217
      %v2474 = vmul.f32 %v1450, %v2218
      %v2475 = vmul.f32 %v1451, %v2219
      %v2476 = vmul.f32 %v1452, %v2220
      %v2477 = vmul.f32 %v1453, %v2221
      %v2478 = vmul.f32 %v1454, %v2222
      %v2479 = vmul.f32 %v1455, %v2223
      %v2480 = vmul.f32 %v1456, %v2224
      %v2481 = vmul.f32 %v1457, %v2225
      %v2482 = vmul.f32 %v1458, %v2226
      %v2483 = vmul.f32 %v1459, %v2227
      %v2484 = vmul.f32 %v1460, %v2228
      %v2485 = vmul.f32 %v1461, %v2229
      %v2486 = vmul.f32 %v1462, %v2230
      %v2487 = vmul.f32 %v1463, %v2231
      %v2488 = vmul.f32 %v1464, %v2232
      %v2489 = vmul.f32 %v1465, %v2233
      %v2490 = vmul.f32 %v1466, %v2234
      %v2491 = vmul.f32 %v1467, %v2235
      %v2492 = vmul.f32 %v1468, %v2236
      %v2493 = vmul.f32 %v1469, %v2237
      %v2494 = vmul.f32 %v1470, %v2238
      %v2495 = vmul.f32 %v1471, %v2239
      %v2496 = vmul.f32 %v1472, %v2240
      %v2497 = vmul.f32 %v1473, %v2241
      %v2498 = vmul.f32 %v1474, %v2242
      %v2499 = vmul.f32 %v1475, %v2243
      %v2500 = vmul.f32 %v1476, %v2244
      %v2501 = vmul.f32 %v1477, %v2245
      %v2502 = vmul.f32 %v1478, %v2246
      %v2503 = vmul.f32 %v1479, %v2247
      %v2504 = vmul.f32 %v1480, %v2248
      %v2505 = vmul.f32 %v1481, %v2249
      %v2506 = vmul.f32 %v1482, %v2250
      %v2507 = vmul.f32 %v1483, %v2251
      %v2508 = vmul.f32 %v1484, %v2252
      %v2509 = vmul.f32 %v1485, %v2253
      %v2510 = vmul.f32 %v1486, %v2254
      %v2511 = vmul.f32 %v1487, %v2255
      %v2512 = vmul.f32 %v1488, %v2256
      %v2513 = vmul.f32 %v1489, %v2257
      %v2514 = vmul.f32 %v1490, %v2258
      %v2515 = vmul.f32 %v1491, %v2259
      %v2516 = vmul.f32 %v1492, %v2260
      %v2517 = vmul.f32 %v1493, %v2261
      %v2518 = vmul.f32 %v1494, %v2262
      %v2519 = vmul.f32 %v1495, %v2263
      %v2520 = vmul.f32 %v1496, %v2264
      %v2521 = vmul.f32 %v1497, %v2265
      %v2522 = vmul.f32 %v1498, %v2266
      %v2523 = vmul.f32 %v1499, %v2267
      %v2524 = vmul.f32 %v1500, %v2268
      %v2525 = vmul.f32 %v1501, %v2269
      %v2526 = vmul.f32 %v1502, %v2270
      %v2527 = vmul.f32 %v1503, %v2271
      %v2528 = vmul.f32 %v1504, %v2272
      %v2529 = vmul.f32 %v1505, %v2273
      %v2530 = vmul.f32 %v1506, %v2274
      %v2531 = vmul.f32 %v1507, %v2275
      %v2532 = vmul.f32 %v1508, %v2276
      %v2533 = vmul.f32 %v1509, %v2277
      %v2534 = vmul.f32 %v1510, %v2278
      %v2535 = vmul.f32 %v1511, %v2279
      %v2536 = vmul.f32 %v1512, %v2280
      %v2537 = vmul.f32 %v1513, %v2281
      %v2538 = vmul.f32 %v1514, %v2282
      %v2539 = vmul.f32 %v1515, %v2283
      %v2540 = vmul.f32 %v1516, %v2284
      %v2541 = vmul.f32 %v1517, %v2285
      %v2542 = vmul.f32 %v1518, %v2286
      %v2543 = vmul.f32 %v1519, %v2287
      %v2544 = vmul.f32 %v1520, %v2288
      %v2545 = vmul.f32 %v1521, %v2289
      %v2546 = vmul.f32 %v1522, %v2290
      %v2547 = vmul.f32 %v1523, %v2291
      %v2548 = vmul.f32 %v1524, %v2292
      %v2549 = vmul.f32 %v1525, %v2293
      %v2550 = vmul.f32 %v1526, %v2294
      %v2551 = vmul.f32 %v1527, %v2295
      %v2552 = vmul.f32 %v1528, %v2296
      %v2553 = vmul.f32 %v1529, %v2297
      %v2554 = vmul.f32 %v1530, %v2298
      %v2555 = vmul.f32 %v1531, %v2299
      %v2556 = vmul.f32 %v1532, %v2300
      %v2557 = vmul.f32 %v1533, %v2301
      %v2558 = vmul.f32 %v1534, %v2302
      %v2559 = vmul.f32 %v1535, %v2303
      %v2560 = vmul.f32 %v1536, %v2304
      %v2561 = vmul.f32 %v1537, %v2305
      %v2562 = vmul.f32 %v1538, %v2306
      %v2563 = vmul.f32 %v1539, %v2307
      %v2564 = vmul.f32 %v1540, %v2308
      %v2565 = vmul.f32 %v1541, %v2309
      %v2566 = vmul.f32 %v1542, %v2310
      %v2567 = vmul.f32 %v1543, %v2311
      %v2568 = vmul.f32 %v1544, %v2312
      %v2569 = vmul.f32 %v1545, %v2313
      %v2570 = vmul.f32 %v1546, %v2314
      %v2571 = vmul.f32 %v1547, %v2315
      %v2572 = vmul.f32 %v1548, %v2316
      %v2573 = vmul.f32 %v1549, %v2317
      %v2574 = vmul.f32 %v1550, %v2318
      %v2575 = vmul.f32 %v1551, %v2319
      %v2576 = vmul.f32 %v1552, %v2320
      %v2577 = vmul.f32 %v1553, %v2321
      %v2578 = vmul.f32 %v1554, %v2322
      %v2579 = vmul.f32 %v1555, %v2323
      %v2580 = vmul.f32 %v1556, %v2324
      %v2581 = vmul.f32 %v1557, %v2325
      %v2582 = vmul.f32 %v1558, %v2326
      %v2583 = vmul.f32 %v1559, %v2327
      %v2584 = vmul.f32 %v1560, %v2328
      %v2585 = vmul.f32 %v1561, %v2329
      %v2586 = vmul.f32 %v1562, %v2330
      %v2587 = vmul.f32 %v1563, %v2331
      %v2588 = vmul.f32 %v1564, %v2332
      %v2589 = vmul.f32 %v1565, %v2333
      %v2590 = vmul.f32 %v1566, %v2334
      %v2591 = vmul.f32 %v1567, %v2335
      %v2592 = vmul.f32 %v1568, %v2336
      %v2593 = vmul.f32 %v1569, %v2337
      %v2594 = vmul.f32 %v1570, %v2338
      %v2595 = vmul.f32 %v1571, %v2339
      %v2596 = vmul.f32 %v1572, %v2340
      %v2597 = vmul.f32 %v1573, %v2341
      %v2598 = vmul.f32 %v1574, %v2342
      %v2599 = vmul.f32 %v1575, %v2343
      %v2600 = vmul.f32 %v1576, %v2344
      %v2601 = vmul.f32 %v1577, %v2345
      %v2602 = vmul.f32 %v1578, %v2346
      %v2603 = vmul.f32 %v1579, %v2347
      %v2604 = vmul.f32 %v1580, %v2348
      %v2605 = vmul.f32 %v1581, %v2349
      %v2606 = vmul.f32 %v1582, %v2350
      %v2607 = vmul.f32 %v1583, %v2351
      %v2608 = vmul.f32 %v1584, %v2352
      %v2609 = vmul.f32 %v1585, %v2353
      %v2610 = vmul.f32 %v1586, %v2354
      %v2611 = vmul.f32 %v1587, %v2355
      %v2612 = vmul.f32 %v1588, %v2356
      %v2613 = vmul.f32 %v1589, %v2357
      %v2614 = vmul.f32 %v1590, %v2358
      %v2615 = vmul.f32 %v1591, %v2359
      %v2616 = vmul.f32 %v1592, %v2360
      %v2617 = vmul.f32 %v1593, %v2361
      %v2618 = vmul.f32 %v1594, %v2362
      %v2619 = vmul.f32 %v1595, %v2363
      %v2620 = vmul.f32 %v1596, %v2364
      %v2621 = vmul.f32 %v1597, %v2365
      %v2622 = vmul.f32 %v1598, %v2366
      %v2623 = vmul.f32 %v1599, %v2367
      %v2624 = vmul.f32 %v1600, %v2368
      %v2625 = vmul.f32 %v1601, %v2369
      %v2626 = vmul.f32 %v1602, %v2370
      %v2627 = vmul.f32 %v1603, %v2371
      %v2628 = vmul.f32 %v1604, %v2372
      %v2629 = vmul.f32 %v1605, %v2373
      %v2630 = vmul.f32 %v1606, %v2374
      %v2631 = vmul.f32 %v1607, %v2375
      %v2632 = vmul.f32 %v1608, %v2376
      %v2633 = vmul.f32 %v1609, %v2377
      %v2634 = vmul.f32 %v1610, %v2378
      %v2635 = vmul.f32 %v1611, %v2379
      %v2636 = vmul.f32 %v1612, %v2380
      %v2637 = vmul.f32 %v1613, %v2381
      %v2638 = vmul.f32 %v1614, %v2382
      %v2639 = vmul.f32 %v1615, %v2383
      %v2640 = vmul.f32 %v1616, %v2384
      %v2641 = vmul.f32 %v1617, %v2385
      %v2642 = vmul.f32 %v1618, %v2386
      %v2643 = vmul.f32 %v1619, %v2387
      %v2644 = vmul.f32 %v1620, %v2388
      %v2645 = vmul.f32 %v1621, %v2389
      %v2646 = vmul.f32 %v1622, %v2390
      %v2647 = vmul.f32 %v1623, %v2391
      %v2648 = vmul.f32 %v1624, %v2392
      %v2649 = vmul.f32 %v1625, %v2393
      %v2650 = vmul.f32 %v1626, %v2394
      %v2651 = vmul.f32 %v1627, %v2395
      %v2652 = vmul.f32 %v1628, %v2396
      %v2653 = vmul.f32 %v1629, %v2397
      %v2654 = vmul.f32 %v1630, %v2398
      %v2655 = vmul.f32 %v1631, %v2399
      %v2656 = vmul.f32 %v1632, %v2400
      %v2657 = vmul.f32 %v1633, %v2401
      %v2658 = vmul.f32 %v1634, %v2402
      %v2659 = vmul.f32 %v1635, %v2403
      %v2660 = vmul.f32 %v1636, %v2404
      %v2661 = vmul.f32 %v1637, %v2405
      %v2662 = vmul.f32 %v1638, %v2406
      %v2663 = vmul.f32 %v1639, %v2407
      %v2664 = vmul.f32 %v1640, %v2408
      %v2665 = vmul.f32 %v1641, %v2409
      %v2666 = vmul.f32 %v1642, %v2410
      %v2667 = vmul.f32 %v1643, %v2411
      %v2668 = vmul.f32 %v1644, %v2412
      %v2669 = vmul.f32 %v1645, %v2413
      %v2670 = vmul.f32 %v1646, %v2414
      %v2671 = vmul.f32 %v1647, %v2415
      %v2672 = vmul.f32 %v1648, %v2416
      %v2673 = vmul.f32 %v1649, %v2417
      %v2674 = vmul.f32 %v1650, %v2418
      %v2675 = vmul.f32 %v1651, %v2419
      %v2676 = vmul.f32 %v1652, %v2420
      %v2677 = vmul.f32 %v1653, %v2421
      %v2678 = vmul.f32 %v1654, %v2422
      %v2679 = vmul.f32 %v1655, %v2423
      %v2680 = vpack.c.bf16 %v2428, %v2424
      %v2681 = vpack.c.bf16 %v2429, %v2425
      %v2682 = vpack.c.bf16 %v2430, %v2426
      %v2683 = vpack.c.bf16 %v2431, %v2427
      %v2684 = vpack.c.bf16 %v2436, %v2432
      %v2685 = vpack.c.bf16 %v2437, %v2433
      %v2686 = vpack.c.bf16 %v2438, %v2434
      %v2687 = vpack.c.bf16 %v2439, %v2435
      %v2688 = vpack.c.bf16 %v2444, %v2440
      %v2689 = vpack.c.bf16 %v2445, %v2441
      %v2690 = vpack.c.bf16 %v2446, %v2442
      %v2691 = vpack.c.bf16 %v2447, %v2443
      %v2692 = vpack.c.bf16 %v2452, %v2448
      %v2693 = vpack.c.bf16 %v2453, %v2449
      %v2694 = vpack.c.bf16 %v2454, %v2450
      %v2695 = vpack.c.bf16 %v2455, %v2451
      %v2696 = vpack.c.bf16 %v2460, %v2456
      %v2697 = vpack.c.bf16 %v2461, %v2457
      %v2698 = vpack.c.bf16 %v2462, %v2458
      %v2699 = vpack.c.bf16 %v2463, %v2459
      %v2700 = vpack.c.bf16 %v2468, %v2464
      %v2701 = vpack.c.bf16 %v2469, %v2465
      %v2702 = vpack.c.bf16 %v2470, %v2466
      %v2703 = vpack.c.bf16 %v2471, %v2467
      %v2704 = vpack.c.bf16 %v2476, %v2472
      %v2705 = vpack.c.bf16 %v2477, %v2473
      %v2706 = vpack.c.bf16 %v2478, %v2474
      %v2707 = vpack.c.bf16 %v2479, %v2475
      %v2708 = vpack.c.bf16 %v2484, %v2480
      %v2709 = vpack.c.bf16 %v2485, %v2481
      %v2710 = vpack.c.bf16 %v2486, %v2482
      %v2711 = vpack.c.bf16 %v2487, %v2483
      %v2712 = vpack.c.bf16 %v2492, %v2488
      %v2713 = vpack.c.bf16 %v2493, %v2489
      %v2714 = vpack.c.bf16 %v2494, %v2490
      %v2715 = vpack.c.bf16 %v2495, %v2491
      %v2716 = vpack.c.bf16 %v2500, %v2496
      %v2717 = vpack.c.bf16 %v2501, %v2497
      %v2718 = vpack.c.bf16 %v2502, %v2498
      %v2719 = vpack.c.bf16 %v2503, %v2499
      %v2720 = vpack.c.bf16 %v2508, %v2504
      %v2721 = vpack.c.bf16 %v2509, %v2505
      %v2722 = vpack.c.bf16 %v2510, %v2506
      %v2723 = vpack.c.bf16 %v2511, %v2507
      %v2724 = vpack.c.bf16 %v2516, %v2512
      %v2725 = vpack.c.bf16 %v2517, %v2513
      %v2726 = vpack.c.bf16 %v2518, %v2514
      %v2727 = vpack.c.bf16 %v2519, %v2515
      %v2728 = vpack.c.bf16 %v2524, %v2520
      %v2729 = vpack.c.bf16 %v2525, %v2521
      %v2730 = vpack.c.bf16 %v2526, %v2522
      %v2731 = vpack.c.bf16 %v2527, %v2523
      %v2732 = vpack.c.bf16 %v2532, %v2528
      %v2733 = vpack.c.bf16 %v2533, %v2529
      %v2734 = vpack.c.bf16 %v2534, %v2530
      %v2735 = vpack.c.bf16 %v2535, %v2531
      %v2736 = vpack.c.bf16 %v2540, %v2536
      %v2737 = vpack.c.bf16 %v2541, %v2537
      %v2738 = vpack.c.bf16 %v2542, %v2538
      %v2739 = vpack.c.bf16 %v2543, %v2539
      %v2740 = vpack.c.bf16 %v2548, %v2544
      %v2741 = vpack.c.bf16 %v2549, %v2545
      %v2742 = vpack.c.bf16 %v2550, %v2546
      %v2743 = vpack.c.bf16 %v2551, %v2547
      %v2744 = vpack.c.bf16 %v2556, %v2552
      %v2745 = vpack.c.bf16 %v2557, %v2553
      %v2746 = vpack.c.bf16 %v2558, %v2554
      %v2747 = vpack.c.bf16 %v2559, %v2555
      %v2748 = vpack.c.bf16 %v2564, %v2560
      %v2749 = vpack.c.bf16 %v2565, %v2561
      %v2750 = vpack.c.bf16 %v2566, %v2562
      %v2751 = vpack.c.bf16 %v2567, %v2563
      %v2752 = vpack.c.bf16 %v2572, %v2568
      %v2753 = vpack.c.bf16 %v2573, %v2569
      %v2754 = vpack.c.bf16 %v2574, %v2570
      %v2755 = vpack.c.bf16 %v2575, %v2571
      %v2756 = vpack.c.bf16 %v2580, %v2576
      %v2757 = vpack.c.bf16 %v2581, %v2577
      %v2758 = vpack.c.bf16 %v2582, %v2578
      %v2759 = vpack.c.bf16 %v2583, %v2579
      %v2760 = vpack.c.bf16 %v2588, %v2584
      %v2761 = vpack.c.bf16 %v2589, %v2585
      %v2762 = vpack.c.bf16 %v2590, %v2586
      %v2763 = vpack.c.bf16 %v2591, %v2587
      %v2764 = vpack.c.bf16 %v2596, %v2592
      %v2765 = vpack.c.bf16 %v2597, %v2593
      %v2766 = vpack.c.bf16 %v2598, %v2594
      %v2767 = vpack.c.bf16 %v2599, %v2595
      %v2768 = vpack.c.bf16 %v2604, %v2600
      %v2769 = vpack.c.bf16 %v2605, %v2601
      %v2770 = vpack.c.bf16 %v2606, %v2602
      %v2771 = vpack.c.bf16 %v2607, %v2603
      %v2772 = vpack.c.bf16 %v2612, %v2608
      %v2773 = vpack.c.bf16 %v2613, %v2609
      %v2774 = vpack.c.bf16 %v2614, %v2610
      %v2775 = vpack.c.bf16 %v2615, %v2611
      %v2776 = vpack.c.bf16 %v2620, %v2616
      %v2777 = vpack.c.bf16 %v2621, %v2617
      %v2778 = vpack.c.bf16 %v2622, %v2618
      %v2779 = vpack.c.bf16 %v2623, %v2619
      %v2780 = vpack.c.bf16 %v2628, %v2624
      %v2781 = vpack.c.bf16 %v2629, %v2625
      %v2782 = vpack.c.bf16 %v2630, %v2626
      %v2783 = vpack.c.bf16 %v2631, %v2627
      %v2784 = vpack.c.bf16 %v2636, %v2632
      %v2785 = vpack.c.bf16 %v2637, %v2633
      %v2786 = vpack.c.bf16 %v2638, %v2634
      %v2787 = vpack.c.bf16 %v2639, %v2635
      %v2788 = vpack.c.bf16 %v2644, %v2640
      %v2789 = vpack.c.bf16 %v2645, %v2641
      %v2790 = vpack.c.bf16 %v2646, %v2642
      %v2791 = vpack.c.bf16 %v2647, %v2643
      %v2792 = vpack.c.bf16 %v2652, %v2648
      %v2793 = vpack.c.bf16 %v2653, %v2649
      %v2794 = vpack.c.bf16 %v2654, %v2650
      %v2795 = vpack.c.bf16 %v2655, %v2651
      %v2796 = vpack.c.bf16 %v2660, %v2656
      %v2797 = vpack.c.bf16 %v2661, %v2657
      %v2798 = vpack.c.bf16 %v2662, %v2658
      %v2799 = vpack.c.bf16 %v2663, %v2659
      %v2800 = vpack.c.bf16 %v2668, %v2664
      %v2801 = vpack.c.bf16 %v2669, %v2665
      %v2802 = vpack.c.bf16 %v2670, %v2666
      %v2803 = vpack.c.bf16 %v2671, %v2667
      %v2804 = vpack.c.bf16 %v2676, %v2672
      %v2805 = vpack.c.bf16 %v2677, %v2673
      %v2806 = vpack.c.bf16 %v2678, %v2674
      %v2807 = vpack.c.bf16 %v2679, %v2675
      %v2808 = vld [vmem:[%s3] sm:$0xff]
      %v2809 = vld [vmem:[%s3 + $0x8] sm:$0xff]
      %v2810 = vld [vmem:[%s3 + $0x10] sm:$0xff]
      %v2811 = vld [vmem:[%s3 + $0x18] sm:$0xff]
      %v2812 = vld [vmem:[%s3 + $0x20] sm:$0xff]
      %v2813 = vld [vmem:[%s3 + $0x28] sm:$0xff]
      %v2814 = vld [vmem:[%s3 + $0x30] sm:$0xff]
      %v2815 = vld [vmem:[%s3 + $0x38] sm:$0xff]
      %v2816 = vld [vmem:[%s3 + $0x40] sm:$0xff]
      %v2817 = vld [vmem:[%s3 + $0x48] sm:$0xff]
      %v2818 = vld [vmem:[%s3 + $0x50] sm:$0xff]
      %v2819 = vld [vmem:[%s3 + $0x58] sm:$0xff]
      %v2820 = vld [vmem:[%s3 + $0x60] sm:$0xff]
      %v2821 = vld [vmem:[%s3 + $0x68] sm:$0xff]
      %v2822 = vld [vmem:[%s3 + $0x70] sm:$0xff]
      %v2823 = vld [vmem:[%s3 + $0x78] sm:$0xff]
      %v2824 = vld [vmem:[%s3 + $0x80] sm:$0xff]
      %v2825 = vld [vmem:[%s3 + $0x88] sm:$0xff]
      %v2826 = vld [vmem:[%s3 + $0x90] sm:$0xff]
      %v2827 = vld [vmem:[%s3 + $0x98] sm:$0xff]
      %v2828 = vld [vmem:[%s3 + $0xa0] sm:$0xff]
      %v2829 = vld [vmem:[%s3 + $0xa8] sm:$0xff]
      %v2830 = vld [vmem:[%s3 + $0xb0] sm:$0xff]
      %v2831 = vld [vmem:[%s3 + $0xb8] sm:$0xff]
      %v2832 = vld [vmem:[%s3 + $0xc0] sm:$0xff]
      %v2833 = vld [vmem:[%s3 + $0xc8] sm:$0xff]
      %v2834 = vld [vmem:[%s3 + $0xd0] sm:$0xff]
      %v2835 = vld [vmem:[%s3 + $0xd8] sm:$0xff]
      %v2836 = vld [vmem:[%s3 + $0xe0] sm:$0xff]
      %v2837 = vld [vmem:[%s3 + $0xe8] sm:$0xff]
      %v2838 = vld [vmem:[%s3 + $0xf0] sm:$0xff]
      %v2839 = vld [vmem:[%s3 + $0xf8] sm:$0xff]
      %v2840 = vld [vmem:[%s3 + $0x100] sm:$0xff]
      %v2841 = vld [vmem:[%s3 + $0x108] sm:$0xff]
      %v2842 = vld [vmem:[%s3 + $0x110] sm:$0xff]
      %v2843 = vld [vmem:[%s3 + $0x118] sm:$0xff]
      %v2844 = vld [vmem:[%s3 + $0x120] sm:$0xff]
      %v2845 = vld [vmem:[%s3 + $0x128] sm:$0xff]
      %v2846 = vld [vmem:[%s3 + $0x130] sm:$0xff]
      %v2847 = vld [vmem:[%s3 + $0x138] sm:$0xff]
      %v2848 = vld [vmem:[%s3 + $0x140] sm:$0xff]
      %v2849 = vld [vmem:[%s3 + $0x148] sm:$0xff]
      %v2850 = vld [vmem:[%s3 + $0x150] sm:$0xff]
      %v2851 = vld [vmem:[%s3 + $0x158] sm:$0xff]
      %v2852 = vld [vmem:[%s3 + $0x160] sm:$0xff]
      %v2853 = vld [vmem:[%s3 + $0x168] sm:$0xff]
      %v2854 = vld [vmem:[%s3 + $0x170] sm:$0xff]
      %v2855 = vld [vmem:[%s3 + $0x178] sm:$0xff]
      %v2856 = vld [vmem:[%s3 + $0x180] sm:$0xff]
      %v2857 = vld [vmem:[%s3 + $0x188] sm:$0xff]
      %v2858 = vld [vmem:[%s3 + $0x190] sm:$0xff]
      %v2859 = vld [vmem:[%s3 + $0x198] sm:$0xff]
      %v2860 = vld [vmem:[%s3 + $0x1a0] sm:$0xff]
      %v2861 = vld [vmem:[%s3 + $0x1a8] sm:$0xff]
      %v2862 = vld [vmem:[%s3 + $0x1b0] sm:$0xff]
      %v2863 = vld [vmem:[%s3 + $0x1b8] sm:$0xff]
      %v2864 = vld [vmem:[%s3 + $0x1c0] sm:$0xff]
      %v2865 = vld [vmem:[%s3 + $0x1c8] sm:$0xff]
      %v2866 = vld [vmem:[%s3 + $0x1d0] sm:$0xff]
      %v2867 = vld [vmem:[%s3 + $0x1d8] sm:$0xff]
      %v2868 = vld [vmem:[%s3 + $0x1e0] sm:$0xff]
      %v2869 = vld [vmem:[%s3 + $0x1e8] sm:$0xff]
      %v2870 = vld [vmem:[%s3 + $0x1f0] sm:$0xff]
      %v2871 = vld [vmem:[%s3 + $0x1f8] sm:$0xff]
      %v2872 = vld [vmem:[%s3 + $0x200] sm:$0xff]
      %v2873 = vld [vmem:[%s3 + $0x208] sm:$0xff]
      %v2874 = vld [vmem:[%s3 + $0x210] sm:$0xff]
      %v2875 = vld [vmem:[%s3 + $0x218] sm:$0xff]
      %v2876 = vld [vmem:[%s3 + $0x220] sm:$0xff]
      %v2877 = vld [vmem:[%s3 + $0x228] sm:$0xff]
      %v2878 = vld [vmem:[%s3 + $0x230] sm:$0xff]
      %v2879 = vld [vmem:[%s3 + $0x238] sm:$0xff]
      %v2880 = vld [vmem:[%s3 + $0x240] sm:$0xff]
      %v2881 = vld [vmem:[%s3 + $0x248] sm:$0xff]
      %v2882 = vld [vmem:[%s3 + $0x250] sm:$0xff]
      %v2883 = vld [vmem:[%s3 + $0x258] sm:$0xff]
      %v2884 = vld [vmem:[%s3 + $0x260] sm:$0xff]
      %v2885 = vld [vmem:[%s3 + $0x268] sm:$0xff]
      %v2886 = vld [vmem:[%s3 + $0x270] sm:$0xff]
      %v2887 = vld [vmem:[%s3 + $0x278] sm:$0xff]
      %v2888 = vld [vmem:[%s3 + $0x280] sm:$0xff]
      %v2889 = vld [vmem:[%s3 + $0x288] sm:$0xff]
      %v2890 = vld [vmem:[%s3 + $0x290] sm:$0xff]
      %v2891 = vld [vmem:[%s3 + $0x298] sm:$0xff]
      %v2892 = vld [vmem:[%s3 + $0x2a0] sm:$0xff]
      %v2893 = vld [vmem:[%s3 + $0x2a8] sm:$0xff]
      %v2894 = vld [vmem:[%s3 + $0x2b0] sm:$0xff]
      %v2895 = vld [vmem:[%s3 + $0x2b8] sm:$0xff]
      %v2896 = vld [vmem:[%s3 + $0x2c0] sm:$0xff]
      %v2897 = vld [vmem:[%s3 + $0x2c8] sm:$0xff]
      %v2898 = vld [vmem:[%s3 + $0x2d0] sm:$0xff]
      %v2899 = vld [vmem:[%s3 + $0x2d8] sm:$0xff]
      %v2900 = vld [vmem:[%s3 + $0x2e0] sm:$0xff]
      %v2901 = vld [vmem:[%s3 + $0x2e8] sm:$0xff]
      %v2902 = vld [vmem:[%s3 + $0x2f0] sm:$0xff]
      %v2903 = vld [vmem:[%s3 + $0x2f8] sm:$0xff]
      %v2904 = vld [vmem:[%s3 + $0x300] sm:$0xff]
      %v2905 = vld [vmem:[%s3 + $0x308] sm:$0xff]
      %v2906 = vld [vmem:[%s3 + $0x310] sm:$0xff]
      %v2907 = vld [vmem:[%s3 + $0x318] sm:$0xff]
      %v2908 = vld [vmem:[%s3 + $0x320] sm:$0xff]
      %v2909 = vld [vmem:[%s3 + $0x328] sm:$0xff]
      %v2910 = vld [vmem:[%s3 + $0x330] sm:$0xff]
      %v2911 = vld [vmem:[%s3 + $0x338] sm:$0xff]
      %v2912 = vld [vmem:[%s3 + $0x340] sm:$0xff]
      %v2913 = vld [vmem:[%s3 + $0x348] sm:$0xff]
      %v2914 = vld [vmem:[%s3 + $0x350] sm:$0xff]
      %v2915 = vld [vmem:[%s3 + $0x358] sm:$0xff]
      %v2916 = vld [vmem:[%s3 + $0x360] sm:$0xff]
      %v2917 = vld [vmem:[%s3 + $0x368] sm:$0xff]
      %v2918 = vld [vmem:[%s3 + $0x370] sm:$0xff]
      %v2919 = vld [vmem:[%s3 + $0x378] sm:$0xff]
      %v2920 = vld [vmem:[%s3 + $0x380] sm:$0xff]
      %v2921 = vld [vmem:[%s3 + $0x388] sm:$0xff]
      %v2922 = vld [vmem:[%s3 + $0x390] sm:$0xff]
      %v2923 = vld [vmem:[%s3 + $0x398] sm:$0xff]
      %v2924 = vld [vmem:[%s3 + $0x3a0] sm:$0xff]
      %v2925 = vld [vmem:[%s3 + $0x3a8] sm:$0xff]
      %v2926 = vld [vmem:[%s3 + $0x3b0] sm:$0xff]
      %v2927 = vld [vmem:[%s3 + $0x3b8] sm:$0xff]
      %v2928 = vld [vmem:[%s3 + $0x3c0] sm:$0xff]
      %v2929 = vld [vmem:[%s3 + $0x3c8] sm:$0xff]
      %v2930 = vld [vmem:[%s3 + $0x3d0] sm:$0xff]
      %v2931 = vld [vmem:[%s3 + $0x3d8] sm:$0xff]
      %v2932 = vld [vmem:[%s3 + $0x3e0] sm:$0xff]
      %v2933 = vld [vmem:[%s3 + $0x3e8] sm:$0xff]
      %v2934 = vld [vmem:[%s3 + $0x3f0] sm:$0xff]
      %v2935 = vld [vmem:[%s3 + $0x3f8] sm:$0xff]
      %v2936 = vld [vmem:[#allocation5] sm:$0xf]
      %v2938 = vlaneseq
      %v2939 = vshrl.u32 %v2938, 7
      %v2940 = vsub.s32 0, %v2939
      %v2941 = vrot.slane %v2936, %v2940
      %v2942 = vlaneseq
      %v2943 = vshrl.u32 %v2942, 7
      %v2944 = vsub.s32 1, %v2943
      %v2945 = vrot.slane %v2936, %v2944
      %v2946 = vlaneseq
      %v2947 = vshrl.u32 %v2946, 7
      %v2948 = vsub.s32 2, %v2947
      %v2949 = vrot.slane %v2936, %v2948
      %v2950 = vlaneseq
      %v2951 = vshrl.u32 %v2950, 7
      %v2952 = vsub.s32 3, %v2951
      %v2953 = vrot.slane %v2936, %v2952
      %v3086 = vunpack.c.l.b16 %v2808
      %v3087 = vunpack.c.h.b16 %v2808
      %v3088 = vunpack.c.l.b16 %v2809
      %v3089 = vunpack.c.h.b16 %v2809
      %v3090 = vunpack.c.l.b16 %v2810
      %v3091 = vunpack.c.h.b16 %v2810
      %v3092 = vunpack.c.l.b16 %v2811
      %v3093 = vunpack.c.h.b16 %v2811
      %v3094 = vunpack.c.l.b16 %v2812
      %v3095 = vunpack.c.h.b16 %v2812
      %v3096 = vunpack.c.l.b16 %v2813
      %v3097 = vunpack.c.h.b16 %v2813
      %v3098 = vunpack.c.l.b16 %v2814
      %v3099 = vunpack.c.h.b16 %v2814
      %v3100 = vunpack.c.l.b16 %v2815
      %v3101 = vunpack.c.h.b16 %v2815
      %v3102 = vunpack.c.l.b16 %v2816
      %v3103 = vunpack.c.h.b16 %v2816
      %v3104 = vunpack.c.l.b16 %v2817
      %v3105 = vunpack.c.h.b16 %v2817
      %v3106 = vunpack.c.l.b16 %v2818
      %v3107 = vunpack.c.h.b16 %v2818
      %v3108 = vunpack.c.l.b16 %v2819
      %v3109 = vunpack.c.h.b16 %v2819
      %v3110 = vunpack.c.l.b16 %v2820
      %v3111 = vunpack.c.h.b16 %v2820
      %v3112 = vunpack.c.l.b16 %v2821
      %v3113 = vunpack.c.h.b16 %v2821
      %v3114 = vunpack.c.l.b16 %v2822
      %v3115 = vunpack.c.h.b16 %v2822
      %v3116 = vunpack.c.l.b16 %v2823
      %v3117 = vunpack.c.h.b16 %v2823
      %v3118 = vunpack.c.l.b16 %v2824
      %v3119 = vunpack.c.h.b16 %v2824
      %v3120 = vunpack.c.l.b16 %v2825
      %v3121 = vunpack.c.h.b16 %v2825
      %v3122 = vunpack.c.l.b16 %v2826
      %v3123 = vunpack.c.h.b16 %v2826
      %v3124 = vunpack.c.l.b16 %v2827
      %v3125 = vunpack.c.h.b16 %v2827
      %v3126 = vunpack.c.l.b16 %v2828
      %v3127 = vunpack.c.h.b16 %v2828
      %v3128 = vunpack.c.l.b16 %v2829
      %v3129 = vunpack.c.h.b16 %v2829
      %v3130 = vunpack.c.l.b16 %v2830
      %v3131 = vunpack.c.h.b16 %v2830
      %v3132 = vunpack.c.l.b16 %v2831
      %v3133 = vunpack.c.h.b16 %v2831
      %v3134 = vunpack.c.l.b16 %v2832
      %v3135 = vunpack.c.h.b16 %v2832
      %v3136 = vunpack.c.l.b16 %v2833
      %v3137 = vunpack.c.h.b16 %v2833
      %v3138 = vunpack.c.l.b16 %v2834
      %v3139 = vunpack.c.h.b16 %v2834
      %v3140 = vunpack.c.l.b16 %v2835
      %v3141 = vunpack.c.h.b16 %v2835
      %v3142 = vunpack.c.l.b16 %v2836
      %v3143 = vunpack.c.h.b16 %v2836
      %v3144 = vunpack.c.l.b16 %v2837
      %v3145 = vunpack.c.h.b16 %v2837
      %v3146 = vunpack.c.l.b16 %v2838
      %v3147 = vunpack.c.h.b16 %v2838
      %v3148 = vunpack.c.l.b16 %v2839
      %v3149 = vunpack.c.h.b16 %v2839
      %v3150 = vunpack.c.l.b16 %v2840
      %v3151 = vunpack.c.h.b16 %v2840
      %v3152 = vunpack.c.l.b16 %v2841
      %v3153 = vunpack.c.h.b16 %v2841
      %v3154 = vunpack.c.l.b16 %v2842
      %v3155 = vunpack.c.h.b16 %v2842
      %v3156 = vunpack.c.l.b16 %v2843
      %v3157 = vunpack.c.h.b16 %v2843
      %v3158 = vunpack.c.l.b16 %v2844
      %v3159 = vunpack.c.h.b16 %v2844
      %v3160 = vunpack.c.l.b16 %v2845
      %v3161 = vunpack.c.h.b16 %v2845
      %v3162 = vunpack.c.l.b16 %v2846
      %v3163 = vunpack.c.h.b16 %v2846
      %v3164 = vunpack.c.l.b16 %v2847
      %v3165 = vunpack.c.h.b16 %v2847
      %v3166 = vunpack.c.l.b16 %v2848
      %v3167 = vunpack.c.h.b16 %v2848
      %v3168 = vunpack.c.l.b16 %v2849
      %v3169 = vunpack.c.h.b16 %v2849
      %v3170 = vunpack.c.l.b16 %v2850
      %v3171 = vunpack.c.h.b16 %v2850
      %v3172 = vunpack.c.l.b16 %v2851
      %v3173 = vunpack.c.h.b16 %v2851
      %v3174 = vunpack.c.l.b16 %v2852
      %v3175 = vunpack.c.h.b16 %v2852
      %v3176 = vunpack.c.l.b16 %v2853
      %v3177 = vunpack.c.h.b16 %v2853
      %v3178 = vunpack.c.l.b16 %v2854
      %v3179 = vunpack.c.h.b16 %v2854
      %v3180 = vunpack.c.l.b16 %v2855
      %v3181 = vunpack.c.h.b16 %v2855
      %v3182 = vunpack.c.l.b16 %v2856
      %v3183 = vunpack.c.h.b16 %v2856
      %v3184 = vunpack.c.l.b16 %v2857
      %v3185 = vunpack.c.h.b16 %v2857
      %v3186 = vunpack.c.l.b16 %v2858
      %v3187 = vunpack.c.h.b16 %v2858
      %v3188 = vunpack.c.l.b16 %v2859
      %v3189 = vunpack.c.h.b16 %v2859
      %v3190 = vunpack.c.l.b16 %v2860
      %v3191 = vunpack.c.h.b16 %v2860
      %v3192 = vunpack.c.l.b16 %v2861
      %v3193 = vunpack.c.h.b16 %v2861
      %v3194 = vunpack.c.l.b16 %v2862
      %v3195 = vunpack.c.h.b16 %v2862
      %v3196 = vunpack.c.l.b16 %v2863
      %v3197 = vunpack.c.h.b16 %v2863
      %v3198 = vunpack.c.l.b16 %v2864
      %v3199 = vunpack.c.h.b16 %v2864
      %v3200 = vunpack.c.l.b16 %v2865
      %v3201 = vunpack.c.h.b16 %v2865
      %v3202 = vunpack.c.l.b16 %v2866
      %v3203 = vunpack.c.h.b16 %v2866
      %v3204 = vunpack.c.l.b16 %v2867
      %v3205 = vunpack.c.h.b16 %v2867
      %v3206 = vunpack.c.l.b16 %v2868
      %v3207 = vunpack.c.h.b16 %v2868
      %v3208 = vunpack.c.l.b16 %v2869
      %v3209 = vunpack.c.h.b16 %v2869
      %v3210 = vunpack.c.l.b16 %v2870
      %v3211 = vunpack.c.h.b16 %v2870
      %v3212 = vunpack.c.l.b16 %v2871
      %v3213 = vunpack.c.h.b16 %v2871
      %v3214 = vunpack.c.l.b16 %v2872
      %v3215 = vunpack.c.h.b16 %v2872
      %v3216 = vunpack.c.l.b16 %v2873
      %v3217 = vunpack.c.h.b16 %v2873
      %v3218 = vunpack.c.l.b16 %v2874
      %v3219 = vunpack.c.h.b16 %v2874
      %v3220 = vunpack.c.l.b16 %v2875
      %v3221 = vunpack.c.h.b16 %v2875
      %v3222 = vunpack.c.l.b16 %v2876
      %v3223 = vunpack.c.h.b16 %v2876
      %v3224 = vunpack.c.l.b16 %v2877
      %v3225 = vunpack.c.h.b16 %v2877
      %v3226 = vunpack.c.l.b16 %v2878
      %v3227 = vunpack.c.h.b16 %v2878
      %v3228 = vunpack.c.l.b16 %v2879
      %v3229 = vunpack.c.h.b16 %v2879
      %v3230 = vunpack.c.l.b16 %v2880
      %v3231 = vunpack.c.h.b16 %v2880
      %v3232 = vunpack.c.l.b16 %v2881
      %v3233 = vunpack.c.h.b16 %v2881
      %v3234 = vunpack.c.l.b16 %v2882
      %v3235 = vunpack.c.h.b16 %v2882
      %v3236 = vunpack.c.l.b16 %v2883
      %v3237 = vunpack.c.h.b16 %v2883
      %v3238 = vunpack.c.l.b16 %v2884
      %v3239 = vunpack.c.h.b16 %v2884
      %v3240 = vunpack.c.l.b16 %v2885
      %v3241 = vunpack.c.h.b16 %v2885
      %v3242 = vunpack.c.l.b16 %v2886
      %v3243 = vunpack.c.h.b16 %v2886
      %v3244 = vunpack.c.l.b16 %v2887
      %v3245 = vunpack.c.h.b16 %v2887
      %v3246 = vunpack.c.l.b16 %v2888
      %v3247 = vunpack.c.h.b16 %v2888
      %v3248 = vunpack.c.l.b16 %v2889
      %v3249 = vunpack.c.h.b16 %v2889
      %v3250 = vunpack.c.l.b16 %v2890
      %v3251 = vunpack.c.h.b16 %v2890
      %v3252 = vunpack.c.l.b16 %v2891
      %v3253 = vunpack.c.h.b16 %v2891
      %v3254 = vunpack.c.l.b16 %v2892
      %v3255 = vunpack.c.h.b16 %v2892
      %v3256 = vunpack.c.l.b16 %v2893
      %v3257 = vunpack.c.h.b16 %v2893
      %v3258 = vunpack.c.l.b16 %v2894
      %v3259 = vunpack.c.h.b16 %v2894
      %v3260 = vunpack.c.l.b16 %v2895
      %v3261 = vunpack.c.h.b16 %v2895
      %v3262 = vunpack.c.l.b16 %v2896
      %v3263 = vunpack.c.h.b16 %v2896
      %v3264 = vunpack.c.l.b16 %v2897
      %v3265 = vunpack.c.h.b16 %v2897
      %v3266 = vunpack.c.l.b16 %v2898
      %v3267 = vunpack.c.h.b16 %v2898
      %v3268 = vunpack.c.l.b16 %v2899
      %v3269 = vunpack.c.h.b16 %v2899
      %v3270 = vunpack.c.l.b16 %v2900
      %v3271 = vunpack.c.h.b16 %v2900
      %v3272 = vunpack.c.l.b16 %v2901
      %v3273 = vunpack.c.h.b16 %v2901
      %v3274 = vunpack.c.l.b16 %v2902
      %v3275 = vunpack.c.h.b16 %v2902
      %v3276 = vunpack.c.l.b16 %v2903
      %v3277 = vunpack.c.h.b16 %v2903
      %v3278 = vunpack.c.l.b16 %v2904
      %v3279 = vunpack.c.h.b16 %v2904
      %v3280 = vunpack.c.l.b16 %v2905
      %v3281 = vunpack.c.h.b16 %v2905
      %v3282 = vunpack.c.l.b16 %v2906
      %v3283 = vunpack.c.h.b16 %v2906
      %v3284 = vunpack.c.l.b16 %v2907
      %v3285 = vunpack.c.h.b16 %v2907
      %v3286 = vunpack.c.l.b16 %v2908
      %v3287 = vunpack.c.h.b16 %v2908
      %v3288 = vunpack.c.l.b16 %v2909
      %v3289 = vunpack.c.h.b16 %v2909
      %v3290 = vunpack.c.l.b16 %v2910
      %v3291 = vunpack.c.h.b16 %v2910
      %v3292 = vunpack.c.l.b16 %v2911
      %v3293 = vunpack.c.h.b16 %v2911
      %v3294 = vunpack.c.l.b16 %v2912
      %v3295 = vunpack.c.h.b16 %v2912
      %v3296 = vunpack.c.l.b16 %v2913
      %v3297 = vunpack.c.h.b16 %v2913
      %v3298 = vunpack.c.l.b16 %v2914
      %v3299 = vunpack.c.h.b16 %v2914
      %v3300 = vunpack.c.l.b16 %v2915
      %v3301 = vunpack.c.h.b16 %v2915
      %v3302 = vunpack.c.l.b16 %v2916
      %v3303 = vunpack.c.h.b16 %v2916
      %v3304 = vunpack.c.l.b16 %v2917
      %v3305 = vunpack.c.h.b16 %v2917
      %v3306 = vunpack.c.l.b16 %v2918
      %v3307 = vunpack.c.h.b16 %v2918
      %v3308 = vunpack.c.l.b16 %v2919
      %v3309 = vunpack.c.h.b16 %v2919
      %v3310 = vunpack.c.l.b16 %v2920
      %v3311 = vunpack.c.h.b16 %v2920
      %v3312 = vunpack.c.l.b16 %v2921
      %v3313 = vunpack.c.h.b16 %v2921
      %v3314 = vunpack.c.l.b16 %v2922
      %v3315 = vunpack.c.h.b16 %v2922
      %v3316 = vunpack.c.l.b16 %v2923
      %v3317 = vunpack.c.h.b16 %v2923
      %v3318 = vunpack.c.l.b16 %v2924
      %v3319 = vunpack.c.h.b16 %v2924
      %v3320 = vunpack.c.l.b16 %v2925
      %v3321 = vunpack.c.h.b16 %v2925
      %v3322 = vunpack.c.l.b16 %v2926
      %v3323 = vunpack.c.h.b16 %v2926
      %v3324 = vunpack.c.l.b16 %v2927
      %v3325 = vunpack.c.h.b16 %v2927
      %v3326 = vunpack.c.l.b16 %v2928
      %v3327 = vunpack.c.h.b16 %v2928
      %v3328 = vunpack.c.l.b16 %v2929
      %v3329 = vunpack.c.h.b16 %v2929
      %v3330 = vunpack.c.l.b16 %v2930
      %v3331 = vunpack.c.h.b16 %v2930
      %v3332 = vunpack.c.l.b16 %v2931
      %v3333 = vunpack.c.h.b16 %v2931
      %v3334 = vunpack.c.l.b16 %v2932
      %v3335 = vunpack.c.h.b16 %v2932
      %v3336 = vunpack.c.l.b16 %v2933
      %v3337 = vunpack.c.h.b16 %v2933
      %v3338 = vunpack.c.l.b16 %v2934
      %v3339 = vunpack.c.h.b16 %v2934
      %v3340 = vunpack.c.l.b16 %v2935
      %v3341 = vunpack.c.h.b16 %v2935
      %v3342 = vpack.c.b16 %v3090, %v3086
      %v3343 = vpack.c.b16 %v3091, %v3087
      %v3344 = vpack.c.b16 %v3092, %v3088
      %v3345 = vpack.c.b16 %v3093, %v3089
      %v3346 = vpack.c.b16 %v3098, %v3094
      %v3347 = vpack.c.b16 %v3099, %v3095
      %v3348 = vpack.c.b16 %v3100, %v3096
      %v3349 = vpack.c.b16 %v3101, %v3097
      %v3350 = vpack.c.b16 %v3106, %v3102
      %v3351 = vpack.c.b16 %v3107, %v3103
      %v3352 = vpack.c.b16 %v3108, %v3104
      %v3353 = vpack.c.b16 %v3109, %v3105
      %v3354 = vpack.c.b16 %v3114, %v3110
      %v3355 = vpack.c.b16 %v3115, %v3111
      %v3356 = vpack.c.b16 %v3116, %v3112
      %v3357 = vpack.c.b16 %v3117, %v3113
      %v3358 = vpack.c.b16 %v3122, %v3118
      %v3359 = vpack.c.b16 %v3123, %v3119
      %v3360 = vpack.c.b16 %v3124, %v3120
      %v3361 = vpack.c.b16 %v3125, %v3121
      %v3362 = vpack.c.b16 %v3130, %v3126
      %v3363 = vpack.c.b16 %v3131, %v3127
      %v3364 = vpack.c.b16 %v3132, %v3128
      %v3365 = vpack.c.b16 %v3133, %v3129
      %v3366 = vpack.c.b16 %v3138, %v3134
      %v3367 = vpack.c.b16 %v3139, %v3135
      %v3368 = vpack.c.b16 %v3140, %v3136
      %v3369 = vpack.c.b16 %v3141, %v3137
      %v3370 = vpack.c.b16 %v3146, %v3142
      %v3371 = vpack.c.b16 %v3147, %v3143
      %v3372 = vpack.c.b16 %v3148, %v3144
      %v3373 = vpack.c.b16 %v3149, %v3145
      %v3374 = vpack.c.b16 %v3154, %v3150
      %v3375 = vpack.c.b16 %v3155, %v3151
      %v3376 = vpack.c.b16 %v3156, %v3152
      %v3377 = vpack.c.b16 %v3157, %v3153
      %v3378 = vpack.c.b16 %v3162, %v3158
      %v3379 = vpack.c.b16 %v3163, %v3159
      %v3380 = vpack.c.b16 %v3164, %v3160
      %v3381 = vpack.c.b16 %v3165, %v3161
      %v3382 = vpack.c.b16 %v3170, %v3166
      %v3383 = vpack.c.b16 %v3171, %v3167
      %v3384 = vpack.c.b16 %v3172, %v3168
      %v3385 = vpack.c.b16 %v3173, %v3169
      %v3386 = vpack.c.b16 %v3178, %v3174
      %v3387 = vpack.c.b16 %v3179, %v3175
      %v3388 = vpack.c.b16 %v3180, %v3176
      %v3389 = vpack.c.b16 %v3181, %v3177
      %v3390 = vpack.c.b16 %v3186, %v3182
      %v3391 = vpack.c.b16 %v3187, %v3183
      %v3392 = vpack.c.b16 %v3188, %v3184
      %v3393 = vpack.c.b16 %v3189, %v3185
      %v3394 = vpack.c.b16 %v3194, %v3190
      %v3395 = vpack.c.b16 %v3195, %v3191
      %v3396 = vpack.c.b16 %v3196, %v3192
      %v3397 = vpack.c.b16 %v3197, %v3193
      %v3398 = vpack.c.b16 %v3202, %v3198
      %v3399 = vpack.c.b16 %v3203, %v3199
      %v3400 = vpack.c.b16 %v3204, %v3200
      %v3401 = vpack.c.b16 %v3205, %v3201
      %v3402 = vpack.c.b16 %v3210, %v3206
      %v3403 = vpack.c.b16 %v3211, %v3207
      %v3404 = vpack.c.b16 %v3212, %v3208
      %v3405 = vpack.c.b16 %v3213, %v3209
      %v3406 = vpack.c.b16 %v3218, %v3214
      %v3407 = vpack.c.b16 %v3219, %v3215
      %v3408 = vpack.c.b16 %v3220, %v3216
      %v3409 = vpack.c.b16 %v3221, %v3217
      %v3410 = vpack.c.b16 %v3226, %v3222
      %v3411 = vpack.c.b16 %v3227, %v3223
      %v3412 = vpack.c.b16 %v3228, %v3224
      %v3413 = vpack.c.b16 %v3229, %v3225
      %v3414 = vpack.c.b16 %v3234, %v3230
      %v3415 = vpack.c.b16 %v3235, %v3231
      %v3416 = vpack.c.b16 %v3236, %v3232
      %v3417 = vpack.c.b16 %v3237, %v3233
      %v3418 = vpack.c.b16 %v3242, %v3238
      %v3419 = vpack.c.b16 %v3243, %v3239
      %v3420 = vpack.c.b16 %v3244, %v3240
      %v3421 = vpack.c.b16 %v3245, %v3241
      %v3422 = vpack.c.b16 %v3250, %v3246
      %v3423 = vpack.c.b16 %v3251, %v3247
      %v3424 = vpack.c.b16 %v3252, %v3248
      %v3425 = vpack.c.b16 %v3253, %v3249
      %v3426 = vpack.c.b16 %v3258, %v3254
      %v3427 = vpack.c.b16 %v3259, %v3255
      %v3428 = vpack.c.b16 %v3260, %v3256
      %v3429 = vpack.c.b16 %v3261, %v3257
      %v3430 = vpack.c.b16 %v3266, %v3262
      %v3431 = vpack.c.b16 %v3267, %v3263
      %v3432 = vpack.c.b16 %v3268, %v3264
      %v3433 = vpack.c.b16 %v3269, %v3265
      %v3434 = vpack.c.b16 %v3274, %v3270
      %v3435 = vpack.c.b16 %v3275, %v3271
      %v3436 = vpack.c.b16 %v3276, %v3272
      %v3437 = vpack.c.b16 %v3277, %v3273
      %v3438 = vpack.c.b16 %v3282, %v3278
      %v3439 = vpack.c.b16 %v3283, %v3279
      %v3440 = vpack.c.b16 %v3284, %v3280
      %v3441 = vpack.c.b16 %v3285, %v3281
      %v3442 = vpack.c.b16 %v3290, %v3286
      %v3443 = vpack.c.b16 %v3291, %v3287
      %v3444 = vpack.c.b16 %v3292, %v3288
      %v3445 = vpack.c.b16 %v3293, %v3289
      %v3446 = vpack.c.b16 %v3298, %v3294
      %v3447 = vpack.c.b16 %v3299, %v3295
      %v3448 = vpack.c.b16 %v3300, %v3296
      %v3449 = vpack.c.b16 %v3301, %v3297
      %v3450 = vpack.c.b16 %v3306, %v3302
      %v3451 = vpack.c.b16 %v3307, %v3303
      %v3452 = vpack.c.b16 %v3308, %v3304
      %v3453 = vpack.c.b16 %v3309, %v3305
      %v3454 = vpack.c.b16 %v3314, %v3310
      %v3455 = vpack.c.b16 %v3315, %v3311
      %v3456 = vpack.c.b16 %v3316, %v3312
      %v3457 = vpack.c.b16 %v3317, %v3313
      %v3458 = vpack.c.b16 %v3322, %v3318
      %v3459 = vpack.c.b16 %v3323, %v3319
      %v3460 = vpack.c.b16 %v3324, %v3320
      %v3461 = vpack.c.b16 %v3325, %v3321
      %v3462 = vpack.c.b16 %v3330, %v3326
      %v3463 = vpack.c.b16 %v3331, %v3327
      %v3464 = vpack.c.b16 %v3332, %v3328
      %v3465 = vpack.c.b16 %v3333, %v3329
      %v3466 = vpack.c.b16 %v3338, %v3334
      %v3467 = vpack.c.b16 %v3339, %v3335
      %v3468 = vpack.c.b16 %v3340, %v3336
      %v3469 = vpack.c.b16 %v3341, %v3337
      %3598 = vmatprep.subr.bf16.mxu0 %v3343
      %3599 = vmatpush1.bf16.msra.mxu0 %v3342
      %3600 = vmatprep.subr.bf16.mxu0 %v3347
      %3601 = vmatpush1.bf16.msra.mxu0 %v3346
      %3602 = vmatprep.subr.bf16.mxu0 %v3351
      %3603 = vmatpush1.bf16.msra.mxu0 %v3350
      %3604 = vmatprep.subr.bf16.mxu0 %v3355
      %3605 = vmatpush1.bf16.msra.mxu0 %v3354
      %3606 = vmatprep.subr.bf16.mxu0 %v3359
      %3607 = vmatpush1.bf16.msra.mxu0 %v3358
      %3608 = vmatprep.subr.bf16.mxu0 %v3363
      %3609 = vmatpush1.bf16.msra.mxu0 %v3362
      %3610 = vmatprep.subr.bf16.mxu0 %v3367
      %3611 = vmatpush1.bf16.msra.mxu0 %v3366
      %3612 = vmatprep.subr.bf16.mxu0 %v3371
      %3613 = vmatpush1.bf16.msra.mxu0 %v3370
      %3614 = vmatprep.subr.bf16.mxu0 %v3375
      %3615 = vmatpush1.bf16.msra.mxu0 %v3374
      %3616 = vmatprep.subr.bf16.mxu0 %v3379
      %3617 = vmatpush1.bf16.msra.mxu0 %v3378
      %3618 = vmatprep.subr.bf16.mxu0 %v3383
      %3619 = vmatpush1.bf16.msra.mxu0 %v3382
      %3620 = vmatprep.subr.bf16.mxu0 %v3387
      %3621 = vmatpush1.bf16.msra.mxu0 %v3386
      %3622 = vmatprep.subr.bf16.mxu0 %v3391
      %3623 = vmatpush1.bf16.msra.mxu0 %v3390
      %3624 = vmatprep.subr.bf16.mxu0 %v3395
      %3625 = vmatpush1.bf16.msra.mxu0 %v3394
      %3626 = vmatprep.subr.bf16.mxu0 %v3399
      %3627 = vmatpush1.bf16.msra.mxu0 %v3398
      %3628 = vmatprep.subr.bf16.mxu0 %v3403
      %3629 = vmatpush1.bf16.msra.mxu0 %v3402
      %3630 = vmatprep.mubr.bf16.mxu0 %v2681
      %3631 = vmatmul.mubr.bf16.gmra.mrb[0].mxu0 %v2680
      %v3632 = vpop.f32.mrb[0].mxu0
      %v3633 = vadd.f32 %v2941, %v3632
      %v3634 = vpop.f32.mrb[0].mxu0
      %v3635 = vadd.f32 %v2945, %v3634
      %v3636 = vpop.f32.mrb[0].mxu0
      %v3637 = vadd.f32 %v2941, %v3636
      %v3638 = vpop.f32.mrb[0].mxu0
      %v3639 = vadd.f32 %v2945, %v3638
      %3640 = vmatprep.mubr.bf16.mxu0 %v2685
      %3641 = vmatmul.mubr.bf16.gmra.mrb[0].mxu0 %v2684
      %v3642 = vpop.f32.mrb[0].mxu0
      %v3643 = vadd.f32 %v2941, %v3642
      %v3644 = vpop.f32.mrb[0].mxu0
      %v3645 = vadd.f32 %v2945, %v3644
      %v3646 = vpop.f32.mrb[0].mxu0
      %v3647 = vadd.f32 %v2941, %v3646
      %v3648 = vpop.f32.mrb[0].mxu0
      %v3649 = vadd.f32 %v2945, %v3648
      %3650 = vmatprep.mubr.bf16.mxu0 %v2689
      %3651 = vmatmul.mubr.bf16.gmra.mrb[0].mxu0 %v2688
      %v3652 = vpop.f32.mrb[0].mxu0
      %v3653 = vadd.f32 %v2941, %v3652
      %v3654 = vpop.f32.mrb[0].mxu0
      %v3655 = vadd.f32 %v2945, %v3654
      %v3656 = vpop.f32.mrb[0].mxu0
      %v3657 = vadd.f32 %v2941, %v3656
      %v3658 = vpop.f32.mrb[0].mxu0
      %v3659 = vadd.f32 %v2945, %v3658
      %3660 = vmatprep.mubr.bf16.mxu0 %v2693
      %3661 = vmatmul.mubr.bf16.gmra.mrb[0].mxu0 %v2692
      %v3662 = vpop.f32.mrb[0].mxu0
      %v3663 = vadd.f32 %v2941, %v3662
      %v3664 = vpop.f32.mrb[0].mxu0
      %v3665 = vadd.f32 %v2945, %v3664
      %v3666 = vpop.f32.mrb[0].mxu0
      %v3667 = vadd.f32 %v2941, %v3666
      %v3668 = vpop.f32.mrb[0].mxu0
      %v3669 = vadd.f32 %v2945, %v3668
      %3670 = vmatprep.mubr.bf16.mxu0 %v2697
      %3671 = vmatmul.mubr.bf16.gmra.mrb[0].mxu0 %v2696
      %v3672 = vpop.f32.mrb[0].mxu0
      %v3673 = vadd.f32 %v2941, %v3672
      %v3674 = vpop.f32.mrb[0].mxu0
      %v3675 = vadd.f32 %v2945, %v3674
      %v3676 = vpop.f32.mrb[0].mxu0
      %v3677 = vadd.f32 %v2941, %v3676
      %v3678 = vpop.f32.mrb[0].mxu0
      %v3679 = vadd.f32 %v2945, %v3678
      %3680 = vmatprep.mubr.bf16.mxu0 %v2701
      %3681 = vmatmul.mubr.bf16.gmra.mrb[0].mxu0 %v2700
      %v3682 = vpop.f32.mrb[0].mxu0
      %v3683 = vadd.f32 %v2941, %v3682
      %v3684 = vpop.f32.mrb[0].mxu0
      %v3685 = vadd.f32 %v2945, %v3684
      %v3686 = vpop.f32.mrb[0].mxu0
      %v3687 = vadd.f32 %v2941, %v3686
      %v3688 = vpop.f32.mrb[0].mxu0
      %v3689 = vadd.f32 %v2945, %v3688
      %3690 = vmatprep.mubr.bf16.mxu0 %v2705
      %3691 = vmatmul.mubr.bf16.gmra.mrb[0].mxu0 %v2704
      %v3692 = vpop.f32.mrb[0].mxu0
      %v3693 = vadd.f32 %v2941, %v3692
      %v3694 = vpop.f32.mrb[0].mxu0
      %v3695 = vadd.f32 %v2945, %v3694
      %v3696 = vpop.f32.mrb[0].mxu0
      %v3697 = vadd.f32 %v2941, %v3696
      %v3698 = vpop.f32.mrb[0].mxu0
      %v3699 = vadd.f32 %v2945, %v3698
      %3700 = vmatprep.mubr.bf16.mxu0 %v2709
      %3701 = vmatmul.mubr.bf16.gmra.mrb[0].mxu0 %v2708
      %v3702 = vpop.f32.mrb[0].mxu0
      %v3703 = vadd.f32 %v2941, %v3702
      %v3704 = vpop.f32.mrb[0].mxu0
      %v3705 = vadd.f32 %v2945, %v3704
      %v3706 = vpop.f32.mrb[0].mxu0
      %v3707 = vadd.f32 %v2941, %v3706
      %v3708 = vpop.f32.mrb[0].mxu0
      %v3709 = vadd.f32 %v2945, %v3708
      %3710 = vmatprep.mubr.bf16.mxu0 %v2713
      %3711 = vmatmul.mubr.bf16.gmra.mrb[0].mxu0 %v2712
      %v3712 = vpop.f32.mrb[0].mxu0
      %v3713 = vadd.f32 %v2941, %v3712
      %v3714 = vpop.f32.mrb[0].mxu0
      %v3715 = vadd.f32 %v2945, %v3714
      %v3716 = vpop.f32.mrb[0].mxu0
      %v3717 = vadd.f32 %v2941, %v3716
      %v3718 = vpop.f32.mrb[0].mxu0
      %v3719 = vadd.f32 %v2945, %v3718
      %3720 = vmatprep.mubr.bf16.mxu0 %v2717
      %3721 = vmatmul.mubr.bf16.gmra.mrb[0].mxu0 %v2716
      %v3722 = vpop.f32.mrb[0].mxu0
      %v3723 = vadd.f32 %v2941, %v3722
      %v3724 = vpop.f32.mrb[0].mxu0
      %v3725 = vadd.f32 %v2945, %v3724
      %v3726 = vpop.f32.mrb[0].mxu0
      %v3727 = vadd.f32 %v2941, %v3726
      %v3728 = vpop.f32.mrb[0].mxu0
      %v3729 = vadd.f32 %v2945, %v3728
      %3730 = vmatprep.mubr.bf16.mxu0 %v2721
      %3731 = vmatmul.mubr.bf16.gmra.mrb[0].mxu0 %v2720
      %v3732 = vpop.f32.mrb[0].mxu0
      %v3733 = vadd.f32 %v2941, %v3732
      %v3734 = vpop.f32.mrb[0].mxu0
      %v3735 = vadd.f32 %v2945, %v3734
      %v3736 = vpop.f32.mrb[0].mxu0
      %v3737 = vadd.f32 %v2941, %v3736
      %v3738 = vpop.f32.mrb[0].mxu0
      %v3739 = vadd.f32 %v2945, %v3738
      %3740 = vmatprep.mubr.bf16.mxu0 %v2725
      %3741 = vmatmul.mubr.bf16.gmra.mrb[0].mxu0 %v2724
      %v3742 = vpop.f32.mrb[0].mxu0
      %v3743 = vadd.f32 %v2941, %v3742
      %v3744 = vpop.f32.mrb[0].mxu0
      %v3745 = vadd.f32 %v2945, %v3744
      %v3746 = vpop.f32.mrb[0].mxu0
      %v3747 = vadd.f32 %v2941, %v3746
      %v3748 = vpop.f32.mrb[0].mxu0
      %v3749 = vadd.f32 %v2945, %v3748
      %3750 = vmatprep.mubr.bf16.mxu0 %v2729
      %3751 = vmatmul.mubr.bf16.gmra.mrb[0].mxu0 %v2728
      %v3752 = vpop.f32.mrb[0].mxu0
      %v3753 = vadd.f32 %v2941, %v3752
      %v3754 = vpop.f32.mrb[0].mxu0
      %v3755 = vadd.f32 %v2945, %v3754
      %v3756 = vpop.f32.mrb[0].mxu0
      %v3757 = vadd.f32 %v2941, %v3756
      %v3758 = vpop.f32.mrb[0].mxu0
      %v3759 = vadd.f32 %v2945, %v3758
      %3760 = vmatprep.mubr.bf16.mxu0 %v2733
      %3761 = vmatmul.mubr.bf16.gmra.mrb[0].mxu0 %v2732
      %v3762 = vpop.f32.mrb[0].mxu0
      %v3763 = vadd.f32 %v2941, %v3762
      %v3764 = vpop.f32.mrb[0].mxu0
      %v3765 = vadd.f32 %v2945, %v3764
      %v3766 = vpop.f32.mrb[0].mxu0
      %v3767 = vadd.f32 %v2941, %v3766
      %v3768 = vpop.f32.mrb[0].mxu0
      %v3769 = vadd.f32 %v2945, %v3768
      %3770 = vmatprep.mubr.bf16.mxu0 %v2737
      %3771 = vmatmul.mubr.bf16.gmra.mrb[0].mxu0 %v2736
      %v3772 = vpop.f32.mrb[0].mxu0
      %v3773 = vadd.f32 %v2941, %v3772
      %v3774 = vpop.f32.mrb[0].mxu0
      %v3775 = vadd.f32 %v2945, %v3774
      %v3776 = vpop.f32.mrb[0].mxu0
      %v3777 = vadd.f32 %v2941, %v3776
      %v3778 = vpop.f32.mrb[0].mxu0
      %v3779 = vadd.f32 %v2945, %v3778
      %3780 = vmatprep.mubr.bf16.mxu0 %v2741
      %3781 = vmatmul.mubr.bf16.gmra.mrb[0].mxu0 %v2740
      %v3782 = vpop.f32.mrb[0].mxu0
      %v3783 = vadd.f32 %v2941, %v3782
      %v3784 = vpop.f32.mrb[0].mxu0
      %v3785 = vadd.f32 %v2945, %v3784
      %v3786 = vpop.f32.mrb[0].mxu0
      %v3787 = vadd.f32 %v2941, %v3786
      %v3788 = vpop.f32.mrb[0].mxu0
      %v3789 = vadd.f32 %v2945, %v3788
      %3790 = vmatprep.mubr.bf16.mxu0 %v2745
      %3791 = vmatmul.mubr.bf16.gmra.mrb[0].mxu0 %v2744
      %v3792 = vpop.f32.mrb[0].mxu0
      %v3793 = vadd.f32 %v2941, %v3792
      %v3794 = vpop.f32.mrb[0].mxu0
      %v3795 = vadd.f32 %v2945, %v3794
      %v3796 = vpop.f32.mrb[0].mxu0
      %v3797 = vadd.f32 %v2941, %v3796
      %v3798 = vpop.f32.mrb[0].mxu0
      %v3799 = vadd.f32 %v2945, %v3798
      %3800 = vmatprep.mubr.bf16.mxu0 %v2749
      %3801 = vmatmul.mubr.bf16.gmra.mrb[0].mxu0 %v2748
      %v3802 = vpop.f32.mrb[0].mxu0
      %v3803 = vadd.f32 %v2941, %v3802
      %v3804 = vpop.f32.mrb[0].mxu0
      %v3805 = vadd.f32 %v2945, %v3804
      %v3806 = vpop.f32.mrb[0].mxu0
      %v3807 = vadd.f32 %v2941, %v3806
      %v3808 = vpop.f32.mrb[0].mxu0
      %v3809 = vadd.f32 %v2945, %v3808
      %3810 = vmatprep.mubr.bf16.mxu0 %v2753
      %3811 = vmatmul.mubr.bf16.gmra.mrb[0].mxu0 %v2752
      %v3812 = vpop.f32.mrb[0].mxu0
      %v3813 = vadd.f32 %v2941, %v3812
      %v3814 = vpop.f32.mrb[0].mxu0
      %v3815 = vadd.f32 %v2945, %v3814
      %v3816 = vpop.f32.mrb[0].mxu0
      %v3817 = vadd.f32 %v2941, %v3816
      %v3818 = vpop.f32.mrb[0].mxu0
      %v3819 = vadd.f32 %v2945, %v3818
      %3820 = vmatprep.mubr.bf16.mxu0 %v2757
      %3821 = vmatmul.mubr.bf16.gmra.mrb[0].mxu0 %v2756
      %v3822 = vpop.f32.mrb[0].mxu0
      %v3823 = vadd.f32 %v2941, %v3822
      %v3824 = vpop.f32.mrb[0].mxu0
      %v3825 = vadd.f32 %v2945, %v3824
      %v3826 = vpop.f32.mrb[0].mxu0
      %v3827 = vadd.f32 %v2941, %v3826
      %v3828 = vpop.f32.mrb[0].mxu0
      %v3829 = vadd.f32 %v2945, %v3828
      %3830 = vmatprep.mubr.bf16.mxu0 %v2761
      %3831 = vmatmul.mubr.bf16.gmra.mrb[0].mxu0 %v2760
      %v3832 = vpop.f32.mrb[0].mxu0
      %v3833 = vadd.f32 %v2941, %v3832
      %v3834 = vpop.f32.mrb[0].mxu0
      %v3835 = vadd.f32 %v2945, %v3834
      %v3836 = vpop.f32.mrb[0].mxu0
      %v3837 = vadd.f32 %v2941, %v3836
      %v3838 = vpop.f32.mrb[0].mxu0
      %v3839 = vadd.f32 %v2945, %v3838
      %3840 = vmatprep.mubr.bf16.mxu0 %v2765
      %3841 = vmatmul.mubr.bf16.gmra.mrb[0].mxu0 %v2764
      %v3842 = vpop.f32.mrb[0].mxu0
      %v3843 = vadd.f32 %v2941, %v3842
      %v3844 = vpop.f32.mrb[0].mxu0
      %v3845 = vadd.f32 %v2945, %v3844
      %v3846 = vpop.f32.mrb[0].mxu0
      %v3847 = vadd.f32 %v2941, %v3846
      %v3848 = vpop.f32.mrb[0].mxu0
      %v3849 = vadd.f32 %v2945, %v3848
      %3850 = vmatprep.mubr.bf16.mxu0 %v2769
      %3851 = vmatmul.mubr.bf16.gmra.mrb[0].mxu0 %v2768
      %v3852 = vpop.f32.mrb[0].mxu0
      %v3853 = vadd.f32 %v2941, %v3852
      %v3854 = vpop.f32.mrb[0].mxu0
      %v3855 = vadd.f32 %v2945, %v3854
      %v3856 = vpop.f32.mrb[0].mxu0
      %v3857 = vadd.f32 %v2941, %v3856
      %v3858 = vpop.f32.mrb[0].mxu0
      %v3859 = vadd.f32 %v2945, %v3858
      %3860 = vmatprep.mubr.bf16.mxu0 %v2773
      %3861 = vmatmul.mubr.bf16.gmra.mrb[0].mxu0 %v2772
      %v3862 = vpop.f32.mrb[0].mxu0
      %v3863 = vadd.f32 %v2941, %v3862
      %v3864 = vpop.f32.mrb[0].mxu0
      %v3865 = vadd.f32 %v2945, %v3864
      %v3866 = vpop.f32.mrb[0].mxu0
      %v3867 = vadd.f32 %v2941, %v3866
      %v3868 = vpop.f32.mrb[0].mxu0
      %v3869 = vadd.f32 %v2945, %v3868
      %3870 = vmatprep.mubr.bf16.mxu0 %v2777
      %3871 = vmatmul.mubr.bf16.gmra.mrb[0].mxu0 %v2776
      %v3872 = vpop.f32.mrb[0].mxu0
      %v3873 = vadd.f32 %v2941, %v3872
      %v3874 = vpop.f32.mrb[0].mxu0
      %v3875 = vadd.f32 %v2945, %v3874
      %v3876 = vpop.f32.mrb[0].mxu0
      %v3877 = vadd.f32 %v2941, %v3876
      %v3878 = vpop.f32.mrb[0].mxu0
      %v3879 = vadd.f32 %v2945, %v3878
      %3880 = vmatprep.mubr.bf16.mxu0 %v2781
      %3881 = vmatmul.mubr.bf16.gmra.mrb[0].mxu0 %v2780
      %v3882 = vpop.f32.mrb[0].mxu0
      %v3883 = vadd.f32 %v2941, %v3882
      %v3884 = vpop.f32.mrb[0].mxu0
      %v3885 = vadd.f32 %v2945, %v3884
      %v3886 = vpop.f32.mrb[0].mxu0
      %v3887 = vadd.f32 %v2941, %v3886
      %v3888 = vpop.f32.mrb[0].mxu0
      %v3889 = vadd.f32 %v2945, %v3888
      %3890 = vmatprep.mubr.bf16.mxu0 %v2785
      %3891 = vmatmul.mubr.bf16.gmra.mrb[0].mxu0 %v2784
      %v3892 = vpop.f32.mrb[0].mxu0
      %v3893 = vadd.f32 %v2941, %v3892
      %v3894 = vpop.f32.mrb[0].mxu0
      %v3895 = vadd.f32 %v2945, %v3894
      %v3896 = vpop.f32.mrb[0].mxu0
      %v3897 = vadd.f32 %v2941, %v3896
      %v3898 = vpop.f32.mrb[0].mxu0
      %v3899 = vadd.f32 %v2945, %v3898
      %3900 = vmatprep.mubr.bf16.mxu0 %v2789
      %3901 = vmatmul.mubr.bf16.gmra.mrb[0].mxu0 %v2788
      %v3902 = vpop.f32.mrb[0].mxu0
      %v3903 = vadd.f32 %v2941, %v3902
      %v3904 = vpop.f32.mrb[0].mxu0
      %v3905 = vadd.f32 %v2945, %v3904
      %v3906 = vpop.f32.mrb[0].mxu0
      %v3907 = vadd.f32 %v2941, %v3906
      %v3908 = vpop.f32.mrb[0].mxu0
      %v3909 = vadd.f32 %v2945, %v3908
      %3910 = vmatprep.mubr.bf16.mxu0 %v2793
      %3911 = vmatmul.mubr.bf16.gmra.mrb[0].mxu0 %v2792
      %v3912 = vpop.f32.mrb[0].mxu0
      %v3913 = vadd.f32 %v2941, %v3912
      %v3914 = vpop.f32.mrb[0].mxu0
      %v3915 = vadd.f32 %v2945, %v3914
      %v3916 = vpop.f32.mrb[0].mxu0
      %v3917 = vadd.f32 %v2941, %v3916
      %v3918 = vpop.f32.mrb[0].mxu0
      %v3919 = vadd.f32 %v2945, %v3918
      %3920 = vmatprep.mubr.bf16.mxu0 %v2797
      %3921 = vmatmul.mubr.bf16.gmra.mrb[0].mxu0 %v2796
      %v3922 = vpop.f32.mrb[0].mxu0
      %v3923 = vadd.f32 %v2941, %v3922
      %v3924 = vpop.f32.mrb[0].mxu0
      %v3925 = vadd.f32 %v2945, %v3924
      %v3926 = vpop.f32.mrb[0].mxu0
      %v3927 = vadd.f32 %v2941, %v3926
      %v3928 = vpop.f32.mrb[0].mxu0
      %v3929 = vadd.f32 %v2945, %v3928
      %3930 = vmatprep.mubr.bf16.mxu0 %v2801
      %3931 = vmatmul.mubr.bf16.gmra.mrb[0].mxu0 %v2800
      %v3932 = vpop.f32.mrb[0].mxu0
      %v3933 = vadd.f32 %v2941, %v3932
      %v3934 = vpop.f32.mrb[0].mxu0
      %v3935 = vadd.f32 %v2945, %v3934
      %v3936 = vpop.f32.mrb[0].mxu0
      %v3937 = vadd.f32 %v2941, %v3936
      %v3938 = vpop.f32.mrb[0].mxu0
      %v3939 = vadd.f32 %v2945, %v3938
      %3940 = vmatprep.mubr.bf16.mxu0 %v2805
      %3941 = vmatmul.mubr.bf16.gmra.mrb[0].mxu0 %v2804
      %v3942 = vpop.f32.mrb[0].mxu0
      %v3943 = vadd.f32 %v2941, %v3942
      %v3944 = vpop.f32.mrb[0].mxu0
      %v3945 = vadd.f32 %v2945, %v3944
      %v3946 = vpop.f32.mrb[0].mxu0
      %v3947 = vadd.f32 %v2941, %v3946
      %v3948 = vpop.f32.mrb[0].mxu0
      %v3949 = vadd.f32 %v2945, %v3948
      %3950 = vdwg.mxu0
      %3951 = vmatprep.subr.bf16.mxu0 %v3407
      %3952 = vmatpush1.bf16.msra.mxu0 %v3406
      %3953 = vmatprep.subr.bf16.mxu0 %v3411
      %3954 = vmatpush1.bf16.msra.mxu0 %v3410
      %3955 = vmatprep.subr.bf16.mxu0 %v3415
      %3956 = vmatpush1.bf16.msra.mxu0 %v3414
      %3957 = vmatprep.subr.bf16.mxu0 %v3419
      %3958 = vmatpush1.bf16.msra.mxu0 %v3418
      %3959 = vmatprep.subr.bf16.mxu0 %v3423
      %3960 = vmatpush1.bf16.msra.mxu0 %v3422
      %3961 = vmatprep.subr.bf16.mxu0 %v3427
      %3962 = vmatpush1.bf16.msra.mxu0 %v3426
      %3963 = vmatprep.subr.bf16.mxu0 %v3431
      %3964 = vmatpush1.bf16.msra.mxu0 %v3430
      %3965 = vmatprep.subr.bf16.mxu0 %v3435
      %3966 = vmatpush1.bf16.msra.mxu0 %v3434
      %3967 = vmatprep.subr.bf16.mxu0 %v3439
      %3968 = vmatpush1.bf16.msra.mxu0 %v3438
      %3969 = vmatprep.subr.bf16.mxu0 %v3443
      %3970 = vmatpush1.bf16.msra.mxu0 %v3442
      %3971 = vmatprep.subr.bf16.mxu0 %v3447
      %3972 = vmatpush1.bf16.msra.mxu0 %v3446
      %3973 = vmatprep.subr.bf16.mxu0 %v3451
      %3974 = vmatpush1.bf16.msra.mxu0 %v3450
      %3975 = vmatprep.subr.bf16.mxu0 %v3455
      %3976 = vmatpush1.bf16.msra.mxu0 %v3454
      %3977 = vmatprep.subr.bf16.mxu0 %v3459
      %3978 = vmatpush1.bf16.msra.mxu0 %v3458
      %3979 = vmatprep.subr.bf16.mxu0 %v3463
      %3980 = vmatpush1.bf16.msra.mxu0 %v3462
      %3981 = vmatprep.subr.bf16.mxu0 %v3467
      %3982 = vmatpush1.bf16.msra.mxu0 %v3466
      %3983 = vmatprep.mubr.bf16.mxu0 %v2683
      %3984 = vmatmul.mubr.bf16.gmra.mrb[0].mxu0 %v2682
      %v3985 = vpop.f32.mrb[0].mxu0
      %v3986 = vadd.f32 %v3633, %v3985
      %v3987 = vpop.f32.mrb[0].mxu0
      %v3988 = vadd.f32 %v3635, %v3987
      %v3989 = vpop.f32.mrb[0].mxu0
      %v3990 = vadd.f32 %v3637, %v3989
      %v3991 = vpop.f32.mrb[0].mxu0
      %v3992 = vadd.f32 %v3639, %v3991
      %3993 = vmatprep.mubr.bf16.mxu0 %v2687
      %3994 = vmatmul.mubr.bf16.gmra.mrb[0].mxu0 %v2686
      %v3995 = vpop.f32.mrb[0].mxu0
      %v3996 = vadd.f32 %v3643, %v3995
      %v3997 = vpop.f32.mrb[0].mxu0
      %v3998 = vadd.f32 %v3645, %v3997
      %v3999 = vpop.f32.mrb[0].mxu0
      %v4000 = vadd.f32 %v3647, %v3999
      %v4001 = vpop.f32.mrb[0].mxu0
      %v4002 = vadd.f32 %v3649, %v4001
      %4003 = vmatprep.mubr.bf16.mxu0 %v2691
      %4004 = vmatmul.mubr.bf16.gmra.mrb[0].mxu0 %v2690
      %v4005 = vpop.f32.mrb[0].mxu0
      %v4006 = vadd.f32 %v3653, %v4005
      %v4007 = vpop.f32.mrb[0].mxu0
      %v4008 = vadd.f32 %v3655, %v4007
      %v4009 = vpop.f32.mrb[0].mxu0
      %v4010 = vadd.f32 %v3657, %v4009
      %v4011 = vpop.f32.mrb[0].mxu0
      %v4012 = vadd.f32 %v3659, %v4011
      %4013 = vmatprep.mubr.bf16.mxu0 %v2695
      %4014 = vmatmul.mubr.bf16.gmra.mrb[0].mxu0 %v2694
      %v4015 = vpop.f32.mrb[0].mxu0
      %v4016 = vadd.f32 %v3663, %v4015
      %v4017 = vpop.f32.mrb[0].mxu0
      %v4018 = vadd.f32 %v3665, %v4017
      %v4019 = vpop.f32.mrb[0].mxu0
      %v4020 = vadd.f32 %v3667, %v4019
      %v4021 = vpop.f32.mrb[0].mxu0
      %v4022 = vadd.f32 %v3669, %v4021
      %4023 = vmatprep.mubr.bf16.mxu0 %v2699
      %4024 = vmatmul.mubr.bf16.gmra.mrb[0].mxu0 %v2698
      %v4025 = vpop.f32.mrb[0].mxu0
      %v4026 = vadd.f32 %v3673, %v4025
      %v4027 = vpop.f32.mrb[0].mxu0
      %v4028 = vadd.f32 %v3675, %v4027
      %v4029 = vpop.f32.mrb[0].mxu0
      %v4030 = vadd.f32 %v3677, %v4029
      %v4031 = vpop.f32.mrb[0].mxu0
      %v4032 = vadd.f32 %v3679, %v4031
      %4033 = vmatprep.mubr.bf16.mxu0 %v2703
      %4034 = vmatmul.mubr.bf16.gmra.mrb[0].mxu0 %v2702
      %v4035 = vpop.f32.mrb[0].mxu0
      %v4036 = vadd.f32 %v3683, %v4035
      %v4037 = vpop.f32.mrb[0].mxu0
      %v4038 = vadd.f32 %v3685, %v4037
      %v4039 = vpop.f32.mrb[0].mxu0
      %v4040 = vadd.f32 %v3687, %v4039
      %v4041 = vpop.f32.mrb[0].mxu0
      %v4042 = vadd.f32 %v3689, %v4041
      %4043 = vmatprep.mubr.bf16.mxu0 %v2707
      %4044 = vmatmul.mubr.bf16.gmra.mrb[0].mxu0 %v2706
      %v4045 = vpop.f32.mrb[0].mxu0
      %v4046 = vadd.f32 %v3693, %v4045
      %v4047 = vpop.f32.mrb[0].mxu0
      %v4048 = vadd.f32 %v3695, %v4047
      %v4049 = vpop.f32.mrb[0].mxu0
      %v4050 = vadd.f32 %v3697, %v4049
      %v4051 = vpop.f32.mrb[0].mxu0
      %v4052 = vadd.f32 %v3699, %v4051
      %4053 = vmatprep.mubr.bf16.mxu0 %v2711
      %4054 = vmatmul.mubr.bf16.gmra.mrb[0].mxu0 %v2710
      %v4055 = vpop.f32.mrb[0].mxu0
      %v4056 = vadd.f32 %v3703, %v4055
      %v4057 = vpop.f32.mrb[0].mxu0
      %v4058 = vadd.f32 %v3705, %v4057
      %v4059 = vpop.f32.mrb[0].mxu0
      %v4060 = vadd.f32 %v3707, %v4059
      %v4061 = vpop.f32.mrb[0].mxu0
      %v4062 = vadd.f32 %v3709, %v4061
      %4063 = vmatprep.mubr.bf16.mxu0 %v2715
      %4064 = vmatmul.mubr.bf16.gmra.mrb[0].mxu0 %v2714
      %v4065 = vpop.f32.mrb[0].mxu0
      %v4066 = vadd.f32 %v3713, %v4065
      %v4067 = vpop.f32.mrb[0].mxu0
      %v4068 = vadd.f32 %v3715, %v4067
      %v4069 = vpop.f32.mrb[0].mxu0
      %v4070 = vadd.f32 %v3717, %v4069
      %v4071 = vpop.f32.mrb[0].mxu0
      %v4072 = vadd.f32 %v3719, %v4071
      %4073 = vmatprep.mubr.bf16.mxu0 %v2719
      %4074 = vmatmul.mubr.bf16.gmra.mrb[0].mxu0 %v2718
      %v4075 = vpop.f32.mrb[0].mxu0
      %v4076 = vadd.f32 %v3723, %v4075
      %v4077 = vpop.f32.mrb[0].mxu0
      %v4078 = vadd.f32 %v3725, %v4077
      %v4079 = vpop.f32.mrb[0].mxu0
      %v4080 = vadd.f32 %v3727, %v4079
      %v4081 = vpop.f32.mrb[0].mxu0
      %v4082 = vadd.f32 %v3729, %v4081
      %4083 = vmatprep.mubr.bf16.mxu0 %v2723
      %4084 = vmatmul.mubr.bf16.gmra.mrb[0].mxu0 %v2722
      %v4085 = vpop.f32.mrb[0].mxu0
      %v4086 = vadd.f32 %v3733, %v4085
      %v4087 = vpop.f32.mrb[0].mxu0
      %v4088 = vadd.f32 %v3735, %v4087
      %v4089 = vpop.f32.mrb[0].mxu0
      %v4090 = vadd.f32 %v3737, %v4089
      %v4091 = vpop.f32.mrb[0].mxu0
      %v4092 = vadd.f32 %v3739, %v4091
      %4093 = vmatprep.mubr.bf16.mxu0 %v2727
      %4094 = vmatmul.mubr.bf16.gmra.mrb[0].mxu0 %v2726
      %v4095 = vpop.f32.mrb[0].mxu0
      %v4096 = vadd.f32 %v3743, %v4095
      %v4097 = vpop.f32.mrb[0].mxu0
      %v4098 = vadd.f32 %v3745, %v4097
      %v4099 = vpop.f32.mrb[0].mxu0
      %v4100 = vadd.f32 %v3747, %v4099
      %v4101 = vpop.f32.mrb[0].mxu0
      %v4102 = vadd.f32 %v3749, %v4101
      %4103 = vmatprep.mubr.bf16.mxu0 %v2731
      %4104 = vmatmul.mubr.bf16.gmra.mrb[0].mxu0 %v2730
      %v4105 = vpop.f32.mrb[0].mxu0
      %v4106 = vadd.f32 %v3753, %v4105
      %v4107 = vpop.f32.mrb[0].mxu0
      %v4108 = vadd.f32 %v3755, %v4107
      %v4109 = vpop.f32.mrb[0].mxu0
      %v4110 = vadd.f32 %v3757, %v4109
      %v4111 = vpop.f32.mrb[0].mxu0
      %v4112 = vadd.f32 %v3759, %v4111
      %4113 = vmatprep.mubr.bf16.mxu0 %v2735
      %4114 = vmatmul.mubr.bf16.gmra.mrb[0].mxu0 %v2734
      %v4115 = vpop.f32.mrb[0].mxu0
      %v4116 = vadd.f32 %v3763, %v4115
      %v4117 = vpop.f32.mrb[0].mxu0
      %v4118 = vadd.f32 %v3765, %v4117
      %v4119 = vpop.f32.mrb[0].mxu0
      %v4120 = vadd.f32 %v3767, %v4119
      %v4121 = vpop.f32.mrb[0].mxu0
      %v4122 = vadd.f32 %v3769, %v4121
      %4123 = vmatprep.mubr.bf16.mxu0 %v2739
      %4124 = vmatmul.mubr.bf16.gmra.mrb[0].mxu0 %v2738
      %v4125 = vpop.f32.mrb[0].mxu0
      %v4126 = vadd.f32 %v3773, %v4125
      %v4127 = vpop.f32.mrb[0].mxu0
      %v4128 = vadd.f32 %v3775, %v4127
      %v4129 = vpop.f32.mrb[0].mxu0
      %v4130 = vadd.f32 %v3777, %v4129
      %v4131 = vpop.f32.mrb[0].mxu0
      %v4132 = vadd.f32 %v3779, %v4131
      %4133 = vmatprep.mubr.bf16.mxu0 %v2743
      %4134 = vmatmul.mubr.bf16.gmra.mrb[0].mxu0 %v2742
      %v4135 = vpop.f32.mrb[0].mxu0
      %v4136 = vadd.f32 %v3783, %v4135
      %v4137 = vpop.f32.mrb[0].mxu0
      %v4138 = vadd.f32 %v3785, %v4137
      %v4139 = vpop.f32.mrb[0].mxu0
      %v4140 = vadd.f32 %v3787, %v4139
      %v4141 = vpop.f32.mrb[0].mxu0
      %v4142 = vadd.f32 %v3789, %v4141
      %4143 = vmatprep.mubr.bf16.mxu0 %v2747
      %4144 = vmatmul.mubr.bf16.gmra.mrb[0].mxu0 %v2746
      %v4145 = vpop.f32.mrb[0].mxu0
      %v4146 = vadd.f32 %v3793, %v4145
      %v4147 = vpop.f32.mrb[0].mxu0
      %v4148 = vadd.f32 %v3795, %v4147
      %v4149 = vpop.f32.mrb[0].mxu0
      %v4150 = vadd.f32 %v3797, %v4149
      %v4151 = vpop.f32.mrb[0].mxu0
      %v4152 = vadd.f32 %v3799, %v4151
      %4153 = vmatprep.mubr.bf16.mxu0 %v2751
      %4154 = vmatmul.mubr.bf16.gmra.mrb[0].mxu0 %v2750
      %v4155 = vpop.f32.mrb[0].mxu0
      %v4156 = vadd.f32 %v3803, %v4155
      %v4157 = vpop.f32.mrb[0].mxu0
      %v4158 = vadd.f32 %v3805, %v4157
      %v4159 = vpop.f32.mrb[0].mxu0
      %v4160 = vadd.f32 %v3807, %v4159
      %v4161 = vpop.f32.mrb[0].mxu0
      %v4162 = vadd.f32 %v3809, %v4161
      %4163 = vmatprep.mubr.bf16.mxu0 %v2755
      %4164 = vmatmul.mubr.bf16.gmra.mrb[0].mxu0 %v2754
      %v4165 = vpop.f32.mrb[0].mxu0
      %v4166 = vadd.f32 %v3813, %v4165
      %v4167 = vpop.f32.mrb[0].mxu0
      %v4168 = vadd.f32 %v3815, %v4167
      %v4169 = vpop.f32.mrb[0].mxu0
      %v4170 = vadd.f32 %v3817, %v4169
      %v4171 = vpop.f32.mrb[0].mxu0
      %v4172 = vadd.f32 %v3819, %v4171
      %4173 = vmatprep.mubr.bf16.mxu0 %v2759
      %4174 = vmatmul.mubr.bf16.gmra.mrb[0].mxu0 %v2758
      %v4175 = vpop.f32.mrb[0].mxu0
      %v4176 = vadd.f32 %v3823, %v4175
      %v4177 = vpop.f32.mrb[0].mxu0
      %v4178 = vadd.f32 %v3825, %v4177
      %v4179 = vpop.f32.mrb[0].mxu0
      %v4180 = vadd.f32 %v3827, %v4179
      %v4181 = vpop.f32.mrb[0].mxu0
      %v4182 = vadd.f32 %v3829, %v4181
      %4183 = vmatprep.mubr.bf16.mxu0 %v2763
      %4184 = vmatmul.mubr.bf16.gmra.mrb[0].mxu0 %v2762
      %v4185 = vpop.f32.mrb[0].mxu0
      %v4186 = vadd.f32 %v3833, %v4185
      %v4187 = vpop.f32.mrb[0].mxu0
      %v4188 = vadd.f32 %v3835, %v4187
      %v4189 = vpop.f32.mrb[0].mxu0
      %v4190 = vadd.f32 %v3837, %v4189
      %v4191 = vpop.f32.mrb[0].mxu0
      %v4192 = vadd.f32 %v3839, %v4191
      %4193 = vmatprep.mubr.bf16.mxu0 %v2767
      %4194 = vmatmul.mubr.bf16.gmra.mrb[0].mxu0 %v2766
      %v4195 = vpop.f32.mrb[0].mxu0
      %v4196 = vadd.f32 %v3843, %v4195
      %v4197 = vpop.f32.mrb[0].mxu0
      %v4198 = vadd.f32 %v3845, %v4197
      %v4199 = vpop.f32.mrb[0].mxu0
      %v4200 = vadd.f32 %v3847, %v4199
      %v4201 = vpop.f32.mrb[0].mxu0
      %v4202 = vadd.f32 %v3849, %v4201
      %4203 = vmatprep.mubr.bf16.mxu0 %v2771
      %4204 = vmatmul.mubr.bf16.gmra.mrb[0].mxu0 %v2770
      %v4205 = vpop.f32.mrb[0].mxu0
      %v4206 = vadd.f32 %v3853, %v4205
      %v4207 = vpop.f32.mrb[0].mxu0
      %v4208 = vadd.f32 %v3855, %v4207
      %v4209 = vpop.f32.mrb[0].mxu0
      %v4210 = vadd.f32 %v3857, %v4209
      %v4211 = vpop.f32.mrb[0].mxu0
      %v4212 = vadd.f32 %v3859, %v4211
      %4213 = vmatprep.mubr.bf16.mxu0 %v2775
      %4214 = vmatmul.mubr.bf16.gmra.mrb[0].mxu0 %v2774
      %v4215 = vpop.f32.mrb[0].mxu0
      %v4216 = vadd.f32 %v3863, %v4215
      %v4217 = vpop.f32.mrb[0].mxu0
      %v4218 = vadd.f32 %v3865, %v4217
      %v4219 = vpop.f32.mrb[0].mxu0
      %v4220 = vadd.f32 %v3867, %v4219
      %v4221 = vpop.f32.mrb[0].mxu0
      %v4222 = vadd.f32 %v3869, %v4221
      %4223 = vmatprep.mubr.bf16.mxu0 %v2779
      %4224 = vmatmul.mubr.bf16.gmra.mrb[0].mxu0 %v2778
      %v4225 = vpop.f32.mrb[0].mxu0
      %v4226 = vadd.f32 %v3873, %v4225
      %v4227 = vpop.f32.mrb[0].mxu0
      %v4228 = vadd.f32 %v3875, %v4227
      %v4229 = vpop.f32.mrb[0].mxu0
      %v4230 = vadd.f32 %v3877, %v4229
      %v4231 = vpop.f32.mrb[0].mxu0
      %v4232 = vadd.f32 %v3879, %v4231
      %4233 = vmatprep.mubr.bf16.mxu0 %v2783
      %4234 = vmatmul.mubr.bf16.gmra.mrb[0].mxu0 %v2782
      %v4235 = vpop.f32.mrb[0].mxu0
      %v4236 = vadd.f32 %v3883, %v4235
      %v4237 = vpop.f32.mrb[0].mxu0
      %v4238 = vadd.f32 %v3885, %v4237
      %v4239 = vpop.f32.mrb[0].mxu0
      %v4240 = vadd.f32 %v3887, %v4239
      %v4241 = vpop.f32.mrb[0].mxu0
      %v4242 = vadd.f32 %v3889, %v4241
      %4243 = vmatprep.mubr.bf16.mxu0 %v2787
      %4244 = vmatmul.mubr.bf16.gmra.mrb[0].mxu0 %v2786
      %v4245 = vpop.f32.mrb[0].mxu0
      %v4246 = vadd.f32 %v3893, %v4245
      %v4247 = vpop.f32.mrb[0].mxu0
      %v4248 = vadd.f32 %v3895, %v4247
      %v4249 = vpop.f32.mrb[0].mxu0
      %v4250 = vadd.f32 %v3897, %v4249
      %v4251 = vpop.f32.mrb[0].mxu0
      %v4252 = vadd.f32 %v3899, %v4251
      %4253 = vmatprep.mubr.bf16.mxu0 %v2791
      %4254 = vmatmul.mubr.bf16.gmra.mrb[0].mxu0 %v2790
      %v4255 = vpop.f32.mrb[0].mxu0
      %v4256 = vadd.f32 %v3903, %v4255
      %v4257 = vpop.f32.mrb[0].mxu0
      %v4258 = vadd.f32 %v3905, %v4257
      %v4259 = vpop.f32.mrb[0].mxu0
      %v4260 = vadd.f32 %v3907, %v4259
      %v4261 = vpop.f32.mrb[0].mxu0
      %v4262 = vadd.f32 %v3909, %v4261
      %4263 = vmatprep.mubr.bf16.mxu0 %v2795
      %4264 = vmatmul.mubr.bf16.gmra.mrb[0].mxu0 %v2794
      %v4265 = vpop.f32.mrb[0].mxu0
      %v4266 = vadd.f32 %v3913, %v4265
      %v4267 = vpop.f32.mrb[0].mxu0
      %v4268 = vadd.f32 %v3915, %v4267
      %v4269 = vpop.f32.mrb[0].mxu0
      %v4270 = vadd.f32 %v3917, %v4269
      %v4271 = vpop.f32.mrb[0].mxu0
      %v4272 = vadd.f32 %v3919, %v4271
      %4273 = vmatprep.mubr.bf16.mxu0 %v2799
      %4274 = vmatmul.mubr.bf16.gmra.mrb[0].mxu0 %v2798
      %v4275 = vpop.f32.mrb[0].mxu0
      %v4276 = vadd.f32 %v3923, %v4275
      %v4277 = vpop.f32.mrb[0].mxu0
      %v4278 = vadd.f32 %v3925, %v4277
      %v4279 = vpop.f32.mrb[0].mxu0
      %v4280 = vadd.f32 %v3927, %v4279
      %v4281 = vpop.f32.mrb[0].mxu0
      %v4282 = vadd.f32 %v3929, %v4281
      %4283 = vmatprep.mubr.bf16.mxu0 %v2803
      %4284 = vmatmul.mubr.bf16.gmra.mrb[0].mxu0 %v2802
      %v4285 = vpop.f32.mrb[0].mxu0
      %v4286 = vadd.f32 %v3933, %v4285
      %v4287 = vpop.f32.mrb[0].mxu0
      %v4288 = vadd.f32 %v3935, %v4287
      %v4289 = vpop.f32.mrb[0].mxu0
      %v4290 = vadd.f32 %v3937, %v4289
      %v4291 = vpop.f32.mrb[0].mxu0
      %v4292 = vadd.f32 %v3939, %v4291
      %4293 = vmatprep.mubr.bf16.mxu0 %v2807
      %4294 = vmatmul.mubr.bf16.gmra.mrb[0].mxu0 %v2806
      %v4295 = vpop.f32.mrb[0].mxu0
      %v4296 = vadd.f32 %v3943, %v4295
      %v4297 = vpop.f32.mrb[0].mxu0
      %v4298 = vadd.f32 %v3945, %v4297
      %v4299 = vpop.f32.mrb[0].mxu0
      %v4300 = vadd.f32 %v3947, %v4299
      %v4301 = vpop.f32.mrb[0].mxu0
      %v4302 = vadd.f32 %v3949, %v4301
      %4303 = vdwg.mxu0
      %4304 = vmatprep.subr.bf16.mxu0 %v3345
      %4305 = vmatpush1.bf16.msra.mxu0 %v3344
      %4306 = vmatprep.subr.bf16.mxu0 %v3349
      %4307 = vmatpush1.bf16.msra.mxu0 %v3348
      %4308 = vmatprep.subr.bf16.mxu0 %v3353
      %4309 = vmatpush1.bf16.msra.mxu0 %v3352
      %4310 = vmatprep.subr.bf16.mxu0 %v3357
      %4311 = vmatpush1.bf16.msra.mxu0 %v3356
      %4312 = vmatprep.subr.bf16.mxu0 %v3361
      %4313 = vmatpush1.bf16.msra.mxu0 %v3360
      %4314 = vmatprep.subr.bf16.mxu0 %v3365
      %4315 = vmatpush1.bf16.msra.mxu0 %v3364
      %4316 = vmatprep.subr.bf16.mxu0 %v3369
      %4317 = vmatpush1.bf16.msra.mxu0 %v3368
      %4318 = vmatprep.subr.bf16.mxu0 %v3373
      %4319 = vmatpush1.bf16.msra.mxu0 %v3372
      %4320 = vmatprep.subr.bf16.mxu0 %v3377
      %4321 = vmatpush1.bf16.msra.mxu0 %v3376
      %4322 = vmatprep.subr.bf16.mxu0 %v3381
      %4323 = vmatpush1.bf16.msra.mxu0 %v3380
      %4324 = vmatprep.subr.bf16.mxu0 %v3385
      %4325 = vmatpush1.bf16.msra.mxu0 %v3384
      %4326 = vmatprep.subr.bf16.mxu0 %v3389
      %4327 = vmatpush1.bf16.msra.mxu0 %v3388
      %4328 = vmatprep.subr.bf16.mxu0 %v3393
      %4329 = vmatpush1.bf16.msra.mxu0 %v3392
      %4330 = vmatprep.subr.bf16.mxu0 %v3397
      %4331 = vmatpush1.bf16.msra.mxu0 %v3396
      %4332 = vmatprep.subr.bf16.mxu0 %v3401
      %4333 = vmatpush1.bf16.msra.mxu0 %v3400
      %4334 = vmatprep.subr.bf16.mxu0 %v3405
      %4335 = vmatpush1.bf16.msra.mxu0 %v3404
      %4336 = vmatprep.mubr.bf16.mxu0 %v2681
      %4337 = vmatmul.mubr.bf16.gmra.mrb[0].mxu0 %v2680
      %v4338 = vpop.f32.mrb[0].mxu0
      %v4339 = vadd.f32 %v2949, %v4338
      %v4340 = vpop.f32.mrb[0].mxu0
      %v4341 = vadd.f32 %v2953, %v4340
      %v4342 = vpop.f32.mrb[0].mxu0
      %v4343 = vadd.f32 %v2949, %v4342
      %v4344 = vpop.f32.mrb[0].mxu0
      %v4345 = vadd.f32 %v2953, %v4344
      %4346 = vmatprep.mubr.bf16.mxu0 %v2685
      %4347 = vmatmul.mubr.bf16.gmra.mrb[0].mxu0 %v2684
      %v4348 = vpop.f32.mrb[0].mxu0
      %v4349 = vadd.f32 %v2949, %v4348
      %v4350 = vpop.f32.mrb[0].mxu0
      %v4351 = vadd.f32 %v2953, %v4350
      %v4352 = vpop.f32.mrb[0].mxu0
      %v4353 = vadd.f32 %v2949, %v4352
      %v4354 = vpop.f32.mrb[0].mxu0
      %v4355 = vadd.f32 %v2953, %v4354
      %4356 = vmatprep.mubr.bf16.mxu0 %v2689
      %4357 = vmatmul.mubr.bf16.gmra.mrb[0].mxu0 %v2688
      %v4358 = vpop.f32.mrb[0].mxu0
      %v4359 = vadd.f32 %v2949, %v4358
      %v4360 = vpop.f32.mrb[0].mxu0
      %v4361 = vadd.f32 %v2953, %v4360
      %v4362 = vpop.f32.mrb[0].mxu0
      %v4363 = vadd.f32 %v2949, %v4362
      %v4364 = vpop.f32.mrb[0].mxu0
      %v4365 = vadd.f32 %v2953, %v4364
      %4366 = vmatprep.mubr.bf16.mxu0 %v2693
      %4367 = vmatmul.mubr.bf16.gmra.mrb[0].mxu0 %v2692
      %v4368 = vpop.f32.mrb[0].mxu0
      %v4369 = vadd.f32 %v2949, %v4368
      %v4370 = vpop.f32.mrb[0].mxu0
      %v4371 = vadd.f32 %v2953, %v4370
      %v4372 = vpop.f32.mrb[0].mxu0
      %v4373 = vadd.f32 %v2949, %v4372
      %v4374 = vpop.f32.mrb[0].mxu0
      %v4375 = vadd.f32 %v2953, %v4374
      %4376 = vmatprep.mubr.bf16.mxu0 %v2697
      %4377 = vmatmul.mubr.bf16.gmra.mrb[0].mxu0 %v2696
      %v4378 = vpop.f32.mrb[0].mxu0
      %v4379 = vadd.f32 %v2949, %v4378
      %v4380 = vpop.f32.mrb[0].mxu0
      %v4381 = vadd.f32 %v2953, %v4380
      %v4382 = vpop.f32.mrb[0].mxu0
      %v4383 = vadd.f32 %v2949, %v4382
      %v4384 = vpop.f32.mrb[0].mxu0
      %v4385 = vadd.f32 %v2953, %v4384
      %4386 = vmatprep.mubr.bf16.mxu0 %v2701
      %4387 = vmatmul.mubr.bf16.gmra.mrb[0].mxu0 %v2700
      %v4388 = vpop.f32.mrb[0].mxu0
      %v4389 = vadd.f32 %v2949, %v4388
      %v4390 = vpop.f32.mrb[0].mxu0
      %v4391 = vadd.f32 %v2953, %v4390
      %v4392 = vpop.f32.mrb[0].mxu0
      %v4393 = vadd.f32 %v2949, %v4392
      %v4394 = vpop.f32.mrb[0].mxu0
      %v4395 = vadd.f32 %v2953, %v4394
      %4396 = vmatprep.mubr.bf16.mxu0 %v2705
      %4397 = vmatmul.mubr.bf16.gmra.mrb[0].mxu0 %v2704
      %v4398 = vpop.f32.mrb[0].mxu0
      %v4399 = vadd.f32 %v2949, %v4398
      %v4400 = vpop.f32.mrb[0].mxu0
      %v4401 = vadd.f32 %v2953, %v4400
      %v4402 = vpop.f32.mrb[0].mxu0
      %v4403 = vadd.f32 %v2949, %v4402
      %v4404 = vpop.f32.mrb[0].mxu0
      %v4405 = vadd.f32 %v2953, %v4404
      %4406 = vmatprep.mubr.bf16.mxu0 %v2709
      %4407 = vmatmul.mubr.bf16.gmra.mrb[0].mxu0 %v2708
      %v4408 = vpop.f32.mrb[0].mxu0
      %v4409 = vadd.f32 %v2949, %v4408
      %v4410 = vpop.f32.mrb[0].mxu0
      %v4411 = vadd.f32 %v2953, %v4410
      %v4412 = vpop.f32.mrb[0].mxu0
      %v4413 = vadd.f32 %v2949, %v4412
      %v4414 = vpop.f32.mrb[0].mxu0
      %v4415 = vadd.f32 %v2953, %v4414
      %4416 = vmatprep.mubr.bf16.mxu0 %v2713
      %4417 = vmatmul.mubr.bf16.gmra.mrb[0].mxu0 %v2712
      %v4418 = vpop.f32.mrb[0].mxu0
      %v4419 = vadd.f32 %v2949, %v4418
      %v4420 = vpop.f32.mrb[0].mxu0
      %v4421 = vadd.f32 %v2953, %v4420
      %v4422 = vpop.f32.mrb[0].mxu0
      %v4423 = vadd.f32 %v2949, %v4422
      %v4424 = vpop.f32.mrb[0].mxu0
      %v4425 = vadd.f32 %v2953, %v4424
      %4426 = vmatprep.mubr.bf16.mxu0 %v2717
      %4427 = vmatmul.mubr.bf16.gmra.mrb[0].mxu0 %v2716
      %v4428 = vpop.f32.mrb[0].mxu0
      %v4429 = vadd.f32 %v2949, %v4428
      %v4430 = vpop.f32.mrb[0].mxu0
      %v4431 = vadd.f32 %v2953, %v4430
      %v4432 = vpop.f32.mrb[0].mxu0
      %v4433 = vadd.f32 %v2949, %v4432
      %v4434 = vpop.f32.mrb[0].mxu0
      %v4435 = vadd.f32 %v2953, %v4434
      %4436 = vmatprep.mubr.bf16.mxu0 %v2721
      %4437 = vmatmul.mubr.bf16.gmra.mrb[0].mxu0 %v2720
      %v4438 = vpop.f32.mrb[0].mxu0
      %v4439 = vadd.f32 %v2949, %v4438
      %v4440 = vpop.f32.mrb[0].mxu0
      %v4441 = vadd.f32 %v2953, %v4440
      %v4442 = vpop.f32.mrb[0].mxu0
      %v4443 = vadd.f32 %v2949, %v4442
      %v4444 = vpop.f32.mrb[0].mxu0
      %v4445 = vadd.f32 %v2953, %v4444
      %4446 = vmatprep.mubr.bf16.mxu0 %v2725
      %4447 = vmatmul.mubr.bf16.gmra.mrb[0].mxu0 %v2724
      %v4448 = vpop.f32.mrb[0].mxu0
      %v4449 = vadd.f32 %v2949, %v4448
      %v4450 = vpop.f32.mrb[0].mxu0
      %v4451 = vadd.f32 %v2953, %v4450
      %v4452 = vpop.f32.mrb[0].mxu0
      %v4453 = vadd.f32 %v2949, %v4452
      %v4454 = vpop.f32.mrb[0].mxu0
      %v4455 = vadd.f32 %v2953, %v4454
      %4456 = vmatprep.mubr.bf16.mxu0 %v2729
      %4457 = vmatmul.mubr.bf16.gmra.mrb[0].mxu0 %v2728
      %v4458 = vpop.f32.mrb[0].mxu0
      %v4459 = vadd.f32 %v2949, %v4458
      %v4460 = vpop.f32.mrb[0].mxu0
      %v4461 = vadd.f32 %v2953, %v4460
      %v4462 = vpop.f32.mrb[0].mxu0
      %v4463 = vadd.f32 %v2949, %v4462
      %v4464 = vpop.f32.mrb[0].mxu0
      %v4465 = vadd.f32 %v2953, %v4464
      %4466 = vmatprep.mubr.bf16.mxu0 %v2733
      %4467 = vmatmul.mubr.bf16.gmra.mrb[0].mxu0 %v2732
      %v4468 = vpop.f32.mrb[0].mxu0
      %v4469 = vadd.f32 %v2949, %v4468
      %v4470 = vpop.f32.mrb[0].mxu0
      %v4471 = vadd.f32 %v2953, %v4470
      %v4472 = vpop.f32.mrb[0].mxu0
      %v4473 = vadd.f32 %v2949, %v4472
      %v4474 = vpop.f32.mrb[0].mxu0
      %v4475 = vadd.f32 %v2953, %v4474
      %4476 = vmatprep.mubr.bf16.mxu0 %v2737
      %4477 = vmatmul.mubr.bf16.gmra.mrb[0].mxu0 %v2736
      %v4478 = vpop.f32.mrb[0].mxu0
      %v4479 = vadd.f32 %v2949, %v4478
      %v4480 = vpop.f32.mrb[0].mxu0
      %v4481 = vadd.f32 %v2953, %v4480
      %v4482 = vpop.f32.mrb[0].mxu0
      %v4483 = vadd.f32 %v2949, %v4482
      %v4484 = vpop.f32.mrb[0].mxu0
      %v4485 = vadd.f32 %v2953, %v4484
      %4486 = vmatprep.mubr.bf16.mxu0 %v2741
      %4487 = vmatmul.mubr.bf16.gmra.mrb[0].mxu0 %v2740
      %v4488 = vpop.f32.mrb[0].mxu0
      %v4489 = vadd.f32 %v2949, %v4488
      %v4490 = vpop.f32.mrb[0].mxu0
      %v4491 = vadd.f32 %v2953, %v4490
      %v4492 = vpop.f32.mrb[0].mxu0
      %v4493 = vadd.f32 %v2949, %v4492
      %v4494 = vpop.f32.mrb[0].mxu0
      %v4495 = vadd.f32 %v2953, %v4494
      %4496 = vmatprep.mubr.bf16.mxu0 %v2745
      %4497 = vmatmul.mubr.bf16.gmra.mrb[0].mxu0 %v2744
      %v4498 = vpop.f32.mrb[0].mxu0
      %v4499 = vadd.f32 %v2949, %v4498
      %v4500 = vpop.f32.mrb[0].mxu0
      %v4501 = vadd.f32 %v2953, %v4500
      %v4502 = vpop.f32.mrb[0].mxu0
      %v4503 = vadd.f32 %v2949, %v4502
      %v4504 = vpop.f32.mrb[0].mxu0
      %v4505 = vadd.f32 %v2953, %v4504
      %4506 = vmatprep.mubr.bf16.mxu0 %v2749
      %4507 = vmatmul.mubr.bf16.gmra.mrb[0].mxu0 %v2748
      %v4508 = vpop.f32.mrb[0].mxu0
      %v4509 = vadd.f32 %v2949, %v4508
      %v4510 = vpop.f32.mrb[0].mxu0
      %v4511 = vadd.f32 %v2953, %v4510
      %v4512 = vpop.f32.mrb[0].mxu0
      %v4513 = vadd.f32 %v2949, %v4512
      %v4514 = vpop.f32.mrb[0].mxu0
      %v4515 = vadd.f32 %v2953, %v4514
      %4516 = vmatprep.mubr.bf16.mxu0 %v2753
      %4517 = vmatmul.mubr.bf16.gmra.mrb[0].mxu0 %v2752
      %v4518 = vpop.f32.mrb[0].mxu0
      %v4519 = vadd.f32 %v2949, %v4518
      %v4520 = vpop.f32.mrb[0].mxu0
      %v4521 = vadd.f32 %v2953, %v4520
      %v4522 = vpop.f32.mrb[0].mxu0
      %v4523 = vadd.f32 %v2949, %v4522
      %v4524 = vpop.f32.mrb[0].mxu0
      %v4525 = vadd.f32 %v2953, %v4524
      %4526 = vmatprep.mubr.bf16.mxu0 %v2757
      %4527 = vmatmul.mubr.bf16.gmra.mrb[0].mxu0 %v2756
      %v4528 = vpop.f32.mrb[0].mxu0
      %v4529 = vadd.f32 %v2949, %v4528
      %v4530 = vpop.f32.mrb[0].mxu0
      %v4531 = vadd.f32 %v2953, %v4530
      %v4532 = vpop.f32.mrb[0].mxu0
      %v4533 = vadd.f32 %v2949, %v4532
      %v4534 = vpop.f32.mrb[0].mxu0
      %v4535 = vadd.f32 %v2953, %v4534
      %4536 = vmatprep.mubr.bf16.mxu0 %v2761
      %4537 = vmatmul.mubr.bf16.gmra.mrb[0].mxu0 %v2760
      %v4538 = vpop.f32.mrb[0].mxu0
      %v4539 = vadd.f32 %v2949, %v4538
      %v4540 = vpop.f32.mrb[0].mxu0
      %v4541 = vadd.f32 %v2953, %v4540
      %v4542 = vpop.f32.mrb[0].mxu0
      %v4543 = vadd.f32 %v2949, %v4542
      %v4544 = vpop.f32.mrb[0].mxu0
      %v4545 = vadd.f32 %v2953, %v4544
      %4546 = vmatprep.mubr.bf16.mxu0 %v2765
      %4547 = vmatmul.mubr.bf16.gmra.mrb[0].mxu0 %v2764
      %v4548 = vpop.f32.mrb[0].mxu0
      %v4549 = vadd.f32 %v2949, %v4548
      %v4550 = vpop.f32.mrb[0].mxu0
      %v4551 = vadd.f32 %v2953, %v4550
      %v4552 = vpop.f32.mrb[0].mxu0
      %v4553 = vadd.f32 %v2949, %v4552
      %v4554 = vpop.f32.mrb[0].mxu0
      %v4555 = vadd.f32 %v2953, %v4554
      %4556 = vmatprep.mubr.bf16.mxu0 %v2769
      %4557 = vmatmul.mubr.bf16.gmra.mrb[0].mxu0 %v2768
      %v4558 = vpop.f32.mrb[0].mxu0
      %v4559 = vadd.f32 %v2949, %v4558
      %v4560 = vpop.f32.mrb[0].mxu0
      %v4561 = vadd.f32 %v2953, %v4560
      %v4562 = vpop.f32.mrb[0].mxu0
      %v4563 = vadd.f32 %v2949, %v4562
      %v4564 = vpop.f32.mrb[0].mxu0
      %v4565 = vadd.f32 %v2953, %v4564
      %4566 = vmatprep.mubr.bf16.mxu0 %v2773
      %4567 = vmatmul.mubr.bf16.gmra.mrb[0].mxu0 %v2772
      %v4568 = vpop.f32.mrb[0].mxu0
      %v4569 = vadd.f32 %v2949, %v4568
      %v4570 = vpop.f32.mrb[0].mxu0
      %v4571 = vadd.f32 %v2953, %v4570
      %v4572 = vpop.f32.mrb[0].mxu0
      %v4573 = vadd.f32 %v2949, %v4572
      %v4574 = vpop.f32.mrb[0].mxu0
      %v4575 = vadd.f32 %v2953, %v4574
      %4576 = vmatprep.mubr.bf16.mxu0 %v2777
      %4577 = vmatmul.mubr.bf16.gmra.mrb[0].mxu0 %v2776
      %v4578 = vpop.f32.mrb[0].mxu0
      %v4579 = vadd.f32 %v2949, %v4578
      %v4580 = vpop.f32.mrb[0].mxu0
      %v4581 = vadd.f32 %v2953, %v4580
      %v4582 = vpop.f32.mrb[0].mxu0
      %v4583 = vadd.f32 %v2949, %v4582
      %v4584 = vpop.f32.mrb[0].mxu0
      %v4585 = vadd.f32 %v2953, %v4584
      %4586 = vmatprep.mubr.bf16.mxu0 %v2781
      %4587 = vmatmul.mubr.bf16.gmra.mrb[0].mxu0 %v2780
      %v4588 = vpop.f32.mrb[0].mxu0
      %v4589 = vadd.f32 %v2949, %v4588
      %v4590 = vpop.f32.mrb[0].mxu0
      %v4591 = vadd.f32 %v2953, %v4590
      %v4592 = vpop.f32.mrb[0].mxu0
      %v4593 = vadd.f32 %v2949, %v4592
      %v4594 = vpop.f32.mrb[0].mxu0
      %v4595 = vadd.f32 %v2953, %v4594
      %4596 = vmatprep.mubr.bf16.mxu0 %v2785
      %4597 = vmatmul.mubr.bf16.gmra.mrb[0].mxu0 %v2784
      %v4598 = vpop.f32.mrb[0].mxu0
      %v4599 = vadd.f32 %v2949, %v4598
      %v4600 = vpop.f32.mrb[0].mxu0
      %v4601 = vadd.f32 %v2953, %v4600
      %v4602 = vpop.f32.mrb[0].mxu0
      %v4603 = vadd.f32 %v2949, %v4602
      %v4604 = vpop.f32.mrb[0].mxu0
      %v4605 = vadd.f32 %v2953, %v4604
      %4606 = vmatprep.mubr.bf16.mxu0 %v2789
      %4607 = vmatmul.mubr.bf16.gmra.mrb[0].mxu0 %v2788
      %v4608 = vpop.f32.mrb[0].mxu0
      %v4609 = vadd.f32 %v2949, %v4608
      %v4610 = vpop.f32.mrb[0].mxu0
      %v4611 = vadd.f32 %v2953, %v4610
      %v4612 = vpop.f32.mrb[0].mxu0
      %v4613 = vadd.f32 %v2949, %v4612
      %v4614 = vpop.f32.mrb[0].mxu0
      %v4615 = vadd.f32 %v2953, %v4614
      %4616 = vmatprep.mubr.bf16.mxu0 %v2793
      %4617 = vmatmul.mubr.bf16.gmra.mrb[0].mxu0 %v2792
      %v4618 = vpop.f32.mrb[0].mxu0
      %v4619 = vadd.f32 %v2949, %v4618
      %v4620 = vpop.f32.mrb[0].mxu0
      %v4621 = vadd.f32 %v2953, %v4620
      %v4622 = vpop.f32.mrb[0].mxu0
      %v4623 = vadd.f32 %v2949, %v4622
      %v4624 = vpop.f32.mrb[0].mxu0
      %v4625 = vadd.f32 %v2953, %v4624
      %4626 = vmatprep.mubr.bf16.mxu0 %v2797
      %4627 = vmatmul.mubr.bf16.gmra.mrb[0].mxu0 %v2796
      %v4628 = vpop.f32.mrb[0].mxu0
      %v4629 = vadd.f32 %v2949, %v4628
      %v4630 = vpop.f32.mrb[0].mxu0
      %v4631 = vadd.f32 %v2953, %v4630
      %v4632 = vpop.f32.mrb[0].mxu0
      %v4633 = vadd.f32 %v2949, %v4632
      %v4634 = vpop.f32.mrb[0].mxu0
      %v4635 = vadd.f32 %v2953, %v4634
      %4636 = vmatprep.mubr.bf16.mxu0 %v2801
      %4637 = vmatmul.mubr.bf16.gmra.mrb[0].mxu0 %v2800
      %v4638 = vpop.f32.mrb[0].mxu0
      %v4639 = vadd.f32 %v2949, %v4638
      %v4640 = vpop.f32.mrb[0].mxu0
      %v4641 = vadd.f32 %v2953, %v4640
      %v4642 = vpop.f32.mrb[0].mxu0
      %v4643 = vadd.f32 %v2949, %v4642
      %v4644 = vpop.f32.mrb[0].mxu0
      %v4645 = vadd.f32 %v2953, %v4644
      %4646 = vmatprep.mubr.bf16.mxu0 %v2805
      %4647 = vmatmul.mubr.bf16.gmra.mrb[0].mxu0 %v2804
      %v4648 = vpop.f32.mrb[0].mxu0
      %v4649 = vadd.f32 %v2949, %v4648
      %v4650 = vpop.f32.mrb[0].mxu0
      %v4651 = vadd.f32 %v2953, %v4650
      %v4652 = vpop.f32.mrb[0].mxu0
      %v4653 = vadd.f32 %v2949, %v4652
      %v4654 = vpop.f32.mrb[0].mxu0
      %v4655 = vadd.f32 %v2953, %v4654
      %4656 = vdwg.mxu0
      %4657 = vmatprep.subr.bf16.mxu0 %v3409
      %4658 = vmatpush1.bf16.msra.mxu0 %v3408
      %4659 = vmatprep.subr.bf16.mxu0 %v3413
      %4660 = vmatpush1.bf16.msra.mxu0 %v3412
      %4661 = vmatprep.subr.bf16.mxu0 %v3417
      %4662 = vmatpush1.bf16.msra.mxu0 %v3416
      %4663 = vmatprep.subr.bf16.mxu0 %v3421
      %4664 = vmatpush1.bf16.msra.mxu0 %v3420
      %4665 = vmatprep.subr.bf16.mxu0 %v3425
      %4666 = vmatpush1.bf16.msra.mxu0 %v3424
      %4667 = vmatprep.subr.bf16.mxu0 %v3429
      %4668 = vmatpush1.bf16.msra.mxu0 %v3428
      %4669 = vmatprep.subr.bf16.mxu0 %v3433
      %4670 = vmatpush1.bf16.msra.mxu0 %v3432
      %4671 = vmatprep.subr.bf16.mxu0 %v3437
      %4672 = vmatpush1.bf16.msra.mxu0 %v3436
      %4673 = vmatprep.subr.bf16.mxu0 %v3441
      %4674 = vmatpush1.bf16.msra.mxu0 %v3440
      %4675 = vmatprep.subr.bf16.mxu0 %v3445
      %4676 = vmatpush1.bf16.msra.mxu0 %v3444
      %4677 = vmatprep.subr.bf16.mxu0 %v3449
      %4678 = vmatpush1.bf16.msra.mxu0 %v3448
      %4679 = vmatprep.subr.bf16.mxu0 %v3453
      %4680 = vmatpush1.bf16.msra.mxu0 %v3452
      %4681 = vmatprep.subr.bf16.mxu0 %v3457
      %4682 = vmatpush1.bf16.msra.mxu0 %v3456
      %4683 = vmatprep.subr.bf16.mxu0 %v3461
      %4684 = vmatpush1.bf16.msra.mxu0 %v3460
      %4685 = vmatprep.subr.bf16.mxu0 %v3465
      %4686 = vmatpush1.bf16.msra.mxu0 %v3464
      %4687 = vmatprep.subr.bf16.mxu0 %v3469
      %4688 = vmatpush1.bf16.msra.mxu0 %v3468
      %4689 = vmatprep.mubr.bf16.mxu0 %v2683
      %4690 = vmatmul.mubr.bf16.gmra.mrb[0].mxu0 %v2682
      %v4691 = vpop.f32.mrb[0].mxu0
      %v4692 = vadd.f32 %v4339, %v4691
      %v4693 = vpop.f32.mrb[0].mxu0
      %v4694 = vadd.f32 %v4341, %v4693
      %v4695 = vpop.f32.mrb[0].mxu0
      %v4696 = vadd.f32 %v4343, %v4695
      %v4697 = vpop.f32.mrb[0].mxu0
      %v4698 = vadd.f32 %v4345, %v4697
      %4699 = vmatprep.mubr.bf16.mxu0 %v2687
      %4700 = vmatmul.mubr.bf16.gmra.mrb[0].mxu0 %v2686
      %v4701 = vpop.f32.mrb[0].mxu0
      %v4702 = vadd.f32 %v4349, %v4701
      %v4703 = vpop.f32.mrb[0].mxu0
      %v4704 = vadd.f32 %v4351, %v4703
      %v4705 = vpop.f32.mrb[0].mxu0
      %v4706 = vadd.f32 %v4353, %v4705
      %v4707 = vpop.f32.mrb[0].mxu0
      %v4708 = vadd.f32 %v4355, %v4707
      %4709 = vmatprep.mubr.bf16.mxu0 %v2691
      %4710 = vmatmul.mubr.bf16.gmra.mrb[0].mxu0 %v2690
      %v4711 = vpop.f32.mrb[0].mxu0
      %v4712 = vadd.f32 %v4359, %v4711
      %v4713 = vpop.f32.mrb[0].mxu0
      %v4714 = vadd.f32 %v4361, %v4713
      %v4715 = vpop.f32.mrb[0].mxu0
      %v4716 = vadd.f32 %v4363, %v4715
      %v4717 = vpop.f32.mrb[0].mxu0
      %v4718 = vadd.f32 %v4365, %v4717
      %4719 = vmatprep.mubr.bf16.mxu0 %v2695
      %4720 = vmatmul.mubr.bf16.gmra.mrb[0].mxu0 %v2694
      %v4721 = vpop.f32.mrb[0].mxu0
      %v4722 = vadd.f32 %v4369, %v4721
      %v4723 = vpop.f32.mrb[0].mxu0
      %v4724 = vadd.f32 %v4371, %v4723
      %v4725 = vpop.f32.mrb[0].mxu0
      %v4726 = vadd.f32 %v4373, %v4725
      %v4727 = vpop.f32.mrb[0].mxu0
      %v4728 = vadd.f32 %v4375, %v4727
      %4729 = vmatprep.mubr.bf16.mxu0 %v2699
      %4730 = vmatmul.mubr.bf16.gmra.mrb[0].mxu0 %v2698
      %v4731 = vpop.f32.mrb[0].mxu0
      %v4732 = vadd.f32 %v4379, %v4731
      %v4733 = vpop.f32.mrb[0].mxu0
      %v4734 = vadd.f32 %v4381, %v4733
      %v4735 = vpop.f32.mrb[0].mxu0
      %v4736 = vadd.f32 %v4383, %v4735
      %v4737 = vpop.f32.mrb[0].mxu0
      %v4738 = vadd.f32 %v4385, %v4737
      %4739 = vmatprep.mubr.bf16.mxu0 %v2703
      %4740 = vmatmul.mubr.bf16.gmra.mrb[0].mxu0 %v2702
      %v4741 = vpop.f32.mrb[0].mxu0
      %v4742 = vadd.f32 %v4389, %v4741
      %v4743 = vpop.f32.mrb[0].mxu0
      %v4744 = vadd.f32 %v4391, %v4743
      %v4745 = vpop.f32.mrb[0].mxu0
      %v4746 = vadd.f32 %v4393, %v4745
      %v4747 = vpop.f32.mrb[0].mxu0
      %v4748 = vadd.f32 %v4395, %v4747
      %4749 = vmatprep.mubr.bf16.mxu0 %v2707
      %4750 = vmatmul.mubr.bf16.gmra.mrb[0].mxu0 %v2706
      %v4751 = vpop.f32.mrb[0].mxu0
      %v4752 = vadd.f32 %v4399, %v4751
      %v4753 = vpop.f32.mrb[0].mxu0
      %v4754 = vadd.f32 %v4401, %v4753
      %v4755 = vpop.f32.mrb[0].mxu0
      %v4756 = vadd.f32 %v4403, %v4755
      %v4757 = vpop.f32.mrb[0].mxu0
      %v4758 = vadd.f32 %v4405, %v4757
      %4759 = vmatprep.mubr.bf16.mxu0 %v2711
      %4760 = vmatmul.mubr.bf16.gmra.mrb[0].mxu0 %v2710
      %v4761 = vpop.f32.mrb[0].mxu0
      %v4762 = vadd.f32 %v4409, %v4761
      %v4763 = vpop.f32.mrb[0].mxu0
      %v4764 = vadd.f32 %v4411, %v4763
      %v4765 = vpop.f32.mrb[0].mxu0
      %v4766 = vadd.f32 %v4413, %v4765
      %v4767 = vpop.f32.mrb[0].mxu0
      %v4768 = vadd.f32 %v4415, %v4767
      %4769 = vmatprep.mubr.bf16.mxu0 %v2715
      %4770 = vmatmul.mubr.bf16.gmra.mrb[0].mxu0 %v2714
      %v4771 = vpop.f32.mrb[0].mxu0
      %v4772 = vadd.f32 %v4419, %v4771
      %v4773 = vpop.f32.mrb[0].mxu0
      %v4774 = vadd.f32 %v4421, %v4773
      %v4775 = vpop.f32.mrb[0].mxu0
      %v4776 = vadd.f32 %v4423, %v4775
      %v4777 = vpop.f32.mrb[0].mxu0
      %v4778 = vadd.f32 %v4425, %v4777
      %4779 = vmatprep.mubr.bf16.mxu0 %v2719
      %4780 = vmatmul.mubr.bf16.gmra.mrb[0].mxu0 %v2718
      %v4781 = vpop.f32.mrb[0].mxu0
      %v4782 = vadd.f32 %v4429, %v4781
      %v4783 = vpop.f32.mrb[0].mxu0
      %v4784 = vadd.f32 %v4431, %v4783
      %v4785 = vpop.f32.mrb[0].mxu0
      %v4786 = vadd.f32 %v4433, %v4785
      %v4787 = vpop.f32.mrb[0].mxu0
      %v4788 = vadd.f32 %v4435, %v4787
      %4789 = vmatprep.mubr.bf16.mxu0 %v2723
      %4790 = vmatmul.mubr.bf16.gmra.mrb[0].mxu0 %v2722
      %v4791 = vpop.f32.mrb[0].mxu0
      %v4792 = vadd.f32 %v4439, %v4791
      %v4793 = vpop.f32.mrb[0].mxu0
      %v4794 = vadd.f32 %v4441, %v4793
      %v4795 = vpop.f32.mrb[0].mxu0
      %v4796 = vadd.f32 %v4443, %v4795
      %v4797 = vpop.f32.mrb[0].mxu0
      %v4798 = vadd.f32 %v4445, %v4797
      %4799 = vmatprep.mubr.bf16.mxu0 %v2727
      %4800 = vmatmul.mubr.bf16.gmra.mrb[0].mxu0 %v2726
      %v4801 = vpop.f32.mrb[0].mxu0
      %v4802 = vadd.f32 %v4449, %v4801
      %v4803 = vpop.f32.mrb[0].mxu0
      %v4804 = vadd.f32 %v4451, %v4803
      %v4805 = vpop.f32.mrb[0].mxu0
      %v4806 = vadd.f32 %v4453, %v4805
      %v4807 = vpop.f32.mrb[0].mxu0
      %v4808 = vadd.f32 %v4455, %v4807
      %4809 = vmatprep.mubr.bf16.mxu0 %v2731
      %4810 = vmatmul.mubr.bf16.gmra.mrb[0].mxu0 %v2730
      %v4811 = vpop.f32.mrb[0].mxu0
      %v4812 = vadd.f32 %v4459, %v4811
      %v4813 = vpop.f32.mrb[0].mxu0
      %v4814 = vadd.f32 %v4461, %v4813
      %v4815 = vpop.f32.mrb[0].mxu0
      %v4816 = vadd.f32 %v4463, %v4815
      %v4817 = vpop.f32.mrb[0].mxu0
      %v4818 = vadd.f32 %v4465, %v4817
      %4819 = vmatprep.mubr.bf16.mxu0 %v2735
      %4820 = vmatmul.mubr.bf16.gmra.mrb[0].mxu0 %v2734
      %v4821 = vpop.f32.mrb[0].mxu0
      %v4822 = vadd.f32 %v4469, %v4821
      %v4823 = vpop.f32.mrb[0].mxu0
      %v4824 = vadd.f32 %v4471, %v4823
      %v4825 = vpop.f32.mrb[0].mxu0
      %v4826 = vadd.f32 %v4473, %v4825
      %v4827 = vpop.f32.mrb[0].mxu0
      %v4828 = vadd.f32 %v4475, %v4827
      %4829 = vmatprep.mubr.bf16.mxu0 %v2739
      %4830 = vmatmul.mubr.bf16.gmra.mrb[0].mxu0 %v2738
      %v4831 = vpop.f32.mrb[0].mxu0
      %v4832 = vadd.f32 %v4479, %v4831
      %v4833 = vpop.f32.mrb[0].mxu0
      %v4834 = vadd.f32 %v4481, %v4833
      %v4835 = vpop.f32.mrb[0].mxu0
      %v4836 = vadd.f32 %v4483, %v4835
      %v4837 = vpop.f32.mrb[0].mxu0
      %v4838 = vadd.f32 %v4485, %v4837
      %4839 = vmatprep.mubr.bf16.mxu0 %v2743
      %4840 = vmatmul.mubr.bf16.gmra.mrb[0].mxu0 %v2742
      %v4841 = vpop.f32.mrb[0].mxu0
      %v4842 = vadd.f32 %v4489, %v4841
      %v4843 = vpop.f32.mrb[0].mxu0
      %v4844 = vadd.f32 %v4491, %v4843
      %v4845 = vpop.f32.mrb[0].mxu0
      %v4846 = vadd.f32 %v4493, %v4845
      %v4847 = vpop.f32.mrb[0].mxu0
      %v4848 = vadd.f32 %v4495, %v4847
      %4849 = vmatprep.mubr.bf16.mxu0 %v2747
      %4850 = vmatmul.mubr.bf16.gmra.mrb[0].mxu0 %v2746
      %v4851 = vpop.f32.mrb[0].mxu0
      %v4852 = vadd.f32 %v4499, %v4851
      %v4853 = vpop.f32.mrb[0].mxu0
      %v4854 = vadd.f32 %v4501, %v4853
      %v4855 = vpop.f32.mrb[0].mxu0
      %v4856 = vadd.f32 %v4503, %v4855
      %v4857 = vpop.f32.mrb[0].mxu0
      %v4858 = vadd.f32 %v4505, %v4857
      %4859 = vmatprep.mubr.bf16.mxu0 %v2751
      %4860 = vmatmul.mubr.bf16.gmra.mrb[0].mxu0 %v2750
      %v4861 = vpop.f32.mrb[0].mxu0
      %v4862 = vadd.f32 %v4509, %v4861
      %v4863 = vpop.f32.mrb[0].mxu0
      %v4864 = vadd.f32 %v4511, %v4863
      %v4865 = vpop.f32.mrb[0].mxu0
      %v4866 = vadd.f32 %v4513, %v4865
      %v4867 = vpop.f32.mrb[0].mxu0
      %v4868 = vadd.f32 %v4515, %v4867
      %4869 = vmatprep.mubr.bf16.mxu0 %v2755
      %4870 = vmatmul.mubr.bf16.gmra.mrb[0].mxu0 %v2754
      %v4871 = vpop.f32.mrb[0].mxu0
      %v4872 = vadd.f32 %v4519, %v4871
      %v4873 = vpop.f32.mrb[0].mxu0
      %v4874 = vadd.f32 %v4521, %v4873
      %v4875 = vpop.f32.mrb[0].mxu0
      %v4876 = vadd.f32 %v4523, %v4875
      %v4877 = vpop.f32.mrb[0].mxu0
      %v4878 = vadd.f32 %v4525, %v4877
      %4879 = vmatprep.mubr.bf16.mxu0 %v2759
      %4880 = vmatmul.mubr.bf16.gmra.mrb[0].mxu0 %v2758
      %v4881 = vpop.f32.mrb[0].mxu0
      %v4882 = vadd.f32 %v4529, %v4881
      %v4883 = vpop.f32.mrb[0].mxu0
      %v4884 = vadd.f32 %v4531, %v4883
      %v4885 = vpop.f32.mrb[0].mxu0
      %v4886 = vadd.f32 %v4533, %v4885
      %v4887 = vpop.f32.mrb[0].mxu0
      %v4888 = vadd.f32 %v4535, %v4887
      %4889 = vmatprep.mubr.bf16.mxu0 %v2763
      %4890 = vmatmul.mubr.bf16.gmra.mrb[0].mxu0 %v2762
      %v4891 = vpop.f32.mrb[0].mxu0
      %v4892 = vadd.f32 %v4539, %v4891
      %v4893 = vpop.f32.mrb[0].mxu0
      %v4894 = vadd.f32 %v4541, %v4893
      %v4895 = vpop.f32.mrb[0].mxu0
      %v4896 = vadd.f32 %v4543, %v4895
      %v4897 = vpop.f32.mrb[0].mxu0
      %v4898 = vadd.f32 %v4545, %v4897
      %4899 = vmatprep.mubr.bf16.mxu0 %v2767
      %4900 = vmatmul.mubr.bf16.gmra.mrb[0].mxu0 %v2766
      %v4901 = vpop.f32.mrb[0].mxu0
      %v4902 = vadd.f32 %v4549, %v4901
      %v4903 = vpop.f32.mrb[0].mxu0
      %v4904 = vadd.f32 %v4551, %v4903
      %v4905 = vpop.f32.mrb[0].mxu0
      %v4906 = vadd.f32 %v4553, %v4905
      %v4907 = vpop.f32.mrb[0].mxu0
      %v4908 = vadd.f32 %v4555, %v4907
      %4909 = vmatprep.mubr.bf16.mxu0 %v2771
      %4910 = vmatmul.mubr.bf16.gmra.mrb[0].mxu0 %v2770
      %v4911 = vpop.f32.mrb[0].mxu0
      %v4912 = vadd.f32 %v4559, %v4911
      %v4913 = vpop.f32.mrb[0].mxu0
      %v4914 = vadd.f32 %v4561, %v4913
      %v4915 = vpop.f32.mrb[0].mxu0
      %v4916 = vadd.f32 %v4563, %v4915
      %v4917 = vpop.f32.mrb[0].mxu0
      %v4918 = vadd.f32 %v4565, %v4917
      %4919 = vmatprep.mubr.bf16.mxu0 %v2775
      %4920 = vmatmul.mubr.bf16.gmra.mrb[0].mxu0 %v2774
      %v4921 = vpop.f32.mrb[0].mxu0
      %v4922 = vadd.f32 %v4569, %v4921
      %v4923 = vpop.f32.mrb[0].mxu0
      %v4924 = vadd.f32 %v4571, %v4923
      %v4925 = vpop.f32.mrb[0].mxu0
      %v4926 = vadd.f32 %v4573, %v4925
      %v4927 = vpop.f32.mrb[0].mxu0
      %v4928 = vadd.f32 %v4575, %v4927
      %4929 = vmatprep.mubr.bf16.mxu0 %v2779
      %4930 = vmatmul.mubr.bf16.gmra.mrb[0].mxu0 %v2778
      %v4931 = vpop.f32.mrb[0].mxu0
      %v4932 = vadd.f32 %v4579, %v4931
      %v4933 = vpop.f32.mrb[0].mxu0
      %v4934 = vadd.f32 %v4581, %v4933
      %v4935 = vpop.f32.mrb[0].mxu0
      %v4936 = vadd.f32 %v4583, %v4935
      %v4937 = vpop.f32.mrb[0].mxu0
      %v4938 = vadd.f32 %v4585, %v4937
      %4939 = vmatprep.mubr.bf16.mxu0 %v2783
      %4940 = vmatmul.mubr.bf16.gmra.mrb[0].mxu0 %v2782
      %v4941 = vpop.f32.mrb[0].mxu0
      %v4942 = vadd.f32 %v4589, %v4941
      %v4943 = vpop.f32.mrb[0].mxu0
      %v4944 = vadd.f32 %v4591, %v4943
      %v4945 = vpop.f32.mrb[0].mxu0
      %v4946 = vadd.f32 %v4593, %v4945
      %v4947 = vpop.f32.mrb[0].mxu0
      %v4948 = vadd.f32 %v4595, %v4947
      %4949 = vmatprep.mubr.bf16.mxu0 %v2787
      %4950 = vmatmul.mubr.bf16.gmra.mrb[0].mxu0 %v2786
      %v4951 = vpop.f32.mrb[0].mxu0
      %v4952 = vadd.f32 %v4599, %v4951
      %v4953 = vpop.f32.mrb[0].mxu0
      %v4954 = vadd.f32 %v4601, %v4953
      %v4955 = vpop.f32.mrb[0].mxu0
      %v4956 = vadd.f32 %v4603, %v4955
      %v4957 = vpop.f32.mrb[0].mxu0
      %v4958 = vadd.f32 %v4605, %v4957
      %4959 = vmatprep.mubr.bf16.mxu0 %v2791
      %4960 = vmatmul.mubr.bf16.gmra.mrb[0].mxu0 %v2790
      %v4961 = vpop.f32.mrb[0].mxu0
      %v4962 = vadd.f32 %v4609, %v4961
      %v4963 = vpop.f32.mrb[0].mxu0
      %v4964 = vadd.f32 %v4611, %v4963
      %v4965 = vpop.f32.mrb[0].mxu0
      %v4966 = vadd.f32 %v4613, %v4965
      %v4967 = vpop.f32.mrb[0].mxu0
      %v4968 = vadd.f32 %v4615, %v4967
      %4969 = vmatprep.mubr.bf16.mxu0 %v2795
      %4970 = vmatmul.mubr.bf16.gmra.mrb[0].mxu0 %v2794
      %v4971 = vpop.f32.mrb[0].mxu0
      %v4972 = vadd.f32 %v4619, %v4971
      %v4973 = vpop.f32.mrb[0].mxu0
      %v4974 = vadd.f32 %v4621, %v4973
      %v4975 = vpop.f32.mrb[0].mxu0
      %v4976 = vadd.f32 %v4623, %v4975
      %v4977 = vpop.f32.mrb[0].mxu0
      %v4978 = vadd.f32 %v4625, %v4977
      %4979 = vmatprep.mubr.bf16.mxu0 %v2799
      %4980 = vmatmul.mubr.bf16.gmra.mrb[0].mxu0 %v2798
      %v4981 = vpop.f32.mrb[0].mxu0
      %v4982 = vadd.f32 %v4629, %v4981
      %v4983 = vpop.f32.mrb[0].mxu0
      %v4984 = vadd.f32 %v4631, %v4983
      %v4985 = vpop.f32.mrb[0].mxu0
      %v4986 = vadd.f32 %v4633, %v4985
      %v4987 = vpop.f32.mrb[0].mxu0
      %v4988 = vadd.f32 %v4635, %v4987
      %4989 = vmatprep.mubr.bf16.mxu0 %v2803
      %4990 = vmatmul.mubr.bf16.gmra.mrb[0].mxu0 %v2802
      %v4991 = vpop.f32.mrb[0].mxu0
      %v4992 = vadd.f32 %v4639, %v4991
      %v4993 = vpop.f32.mrb[0].mxu0
      %v4994 = vadd.f32 %v4641, %v4993
      %v4995 = vpop.f32.mrb[0].mxu0
      %v4996 = vadd.f32 %v4643, %v4995
      %v4997 = vpop.f32.mrb[0].mxu0
      %v4998 = vadd.f32 %v4645, %v4997
      %4999 = vmatprep.mubr.bf16.mxu0 %v2807
      %5000 = vmatmul.mubr.bf16.gmra.mrb[0].mxu0 %v2806
      %v5001 = vpop.f32.mrb[0].mxu0
      %v5002 = vadd.f32 %v4649, %v5001
      %v5003 = vpop.f32.mrb[0].mxu0
      %v5004 = vadd.f32 %v4651, %v5003
      %v5005 = vpop.f32.mrb[0].mxu0
      %v5006 = vadd.f32 %v4653, %v5005
      %v5007 = vpop.f32.mrb[0].mxu0
      %v5008 = vadd.f32 %v4655, %v5007
      %5009 = vdwg.mxu0
      %v5010 = vmul.f32 %v3986, 0.5
      %v5011 = vmul.f32 %v3988, 0.5
      %v5012 = vmul.f32 %v4692, 0.5
      %v5013 = vmul.f32 %v4694, 0.5
      %v5014 = vmul.f32 %v3990, 0.5
      %v5015 = vmul.f32 %v3992, 0.5
      %v5016 = vmul.f32 %v4696, 0.5
      %v5017 = vmul.f32 %v4698, 0.5
      %v5018 = vmul.f32 %v3996, 0.5
      %v5019 = vmul.f32 %v3998, 0.5
      %v5020 = vmul.f32 %v4702, 0.5
      %v5021 = vmul.f32 %v4704, 0.5
      %v5022 = vmul.f32 %v4000, 0.5
      %v5023 = vmul.f32 %v4002, 0.5
      %v5024 = vmul.f32 %v4706, 0.5
      %v5025 = vmul.f32 %v4708, 0.5
      %v5026 = vmul.f32 %v4006, 0.5
      %v5027 = vmul.f32 %v4008, 0.5
      %v5028 = vmul.f32 %v4712, 0.5
      %v5029 = vmul.f32 %v4714, 0.5
      %v5030 = vmul.f32 %v4010, 0.5
      %v5031 = vmul.f32 %v4012, 0.5
      %v5032 = vmul.f32 %v4716, 0.5
      %v5033 = vmul.f32 %v4718, 0.5
      %v5034 = vmul.f32 %v4016, 0.5
      %v5035 = vmul.f32 %v4018, 0.5
      %v5036 = vmul.f32 %v4722, 0.5
      %v5037 = vmul.f32 %v4724, 0.5
      %v5038 = vmul.f32 %v4020, 0.5
      %v5039 = vmul.f32 %v4022, 0.5
      %v5040 = vmul.f32 %v4726, 0.5
      %v5041 = vmul.f32 %v4728, 0.5
      %v5042 = vmul.f32 %v4026, 0.5
      %v5043 = vmul.f32 %v4028, 0.5
      %v5044 = vmul.f32 %v4732, 0.5
      %v5045 = vmul.f32 %v4734, 0.5
      %v5046 = vmul.f32 %v4030, 0.5
      %v5047 = vmul.f32 %v4032, 0.5
      %v5048 = vmul.f32 %v4736, 0.5
      %v5049 = vmul.f32 %v4738, 0.5
      %v5050 = vmul.f32 %v4036, 0.5
      %v5051 = vmul.f32 %v4038, 0.5
      %v5052 = vmul.f32 %v4742, 0.5
      %v5053 = vmul.f32 %v4744, 0.5
      %v5054 = vmul.f32 %v4040, 0.5
      %v5055 = vmul.f32 %v4042, 0.5
      %v5056 = vmul.f32 %v4746, 0.5
      %v5057 = vmul.f32 %v4748, 0.5
      %v5058 = vmul.f32 %v4046, 0.5
      %v5059 = vmul.f32 %v4048, 0.5
      %v5060 = vmul.f32 %v4752, 0.5
      %v5061 = vmul.f32 %v4754, 0.5
      %v5062 = vmul.f32 %v4050, 0.5
      %v5063 = vmul.f32 %v4052, 0.5
      %v5064 = vmul.f32 %v4756, 0.5
      %v5065 = vmul.f32 %v4758, 0.5
      %v5066 = vmul.f32 %v4056, 0.5
      %v5067 = vmul.f32 %v4058, 0.5
      %v5068 = vmul.f32 %v4762, 0.5
      %v5069 = vmul.f32 %v4764, 0.5
      %v5070 = vmul.f32 %v4060, 0.5
      %v5071 = vmul.f32 %v4062, 0.5
      %v5072 = vmul.f32 %v4766, 0.5
      %v5073 = vmul.f32 %v4768, 0.5
      %v5074 = vmul.f32 %v4066, 0.5
      %v5075 = vmul.f32 %v4068, 0.5
      %v5076 = vmul.f32 %v4772, 0.5
      %v5077 = vmul.f32 %v4774, 0.5
      %v5078 = vmul.f32 %v4070, 0.5
      %v5079 = vmul.f32 %v4072, 0.5
      %v5080 = vmul.f32 %v4776, 0.5
      %v5081 = vmul.f32 %v4778, 0.5
      %v5082 = vmul.f32 %v4076, 0.5
      %v5083 = vmul.f32 %v4078, 0.5
      %v5084 = vmul.f32 %v4782, 0.5
      %v5085 = vmul.f32 %v4784, 0.5
      %v5086 = vmul.f32 %v4080, 0.5
      %v5087 = vmul.f32 %v4082, 0.5
      %v5088 = vmul.f32 %v4786, 0.5
      %v5089 = vmul.f32 %v4788, 0.5
      %v5090 = vmul.f32 %v4086, 0.5
      %v5091 = vmul.f32 %v4088, 0.5
      %v5092 = vmul.f32 %v4792, 0.5
      %v5093 = vmul.f32 %v4794, 0.5
      %v5094 = vmul.f32 %v4090, 0.5
      %v5095 = vmul.f32 %v4092, 0.5
      %v5096 = vmul.f32 %v4796, 0.5
      %v5097 = vmul.f32 %v4798, 0.5
      %v5098 = vmul.f32 %v4096, 0.5
      %v5099 = vmul.f32 %v4098, 0.5
      %v5100 = vmul.f32 %v4802, 0.5
      %v5101 = vmul.f32 %v4804, 0.5
      %v5102 = vmul.f32 %v4100, 0.5
      %v5103 = vmul.f32 %v4102, 0.5
      %v5104 = vmul.f32 %v4806, 0.5
      %v5105 = vmul.f32 %v4808, 0.5
      %v5106 = vmul.f32 %v4106, 0.5
      %v5107 = vmul.f32 %v4108, 0.5
      %v5108 = vmul.f32 %v4812, 0.5
      %v5109 = vmul.f32 %v4814, 0.5
      %v5110 = vmul.f32 %v4110, 0.5
      %v5111 = vmul.f32 %v4112, 0.5
      %v5112 = vmul.f32 %v4816, 0.5
      %v5113 = vmul.f32 %v4818, 0.5
      %v5114 = vmul.f32 %v4116, 0.5
      %v5115 = vmul.f32 %v4118, 0.5
      %v5116 = vmul.f32 %v4822, 0.5
      %v5117 = vmul.f32 %v4824, 0.5
      %v5118 = vmul.f32 %v4120, 0.5
      %v5119 = vmul.f32 %v4122, 0.5
      %v5120 = vmul.f32 %v4826, 0.5
      %v5121 = vmul.f32 %v4828, 0.5
      %v5122 = vmul.f32 %v4126, 0.5
      %v5123 = vmul.f32 %v4128, 0.5
      %v5124 = vmul.f32 %v4832, 0.5
      %v5125 = vmul.f32 %v4834, 0.5
      %v5126 = vmul.f32 %v4130, 0.5
      %v5127 = vmul.f32 %v4132, 0.5
      %v5128 = vmul.f32 %v4836, 0.5
      %v5129 = vmul.f32 %v4838, 0.5
      %v5130 = vmul.f32 %v4136, 0.5
      %v5131 = vmul.f32 %v4138, 0.5
      %v5132 = vmul.f32 %v4842, 0.5
      %v5133 = vmul.f32 %v4844, 0.5
      %v5134 = vmul.f32 %v4140, 0.5
      %v5135 = vmul.f32 %v4142, 0.5
      %v5136 = vmul.f32 %v4846, 0.5
      %v5137 = vmul.f32 %v4848, 0.5
      %v5138 = vmul.f32 %v4146, 0.5
      %v5139 = vmul.f32 %v4148, 0.5
      %v5140 = vmul.f32 %v4852, 0.5
      %v5141 = vmul.f32 %v4854, 0.5
      %v5142 = vmul.f32 %v4150, 0.5
      %v5143 = vmul.f32 %v4152, 0.5
      %v5144 = vmul.f32 %v4856, 0.5
      %v5145 = vmul.f32 %v4858, 0.5
      %v5146 = vmul.f32 %v4156, 0.5
      %v5147 = vmul.f32 %v4158, 0.5
      %v5148 = vmul.f32 %v4862, 0.5
      %v5149 = vmul.f32 %v4864, 0.5
      %v5150 = vmul.f32 %v4160, 0.5
      %v5151 = vmul.f32 %v4162, 0.5
      %v5152 = vmul.f32 %v4866, 0.5
      %v5153 = vmul.f32 %v4868, 0.5
      %v5154 = vmul.f32 %v4166, 0.5
      %v5155 = vmul.f32 %v4168, 0.5
      %v5156 = vmul.f32 %v4872, 0.5
      %v5157 = vmul.f32 %v4874, 0.5
      %v5158 = vmul.f32 %v4170, 0.5
      %v5159 = vmul.f32 %v4172, 0.5
      %v5160 = vmul.f32 %v4876, 0.5
      %v5161 = vmul.f32 %v4878, 0.5
      %v5162 = vmul.f32 %v4176, 0.5
      %v5163 = vmul.f32 %v4178, 0.5
      %v5164 = vmul.f32 %v4882, 0.5
      %v5165 = vmul.f32 %v4884, 0.5
      %v5166 = vmul.f32 %v4180, 0.5
      %v5167 = vmul.f32 %v4182, 0.5
      %v5168 = vmul.f32 %v4886, 0.5
      %v5169 = vmul.f32 %v4888, 0.5
      %v5170 = vmul.f32 %v4186, 0.5
      %v5171 = vmul.f32 %v4188, 0.5
      %v5172 = vmul.f32 %v4892, 0.5
      %v5173 = vmul.f32 %v4894, 0.5
      %v5174 = vmul.f32 %v4190, 0.5
      %v5175 = vmul.f32 %v4192, 0.5
      %v5176 = vmul.f32 %v4896, 0.5
      %v5177 = vmul.f32 %v4898, 0.5
      %v5178 = vmul.f32 %v4196, 0.5
      %v5179 = vmul.f32 %v4198, 0.5
      %v5180 = vmul.f32 %v4902, 0.5
      %v5181 = vmul.f32 %v4904, 0.5
      %v5182 = vmul.f32 %v4200, 0.5
      %v5183 = vmul.f32 %v4202, 0.5
      %v5184 = vmul.f32 %v4906, 0.5
      %v5185 = vmul.f32 %v4908, 0.5
      %v5186 = vmul.f32 %v4206, 0.5
      %v5187 = vmul.f32 %v4208, 0.5
      %v5188 = vmul.f32 %v4912, 0.5
      %v5189 = vmul.f32 %v4914, 0.5
      %v5190 = vmul.f32 %v4210, 0.5
      %v5191 = vmul.f32 %v4212, 0.5
      %v5192 = vmul.f32 %v4916, 0.5
      %v5193 = vmul.f32 %v4918, 0.5
      %v5194 = vmul.f32 %v4216, 0.5
      %v5195 = vmul.f32 %v4218, 0.5
      %v5196 = vmul.f32 %v4922, 0.5
      %v5197 = vmul.f32 %v4924, 0.5
      %v5198 = vmul.f32 %v4220, 0.5
      %v5199 = vmul.f32 %v4222, 0.5
      %v5200 = vmul.f32 %v4926, 0.5
      %v5201 = vmul.f32 %v4928, 0.5
      %v5202 = vmul.f32 %v4226, 0.5
      %v5203 = vmul.f32 %v4228, 0.5
      %v5204 = vmul.f32 %v4932, 0.5
      %v5205 = vmul.f32 %v4934, 0.5
      %v5206 = vmul.f32 %v4230, 0.5
      %v5207 = vmul.f32 %v4232, 0.5
      %v5208 = vmul.f32 %v4936, 0.5
      %v5209 = vmul.f32 %v4938, 0.5
      %v5210 = vmul.f32 %v4236, 0.5
      %v5211 = vmul.f32 %v4238, 0.5
      %v5212 = vmul.f32 %v4942, 0.5
      %v5213 = vmul.f32 %v4944, 0.5
      %v5214 = vmul.f32 %v4240, 0.5
      %v5215 = vmul.f32 %v4242, 0.5
      %v5216 = vmul.f32 %v4946, 0.5
      %v5217 = vmul.f32 %v4948, 0.5
      %v5218 = vmul.f32 %v4246, 0.5
      %v5219 = vmul.f32 %v4248, 0.5
      %v5220 = vmul.f32 %v4952, 0.5
      %v5221 = vmul.f32 %v4954, 0.5
      %v5222 = vmul.f32 %v4250, 0.5
      %v5223 = vmul.f32 %v4252, 0.5
      %v5224 = vmul.f32 %v4956, 0.5
      %v5225 = vmul.f32 %v4958, 0.5
      %v5226 = vmul.f32 %v4256, 0.5
      %v5227 = vmul.f32 %v4258, 0.5
      %v5228 = vmul.f32 %v4962, 0.5
      %v5229 = vmul.f32 %v4964, 0.5
      %v5230 = vmul.f32 %v4260, 0.5
      %v5231 = vmul.f32 %v4262, 0.5
      %v5232 = vmul.f32 %v4966, 0.5
      %v5233 = vmul.f32 %v4968, 0.5
      %v5234 = vmul.f32 %v4266, 0.5
      %v5235 = vmul.f32 %v4268, 0.5
      %v5236 = vmul.f32 %v4972, 0.5
      %v5237 = vmul.f32 %v4974, 0.5
      %v5238 = vmul.f32 %v4270, 0.5
      %v5239 = vmul.f32 %v4272, 0.5
      %v5240 = vmul.f32 %v4976, 0.5
      %v5241 = vmul.f32 %v4978, 0.5
      %v5242 = vmul.f32 %v4276, 0.5
      %v5243 = vmul.f32 %v4278, 0.5
      %v5244 = vmul.f32 %v4982, 0.5
      %v5245 = vmul.f32 %v4984, 0.5
      %v5246 = vmul.f32 %v4280, 0.5
      %v5247 = vmul.f32 %v4282, 0.5
      %v5248 = vmul.f32 %v4986, 0.5
      %v5249 = vmul.f32 %v4988, 0.5
      %v5250 = vmul.f32 %v4286, 0.5
      %v5251 = vmul.f32 %v4288, 0.5
      %v5252 = vmul.f32 %v4992, 0.5
      %v5253 = vmul.f32 %v4994, 0.5
      %v5254 = vmul.f32 %v4290, 0.5
      %v5255 = vmul.f32 %v4292, 0.5
      %v5256 = vmul.f32 %v4996, 0.5
      %v5257 = vmul.f32 %v4998, 0.5
      %v5258 = vmul.f32 %v4296, 0.5
      %v5259 = vmul.f32 %v4298, 0.5
      %v5260 = vmul.f32 %v5002, 0.5
      %v5261 = vmul.f32 %v5004, 0.5
      %v5262 = vmul.f32 %v4300, 0.5
      %v5263 = vmul.f32 %v4302, 0.5
      %v5264 = vmul.f32 %v5006, 0.5
      %v5265 = vmul.f32 %v5008, 0.5
      %v5266 = vmul.f32 %v3986, 0.70710677
      %v5267 = vmul.f32 %v3988, 0.70710677
      %v5268 = vmul.f32 %v4692, 0.70710677
      %v5269 = vmul.f32 %v4694, 0.70710677
      %v5270 = vmul.f32 %v3990, 0.70710677
      %v5271 = vmul.f32 %v3992, 0.70710677
      %v5272 = vmul.f32 %v4696, 0.70710677
      %v5273 = vmul.f32 %v4698, 0.70710677
      %v5274 = vmul.f32 %v3996, 0.70710677
      %v5275 = vmul.f32 %v3998, 0.70710677
      %v5276 = vmul.f32 %v4702, 0.70710677
      %v5277 = vmul.f32 %v4704, 0.70710677
      %v5278 = vmul.f32 %v4000, 0.70710677
      %v5279 = vmul.f32 %v4002, 0.70710677
      %v5280 = vmul.f32 %v4706, 0.70710677
      %v5281 = vmul.f32 %v4708, 0.70710677
      %v5282 = vmul.f32 %v4006, 0.70710677
      %v5283 = vmul.f32 %v4008, 0.70710677
      %v5284 = vmul.f32 %v4712, 0.70710677
      %v5285 = vmul.f32 %v4714, 0.70710677
      %v5286 = vmul.f32 %v4010, 0.70710677
      %v5287 = vmul.f32 %v4012, 0.70710677
      %v5288 = vmul.f32 %v4716, 0.70710677
      %v5289 = vmul.f32 %v4718, 0.70710677
      %v5290 = vmul.f32 %v4016, 0.70710677
      %v5291 = vmul.f32 %v4018, 0.70710677
      %v5292 = vmul.f32 %v4722, 0.70710677
      %v5293 = vmul.f32 %v4724, 0.70710677
      %v5294 = vmul.f32 %v4020, 0.70710677
      %v5295 = vmul.f32 %v4022, 0.70710677
      %v5296 = vmul.f32 %v4726, 0.70710677
      %v5297 = vmul.f32 %v4728, 0.70710677
      %v5298 = vmul.f32 %v4026, 0.70710677
      %v5299 = vmul.f32 %v4028, 0.70710677
      %v5300 = vmul.f32 %v4732, 0.70710677
      %v5301 = vmul.f32 %v4734, 0.70710677
      %v5302 = vmul.f32 %v4030, 0.70710677
      %v5303 = vmul.f32 %v4032, 0.70710677
      %v5304 = vmul.f32 %v4736, 0.70710677
      %v5305 = vmul.f32 %v4738, 0.70710677
      %v5306 = vmul.f32 %v4036, 0.70710677
      %v5307 = vmul.f32 %v4038, 0.70710677
      %v5308 = vmul.f32 %v4742, 0.70710677
      %v5309 = vmul.f32 %v4744, 0.70710677
      %v5310 = vmul.f32 %v4040, 0.70710677
      %v5311 = vmul.f32 %v4042, 0.70710677
      %v5312 = vmul.f32 %v4746, 0.70710677
      %v5313 = vmul.f32 %v4748, 0.70710677
      %v5314 = vmul.f32 %v4046, 0.70710677
      %v5315 = vmul.f32 %v4048, 0.70710677
      %v5316 = vmul.f32 %v4752, 0.70710677
      %v5317 = vmul.f32 %v4754, 0.70710677
      %v5318 = vmul.f32 %v4050, 0.70710677
      %v5319 = vmul.f32 %v4052, 0.70710677
      %v5320 = vmul.f32 %v4756, 0.70710677
      %v5321 = vmul.f32 %v4758, 0.70710677
      %v5322 = vmul.f32 %v4056, 0.70710677
      %v5323 = vmul.f32 %v4058, 0.70710677
      %v5324 = vmul.f32 %v4762, 0.70710677
      %v5325 = vmul.f32 %v4764, 0.70710677
      %v5326 = vmul.f32 %v4060, 0.70710677
      %v5327 = vmul.f32 %v4062, 0.70710677
      %v5328 = vmul.f32 %v4766, 0.70710677
      %v5329 = vmul.f32 %v4768, 0.70710677
      %v5330 = vmul.f32 %v4066, 0.70710677
      %v5331 = vmul.f32 %v4068, 0.70710677
      %v5332 = vmul.f32 %v4772, 0.70710677
      %v5333 = vmul.f32 %v4774, 0.70710677
      %v5334 = vmul.f32 %v4070, 0.70710677
      %v5335 = vmul.f32 %v4072, 0.70710677
      %v5336 = vmul.f32 %v4776, 0.70710677
      %v5337 = vmul.f32 %v4778, 0.70710677
      %v5338 = vmul.f32 %v4076, 0.70710677
      %v5339 = vmul.f32 %v4078, 0.70710677
      %v5340 = vmul.f32 %v4782, 0.70710677
      %v5341 = vmul.f32 %v4784, 0.70710677
      %v5342 = vmul.f32 %v4080, 0.70710677
      %v5343 = vmul.f32 %v4082, 0.70710677
      %v5344 = vmul.f32 %v4786, 0.70710677
      %v5345 = vmul.f32 %v4788, 0.70710677
      %v5346 = vmul.f32 %v4086, 0.70710677
      %v5347 = vmul.f32 %v4088, 0.70710677
      %v5348 = vmul.f32 %v4792, 0.70710677
      %v5349 = vmul.f32 %v4794, 0.70710677
      %v5350 = vmul.f32 %v4090, 0.70710677
      %v5351 = vmul.f32 %v4092, 0.70710677
      %v5352 = vmul.f32 %v4796, 0.70710677
      %v5353 = vmul.f32 %v4798, 0.70710677
      %v5354 = vmul.f32 %v4096, 0.70710677
      %v5355 = vmul.f32 %v4098, 0.70710677
      %v5356 = vmul.f32 %v4802, 0.70710677
      %v5357 = vmul.f32 %v4804, 0.70710677
      %v5358 = vmul.f32 %v4100, 0.70710677
      %v5359 = vmul.f32 %v4102, 0.70710677
      %v5360 = vmul.f32 %v4806, 0.70710677
      %v5361 = vmul.f32 %v4808, 0.70710677
      %v5362 = vmul.f32 %v4106, 0.70710677
      %v5363 = vmul.f32 %v4108, 0.70710677
      %v5364 = vmul.f32 %v4812, 0.70710677
      %v5365 = vmul.f32 %v4814, 0.70710677
      %v5366 = vmul.f32 %v4110, 0.70710677
      %v5367 = vmul.f32 %v4112, 0.70710677
      %v5368 = vmul.f32 %v4816, 0.70710677
      %v5369 = vmul.f32 %v4818, 0.70710677
      %v5370 = vmul.f32 %v4116, 0.70710677
      %v5371 = vmul.f32 %v4118, 0.70710677
      %v5372 = vmul.f32 %v4822, 0.70710677
      %v5373 = vmul.f32 %v4824, 0.70710677
      %v5374 = vmul.f32 %v4120, 0.70710677
      %v5375 = vmul.f32 %v4122, 0.70710677
      %v5376 = vmul.f32 %v4826, 0.70710677
      %v5377 = vmul.f32 %v4828, 0.70710677
      %v5378 = vmul.f32 %v4126, 0.70710677
      %v5379 = vmul.f32 %v4128, 0.70710677
      %v5380 = vmul.f32 %v4832, 0.70710677
      %v5381 = vmul.f32 %v4834, 0.70710677
      %v5382 = vmul.f32 %v4130, 0.70710677
      %v5383 = vmul.f32 %v4132, 0.70710677
      %v5384 = vmul.f32 %v4836, 0.70710677
      %v5385 = vmul.f32 %v4838, 0.70710677
      %v5386 = vmul.f32 %v4136, 0.70710677
      %v5387 = vmul.f32 %v4138, 0.70710677
      %v5388 = vmul.f32 %v4842, 0.70710677
      %v5389 = vmul.f32 %v4844, 0.70710677
      %v5390 = vmul.f32 %v4140, 0.70710677
      %v5391 = vmul.f32 %v4142, 0.70710677
      %v5392 = vmul.f32 %v4846, 0.70710677
      %v5393 = vmul.f32 %v4848, 0.70710677
      %v5394 = vmul.f32 %v4146, 0.70710677
      %v5395 = vmul.f32 %v4148, 0.70710677
      %v5396 = vmul.f32 %v4852, 0.70710677
      %v5397 = vmul.f32 %v4854, 0.70710677
      %v5398 = vmul.f32 %v4150, 0.70710677
      %v5399 = vmul.f32 %v4152, 0.70710677
      %v5400 = vmul.f32 %v4856, 0.70710677
      %v5401 = vmul.f32 %v4858, 0.70710677
      %v5402 = vmul.f32 %v4156, 0.70710677
      %v5403 = vmul.f32 %v4158, 0.70710677
      %v5404 = vmul.f32 %v4862, 0.70710677
      %v5405 = vmul.f32 %v4864, 0.70710677
      %v5406 = vmul.f32 %v4160, 0.70710677
      %v5407 = vmul.f32 %v4162, 0.70710677
      %v5408 = vmul.f32 %v4866, 0.70710677
      %v5409 = vmul.f32 %v4868, 0.70710677
      %v5410 = vmul.f32 %v4166, 0.70710677
      %v5411 = vmul.f32 %v4168, 0.70710677
      %v5412 = vmul.f32 %v4872, 0.70710677
      %v5413 = vmul.f32 %v4874, 0.70710677
      %v5414 = vmul.f32 %v4170, 0.70710677
      %v5415 = vmul.f32 %v4172, 0.70710677
      %v5416 = vmul.f32 %v4876, 0.70710677
      %v5417 = vmul.f32 %v4878, 0.70710677
      %v5418 = vmul.f32 %v4176, 0.70710677
      %v5419 = vmul.f32 %v4178, 0.70710677
      %v5420 = vmul.f32 %v4882, 0.70710677
      %v5421 = vmul.f32 %v4884, 0.70710677
      %v5422 = vmul.f32 %v4180, 0.70710677
      %v5423 = vmul.f32 %v4182, 0.70710677
      %v5424 = vmul.f32 %v4886, 0.70710677
      %v5425 = vmul.f32 %v4888, 0.70710677
      %v5426 = vmul.f32 %v4186, 0.70710677
      %v5427 = vmul.f32 %v4188, 0.70710677
      %v5428 = vmul.f32 %v4892, 0.70710677
      %v5429 = vmul.f32 %v4894, 0.70710677
      %v5430 = vmul.f32 %v4190, 0.70710677
      %v5431 = vmul.f32 %v4192, 0.70710677
      %v5432 = vmul.f32 %v4896, 0.70710677
      %v5433 = vmul.f32 %v4898, 0.70710677
      %v5434 = vmul.f32 %v4196, 0.70710677
      %v5435 = vmul.f32 %v4198, 0.70710677
      %v5436 = vmul.f32 %v4902, 0.70710677
      %v5437 = vmul.f32 %v4904, 0.70710677
      %v5438 = vmul.f32 %v4200, 0.70710677
      %v5439 = vmul.f32 %v4202, 0.70710677
      %v5440 = vmul.f32 %v4906, 0.70710677
      %v5441 = vmul.f32 %v4908, 0.70710677
      %v5442 = vmul.f32 %v4206, 0.70710677
      %v5443 = vmul.f32 %v4208, 0.70710677
      %v5444 = vmul.f32 %v4912, 0.70710677
      %v5445 = vmul.f32 %v4914, 0.70710677
      %v5446 = vmul.f32 %v4210, 0.70710677
      %v5447 = vmul.f32 %v4212, 0.70710677
      %v5448 = vmul.f32 %v4916, 0.70710677
      %v5449 = vmul.f32 %v4918, 0.70710677
      %v5450 = vmul.f32 %v4216, 0.70710677
      %v5451 = vmul.f32 %v4218, 0.70710677
      %v5452 = vmul.f32 %v4922, 0.70710677
      %v5453 = vmul.f32 %v4924, 0.70710677
      %v5454 = vmul.f32 %v4220, 0.70710677
      %v5455 = vmul.f32 %v4222, 0.70710677
      %v5456 = vmul.f32 %v4926, 0.70710677
      %v5457 = vmul.f32 %v4928, 0.70710677
      %v5458 = vmul.f32 %v4226, 0.70710677
      %v5459 = vmul.f32 %v4228, 0.70710677
      %v5460 = vmul.f32 %v4932, 0.70710677
      %v5461 = vmul.f32 %v4934, 0.70710677
      %v5462 = vmul.f32 %v4230, 0.70710677
      %v5463 = vmul.f32 %v4232, 0.70710677
      %v5464 = vmul.f32 %v4936, 0.70710677
      %v5465 = vmul.f32 %v4938, 0.70710677
      %v5466 = vmul.f32 %v4236, 0.70710677
      %v5467 = vmul.f32 %v4238, 0.70710677
      %v5468 = vmul.f32 %v4942, 0.70710677
      %v5469 = vmul.f32 %v4944, 0.70710677
      %v5470 = vmul.f32 %v4240, 0.70710677
      %v5471 = vmul.f32 %v4242, 0.70710677
      %v5472 = vmul.f32 %v4946, 0.70710677
      %v5473 = vmul.f32 %v4948, 0.70710677
      %v5474 = vmul.f32 %v4246, 0.70710677
      %v5475 = vmul.f32 %v4248, 0.70710677
      %v5476 = vmul.f32 %v4952, 0.70710677
      %v5477 = vmul.f32 %v4954, 0.70710677
      %v5478 = vmul.f32 %v4250, 0.70710677
      %v5479 = vmul.f32 %v4252, 0.70710677
      %v5480 = vmul.f32 %v4956, 0.70710677
      %v5481 = vmul.f32 %v4958, 0.70710677
      %v5482 = vmul.f32 %v4256, 0.70710677
      %v5483 = vmul.f32 %v4258, 0.70710677
      %v5484 = vmul.f32 %v4962, 0.70710677
      %v5485 = vmul.f32 %v4964, 0.70710677
      %v5486 = vmul.f32 %v4260, 0.70710677
      %v5487 = vmul.f32 %v4262, 0.70710677
      %v5488 = vmul.f32 %v4966, 0.70710677
      %v5489 = vmul.f32 %v4968, 0.70710677
      %v5490 = vmul.f32 %v4266, 0.70710677
      %v5491 = vmul.f32 %v4268, 0.70710677
      %v5492 = vmul.f32 %v4972, 0.70710677
      %v5493 = vmul.f32 %v4974, 0.70710677
      %v5494 = vmul.f32 %v4270, 0.70710677
      %v5495 = vmul.f32 %v4272, 0.70710677
      %v5496 = vmul.f32 %v4976, 0.70710677
      %v5497 = vmul.f32 %v4978, 0.70710677
      %v5498 = vmul.f32 %v4276, 0.70710677
      %v5499 = vmul.f32 %v4278, 0.70710677
      %v5500 = vmul.f32 %v4982, 0.70710677
      %v5501 = vmul.f32 %v4984, 0.70710677
      %v5502 = vmul.f32 %v4280, 0.70710677
      %v5503 = vmul.f32 %v4282, 0.70710677
      %v5504 = vmul.f32 %v4986, 0.70710677
      %v5505 = vmul.f32 %v4988, 0.70710677
      %v5506 = vmul.f32 %v4286, 0.70710677
      %v5507 = vmul.f32 %v4288, 0.70710677
      %v5508 = vmul.f32 %v4992, 0.70710677
      %v5509 = vmul.f32 %v4994, 0.70710677
      %v5510 = vmul.f32 %v4290, 0.70710677
      %v5511 = vmul.f32 %v4292, 0.70710677
      %v5512 = vmul.f32 %v4996, 0.70710677
      %v5513 = vmul.f32 %v4998, 0.70710677
      %v5514 = vmul.f32 %v4296, 0.70710677
      %v5515 = vmul.f32 %v4298, 0.70710677
      %v5516 = vmul.f32 %v5002, 0.70710677
      %v5517 = vmul.f32 %v5004, 0.70710677
      %v5518 = vmul.f32 %v4300, 0.70710677
      %v5519 = vmul.f32 %v4302, 0.70710677
      %v5520 = vmul.f32 %v5006, 0.70710677
      %v5521 = vmul.f32 %v5008, 0.70710677
      %v5522 = verf.f32.pop %v5266
      %v5523 = verf.f32.pop %v5267
      %v5524 = verf.f32.pop %v5268
      %v5525 = verf.f32.pop %v5269
      %v5526 = verf.f32.pop %v5270
      %v5527 = verf.f32.pop %v5271
      %v5528 = verf.f32.pop %v5272
      %v5529 = verf.f32.pop %v5273
      %v5530 = verf.f32.pop %v5274
      %v5531 = verf.f32.pop %v5275
      %v5532 = verf.f32.pop %v5276
      %v5533 = verf.f32.pop %v5277
      %v5534 = verf.f32.pop %v5278
      %v5535 = verf.f32.pop %v5279
      %v5536 = verf.f32.pop %v5280
      %v5537 = verf.f32.pop %v5281
      %v5538 = verf.f32.pop %v5282
      %v5539 = verf.f32.pop %v5283
      %v5540 = verf.f32.pop %v5284
      %v5541 = verf.f32.pop %v5285
      %v5542 = verf.f32.pop %v5286
      %v5543 = verf.f32.pop %v5287
      %v5544 = verf.f32.pop %v5288
      %v5545 = verf.f32.pop %v5289
      %v5546 = verf.f32.pop %v5290
      %v5547 = verf.f32.pop %v5291
      %v5548 = verf.f32.pop %v5292
      %v5549 = verf.f32.pop %v5293
      %v5550 = verf.f32.pop %v5294
      %v5551 = verf.f32.pop %v5295
      %v5552 = verf.f32.pop %v5296
      %v5553 = verf.f32.pop %v5297
      %v5554 = verf.f32.pop %v5298
      %v5555 = verf.f32.pop %v5299
      %v5556 = verf.f32.pop %v5300
      %v5557 = verf.f32.pop %v5301
      %v5558 = verf.f32.pop %v5302
      %v5559 = verf.f32.pop %v5303
      %v5560 = verf.f32.pop %v5304
      %v5561 = verf.f32.pop %v5305
      %v5562 = verf.f32.pop %v5306
      %v5563 = verf.f32.pop %v5307
      %v5564 = verf.f32.pop %v5308
      %v5565 = verf.f32.pop %v5309
      %v5566 = verf.f32.pop %v5310
      %v5567 = verf.f32.pop %v5311
      %v5568 = verf.f32.pop %v5312
      %v5569 = verf.f32.pop %v5313
      %v5570 = verf.f32.pop %v5314
      %v5571 = verf.f32.pop %v5315
      %v5572 = verf.f32.pop %v5316
      %v5573 = verf.f32.pop %v5317
      %v5574 = verf.f32.pop %v5318
      %v5575 = verf.f32.pop %v5319
      %v5576 = verf.f32.pop %v5320
      %v5577 = verf.f32.pop %v5321
      %v5578 = verf.f32.pop %v5322
      %v5579 = verf.f32.pop %v5323
      %v5580 = verf.f32.pop %v5324
      %v5581 = verf.f32.pop %v5325
      %v5582 = verf.f32.pop %v5326
      %v5583 = verf.f32.pop %v5327
      %v5584 = verf.f32.pop %v5328
      %v5585 = verf.f32.pop %v5329
      %v5586 = verf.f32.pop %v5330
      %v5587 = verf.f32.pop %v5331
      %v5588 = verf.f32.pop %v5332
      %v5589 = verf.f32.pop %v5333
      %v5590 = verf.f32.pop %v5334
      %v5591 = verf.f32.pop %v5335
      %v5592 = verf.f32.pop %v5336
      %v5593 = verf.f32.pop %v5337
      %v5594 = verf.f32.pop %v5338
      %v5595 = verf.f32.pop %v5339
      %v5596 = verf.f32.pop %v5340
      %v5597 = verf.f32.pop %v5341
      %v5598 = verf.f32.pop %v5342
      %v5599 = verf.f32.pop %v5343
      %v5600 = verf.f32.pop %v5344
      %v5601 = verf.f32.pop %v5345
      %v5602 = verf.f32.pop %v5346
      %v5603 = verf.f32.pop %v5347
      %v5604 = verf.f32.pop %v5348
      %v5605 = verf.f32.pop %v5349
      %v5606 = verf.f32.pop %v5350
      %v5607 = verf.f32.pop %v5351
      %v5608 = verf.f32.pop %v5352
      %v5609 = verf.f32.pop %v5353
      %v5610 = verf.f32.pop %v5354
      %v5611 = verf.f32.pop %v5355
      %v5612 = verf.f32.pop %v5356
      %v5613 = verf.f32.pop %v5357
      %v5614 = verf.f32.pop %v5358
      %v5615 = verf.f32.pop %v5359
      %v5616 = verf.f32.pop %v5360
      %v5617 = verf.f32.pop %v5361
      %v5618 = verf.f32.pop %v5362
      %v5619 = verf.f32.pop %v5363
      %v5620 = verf.f32.pop %v5364
      %v5621 = verf.f32.pop %v5365
      %v5622 = verf.f32.pop %v5366
      %v5623 = verf.f32.pop %v5367
      %v5624 = verf.f32.pop %v5368
      %v5625 = verf.f32.pop %v5369
      %v5626 = verf.f32.pop %v5370
      %v5627 = verf.f32.pop %v5371
      %v5628 = verf.f32.pop %v5372
      %v5629 = verf.f32.pop %v5373
      %v5630 = verf.f32.pop %v5374
      %v5631 = verf.f32.pop %v5375
      %v5632 = verf.f32.pop %v5376
      %v5633 = verf.f32.pop %v5377
      %v5634 = verf.f32.pop %v5378
      %v5635 = verf.f32.pop %v5379
      %v5636 = verf.f32.pop %v5380
      %v5637 = verf.f32.pop %v5381
      %v5638 = verf.f32.pop %v5382
      %v5639 = verf.f32.pop %v5383
      %v5640 = verf.f32.pop %v5384
      %v5641 = verf.f32.pop %v5385
      %v5642 = verf.f32.pop %v5386
      %v5643 = verf.f32.pop %v5387
      %v5644 = verf.f32.pop %v5388
      %v5645 = verf.f32.pop %v5389
      %v5646 = verf.f32.pop %v5390
      %v5647 = verf.f32.pop %v5391
      %v5648 = verf.f32.pop %v5392
      %v5649 = verf.f32.pop %v5393
      %v5650 = verf.f32.pop %v5394
      %v5651 = verf.f32.pop %v5395
      %v5652 = verf.f32.pop %v5396
      %v5653 = verf.f32.pop %v5397
      %v5654 = verf.f32.pop %v5398
      %v5655 = verf.f32.pop %v5399
      %v5656 = verf.f32.pop %v5400
      %v5657 = verf.f32.pop %v5401
      %v5658 = verf.f32.pop %v5402
      %v5659 = verf.f32.pop %v5403
      %v5660 = verf.f32.pop %v5404
      %v5661 = verf.f32.pop %v5405
      %v5662 = verf.f32.pop %v5406
      %v5663 = verf.f32.pop %v5407
      %v5664 = verf.f32.pop %v5408
      %v5665 = verf.f32.pop %v5409
      %v5666 = verf.f32.pop %v5410
      %v5667 = verf.f32.pop %v5411
      %v5668 = verf.f32.pop %v5412
      %v5669 = verf.f32.pop %v5413
      %v5670 = verf.f32.pop %v5414
      %v5671 = verf.f32.pop %v5415
      %v5672 = verf.f32.pop %v5416
      %v5673 = verf.f32.pop %v5417
      %v5674 = verf.f32.pop %v5418
      %v5675 = verf.f32.pop %v5419
      %v5676 = verf.f32.pop %v5420
      %v5677 = verf.f32.pop %v5421
      %v5678 = verf.f32.pop %v5422
      %v5679 = verf.f32.pop %v5423
      %v5680 = verf.f32.pop %v5424
      %v5681 = verf.f32.pop %v5425
      %v5682 = verf.f32.pop %v5426
      %v5683 = verf.f32.pop %v5427
      %v5684 = verf.f32.pop %v5428
      %v5685 = verf.f32.pop %v5429
      %v5686 = verf.f32.pop %v5430
      %v5687 = verf.f32.pop %v5431
      %v5688 = verf.f32.pop %v5432
      %v5689 = verf.f32.pop %v5433
      %v5690 = verf.f32.pop %v5434
      %v5691 = verf.f32.pop %v5435
      %v5692 = verf.f32.pop %v5436
      %v5693 = verf.f32.pop %v5437
      %v5694 = verf.f32.pop %v5438
      %v5695 = verf.f32.pop %v5439
      %v5696 = verf.f32.pop %v5440
      %v5697 = verf.f32.pop %v5441
      %v5698 = verf.f32.pop %v5442
      %v5699 = verf.f32.pop %v5443
      %v5700 = verf.f32.pop %v5444
      %v5701 = verf.f32.pop %v5445
      %v5702 = verf.f32.pop %v5446
      %v5703 = verf.f32.pop %v5447
      %v5704 = verf.f32.pop %v5448
      %v5705 = verf.f32.pop %v5449
      %v5706 = verf.f32.pop %v5450
      %v5707 = verf.f32.pop %v5451
      %v5708 = verf.f32.pop %v5452
      %v5709 = verf.f32.pop %v5453
      %v5710 = verf.f32.pop %v5454
      %v5711 = verf.f32.pop %v5455
      %v5712 = verf.f32.pop %v5456
      %v5713 = verf.f32.pop %v5457
      %v5714 = verf.f32.pop %v5458
      %v5715 = verf.f32.pop %v5459
      %v5716 = verf.f32.pop %v5460
      %v5717 = verf.f32.pop %v5461
      %v5718 = verf.f32.pop %v5462
      %v5719 = verf.f32.pop %v5463
      %v5720 = verf.f32.pop %v5464
      %v5721 = verf.f32.pop %v5465
      %v5722 = verf.f32.pop %v5466
      %v5723 = verf.f32.pop %v5467
      %v5724 = verf.f32.pop %v5468
      %v5725 = verf.f32.pop %v5469
      %v5726 = verf.f32.pop %v5470
      %v5727 = verf.f32.pop %v5471
      %v5728 = verf.f32.pop %v5472
      %v5729 = verf.f32.pop %v5473
      %v5730 = verf.f32.pop %v5474
      %v5731 = verf.f32.pop %v5475
      %v5732 = verf.f32.pop %v5476
      %v5733 = verf.f32.pop %v5477
      %v5734 = verf.f32.pop %v5478
      %v5735 = verf.f32.pop %v5479
      %v5736 = verf.f32.pop %v5480
      %v5737 = verf.f32.pop %v5481
      %v5738 = verf.f32.pop %v5482
      %v5739 = verf.f32.pop %v5483
      %v5740 = verf.f32.pop %v5484
      %v5741 = verf.f32.pop %v5485
      %v5742 = verf.f32.pop %v5486
      %v5743 = verf.f32.pop %v5487
      %v5744 = verf.f32.pop %v5488
      %v5745 = verf.f32.pop %v5489
      %v5746 = verf.f32.pop %v5490
      %v5747 = verf.f32.pop %v5491
      %v5748 = verf.f32.pop %v5492
      %v5749 = verf.f32.pop %v5493
      %v5750 = verf.f32.pop %v5494
      %v5751 = verf.f32.pop %v5495
      %v5752 = verf.f32.pop %v5496
      %v5753 = verf.f32.pop %v5497
      %v5754 = verf.f32.pop %v5498
      %v5755 = verf.f32.pop %v5499
      %v5756 = verf.f32.pop %v5500
      %v5757 = verf.f32.pop %v5501
      %v5758 = verf.f32.pop %v5502
      %v5759 = verf.f32.pop %v5503
      %v5760 = verf.f32.pop %v5504
      %v5761 = verf.f32.pop %v5505
      %v5762 = verf.f32.pop %v5506
      %v5763 = verf.f32.pop %v5507
      %v5764 = verf.f32.pop %v5508
      %v5765 = verf.f32.pop %v5509
      %v5766 = verf.f32.pop %v5510
      %v5767 = verf.f32.pop %v5511
      %v5768 = verf.f32.pop %v5512
      %v5769 = verf.f32.pop %v5513
      %v5770 = verf.f32.pop %v5514
      %v5771 = verf.f32.pop %v5515
      %v5772 = verf.f32.pop %v5516
      %v5773 = verf.f32.pop %v5517
      %v5774 = verf.f32.pop %v5518
      %v5775 = verf.f32.pop %v5519
      %v5776 = verf.f32.pop %v5520
      %v5777 = verf.f32.pop %v5521
      %v5778 = vadd.f32 %v5522, 1.0
      %v5779 = vadd.f32 %v5523, 1.0
      %v5780 = vadd.f32 %v5524, 1.0
      %v5781 = vadd.f32 %v5525, 1.0
      %v5782 = vadd.f32 %v5526, 1.0
      %v5783 = vadd.f32 %v5527, 1.0
      %v5784 = vadd.f32 %v5528, 1.0
      %v5785 = vadd.f32 %v5529, 1.0
      %v5786 = vadd.f32 %v5530, 1.0
      %v5787 = vadd.f32 %v5531, 1.0
      %v5788 = vadd.f32 %v5532, 1.0
      %v5789 = vadd.f32 %v5533, 1.0
      %v5790 = vadd.f32 %v5534, 1.0
      %v5791 = vadd.f32 %v5535, 1.0
      %v5792 = vadd.f32 %v5536, 1.0
      %v5793 = vadd.f32 %v5537, 1.0
      %v5794 = vadd.f32 %v5538, 1.0
      %v5795 = vadd.f32 %v5539, 1.0
      %v5796 = vadd.f32 %v5540, 1.0
      %v5797 = vadd.f32 %v5541, 1.0
      %v5798 = vadd.f32 %v5542, 1.0
      %v5799 = vadd.f32 %v5543, 1.0
      %v5800 = vadd.f32 %v5544, 1.0
      %v5801 = vadd.f32 %v5545, 1.0
      %v5802 = vadd.f32 %v5546, 1.0
      %v5803 = vadd.f32 %v5547, 1.0
      %v5804 = vadd.f32 %v5548, 1.0
      %v5805 = vadd.f32 %v5549, 1.0
      %v5806 = vadd.f32 %v5550, 1.0
      %v5807 = vadd.f32 %v5551, 1.0
      %v5808 = vadd.f32 %v5552, 1.0
      %v5809 = vadd.f32 %v5553, 1.0
      %v5810 = vadd.f32 %v5554, 1.0
      %v5811 = vadd.f32 %v5555, 1.0
      %v5812 = vadd.f32 %v5556, 1.0
      %v5813 = vadd.f32 %v5557, 1.0
      %v5814 = vadd.f32 %v5558, 1.0
      %v5815 = vadd.f32 %v5559, 1.0
      %v5816 = vadd.f32 %v5560, 1.0
      %v5817 = vadd.f32 %v5561, 1.0
      %v5818 = vadd.f32 %v5562, 1.0
      %v5819 = vadd.f32 %v5563, 1.0
      %v5820 = vadd.f32 %v5564, 1.0
      %v5821 = vadd.f32 %v5565, 1.0
      %v5822 = vadd.f32 %v5566, 1.0
      %v5823 = vadd.f32 %v5567, 1.0
      %v5824 = vadd.f32 %v5568, 1.0
      %v5825 = vadd.f32 %v5569, 1.0
      %v5826 = vadd.f32 %v5570, 1.0
      %v5827 = vadd.f32 %v5571, 1.0
      %v5828 = vadd.f32 %v5572, 1.0
      %v5829 = vadd.f32 %v5573, 1.0
      %v5830 = vadd.f32 %v5574, 1.0
      %v5831 = vadd.f32 %v5575, 1.0
      %v5832 = vadd.f32 %v5576, 1.0
      %v5833 = vadd.f32 %v5577, 1.0
      %v5834 = vadd.f32 %v5578, 1.0
      %v5835 = vadd.f32 %v5579, 1.0
      %v5836 = vadd.f32 %v5580, 1.0
      %v5837 = vadd.f32 %v5581, 1.0
      %v5838 = vadd.f32 %v5582, 1.0
      %v5839 = vadd.f32 %v5583, 1.0
      %v5840 = vadd.f32 %v5584, 1.0
      %v5841 = vadd.f32 %v5585, 1.0
      %v5842 = vadd.f32 %v5586, 1.0
      %v5843 = vadd.f32 %v5587, 1.0
      %v5844 = vadd.f32 %v5588, 1.0
      %v5845 = vadd.f32 %v5589, 1.0
      %v5846 = vadd.f32 %v5590, 1.0
      %v5847 = vadd.f32 %v5591, 1.0
      %v5848 = vadd.f32 %v5592, 1.0
      %v5849 = vadd.f32 %v5593, 1.0
      %v5850 = vadd.f32 %v5594, 1.0
      %v5851 = vadd.f32 %v5595, 1.0
      %v5852 = vadd.f32 %v5596, 1.0
      %v5853 = vadd.f32 %v5597, 1.0
      %v5854 = vadd.f32 %v5598, 1.0
      %v5855 = vadd.f32 %v5599, 1.0
      %v5856 = vadd.f32 %v5600, 1.0
      %v5857 = vadd.f32 %v5601, 1.0
      %v5858 = vadd.f32 %v5602, 1.0
      %v5859 = vadd.f32 %v5603, 1.0
      %v5860 = vadd.f32 %v5604, 1.0
      %v5861 = vadd.f32 %v5605, 1.0
      %v5862 = vadd.f32 %v5606, 1.0
      %v5863 = vadd.f32 %v5607, 1.0
      %v5864 = vadd.f32 %v5608, 1.0
      %v5865 = vadd.f32 %v5609, 1.0
      %v5866 = vadd.f32 %v5610, 1.0
      %v5867 = vadd.f32 %v5611, 1.0
      %v5868 = vadd.f32 %v5612, 1.0
      %v5869 = vadd.f32 %v5613, 1.0
      %v5870 = vadd.f32 %v5614, 1.0
      %v5871 = vadd.f32 %v5615, 1.0
      %v5872 = vadd.f32 %v5616, 1.0
      %v5873 = vadd.f32 %v5617, 1.0
      %v5874 = vadd.f32 %v5618, 1.0
      %v5875 = vadd.f32 %v5619, 1.0
      %v5876 = vadd.f32 %v5620, 1.0
      %v5877 = vadd.f32 %v5621, 1.0
      %v5878 = vadd.f32 %v5622, 1.0
      %v5879 = vadd.f32 %v5623, 1.0
      %v5880 = vadd.f32 %v5624, 1.0
      %v5881 = vadd.f32 %v5625, 1.0
      %v5882 = vadd.f32 %v5626, 1.0
      %v5883 = vadd.f32 %v5627, 1.0
      %v5884 = vadd.f32 %v5628, 1.0
      %v5885 = vadd.f32 %v5629, 1.0
      %v5886 = vadd.f32 %v5630, 1.0
      %v5887 = vadd.f32 %v5631, 1.0
      %v5888 = vadd.f32 %v5632, 1.0
      %v5889 = vadd.f32 %v5633, 1.0
      %v5890 = vadd.f32 %v5634, 1.0
      %v5891 = vadd.f32 %v5635, 1.0
      %v5892 = vadd.f32 %v5636, 1.0
      %v5893 = vadd.f32 %v5637, 1.0
      %v5894 = vadd.f32 %v5638, 1.0
      %v5895 = vadd.f32 %v5639, 1.0
      %v5896 = vadd.f32 %v5640, 1.0
      %v5897 = vadd.f32 %v5641, 1.0
      %v5898 = vadd.f32 %v5642, 1.0
      %v5899 = vadd.f32 %v5643, 1.0
      %v5900 = vadd.f32 %v5644, 1.0
      %v5901 = vadd.f32 %v5645, 1.0
      %v5902 = vadd.f32 %v5646, 1.0
      %v5903 = vadd.f32 %v5647, 1.0
      %v5904 = vadd.f32 %v5648, 1.0
      %v5905 = vadd.f32 %v5649, 1.0
      %v5906 = vadd.f32 %v5650, 1.0
      %v5907 = vadd.f32 %v5651, 1.0
      %v5908 = vadd.f32 %v5652, 1.0
      %v5909 = vadd.f32 %v5653, 1.0
      %v5910 = vadd.f32 %v5654, 1.0
      %v5911 = vadd.f32 %v5655, 1.0
      %v5912 = vadd.f32 %v5656, 1.0
      %v5913 = vadd.f32 %v5657, 1.0
      %v5914 = vadd.f32 %v5658, 1.0
      %v5915 = vadd.f32 %v5659, 1.0
      %v5916 = vadd.f32 %v5660, 1.0
      %v5917 = vadd.f32 %v5661, 1.0
      %v5918 = vadd.f32 %v5662, 1.0
      %v5919 = vadd.f32 %v5663, 1.0
      %v5920 = vadd.f32 %v5664, 1.0
      %v5921 = vadd.f32 %v5665, 1.0
      %v5922 = vadd.f32 %v5666, 1.0
      %v5923 = vadd.f32 %v5667, 1.0
      %v5924 = vadd.f32 %v5668, 1.0
      %v5925 = vadd.f32 %v5669, 1.0
      %v5926 = vadd.f32 %v5670, 1.0
      %v5927 = vadd.f32 %v5671, 1.0
      %v5928 = vadd.f32 %v5672, 1.0
      %v5929 = vadd.f32 %v5673, 1.0
      %v5930 = vadd.f32 %v5674, 1.0
      %v5931 = vadd.f32 %v5675, 1.0
      %v5932 = vadd.f32 %v5676, 1.0
      %v5933 = vadd.f32 %v5677, 1.0
      %v5934 = vadd.f32 %v5678, 1.0
      %v5935 = vadd.f32 %v5679, 1.0
      %v5936 = vadd.f32 %v5680, 1.0
      %v5937 = vadd.f32 %v5681, 1.0
      %v5938 = vadd.f32 %v5682, 1.0
      %v5939 = vadd.f32 %v5683, 1.0
      %v5940 = vadd.f32 %v5684, 1.0
      %v5941 = vadd.f32 %v5685, 1.0
      %v5942 = vadd.f32 %v5686, 1.0
      %v5943 = vadd.f32 %v5687, 1.0
      %v5944 = vadd.f32 %v5688, 1.0
      %v5945 = vadd.f32 %v5689, 1.0
      %v5946 = vadd.f32 %v5690, 1.0
      %v5947 = vadd.f32 %v5691, 1.0
      %v5948 = vadd.f32 %v5692, 1.0
      %v5949 = vadd.f32 %v5693, 1.0
      %v5950 = vadd.f32 %v5694, 1.0
      %v5951 = vadd.f32 %v5695, 1.0
      %v5952 = vadd.f32 %v5696, 1.0
      %v5953 = vadd.f32 %v5697, 1.0
      %v5954 = vadd.f32 %v5698, 1.0
      %v5955 = vadd.f32 %v5699, 1.0
      %v5956 = vadd.f32 %v5700, 1.0
      %v5957 = vadd.f32 %v5701, 1.0
      %v5958 = vadd.f32 %v5702, 1.0
      %v5959 = vadd.f32 %v5703, 1.0
      %v5960 = vadd.f32 %v5704, 1.0
      %v5961 = vadd.f32 %v5705, 1.0
      %v5962 = vadd.f32 %v5706, 1.0
      %v5963 = vadd.f32 %v5707, 1.0
      %v5964 = vadd.f32 %v5708, 1.0
      %v5965 = vadd.f32 %v5709, 1.0
      %v5966 = vadd.f32 %v5710, 1.0
      %v5967 = vadd.f32 %v5711, 1.0
      %v5968 = vadd.f32 %v5712, 1.0
      %v5969 = vadd.f32 %v5713, 1.0
      %v5970 = vadd.f32 %v5714, 1.0
      %v5971 = vadd.f32 %v5715, 1.0
      %v5972 = vadd.f32 %v5716, 1.0
      %v5973 = vadd.f32 %v5717, 1.0
      %v5974 = vadd.f32 %v5718, 1.0
      %v5975 = vadd.f32 %v5719, 1.0
      %v5976 = vadd.f32 %v5720, 1.0
      %v5977 = vadd.f32 %v5721, 1.0
      %v5978 = vadd.f32 %v5722, 1.0
      %v5979 = vadd.f32 %v5723, 1.0
      %v5980 = vadd.f32 %v5724, 1.0
      %v5981 = vadd.f32 %v5725, 1.0
      %v5982 = vadd.f32 %v5726, 1.0
      %v5983 = vadd.f32 %v5727, 1.0
      %v5984 = vadd.f32 %v5728, 1.0
      %v5985 = vadd.f32 %v5729, 1.0
      %v5986 = vadd.f32 %v5730, 1.0
      %v5987 = vadd.f32 %v5731, 1.0
      %v5988 = vadd.f32 %v5732, 1.0
      %v5989 = vadd.f32 %v5733, 1.0
      %v5990 = vadd.f32 %v5734, 1.0
      %v5991 = vadd.f32 %v5735, 1.0
      %v5992 = vadd.f32 %v5736, 1.0
      %v5993 = vadd.f32 %v5737, 1.0
      %v5994 = vadd.f32 %v5738, 1.0
      %v5995 = vadd.f32 %v5739, 1.0
      %v5996 = vadd.f32 %v5740, 1.0
      %v5997 = vadd.f32 %v5741, 1.0
      %v5998 = vadd.f32 %v5742, 1.0
      %v5999 = vadd.f32 %v5743, 1.0
      %v6000 = vadd.f32 %v5744, 1.0
      %v6001 = vadd.f32 %v5745, 1.0
      %v6002 = vadd.f32 %v5746, 1.0
      %v6003 = vadd.f32 %v5747, 1.0
      %v6004 = vadd.f32 %v5748, 1.0
      %v6005 = vadd.f32 %v5749, 1.0
      %v6006 = vadd.f32 %v5750, 1.0
      %v6007 = vadd.f32 %v5751, 1.0
      %v6008 = vadd.f32 %v5752, 1.0
      %v6009 = vadd.f32 %v5753, 1.0
      %v6010 = vadd.f32 %v5754, 1.0
      %v6011 = vadd.f32 %v5755, 1.0
      %v6012 = vadd.f32 %v5756, 1.0
      %v6013 = vadd.f32 %v5757, 1.0
      %v6014 = vadd.f32 %v5758, 1.0
      %v6015 = vadd.f32 %v5759, 1.0
      %v6016 = vadd.f32 %v5760, 1.0
      %v6017 = vadd.f32 %v5761, 1.0
      %v6018 = vadd.f32 %v5762, 1.0
      %v6019 = vadd.f32 %v5763, 1.0
      %v6020 = vadd.f32 %v5764, 1.0
      %v6021 = vadd.f32 %v5765, 1.0
      %v6022 = vadd.f32 %v5766, 1.0
      %v6023 = vadd.f32 %v5767, 1.0
      %v6024 = vadd.f32 %v5768, 1.0
      %v6025 = vadd.f32 %v5769, 1.0
      %v6026 = vadd.f32 %v5770, 1.0
      %v6027 = vadd.f32 %v5771, 1.0
      %v6028 = vadd.f32 %v5772, 1.0
      %v6029 = vadd.f32 %v5773, 1.0
      %v6030 = vadd.f32 %v5774, 1.0
      %v6031 = vadd.f32 %v5775, 1.0
      %v6032 = vadd.f32 %v5776, 1.0
      %v6033 = vadd.f32 %v5777, 1.0
      %v6034 = vmul.f32 %v5010, %v5778
      %v6035 = vmul.f32 %v5011, %v5779
      %v6036 = vmul.f32 %v5012, %v5780
      %v6037 = vmul.f32 %v5013, %v5781
      %v6038 = vmul.f32 %v5014, %v5782
      %v6039 = vmul.f32 %v5015, %v5783
      %v6040 = vmul.f32 %v5016, %v5784
      %v6041 = vmul.f32 %v5017, %v5785
      %v6042 = vmul.f32 %v5018, %v5786
      %v6043 = vmul.f32 %v5019, %v5787
      %v6044 = vmul.f32 %v5020, %v5788
      %v6045 = vmul.f32 %v5021, %v5789
      %v6046 = vmul.f32 %v5022, %v5790
      %v6047 = vmul.f32 %v5023, %v5791
      %v6048 = vmul.f32 %v5024, %v5792
      %v6049 = vmul.f32 %v5025, %v5793
      %v6050 = vmul.f32 %v5026, %v5794
      %v6051 = vmul.f32 %v5027, %v5795
      %v6052 = vmul.f32 %v5028, %v5796
      %v6053 = vmul.f32 %v5029, %v5797
      %v6054 = vmul.f32 %v5030, %v5798
      %v6055 = vmul.f32 %v5031, %v5799
      %v6056 = vmul.f32 %v5032, %v5800
      %v6057 = vmul.f32 %v5033, %v5801
      %v6058 = vmul.f32 %v5034, %v5802
      %v6059 = vmul.f32 %v5035, %v5803
      %v6060 = vmul.f32 %v5036, %v5804
      %v6061 = vmul.f32 %v5037, %v5805
      %v6062 = vmul.f32 %v5038, %v5806
      %v6063 = vmul.f32 %v5039, %v5807
      %v6064 = vmul.f32 %v5040, %v5808
      %v6065 = vmul.f32 %v5041, %v5809
      %v6066 = vmul.f32 %v5042, %v5810
      %v6067 = vmul.f32 %v5043, %v5811
      %v6068 = vmul.f32 %v5044, %v5812
      %v6069 = vmul.f32 %v5045, %v5813
      %v6070 = vmul.f32 %v5046, %v5814
      %v6071 = vmul.f32 %v5047, %v5815
      %v6072 = vmul.f32 %v5048, %v5816
      %v6073 = vmul.f32 %v5049, %v5817
      %v6074 = vmul.f32 %v5050, %v5818
      %v6075 = vmul.f32 %v5051, %v5819
      %v6076 = vmul.f32 %v5052, %v5820
      %v6077 = vmul.f32 %v5053, %v5821
      %v6078 = vmul.f32 %v5054, %v5822
      %v6079 = vmul.f32 %v5055, %v5823
      %v6080 = vmul.f32 %v5056, %v5824
      %v6081 = vmul.f32 %v5057, %v5825
      %v6082 = vmul.f32 %v5058, %v5826
      %v6083 = vmul.f32 %v5059, %v5827
      %v6084 = vmul.f32 %v5060, %v5828
      %v6085 = vmul.f32 %v5061, %v5829
      %v6086 = vmul.f32 %v5062, %v5830
      %v6087 = vmul.f32 %v5063, %v5831
      %v6088 = vmul.f32 %v5064, %v5832
      %v6089 = vmul.f32 %v5065, %v5833
      %v6090 = vmul.f32 %v5066, %v5834
      %v6091 = vmul.f32 %v5067, %v5835
      %v6092 = vmul.f32 %v5068, %v5836
      %v6093 = vmul.f32 %v5069, %v5837
      %v6094 = vmul.f32 %v5070, %v5838
      %v6095 = vmul.f32 %v5071, %v5839
      %v6096 = vmul.f32 %v5072, %v5840
      %v6097 = vmul.f32 %v5073, %v5841
      %v6098 = vmul.f32 %v5074, %v5842
      %v6099 = vmul.f32 %v5075, %v5843
      %v6100 = vmul.f32 %v5076, %v5844
      %v6101 = vmul.f32 %v5077, %v5845
      %v6102 = vmul.f32 %v5078, %v5846
      %v6103 = vmul.f32 %v5079, %v5847
      %v6104 = vmul.f32 %v5080, %v5848
      %v6105 = vmul.f32 %v5081, %v5849
      %v6106 = vmul.f32 %v5082, %v5850
      %v6107 = vmul.f32 %v5083, %v5851
      %v6108 = vmul.f32 %v5084, %v5852
      %v6109 = vmul.f32 %v5085, %v5853
      %v6110 = vmul.f32 %v5086, %v5854
      %v6111 = vmul.f32 %v5087, %v5855
      %v6112 = vmul.f32 %v5088, %v5856
      %v6113 = vmul.f32 %v5089, %v5857
      %v6114 = vmul.f32 %v5090, %v5858
      %v6115 = vmul.f32 %v5091, %v5859
      %v6116 = vmul.f32 %v5092, %v5860
      %v6117 = vmul.f32 %v5093, %v5861
      %v6118 = vmul.f32 %v5094, %v5862
      %v6119 = vmul.f32 %v5095, %v5863
      %v6120 = vmul.f32 %v5096, %v5864
      %v6121 = vmul.f32 %v5097, %v5865
      %v6122 = vmul.f32 %v5098, %v5866
      %v6123 = vmul.f32 %v5099, %v5867
      %v6124 = vmul.f32 %v5100, %v5868
      %v6125 = vmul.f32 %v5101, %v5869
      %v6126 = vmul.f32 %v5102, %v5870
      %v6127 = vmul.f32 %v5103, %v5871
      %v6128 = vmul.f32 %v5104, %v5872
      %v6129 = vmul.f32 %v5105, %v5873
      %v6130 = vmul.f32 %v5106, %v5874
      %v6131 = vmul.f32 %v5107, %v5875
      %v6132 = vmul.f32 %v5108, %v5876
      %v6133 = vmul.f32 %v5109, %v5877
      %v6134 = vmul.f32 %v5110, %v5878
      %v6135 = vmul.f32 %v5111, %v5879
      %v6136 = vmul.f32 %v5112, %v5880
      %v6137 = vmul.f32 %v5113, %v5881
      %v6138 = vmul.f32 %v5114, %v5882
      %v6139 = vmul.f32 %v5115, %v5883
      %v6140 = vmul.f32 %v5116, %v5884
      %v6141 = vmul.f32 %v5117, %v5885
      %v6142 = vmul.f32 %v5118, %v5886
      %v6143 = vmul.f32 %v5119, %v5887
      %v6144 = vmul.f32 %v5120, %v5888
      %v6145 = vmul.f32 %v5121, %v5889
      %v6146 = vmul.f32 %v5122, %v5890
      %v6147 = vmul.f32 %v5123, %v5891
      %v6148 = vmul.f32 %v5124, %v5892
      %v6149 = vmul.f32 %v5125, %v5893
      %v6150 = vmul.f32 %v5126, %v5894
      %v6151 = vmul.f32 %v5127, %v5895
      %v6152 = vmul.f32 %v5128, %v5896
      %v6153 = vmul.f32 %v5129, %v5897
      %v6154 = vmul.f32 %v5130, %v5898
      %v6155 = vmul.f32 %v5131, %v5899
      %v6156 = vmul.f32 %v5132, %v5900
      %v6157 = vmul.f32 %v5133, %v5901
      %v6158 = vmul.f32 %v5134, %v5902
      %v6159 = vmul.f32 %v5135, %v5903
      %v6160 = vmul.f32 %v5136, %v5904
      %v6161 = vmul.f32 %v5137, %v5905
      %v6162 = vmul.f32 %v5138, %v5906
      %v6163 = vmul.f32 %v5139, %v5907
      %v6164 = vmul.f32 %v5140, %v5908
      %v6165 = vmul.f32 %v5141, %v5909
      %v6166 = vmul.f32 %v5142, %v5910
      %v6167 = vmul.f32 %v5143, %v5911
      %v6168 = vmul.f32 %v5144, %v5912
      %v6169 = vmul.f32 %v5145, %v5913
      %v6170 = vmul.f32 %v5146, %v5914
      %v6171 = vmul.f32 %v5147, %v5915
      %v6172 = vmul.f32 %v5148, %v5916
      %v6173 = vmul.f32 %v5149, %v5917
      %v6174 = vmul.f32 %v5150, %v5918
      %v6175 = vmul.f32 %v5151, %v5919
      %v6176 = vmul.f32 %v5152, %v5920
      %v6177 = vmul.f32 %v5153, %v5921
      %v6178 = vmul.f32 %v5154, %v5922
      %v6179 = vmul.f32 %v5155, %v5923
      %v6180 = vmul.f32 %v5156, %v5924
      %v6181 = vmul.f32 %v5157, %v5925
      %v6182 = vmul.f32 %v5158, %v5926
      %v6183 = vmul.f32 %v5159, %v5927
      %v6184 = vmul.f32 %v5160, %v5928
      %v6185 = vmul.f32 %v5161, %v5929
      %v6186 = vmul.f32 %v5162, %v5930
      %v6187 = vmul.f32 %v5163, %v5931
      %v6188 = vmul.f32 %v5164, %v5932
      %v6189 = vmul.f32 %v5165, %v5933
      %v6190 = vmul.f32 %v5166, %v5934
      %v6191 = vmul.f32 %v5167, %v5935
      %v6192 = vmul.f32 %v5168, %v5936
      %v6193 = vmul.f32 %v5169, %v5937
      %v6194 = vmul.f32 %v5170, %v5938
      %v6195 = vmul.f32 %v5171, %v5939
      %v6196 = vmul.f32 %v5172, %v5940
      %v6197 = vmul.f32 %v5173, %v5941
      %v6198 = vmul.f32 %v5174, %v5942
      %v6199 = vmul.f32 %v5175, %v5943
      %v6200 = vmul.f32 %v5176, %v5944
      %v6201 = vmul.f32 %v5177, %v5945
      %v6202 = vmul.f32 %v5178, %v5946
      %v6203 = vmul.f32 %v5179, %v5947
      %v6204 = vmul.f32 %v5180, %v5948
      %v6205 = vmul.f32 %v5181, %v5949
      %v6206 = vmul.f32 %v5182, %v5950
      %v6207 = vmul.f32 %v5183, %v5951
      %v6208 = vmul.f32 %v5184, %v5952
      %v6209 = vmul.f32 %v5185, %v5953
      %v6210 = vmul.f32 %v5186, %v5954
      %v6211 = vmul.f32 %v5187, %v5955
      %v6212 = vmul.f32 %v5188, %v5956
      %v6213 = vmul.f32 %v5189, %v5957
      %v6214 = vmul.f32 %v5190, %v5958
      %v6215 = vmul.f32 %v5191, %v5959
      %v6216 = vmul.f32 %v5192, %v5960
      %v6217 = vmul.f32 %v5193, %v5961
      %v6218 = vmul.f32 %v5194, %v5962
      %v6219 = vmul.f32 %v5195, %v5963
      %v6220 = vmul.f32 %v5196, %v5964
      %v6221 = vmul.f32 %v5197, %v5965
      %v6222 = vmul.f32 %v5198, %v5966
      %v6223 = vmul.f32 %v5199, %v5967
      %v6224 = vmul.f32 %v5200, %v5968
      %v6225 = vmul.f32 %v5201, %v5969
      %v6226 = vmul.f32 %v5202, %v5970
      %v6227 = vmul.f32 %v5203, %v5971
      %v6228 = vmul.f32 %v5204, %v5972
      %v6229 = vmul.f32 %v5205, %v5973
      %v6230 = vmul.f32 %v5206, %v5974
      %v6231 = vmul.f32 %v5207, %v5975
      %v6232 = vmul.f32 %v5208, %v5976
      %v6233 = vmul.f32 %v5209, %v5977
      %v6234 = vmul.f32 %v5210, %v5978
      %v6235 = vmul.f32 %v5211, %v5979
      %v6236 = vmul.f32 %v5212, %v5980
      %v6237 = vmul.f32 %v5213, %v5981
      %v6238 = vmul.f32 %v5214, %v5982
      %v6239 = vmul.f32 %v5215, %v5983
      %v6240 = vmul.f32 %v5216, %v5984
      %v6241 = vmul.f32 %v5217, %v5985
      %v6242 = vmul.f32 %v5218, %v5986
      %v6243 = vmul.f32 %v5219, %v5987
      %v6244 = vmul.f32 %v5220, %v5988
      %v6245 = vmul.f32 %v5221, %v5989
      %v6246 = vmul.f32 %v5222, %v5990
      %v6247 = vmul.f32 %v5223, %v5991
      %v6248 = vmul.f32 %v5224, %v5992
      %v6249 = vmul.f32 %v5225, %v5993
      %v6250 = vmul.f32 %v5226, %v5994
      %v6251 = vmul.f32 %v5227, %v5995
      %v6252 = vmul.f32 %v5228, %v5996
      %v6253 = vmul.f32 %v5229, %v5997
      %v6254 = vmul.f32 %v5230, %v5998
      %v6255 = vmul.f32 %v5231, %v5999
      %v6256 = vmul.f32 %v5232, %v6000
      %v6257 = vmul.f32 %v5233, %v6001
      %v6258 = vmul.f32 %v5234, %v6002
      %v6259 = vmul.f32 %v5235, %v6003
      %v6260 = vmul.f32 %v5236, %v6004
      %v6261 = vmul.f32 %v5237, %v6005
      %v6262 = vmul.f32 %v5238, %v6006
      %v6263 = vmul.f32 %v5239, %v6007
      %v6264 = vmul.f32 %v5240, %v6008
      %v6265 = vmul.f32 %v5241, %v6009
      %v6266 = vmul.f32 %v5242, %v6010
      %v6267 = vmul.f32 %v5243, %v6011
      %v6268 = vmul.f32 %v5244, %v6012
      %v6269 = vmul.f32 %v5245, %v6013
      %v6270 = vmul.f32 %v5246, %v6014
      %v6271 = vmul.f32 %v5247, %v6015
      %v6272 = vmul.f32 %v5248, %v6016
      %v6273 = vmul.f32 %v5249, %v6017
      %v6274 = vmul.f32 %v5250, %v6018
      %v6275 = vmul.f32 %v5251, %v6019
      %v6276 = vmul.f32 %v5252, %v6020
      %v6277 = vmul.f32 %v5253, %v6021
      %v6278 = vmul.f32 %v5254, %v6022
      %v6279 = vmul.f32 %v5255, %v6023
      %v6280 = vmul.f32 %v5256, %v6024
      %v6281 = vmul.f32 %v5257, %v6025
      %v6282 = vmul.f32 %v5258, %v6026
      %v6283 = vmul.f32 %v5259, %v6027
      %v6284 = vmul.f32 %v5260, %v6028
      %v6285 = vmul.f32 %v5261, %v6029
      %v6286 = vmul.f32 %v5262, %v6030
      %v6287 = vmul.f32 %v5263, %v6031
      %v6288 = vmul.f32 %v5264, %v6032
      %v6289 = vmul.f32 %v5265, %v6033
      %v6290 = vpack.c.bf16 %v6038, %v6034
      %v6291 = vpack.c.bf16 %v6039, %v6035
      %v6292 = vpack.c.bf16 %v6040, %v6036
      %v6293 = vpack.c.bf16 %v6041, %v6037
      %v6294 = vpack.c.bf16 %v6046, %v6042
      %v6295 = vpack.c.bf16 %v6047, %v6043
      %v6296 = vpack.c.bf16 %v6048, %v6044
      %v6297 = vpack.c.bf16 %v6049, %v6045
      %v6298 = vpack.c.bf16 %v6054, %v6050
      %v6299 = vpack.c.bf16 %v6055, %v6051
      %v6300 = vpack.c.bf16 %v6056, %v6052
      %v6301 = vpack.c.bf16 %v6057, %v6053
      %v6302 = vpack.c.bf16 %v6062, %v6058
      %v6303 = vpack.c.bf16 %v6063, %v6059
      %v6304 = vpack.c.bf16 %v6064, %v6060
      %v6305 = vpack.c.bf16 %v6065, %v6061
      %v6306 = vpack.c.bf16 %v6070, %v6066
      %v6307 = vpack.c.bf16 %v6071, %v6067
      %v6308 = vpack.c.bf16 %v6072, %v6068
      %v6309 = vpack.c.bf16 %v6073, %v6069
      %v6310 = vpack.c.bf16 %v6078, %v6074
      %v6311 = vpack.c.bf16 %v6079, %v6075
      %v6312 = vpack.c.bf16 %v6080, %v6076
      %v6313 = vpack.c.bf16 %v6081, %v6077
      %v6314 = vpack.c.bf16 %v6086, %v6082
      %v6315 = vpack.c.bf16 %v6087, %v6083
      %v6316 = vpack.c.bf16 %v6088, %v6084
      %v6317 = vpack.c.bf16 %v6089, %v6085
      %v6318 = vpack.c.bf16 %v6094, %v6090
      %v6319 = vpack.c.bf16 %v6095, %v6091
      %v6320 = vpack.c.bf16 %v6096, %v6092
      %v6321 = vpack.c.bf16 %v6097, %v6093
      %v6322 = vpack.c.bf16 %v6102, %v6098
      %v6323 = vpack.c.bf16 %v6103, %v6099
      %v6324 = vpack.c.bf16 %v6104, %v6100
      %v6325 = vpack.c.bf16 %v6105, %v6101
      %v6326 = vpack.c.bf16 %v6110, %v6106
      %v6327 = vpack.c.bf16 %v6111, %v6107
      %v6328 = vpack.c.bf16 %v6112, %v6108
      %v6329 = vpack.c.bf16 %v6113, %v6109
      %v6330 = vpack.c.bf16 %v6118, %v6114
      %v6331 = vpack.c.bf16 %v6119, %v6115
      %v6332 = vpack.c.bf16 %v6120, %v6116
      %v6333 = vpack.c.bf16 %v6121, %v6117
      %v6334 = vpack.c.bf16 %v6126, %v6122
      %v6335 = vpack.c.bf16 %v6127, %v6123
      %v6336 = vpack.c.bf16 %v6128, %v6124
      %v6337 = vpack.c.bf16 %v6129, %v6125
      %v6338 = vpack.c.bf16 %v6134, %v6130
      %v6339 = vpack.c.bf16 %v6135, %v6131
      %v6340 = vpack.c.bf16 %v6136, %v6132
      %v6341 = vpack.c.bf16 %v6137, %v6133
      %v6342 = vpack.c.bf16 %v6142, %v6138
      %v6343 = vpack.c.bf16 %v6143, %v6139
      %v6344 = vpack.c.bf16 %v6144, %v6140
      %v6345 = vpack.c.bf16 %v6145, %v6141
      %v6346 = vpack.c.bf16 %v6150, %v6146
      %v6347 = vpack.c.bf16 %v6151, %v6147
      %v6348 = vpack.c.bf16 %v6152, %v6148
      %v6349 = vpack.c.bf16 %v6153, %v6149
      %v6350 = vpack.c.bf16 %v6158, %v6154
      %v6351 = vpack.c.bf16 %v6159, %v6155
      %v6352 = vpack.c.bf16 %v6160, %v6156
      %v6353 = vpack.c.bf16 %v6161, %v6157
      %v6354 = vpack.c.bf16 %v6166, %v6162
      %v6355 = vpack.c.bf16 %v6167, %v6163
      %v6356 = vpack.c.bf16 %v6168, %v6164
      %v6357 = vpack.c.bf16 %v6169, %v6165
      %v6358 = vpack.c.bf16 %v6174, %v6170
      %v6359 = vpack.c.bf16 %v6175, %v6171
      %v6360 = vpack.c.bf16 %v6176, %v6172
      %v6361 = vpack.c.bf16 %v6177, %v6173
      %v6362 = vpack.c.bf16 %v6182, %v6178
      %v6363 = vpack.c.bf16 %v6183, %v6179
      %v6364 = vpack.c.bf16 %v6184, %v6180
      %v6365 = vpack.c.bf16 %v6185, %v6181
      %v6366 = vpack.c.bf16 %v6190, %v6186
      %v6367 = vpack.c.bf16 %v6191, %v6187
      %v6368 = vpack.c.bf16 %v6192, %v6188
      %v6369 = vpack.c.bf16 %v6193, %v6189
      %v6370 = vpack.c.bf16 %v6198, %v6194
      %v6371 = vpack.c.bf16 %v6199, %v6195
      %v6372 = vpack.c.bf16 %v6200, %v6196
      %v6373 = vpack.c.bf16 %v6201, %v6197
      %v6374 = vpack.c.bf16 %v6206, %v6202
      %v6375 = vpack.c.bf16 %v6207, %v6203
      %v6376 = vpack.c.bf16 %v6208, %v6204
      %v6377 = vpack.c.bf16 %v6209, %v6205
      %v6378 = vpack.c.bf16 %v6214, %v6210
      %v6379 = vpack.c.bf16 %v6215, %v6211
      %v6380 = vpack.c.bf16 %v6216, %v6212
      %v6381 = vpack.c.bf16 %v6217, %v6213
      %v6382 = vpack.c.bf16 %v6222, %v6218
      %v6383 = vpack.c.bf16 %v6223, %v6219
      %v6384 = vpack.c.bf16 %v6224, %v6220
      %v6385 = vpack.c.bf16 %v6225, %v6221
      %v6386 = vpack.c.bf16 %v6230, %v6226
      %v6387 = vpack.c.bf16 %v6231, %v6227
      %v6388 = vpack.c.bf16 %v6232, %v6228
      %v6389 = vpack.c.bf16 %v6233, %v6229
      %v6390 = vpack.c.bf16 %v6238, %v6234
      %v6391 = vpack.c.bf16 %v6239, %v6235
      %v6392 = vpack.c.bf16 %v6240, %v6236
      %v6393 = vpack.c.bf16 %v6241, %v6237
      %v6394 = vpack.c.bf16 %v6246, %v6242
      %v6395 = vpack.c.bf16 %v6247, %v6243
      %v6396 = vpack.c.bf16 %v6248, %v6244
      %v6397 = vpack.c.bf16 %v6249, %v6245
      %v6398 = vpack.c.bf16 %v6254, %v6250
      %v6399 = vpack.c.bf16 %v6255, %v6251
      %v6400 = vpack.c.bf16 %v6256, %v6252
      %v6401 = vpack.c.bf16 %v6257, %v6253
      %v6402 = vpack.c.bf16 %v6262, %v6258
      %v6403 = vpack.c.bf16 %v6263, %v6259
      %v6404 = vpack.c.bf16 %v6264, %v6260
      %v6405 = vpack.c.bf16 %v6265, %v6261
      %v6406 = vpack.c.bf16 %v6270, %v6266
      %v6407 = vpack.c.bf16 %v6271, %v6267
      %v6408 = vpack.c.bf16 %v6272, %v6268
      %v6409 = vpack.c.bf16 %v6273, %v6269
      %v6410 = vpack.c.bf16 %v6278, %v6274
      %v6411 = vpack.c.bf16 %v6279, %v6275
      %v6412 = vpack.c.bf16 %v6280, %v6276
      %v6413 = vpack.c.bf16 %v6281, %v6277
      %v6414 = vpack.c.bf16 %v6286, %v6282
      %v6415 = vpack.c.bf16 %v6287, %v6283
      %v6416 = vpack.c.bf16 %v6288, %v6284
      %v6417 = vpack.c.bf16 %v6289, %v6285
      %v6418 = vld [vmem:[%s5] sm:$0xff]
      %v6419 = vld [vmem:[%s5 + $0x8] sm:$0xff]
      %v6420 = vld [vmem:[%s5 + $0x10] sm:$0xff]
      %v6421 = vld [vmem:[%s5 + $0x18] sm:$0xff]
      %v6422 = vld [vmem:[%s5 + $0x20] sm:$0xff]
      %v6423 = vld [vmem:[%s5 + $0x28] sm:$0xff]
      %v6424 = vld [vmem:[%s5 + $0x30] sm:$0xff]
      %v6425 = vld [vmem:[%s5 + $0x38] sm:$0xff]
      %v6426 = vld [vmem:[%s5 + $0x40] sm:$0xff]
      %v6427 = vld [vmem:[%s5 + $0x48] sm:$0xff]
      %v6428 = vld [vmem:[%s5 + $0x50] sm:$0xff]
      %v6429 = vld [vmem:[%s5 + $0x58] sm:$0xff]
      %v6430 = vld [vmem:[%s5 + $0x60] sm:$0xff]
      %v6431 = vld [vmem:[%s5 + $0x68] sm:$0xff]
      %v6432 = vld [vmem:[%s5 + $0x70] sm:$0xff]
      %v6433 = vld [vmem:[%s5 + $0x78] sm:$0xff]
      %v6434 = vld [vmem:[%s5 + $0x80] sm:$0xff]
      %v6435 = vld [vmem:[%s5 + $0x88] sm:$0xff]
      %v6436 = vld [vmem:[%s5 + $0x90] sm:$0xff]
      %v6437 = vld [vmem:[%s5 + $0x98] sm:$0xff]
      %v6438 = vld [vmem:[%s5 + $0xa0] sm:$0xff]
      %v6439 = vld [vmem:[%s5 + $0xa8] sm:$0xff]
      %v6440 = vld [vmem:[%s5 + $0xb0] sm:$0xff]
      %v6441 = vld [vmem:[%s5 + $0xb8] sm:$0xff]
      %v6442 = vld [vmem:[%s5 + $0xc0] sm:$0xff]
      %v6443 = vld [vmem:[%s5 + $0xc8] sm:$0xff]
      %v6444 = vld [vmem:[%s5 + $0xd0] sm:$0xff]
      %v6445 = vld [vmem:[%s5 + $0xd8] sm:$0xff]
      %v6446 = vld [vmem:[%s5 + $0xe0] sm:$0xff]
      %v6447 = vld [vmem:[%s5 + $0xe8] sm:$0xff]
      %v6448 = vld [vmem:[%s5 + $0xf0] sm:$0xff]
      %v6449 = vld [vmem:[%s5 + $0xf8] sm:$0xff]
      %v6450 = vld [vmem:[%s5 + $0x100] sm:$0xff]
      %v6451 = vld [vmem:[%s5 + $0x108] sm:$0xff]
      %v6452 = vld [vmem:[%s5 + $0x110] sm:$0xff]
      %v6453 = vld [vmem:[%s5 + $0x118] sm:$0xff]
      %v6454 = vld [vmem:[%s5 + $0x120] sm:$0xff]
      %v6455 = vld [vmem:[%s5 + $0x128] sm:$0xff]
      %v6456 = vld [vmem:[%s5 + $0x130] sm:$0xff]
      %v6457 = vld [vmem:[%s5 + $0x138] sm:$0xff]
      %v6458 = vld [vmem:[%s5 + $0x140] sm:$0xff]
      %v6459 = vld [vmem:[%s5 + $0x148] sm:$0xff]
      %v6460 = vld [vmem:[%s5 + $0x150] sm:$0xff]
      %v6461 = vld [vmem:[%s5 + $0x158] sm:$0xff]
      %v6462 = vld [vmem:[%s5 + $0x160] sm:$0xff]
      %v6463 = vld [vmem:[%s5 + $0x168] sm:$0xff]
      %v6464 = vld [vmem:[%s5 + $0x170] sm:$0xff]
      %v6465 = vld [vmem:[%s5 + $0x178] sm:$0xff]
      %v6466 = vld [vmem:[%s5 + $0x180] sm:$0xff]
      %v6467 = vld [vmem:[%s5 + $0x188] sm:$0xff]
      %v6468 = vld [vmem:[%s5 + $0x190] sm:$0xff]
      %v6469 = vld [vmem:[%s5 + $0x198] sm:$0xff]
      %v6470 = vld [vmem:[%s5 + $0x1a0] sm:$0xff]
      %v6471 = vld [vmem:[%s5 + $0x1a8] sm:$0xff]
      %v6472 = vld [vmem:[%s5 + $0x1b0] sm:$0xff]
      %v6473 = vld [vmem:[%s5 + $0x1b8] sm:$0xff]
      %v6474 = vld [vmem:[%s5 + $0x1c0] sm:$0xff]
      %v6475 = vld [vmem:[%s5 + $0x1c8] sm:$0xff]
      %v6476 = vld [vmem:[%s5 + $0x1d0] sm:$0xff]
      %v6477 = vld [vmem:[%s5 + $0x1d8] sm:$0xff]
      %v6478 = vld [vmem:[%s5 + $0x1e0] sm:$0xff]
      %v6479 = vld [vmem:[%s5 + $0x1e8] sm:$0xff]
      %v6480 = vld [vmem:[%s5 + $0x1f0] sm:$0xff]
      %v6481 = vld [vmem:[%s5 + $0x1f8] sm:$0xff]
      %v6482 = vld [vmem:[#allocation7] sm:$0x3]
      %v6484 = vlaneseq
      %v6485 = vshrl.u32 %v6484, 7
      %v6486 = vsub.s32 0, %v6485
      %v6487 = vrot.slane %v6482, %v6486
      %v6488 = vlaneseq
      %v6489 = vshrl.u32 %v6488, 7
      %v6490 = vsub.s32 1, %v6489
      %v6491 = vrot.slane %v6482, %v6490
      %v6558 = vunpack.c.l.b16 %v6418
      %v6559 = vunpack.c.h.b16 %v6418
      %v6560 = vunpack.c.l.b16 %v6419
      %v6561 = vunpack.c.h.b16 %v6419
      %v6562 = vunpack.c.l.b16 %v6420
      %v6563 = vunpack.c.h.b16 %v6420
      %v6564 = vunpack.c.l.b16 %v6421
      %v6565 = vunpack.c.h.b16 %v6421
      %v6566 = vunpack.c.l.b16 %v6422
      %v6567 = vunpack.c.h.b16 %v6422
      %v6568 = vunpack.c.l.b16 %v6423
      %v6569 = vunpack.c.h.b16 %v6423
      %v6570 = vunpack.c.l.b16 %v6424
      %v6571 = vunpack.c.h.b16 %v6424
      %v6572 = vunpack.c.l.b16 %v6425
      %v6573 = vunpack.c.h.b16 %v6425
      %v6574 = vunpack.c.l.b16 %v6426
      %v6575 = vunpack.c.h.b16 %v6426
      %v6576 = vunpack.c.l.b16 %v6427
      %v6577 = vunpack.c.h.b16 %v6427
      %v6578 = vunpack.c.l.b16 %v6428
      %v6579 = vunpack.c.h.b16 %v6428
      %v6580 = vunpack.c.l.b16 %v6429
      %v6581 = vunpack.c.h.b16 %v6429
      %v6582 = vunpack.c.l.b16 %v6430
      %v6583 = vunpack.c.h.b16 %v6430
      %v6584 = vunpack.c.l.b16 %v6431
      %v6585 = vunpack.c.h.b16 %v6431
      %v6586 = vunpack.c.l.b16 %v6432
      %v6587 = vunpack.c.h.b16 %v6432
      %v6588 = vunpack.c.l.b16 %v6433
      %v6589 = vunpack.c.h.b16 %v6433
      %v6590 = vunpack.c.l.b16 %v6434
      %v6591 = vunpack.c.h.b16 %v6434
      %v6592 = vunpack.c.l.b16 %v6435
      %v6593 = vunpack.c.h.b16 %v6435
      %v6594 = vunpack.c.l.b16 %v6436
      %v6595 = vunpack.c.h.b16 %v6436
      %v6596 = vunpack.c.l.b16 %v6437
      %v6597 = vunpack.c.h.b16 %v6437
      %v6598 = vunpack.c.l.b16 %v6438
      %v6599 = vunpack.c.h.b16 %v6438
      %v6600 = vunpack.c.l.b16 %v6439
      %v6601 = vunpack.c.h.b16 %v6439
      %v6602 = vunpack.c.l.b16 %v6440
      %v6603 = vunpack.c.h.b16 %v6440
      %v6604 = vunpack.c.l.b16 %v6441
      %v6605 = vunpack.c.h.b16 %v6441
      %v6606 = vunpack.c.l.b16 %v6442
      %v6607 = vunpack.c.h.b16 %v6442
      %v6608 = vunpack.c.l.b16 %v6443
      %v6609 = vunpack.c.h.b16 %v6443
      %v6610 = vunpack.c.l.b16 %v6444
      %v6611 = vunpack.c.h.b16 %v6444
      %v6612 = vunpack.c.l.b16 %v6445
      %v6613 = vunpack.c.h.b16 %v6445
      %v6614 = vunpack.c.l.b16 %v6446
      %v6615 = vunpack.c.h.b16 %v6446
      %v6616 = vunpack.c.l.b16 %v6447
      %v6617 = vunpack.c.h.b16 %v6447
      %v6618 = vunpack.c.l.b16 %v6448
      %v6619 = vunpack.c.h.b16 %v6448
      %v6620 = vunpack.c.l.b16 %v6449
      %v6621 = vunpack.c.h.b16 %v6449
      %v6622 = vunpack.c.l.b16 %v6450
      %v6623 = vunpack.c.h.b16 %v6450
      %v6624 = vunpack.c.l.b16 %v6451
      %v6625 = vunpack.c.h.b16 %v6451
      %v6626 = vunpack.c.l.b16 %v6452
      %v6627 = vunpack.c.h.b16 %v6452
      %v6628 = vunpack.c.l.b16 %v6453
      %v6629 = vunpack.c.h.b16 %v6453
      %v6630 = vunpack.c.l.b16 %v6454
      %v6631 = vunpack.c.h.b16 %v6454
      %v6632 = vunpack.c.l.b16 %v6455
      %v6633 = vunpack.c.h.b16 %v6455
      %v6634 = vunpack.c.l.b16 %v6456
      %v6635 = vunpack.c.h.b16 %v6456
      %v6636 = vunpack.c.l.b16 %v6457
      %v6637 = vunpack.c.h.b16 %v6457
      %v6638 = vunpack.c.l.b16 %v6458
      %v6639 = vunpack.c.h.b16 %v6458
      %v6640 = vunpack.c.l.b16 %v6459
      %v6641 = vunpack.c.h.b16 %v6459
      %v6642 = vunpack.c.l.b16 %v6460
      %v6643 = vunpack.c.h.b16 %v6460
      %v6644 = vunpack.c.l.b16 %v6461
      %v6645 = vunpack.c.h.b16 %v6461
      %v6646 = vunpack.c.l.b16 %v6462
      %v6647 = vunpack.c.h.b16 %v6462
      %v6648 = vunpack.c.l.b16 %v6463
      %v6649 = vunpack.c.h.b16 %v6463
      %v6650 = vunpack.c.l.b16 %v6464
      %v6651 = vunpack.c.h.b16 %v6464
      %v6652 = vunpack.c.l.b16 %v6465
      %v6653 = vunpack.c.h.b16 %v6465
      %v6654 = vunpack.c.l.b16 %v6466
      %v6655 = vunpack.c.h.b16 %v6466
      %v6656 = vunpack.c.l.b16 %v6467
      %v6657 = vunpack.c.h.b16 %v6467
      %v6658 = vunpack.c.l.b16 %v6468
      %v6659 = vunpack.c.h.b16 %v6468
      %v6660 = vunpack.c.l.b16 %v6469
      %v6661 = vunpack.c.h.b16 %v6469
      %v6662 = vunpack.c.l.b16 %v6470
      %v6663 = vunpack.c.h.b16 %v6470
      %v6664 = vunpack.c.l.b16 %v6471
      %v6665 = vunpack.c.h.b16 %v6471
      %v6666 = vunpack.c.l.b16 %v6472
      %v6667 = vunpack.c.h.b16 %v6472
      %v6668 = vunpack.c.l.b16 %v6473
      %v6669 = vunpack.c.h.b16 %v6473
      %v6670 = vunpack.c.l.b16 %v6474
      %v6671 = vunpack.c.h.b16 %v6474
      %v6672 = vunpack.c.l.b16 %v6475
      %v6673 = vunpack.c.h.b16 %v6475
      %v6674 = vunpack.c.l.b16 %v6476
      %v6675 = vunpack.c.h.b16 %v6476
      %v6676 = vunpack.c.l.b16 %v6477
      %v6677 = vunpack.c.h.b16 %v6477
      %v6678 = vunpack.c.l.b16 %v6478
      %v6679 = vunpack.c.h.b16 %v6478
      %v6680 = vunpack.c.l.b16 %v6479
      %v6681 = vunpack.c.h.b16 %v6479
      %v6682 = vunpack.c.l.b16 %v6480
      %v6683 = vunpack.c.h.b16 %v6480
      %v6684 = vunpack.c.l.b16 %v6481
      %v6685 = vunpack.c.h.b16 %v6481
      %v6686 = vpack.c.b16 %v6560, %v6558
      %v6687 = vpack.c.b16 %v6561, %v6559
      %v6688 = vpack.c.b16 %v6564, %v6562
      %v6689 = vpack.c.b16 %v6565, %v6563
      %v6690 = vpack.c.b16 %v6568, %v6566
      %v6691 = vpack.c.b16 %v6569, %v6567
      %v6692 = vpack.c.b16 %v6572, %v6570
      %v6693 = vpack.c.b16 %v6573, %v6571
      %v6694 = vpack.c.b16 %v6576, %v6574
      %v6695 = vpack.c.b16 %v6577, %v6575
      %v6696 = vpack.c.b16 %v6580, %v6578
      %v6697 = vpack.c.b16 %v6581, %v6579
      %v6698 = vpack.c.b16 %v6584, %v6582
      %v6699 = vpack.c.b16 %v6585, %v6583
      %v6700 = vpack.c.b16 %v6588, %v6586
      %v6701 = vpack.c.b16 %v6589, %v6587
      %v6702 = vpack.c.b16 %v6592, %v6590
      %v6703 = vpack.c.b16 %v6593, %v6591
      %v6704 = vpack.c.b16 %v6596, %v6594
      %v6705 = vpack.c.b16 %v6597, %v6595
      %v6706 = vpack.c.b16 %v6600, %v6598
      %v6707 = vpack.c.b16 %v6601, %v6599
      %v6708 = vpack.c.b16 %v6604, %v6602
      %v6709 = vpack.c.b16 %v6605, %v6603
      %v6710 = vpack.c.b16 %v6608, %v6606
      %v6711 = vpack.c.b16 %v6609, %v6607
      %v6712 = vpack.c.b16 %v6612, %v6610
      %v6713 = vpack.c.b16 %v6613, %v6611
      %v6714 = vpack.c.b16 %v6616, %v6614
      %v6715 = vpack.c.b16 %v6617, %v6615
      %v6716 = vpack.c.b16 %v6620, %v6618
      %v6717 = vpack.c.b16 %v6621, %v6619
      %v6718 = vpack.c.b16 %v6624, %v6622
      %v6719 = vpack.c.b16 %v6625, %v6623
      %v6720 = vpack.c.b16 %v6628, %v6626
      %v6721 = vpack.c.b16 %v6629, %v6627
      %v6722 = vpack.c.b16 %v6632, %v6630
      %v6723 = vpack.c.b16 %v6633, %v6631
      %v6724 = vpack.c.b16 %v6636, %v6634
      %v6725 = vpack.c.b16 %v6637, %v6635
      %v6726 = vpack.c.b16 %v6640, %v6638
      %v6727 = vpack.c.b16 %v6641, %v6639
      %v6728 = vpack.c.b16 %v6644, %v6642
      %v6729 = vpack.c.b16 %v6645, %v6643
      %v6730 = vpack.c.b16 %v6648, %v6646
      %v6731 = vpack.c.b16 %v6649, %v6647
      %v6732 = vpack.c.b16 %v6652, %v6650
      %v6733 = vpack.c.b16 %v6653, %v6651
      %v6734 = vpack.c.b16 %v6656, %v6654
      %v6735 = vpack.c.b16 %v6657, %v6655
      %v6736 = vpack.c.b16 %v6660, %v6658
      %v6737 = vpack.c.b16 %v6661, %v6659
      %v6738 = vpack.c.b16 %v6664, %v6662
      %v6739 = vpack.c.b16 %v6665, %v6663
      %v6740 = vpack.c.b16 %v6668, %v6666
      %v6741 = vpack.c.b16 %v6669, %v6667
      %v6742 = vpack.c.b16 %v6672, %v6670
      %v6743 = vpack.c.b16 %v6673, %v6671
      %v6744 = vpack.c.b16 %v6676, %v6674
      %v6745 = vpack.c.b16 %v6677, %v6675
      %v6746 = vpack.c.b16 %v6680, %v6678
      %v6747 = vpack.c.b16 %v6681, %v6679
      %v6748 = vpack.c.b16 %v6684, %v6682
      %v6749 = vpack.c.b16 %v6685, %v6683
      %6814 = vmatprep.subr.bf16.mxu0 %v6687
      %6815 = vmatpush1.bf16.msra.mxu0 %v6686
      %6816 = vmatprep.subr.bf16.mxu0 %v6689
      %6817 = vmatpush1.bf16.msra.mxu0 %v6688
      %6818 = vmatprep.subr.bf16.mxu0 %v6691
      %6819 = vmatpush1.bf16.msra.mxu0 %v6690
      %6820 = vmatprep.subr.bf16.mxu0 %v6693
      %6821 = vmatpush1.bf16.msra.mxu0 %v6692
      %6822 = vmatprep.subr.bf16.mxu0 %v6695
      %6823 = vmatpush1.bf16.msra.mxu0 %v6694
      %6824 = vmatprep.subr.bf16.mxu0 %v6697
      %6825 = vmatpush1.bf16.msra.mxu0 %v6696
      %6826 = vmatprep.subr.bf16.mxu0 %v6699
      %6827 = vmatpush1.bf16.msra.mxu0 %v6698
      %6828 = vmatprep.subr.bf16.mxu0 %v6701
      %6829 = vmatpush1.bf16.msra.mxu0 %v6700
      %6830 = vmatprep.subr.bf16.mxu0 %v6703
      %6831 = vmatpush1.bf16.msra.mxu0 %v6702
      %6832 = vmatprep.subr.bf16.mxu0 %v6705
      %6833 = vmatpush1.bf16.msra.mxu0 %v6704
      %6834 = vmatprep.subr.bf16.mxu0 %v6707
      %6835 = vmatpush1.bf16.msra.mxu0 %v6706
      %6836 = vmatprep.subr.bf16.mxu0 %v6709
      %6837 = vmatpush1.bf16.msra.mxu0 %v6708
      %6838 = vmatprep.subr.bf16.mxu0 %v6711
      %6839 = vmatpush1.bf16.msra.mxu0 %v6710
      %6840 = vmatprep.subr.bf16.mxu0 %v6713
      %6841 = vmatpush1.bf16.msra.mxu0 %v6712
      %6842 = vmatprep.subr.bf16.mxu0 %v6715
      %6843 = vmatpush1.bf16.msra.mxu0 %v6714
      %6844 = vmatprep.subr.bf16.mxu0 %v6717
      %6845 = vmatpush1.bf16.msra.mxu0 %v6716
      %6846 = vmatprep.mubr.bf16.mxu0 %v6291
      %6847 = vmatmul.mubr.bf16.gmra.mrb[0].mxu0 %v6290
      %v6848 = vpop.f32.mrb[0].mxu0
      %v6849 = vadd.f32 %v6487, %v6848
      %v6850 = vpop.f32.mrb[0].mxu0
      %v6851 = vadd.f32 %v6491, %v6850
      %v6852 = vpop.f32.mrb[0].mxu0
      %v6853 = vadd.f32 %v6487, %v6852
      %v6854 = vpop.f32.mrb[0].mxu0
      %v6855 = vadd.f32 %v6491, %v6854
      %6856 = vmatprep.mubr.bf16.mxu0 %v6295
      %6857 = vmatmul.mubr.bf16.gmra.mrb[0].mxu0 %v6294
      %v6858 = vpop.f32.mrb[0].mxu0
      %v6859 = vadd.f32 %v6487, %v6858
      %v6860 = vpop.f32.mrb[0].mxu0
      %v6861 = vadd.f32 %v6491, %v6860
      %v6862 = vpop.f32.mrb[0].mxu0
      %v6863 = vadd.f32 %v6487, %v6862
      %v6864 = vpop.f32.mrb[0].mxu0
      %v6865 = vadd.f32 %v6491, %v6864
      %6866 = vmatprep.mubr.bf16.mxu0 %v6299
      %6867 = vmatmul.mubr.bf16.gmra.mrb[0].mxu0 %v6298
      %v6868 = vpop.f32.mrb[0].mxu0
      %v6869 = vadd.f32 %v6487, %v6868
      %v6870 = vpop.f32.mrb[0].mxu0
      %v6871 = vadd.f32 %v6491, %v6870
      %v6872 = vpop.f32.mrb[0].mxu0
      %v6873 = vadd.f32 %v6487, %v6872
      %v6874 = vpop.f32.mrb[0].mxu0
      %v6875 = vadd.f32 %v6491, %v6874
      %6876 = vmatprep.mubr.bf16.mxu0 %v6303
      %6877 = vmatmul.mubr.bf16.gmra.mrb[0].mxu0 %v6302
      %v6878 = vpop.f32.mrb[0].mxu0
      %v6879 = vadd.f32 %v6487, %v6878
      %v6880 = vpop.f32.mrb[0].mxu0
      %v6881 = vadd.f32 %v6491, %v6880
      %v6882 = vpop.f32.mrb[0].mxu0
      %v6883 = vadd.f32 %v6487, %v6882
      %v6884 = vpop.f32.mrb[0].mxu0
      %v6885 = vadd.f32 %v6491, %v6884
      %6886 = vmatprep.mubr.bf16.mxu0 %v6307
      %6887 = vmatmul.mubr.bf16.gmra.mrb[0].mxu0 %v6306
      %v6888 = vpop.f32.mrb[0].mxu0
      %v6889 = vadd.f32 %v6487, %v6888
      %v6890 = vpop.f32.mrb[0].mxu0
      %v6891 = vadd.f32 %v6491, %v6890
      %v6892 = vpop.f32.mrb[0].mxu0
      %v6893 = vadd.f32 %v6487, %v6892
      %v6894 = vpop.f32.mrb[0].mxu0
      %v6895 = vadd.f32 %v6491, %v6894
      %6896 = vmatprep.mubr.bf16.mxu0 %v6311
      %6897 = vmatmul.mubr.bf16.gmra.mrb[0].mxu0 %v6310
      %v6898 = vpop.f32.mrb[0].mxu0
      %v6899 = vadd.f32 %v6487, %v6898
      %v6900 = vpop.f32.mrb[0].mxu0
      %v6901 = vadd.f32 %v6491, %v6900
      %v6902 = vpop.f32.mrb[0].mxu0
      %v6903 = vadd.f32 %v6487, %v6902
      %v6904 = vpop.f32.mrb[0].mxu0
      %v6905 = vadd.f32 %v6491, %v6904
      %6906 = vmatprep.mubr.bf16.mxu0 %v6315
      %6907 = vmatmul.mubr.bf16.gmra.mrb[0].mxu0 %v6314
      %v6908 = vpop.f32.mrb[0].mxu0
      %v6909 = vadd.f32 %v6487, %v6908
      %v6910 = vpop.f32.mrb[0].mxu0
      %v6911 = vadd.f32 %v6491, %v6910
      %v6912 = vpop.f32.mrb[0].mxu0
      %v6913 = vadd.f32 %v6487, %v6912
      %v6914 = vpop.f32.mrb[0].mxu0
      %v6915 = vadd.f32 %v6491, %v6914
      %6916 = vmatprep.mubr.bf16.mxu0 %v6319
      %6917 = vmatmul.mubr.bf16.gmra.mrb[0].mxu0 %v6318
      %v6918 = vpop.f32.mrb[0].mxu0
      %v6919 = vadd.f32 %v6487, %v6918
      %v6920 = vpop.f32.mrb[0].mxu0
      %v6921 = vadd.f32 %v6491, %v6920
      %v6922 = vpop.f32.mrb[0].mxu0
      %v6923 = vadd.f32 %v6487, %v6922
      %v6924 = vpop.f32.mrb[0].mxu0
      %v6925 = vadd.f32 %v6491, %v6924
      %6926 = vmatprep.mubr.bf16.mxu0 %v6323
      %6927 = vmatmul.mubr.bf16.gmra.mrb[0].mxu0 %v6322
      %v6928 = vpop.f32.mrb[0].mxu0
      %v6929 = vadd.f32 %v6487, %v6928
      %v6930 = vpop.f32.mrb[0].mxu0
      %v6931 = vadd.f32 %v6491, %v6930
      %v6932 = vpop.f32.mrb[0].mxu0
      %v6933 = vadd.f32 %v6487, %v6932
      %v6934 = vpop.f32.mrb[0].mxu0
      %v6935 = vadd.f32 %v6491, %v6934
      %6936 = vmatprep.mubr.bf16.mxu0 %v6327
      %6937 = vmatmul.mubr.bf16.gmra.mrb[0].mxu0 %v6326
      %v6938 = vpop.f32.mrb[0].mxu0
      %v6939 = vadd.f32 %v6487, %v6938
      %v6940 = vpop.f32.mrb[0].mxu0
      %v6941 = vadd.f32 %v6491, %v6940
      %v6942 = vpop.f32.mrb[0].mxu0
      %v6943 = vadd.f32 %v6487, %v6942
      %v6944 = vpop.f32.mrb[0].mxu0
      %v6945 = vadd.f32 %v6491, %v6944
      %6946 = vmatprep.mubr.bf16.mxu0 %v6331
      %6947 = vmatmul.mubr.bf16.gmra.mrb[0].mxu0 %v6330
      %v6948 = vpop.f32.mrb[0].mxu0
      %v6949 = vadd.f32 %v6487, %v6948
      %v6950 = vpop.f32.mrb[0].mxu0
      %v6951 = vadd.f32 %v6491, %v6950
      %v6952 = vpop.f32.mrb[0].mxu0
      %v6953 = vadd.f32 %v6487, %v6952
      %v6954 = vpop.f32.mrb[0].mxu0
      %v6955 = vadd.f32 %v6491, %v6954
      %6956 = vmatprep.mubr.bf16.mxu0 %v6335
      %6957 = vmatmul.mubr.bf16.gmra.mrb[0].mxu0 %v6334
      %v6958 = vpop.f32.mrb[0].mxu0
      %v6959 = vadd.f32 %v6487, %v6958
      %v6960 = vpop.f32.mrb[0].mxu0
      %v6961 = vadd.f32 %v6491, %v6960
      %v6962 = vpop.f32.mrb[0].mxu0
      %v6963 = vadd.f32 %v6487, %v6962
      %v6964 = vpop.f32.mrb[0].mxu0
      %v6965 = vadd.f32 %v6491, %v6964
      %6966 = vmatprep.mubr.bf16.mxu0 %v6339
      %6967 = vmatmul.mubr.bf16.gmra.mrb[0].mxu0 %v6338
      %v6968 = vpop.f32.mrb[0].mxu0
      %v6969 = vadd.f32 %v6487, %v6968
      %v6970 = vpop.f32.mrb[0].mxu0
      %v6971 = vadd.f32 %v6491, %v6970
      %v6972 = vpop.f32.mrb[0].mxu0
      %v6973 = vadd.f32 %v6487, %v6972
      %v6974 = vpop.f32.mrb[0].mxu0
      %v6975 = vadd.f32 %v6491, %v6974
      %6976 = vmatprep.mubr.bf16.mxu0 %v6343
      %6977 = vmatmul.mubr.bf16.gmra.mrb[0].mxu0 %v6342
      %v6978 = vpop.f32.mrb[0].mxu0
      %v6979 = vadd.f32 %v6487, %v6978
      %v6980 = vpop.f32.mrb[0].mxu0
      %v6981 = vadd.f32 %v6491, %v6980
      %v6982 = vpop.f32.mrb[0].mxu0
      %v6983 = vadd.f32 %v6487, %v6982
      %v6984 = vpop.f32.mrb[0].mxu0
      %v6985 = vadd.f32 %v6491, %v6984
      %6986 = vmatprep.mubr.bf16.mxu0 %v6347
      %6987 = vmatmul.mubr.bf16.gmra.mrb[0].mxu0 %v6346
      %v6988 = vpop.f32.mrb[0].mxu0
      %v6989 = vadd.f32 %v6487, %v6988
      %v6990 = vpop.f32.mrb[0].mxu0
      %v6991 = vadd.f32 %v6491, %v6990
      %v6992 = vpop.f32.mrb[0].mxu0
      %v6993 = vadd.f32 %v6487, %v6992
      %v6994 = vpop.f32.mrb[0].mxu0
      %v6995 = vadd.f32 %v6491, %v6994
      %6996 = vmatprep.mubr.bf16.mxu0 %v6351
      %6997 = vmatmul.mubr.bf16.gmra.mrb[0].mxu0 %v6350
      %v6998 = vpop.f32.mrb[0].mxu0
      %v6999 = vadd.f32 %v6487, %v6998
      %v7000 = vpop.f32.mrb[0].mxu0
      %v7001 = vadd.f32 %v6491, %v7000
      %v7002 = vpop.f32.mrb[0].mxu0
      %v7003 = vadd.f32 %v6487, %v7002
      %v7004 = vpop.f32.mrb[0].mxu0
      %v7005 = vadd.f32 %v6491, %v7004
      %7006 = vmatprep.mubr.bf16.mxu0 %v6355
      %7007 = vmatmul.mubr.bf16.gmra.mrb[0].mxu0 %v6354
      %v7008 = vpop.f32.mrb[0].mxu0
      %v7009 = vadd.f32 %v6487, %v7008
      %v7010 = vpop.f32.mrb[0].mxu0
      %v7011 = vadd.f32 %v6491, %v7010
      %v7012 = vpop.f32.mrb[0].mxu0
      %v7013 = vadd.f32 %v6487, %v7012
      %v7014 = vpop.f32.mrb[0].mxu0
      %v7015 = vadd.f32 %v6491, %v7014
      %7016 = vmatprep.mubr.bf16.mxu0 %v6359
      %7017 = vmatmul.mubr.bf16.gmra.mrb[0].mxu0 %v6358
      %v7018 = vpop.f32.mrb[0].mxu0
      %v7019 = vadd.f32 %v6487, %v7018
      %v7020 = vpop.f32.mrb[0].mxu0
      %v7021 = vadd.f32 %v6491, %v7020
      %v7022 = vpop.f32.mrb[0].mxu0
      %v7023 = vadd.f32 %v6487, %v7022
      %v7024 = vpop.f32.mrb[0].mxu0
      %v7025 = vadd.f32 %v6491, %v7024
      %7026 = vmatprep.mubr.bf16.mxu0 %v6363
      %7027 = vmatmul.mubr.bf16.gmra.mrb[0].mxu0 %v6362
      %v7028 = vpop.f32.mrb[0].mxu0
      %v7029 = vadd.f32 %v6487, %v7028
      %v7030 = vpop.f32.mrb[0].mxu0
      %v7031 = vadd.f32 %v6491, %v7030
      %v7032 = vpop.f32.mrb[0].mxu0
      %v7033 = vadd.f32 %v6487, %v7032
      %v7034 = vpop.f32.mrb[0].mxu0
      %v7035 = vadd.f32 %v6491, %v7034
      %7036 = vmatprep.mubr.bf16.mxu0 %v6367
      %7037 = vmatmul.mubr.bf16.gmra.mrb[0].mxu0 %v6366
      %v7038 = vpop.f32.mrb[0].mxu0
      %v7039 = vadd.f32 %v6487, %v7038
      %v7040 = vpop.f32.mrb[0].mxu0
      %v7041 = vadd.f32 %v6491, %v7040
      %v7042 = vpop.f32.mrb[0].mxu0
      %v7043 = vadd.f32 %v6487, %v7042
      %v7044 = vpop.f32.mrb[0].mxu0
      %v7045 = vadd.f32 %v6491, %v7044
      %7046 = vmatprep.mubr.bf16.mxu0 %v6371
      %7047 = vmatmul.mubr.bf16.gmra.mrb[0].mxu0 %v6370
      %v7048 = vpop.f32.mrb[0].mxu0
      %v7049 = vadd.f32 %v6487, %v7048
      %v7050 = vpop.f32.mrb[0].mxu0
      %v7051 = vadd.f32 %v6491, %v7050
      %v7052 = vpop.f32.mrb[0].mxu0
      %v7053 = vadd.f32 %v6487, %v7052
      %v7054 = vpop.f32.mrb[0].mxu0
      %v7055 = vadd.f32 %v6491, %v7054
      %7056 = vmatprep.mubr.bf16.mxu0 %v6375
      %7057 = vmatmul.mubr.bf16.gmra.mrb[0].mxu0 %v6374
      %v7058 = vpop.f32.mrb[0].mxu0
      %v7059 = vadd.f32 %v6487, %v7058
      %v7060 = vpop.f32.mrb[0].mxu0
      %v7061 = vadd.f32 %v6491, %v7060
      %v7062 = vpop.f32.mrb[0].mxu0
      %v7063 = vadd.f32 %v6487, %v7062
      %v7064 = vpop.f32.mrb[0].mxu0
      %v7065 = vadd.f32 %v6491, %v7064
      %7066 = vmatprep.mubr.bf16.mxu0 %v6379
      %7067 = vmatmul.mubr.bf16.gmra.mrb[0].mxu0 %v6378
      %v7068 = vpop.f32.mrb[0].mxu0
      %v7069 = vadd.f32 %v6487, %v7068
      %v7070 = vpop.f32.mrb[0].mxu0
      %v7071 = vadd.f32 %v6491, %v7070
      %v7072 = vpop.f32.mrb[0].mxu0
      %v7073 = vadd.f32 %v6487, %v7072
      %v7074 = vpop.f32.mrb[0].mxu0
      %v7075 = vadd.f32 %v6491, %v7074
      %7076 = vmatprep.mubr.bf16.mxu0 %v6383
      %7077 = vmatmul.mubr.bf16.gmra.mrb[0].mxu0 %v6382
      %v7078 = vpop.f32.mrb[0].mxu0
      %v7079 = vadd.f32 %v6487, %v7078
      %v7080 = vpop.f32.mrb[0].mxu0
      %v7081 = vadd.f32 %v6491, %v7080
      %v7082 = vpop.f32.mrb[0].mxu0
      %v7083 = vadd.f32 %v6487, %v7082
      %v7084 = vpop.f32.mrb[0].mxu0
      %v7085 = vadd.f32 %v6491, %v7084
      %7086 = vmatprep.mubr.bf16.mxu0 %v6387
      %7087 = vmatmul.mubr.bf16.gmra.mrb[0].mxu0 %v6386
      %v7088 = vpop.f32.mrb[0].mxu0
      %v7089 = vadd.f32 %v6487, %v7088
      %v7090 = vpop.f32.mrb[0].mxu0
      %v7091 = vadd.f32 %v6491, %v7090
      %v7092 = vpop.f32.mrb[0].mxu0
      %v7093 = vadd.f32 %v6487, %v7092
      %v7094 = vpop.f32.mrb[0].mxu0
      %v7095 = vadd.f32 %v6491, %v7094
      %7096 = vmatprep.mubr.bf16.mxu0 %v6391
      %7097 = vmatmul.mubr.bf16.gmra.mrb[0].mxu0 %v6390
      %v7098 = vpop.f32.mrb[0].mxu0
      %v7099 = vadd.f32 %v6487, %v7098
      %v7100 = vpop.f32.mrb[0].mxu0
      %v7101 = vadd.f32 %v6491, %v7100
      %v7102 = vpop.f32.mrb[0].mxu0
      %v7103 = vadd.f32 %v6487, %v7102
      %v7104 = vpop.f32.mrb[0].mxu0
      %v7105 = vadd.f32 %v6491, %v7104
      %7106 = vmatprep.mubr.bf16.mxu0 %v6395
      %7107 = vmatmul.mubr.bf16.gmra.mrb[0].mxu0 %v6394
      %v7108 = vpop.f32.mrb[0].mxu0
      %v7109 = vadd.f32 %v6487, %v7108
      %v7110 = vpop.f32.mrb[0].mxu0
      %v7111 = vadd.f32 %v6491, %v7110
      %v7112 = vpop.f32.mrb[0].mxu0
      %v7113 = vadd.f32 %v6487, %v7112
      %v7114 = vpop.f32.mrb[0].mxu0
      %v7115 = vadd.f32 %v6491, %v7114
      %7116 = vmatprep.mubr.bf16.mxu0 %v6399
      %7117 = vmatmul.mubr.bf16.gmra.mrb[0].mxu0 %v6398
      %v7118 = vpop.f32.mrb[0].mxu0
      %v7119 = vadd.f32 %v6487, %v7118
      %v7120 = vpop.f32.mrb[0].mxu0
      %v7121 = vadd.f32 %v6491, %v7120
      %v7122 = vpop.f32.mrb[0].mxu0
      %v7123 = vadd.f32 %v6487, %v7122
      %v7124 = vpop.f32.mrb[0].mxu0
      %v7125 = vadd.f32 %v6491, %v7124
      %7126 = vmatprep.mubr.bf16.mxu0 %v6403
      %7127 = vmatmul.mubr.bf16.gmra.mrb[0].mxu0 %v6402
      %v7128 = vpop.f32.mrb[0].mxu0
      %v7129 = vadd.f32 %v6487, %v7128
      %v7130 = vpop.f32.mrb[0].mxu0
      %v7131 = vadd.f32 %v6491, %v7130
      %v7132 = vpop.f32.mrb[0].mxu0
      %v7133 = vadd.f32 %v6487, %v7132
      %v7134 = vpop.f32.mrb[0].mxu0
      %v7135 = vadd.f32 %v6491, %v7134
      %7136 = vmatprep.mubr.bf16.mxu0 %v6407
      %7137 = vmatmul.mubr.bf16.gmra.mrb[0].mxu0 %v6406
      %v7138 = vpop.f32.mrb[0].mxu0
      %v7139 = vadd.f32 %v6487, %v7138
      %v7140 = vpop.f32.mrb[0].mxu0
      %v7141 = vadd.f32 %v6491, %v7140
      %v7142 = vpop.f32.mrb[0].mxu0
      %v7143 = vadd.f32 %v6487, %v7142
      %v7144 = vpop.f32.mrb[0].mxu0
      %v7145 = vadd.f32 %v6491, %v7144
      %7146 = vmatprep.mubr.bf16.mxu0 %v6411
      %7147 = vmatmul.mubr.bf16.gmra.mrb[0].mxu0 %v6410
      %v7148 = vpop.f32.mrb[0].mxu0
      %v7149 = vadd.f32 %v6487, %v7148
      %v7150 = vpop.f32.mrb[0].mxu0
      %v7151 = vadd.f32 %v6491, %v7150
      %v7152 = vpop.f32.mrb[0].mxu0
      %v7153 = vadd.f32 %v6487, %v7152
      %v7154 = vpop.f32.mrb[0].mxu0
      %v7155 = vadd.f32 %v6491, %v7154
      %7156 = vmatprep.mubr.bf16.mxu0 %v6415
      %7157 = vmatmul.mubr.bf16.gmra.mrb[0].mxu0 %v6414
      %v7158 = vpop.f32.mrb[0].mxu0
      %v7159 = vadd.f32 %v6487, %v7158
      %v7160 = vpop.f32.mrb[0].mxu0
      %v7161 = vadd.f32 %v6491, %v7160
      %v7162 = vpop.f32.mrb[0].mxu0
      %v7163 = vadd.f32 %v6487, %v7162
      %v7164 = vpop.f32.mrb[0].mxu0
      %v7165 = vadd.f32 %v6491, %v7164
      %7166 = vdwg.mxu0
      %7167 = vmatprep.subr.bf16.mxu0 %v6719
      %7168 = vmatpush1.bf16.msra.mxu0 %v6718
      %7169 = vmatprep.subr.bf16.mxu0 %v6721
      %7170 = vmatpush1.bf16.msra.mxu0 %v6720
      %7171 = vmatprep.subr.bf16.mxu0 %v6723
      %7172 = vmatpush1.bf16.msra.mxu0 %v6722
      %7173 = vmatprep.subr.bf16.mxu0 %v6725
      %7174 = vmatpush1.bf16.msra.mxu0 %v6724
      %7175 = vmatprep.subr.bf16.mxu0 %v6727
      %7176 = vmatpush1.bf16.msra.mxu0 %v6726
      %7177 = vmatprep.subr.bf16.mxu0 %v6729
      %7178 = vmatpush1.bf16.msra.mxu0 %v6728
      %7179 = vmatprep.subr.bf16.mxu0 %v6731
      %7180 = vmatpush1.bf16.msra.mxu0 %v6730
      %7181 = vmatprep.subr.bf16.mxu0 %v6733
      %7182 = vmatpush1.bf16.msra.mxu0 %v6732
      %7183 = vmatprep.subr.bf16.mxu0 %v6735
      %7184 = vmatpush1.bf16.msra.mxu0 %v6734
      %7185 = vmatprep.subr.bf16.mxu0 %v6737
      %7186 = vmatpush1.bf16.msra.mxu0 %v6736
      %7187 = vmatprep.subr.bf16.mxu0 %v6739
      %7188 = vmatpush1.bf16.msra.mxu0 %v6738
      %7189 = vmatprep.subr.bf16.mxu0 %v6741
      %7190 = vmatpush1.bf16.msra.mxu0 %v6740
      %7191 = vmatprep.subr.bf16.mxu0 %v6743
      %7192 = vmatpush1.bf16.msra.mxu0 %v6742
      %7193 = vmatprep.subr.bf16.mxu0 %v6745
      %7194 = vmatpush1.bf16.msra.mxu0 %v6744
      %7195 = vmatprep.subr.bf16.mxu0 %v6747
      %7196 = vmatpush1.bf16.msra.mxu0 %v6746
      %7197 = vmatprep.subr.bf16.mxu0 %v6749
      %7198 = vmatpush1.bf16.msra.mxu0 %v6748
      %7199 = vmatprep.mubr.bf16.mxu0 %v6293
      %7200 = vmatmul.mubr.bf16.gmra.mrb[0].mxu0 %v6292
      %v7201 = vpop.f32.mrb[0].mxu0
      %v7202 = vadd.f32 %v6849, %v7201
      %v7203 = vpop.f32.mrb[0].mxu0
      %v7204 = vadd.f32 %v6851, %v7203
      %v7205 = vpop.f32.mrb[0].mxu0
      %v7206 = vadd.f32 %v6853, %v7205
      %v7207 = vpop.f32.mrb[0].mxu0
      %v7208 = vadd.f32 %v6855, %v7207
      %7209 = vmatprep.mubr.bf16.mxu0 %v6297
      %7210 = vmatmul.mubr.bf16.gmra.mrb[0].mxu0 %v6296
      %v7211 = vpop.f32.mrb[0].mxu0
      %v7212 = vadd.f32 %v6859, %v7211
      %v7213 = vpop.f32.mrb[0].mxu0
      %v7214 = vadd.f32 %v6861, %v7213
      %v7215 = vpop.f32.mrb[0].mxu0
      %v7216 = vadd.f32 %v6863, %v7215
      %v7217 = vpop.f32.mrb[0].mxu0
      %v7218 = vadd.f32 %v6865, %v7217
      %7219 = vmatprep.mubr.bf16.mxu0 %v6301
      %7220 = vmatmul.mubr.bf16.gmra.mrb[0].mxu0 %v6300
      %v7221 = vpop.f32.mrb[0].mxu0
      %v7222 = vadd.f32 %v6869, %v7221
      %v7223 = vpop.f32.mrb[0].mxu0
      %v7224 = vadd.f32 %v6871, %v7223
      %v7225 = vpop.f32.mrb[0].mxu0
      %v7226 = vadd.f32 %v6873, %v7225
      %v7227 = vpop.f32.mrb[0].mxu0
      %v7228 = vadd.f32 %v6875, %v7227
      %7229 = vmatprep.mubr.bf16.mxu0 %v6305
      %7230 = vmatmul.mubr.bf16.gmra.mrb[0].mxu0 %v6304
      %v7231 = vpop.f32.mrb[0].mxu0
      %v7232 = vadd.f32 %v6879, %v7231
      %v7233 = vpop.f32.mrb[0].mxu0
      %v7234 = vadd.f32 %v6881, %v7233
      %v7235 = vpop.f32.mrb[0].mxu0
      %v7236 = vadd.f32 %v6883, %v7235
      %v7237 = vpop.f32.mrb[0].mxu0
      %v7238 = vadd.f32 %v6885, %v7237
      %7239 = vmatprep.mubr.bf16.mxu0 %v6309
      %7240 = vmatmul.mubr.bf16.gmra.mrb[0].mxu0 %v6308
      %v7241 = vpop.f32.mrb[0].mxu0
      %v7242 = vadd.f32 %v6889, %v7241
      %v7243 = vpop.f32.mrb[0].mxu0
      %v7244 = vadd.f32 %v6891, %v7243
      %v7245 = vpop.f32.mrb[0].mxu0
      %v7246 = vadd.f32 %v6893, %v7245
      %v7247 = vpop.f32.mrb[0].mxu0
      %v7248 = vadd.f32 %v6895, %v7247
      %7249 = vmatprep.mubr.bf16.mxu0 %v6313
      %7250 = vmatmul.mubr.bf16.gmra.mrb[0].mxu0 %v6312
      %v7251 = vpop.f32.mrb[0].mxu0
      %v7252 = vadd.f32 %v6899, %v7251
      %v7253 = vpop.f32.mrb[0].mxu0
      %v7254 = vadd.f32 %v6901, %v7253
      %v7255 = vpop.f32.mrb[0].mxu0
      %v7256 = vadd.f32 %v6903, %v7255
      %v7257 = vpop.f32.mrb[0].mxu0
      %v7258 = vadd.f32 %v6905, %v7257
      %7259 = vmatprep.mubr.bf16.mxu0 %v6317
      %7260 = vmatmul.mubr.bf16.gmra.mrb[0].mxu0 %v6316
      %v7261 = vpop.f32.mrb[0].mxu0
      %v7262 = vadd.f32 %v6909, %v7261
      %v7263 = vpop.f32.mrb[0].mxu0
      %v7264 = vadd.f32 %v6911, %v7263
      %v7265 = vpop.f32.mrb[0].mxu0
      %v7266 = vadd.f32 %v6913, %v7265
      %v7267 = vpop.f32.mrb[0].mxu0
      %v7268 = vadd.f32 %v6915, %v7267
      %7269 = vmatprep.mubr.bf16.mxu0 %v6321
      %7270 = vmatmul.mubr.bf16.gmra.mrb[0].mxu0 %v6320
      %v7271 = vpop.f32.mrb[0].mxu0
      %v7272 = vadd.f32 %v6919, %v7271
      %v7273 = vpop.f32.mrb[0].mxu0
      %v7274 = vadd.f32 %v6921, %v7273
      %v7275 = vpop.f32.mrb[0].mxu0
      %v7276 = vadd.f32 %v6923, %v7275
      %v7277 = vpop.f32.mrb[0].mxu0
      %v7278 = vadd.f32 %v6925, %v7277
      %7279 = vmatprep.mubr.bf16.mxu0 %v6325
      %7280 = vmatmul.mubr.bf16.gmra.mrb[0].mxu0 %v6324
      %v7281 = vpop.f32.mrb[0].mxu0
      %v7282 = vadd.f32 %v6929, %v7281
      %v7283 = vpop.f32.mrb[0].mxu0
      %v7284 = vadd.f32 %v6931, %v7283
      %v7285 = vpop.f32.mrb[0].mxu0
      %v7286 = vadd.f32 %v6933, %v7285
      %v7287 = vpop.f32.mrb[0].mxu0
      %v7288 = vadd.f32 %v6935, %v7287
      %7289 = vmatprep.mubr.bf16.mxu0 %v6329
      %7290 = vmatmul.mubr.bf16.gmra.mrb[0].mxu0 %v6328
      %v7291 = vpop.f32.mrb[0].mxu0
      %v7292 = vadd.f32 %v6939, %v7291
      %v7293 = vpop.f32.mrb[0].mxu0
      %v7294 = vadd.f32 %v6941, %v7293
      %v7295 = vpop.f32.mrb[0].mxu0
      %v7296 = vadd.f32 %v6943, %v7295
      %v7297 = vpop.f32.mrb[0].mxu0
      %v7298 = vadd.f32 %v6945, %v7297
      %7299 = vmatprep.mubr.bf16.mxu0 %v6333
      %7300 = vmatmul.mubr.bf16.gmra.mrb[0].mxu0 %v6332
      %v7301 = vpop.f32.mrb[0].mxu0
      %v7302 = vadd.f32 %v6949, %v7301
      %v7303 = vpop.f32.mrb[0].mxu0
      %v7304 = vadd.f32 %v6951, %v7303
      %v7305 = vpop.f32.mrb[0].mxu0
      %v7306 = vadd.f32 %v6953, %v7305
      %v7307 = vpop.f32.mrb[0].mxu0
      %v7308 = vadd.f32 %v6955, %v7307
      %7309 = vmatprep.mubr.bf16.mxu0 %v6337
      %7310 = vmatmul.mubr.bf16.gmra.mrb[0].mxu0 %v6336
      %v7311 = vpop.f32.mrb[0].mxu0
      %v7312 = vadd.f32 %v6959, %v7311
      %v7313 = vpop.f32.mrb[0].mxu0
      %v7314 = vadd.f32 %v6961, %v7313
      %v7315 = vpop.f32.mrb[0].mxu0
      %v7316 = vadd.f32 %v6963, %v7315
      %v7317 = vpop.f32.mrb[0].mxu0
      %v7318 = vadd.f32 %v6965, %v7317
      %7319 = vmatprep.mubr.bf16.mxu0 %v6341
      %7320 = vmatmul.mubr.bf16.gmra.mrb[0].mxu0 %v6340
      %v7321 = vpop.f32.mrb[0].mxu0
      %v7322 = vadd.f32 %v6969, %v7321
      %v7323 = vpop.f32.mrb[0].mxu0
      %v7324 = vadd.f32 %v6971, %v7323
      %v7325 = vpop.f32.mrb[0].mxu0
      %v7326 = vadd.f32 %v6973, %v7325
      %v7327 = vpop.f32.mrb[0].mxu0
      %v7328 = vadd.f32 %v6975, %v7327
      %7329 = vmatprep.mubr.bf16.mxu0 %v6345
      %7330 = vmatmul.mubr.bf16.gmra.mrb[0].mxu0 %v6344
      %v7331 = vpop.f32.mrb[0].mxu0
      %v7332 = vadd.f32 %v6979, %v7331
      %v7333 = vpop.f32.mrb[0].mxu0
      %v7334 = vadd.f32 %v6981, %v7333
      %v7335 = vpop.f32.mrb[0].mxu0
      %v7336 = vadd.f32 %v6983, %v7335
      %v7337 = vpop.f32.mrb[0].mxu0
      %v7338 = vadd.f32 %v6985, %v7337
      %7339 = vmatprep.mubr.bf16.mxu0 %v6349
      %7340 = vmatmul.mubr.bf16.gmra.mrb[0].mxu0 %v6348
      %v7341 = vpop.f32.mrb[0].mxu0
      %v7342 = vadd.f32 %v6989, %v7341
      %v7343 = vpop.f32.mrb[0].mxu0
      %v7344 = vadd.f32 %v6991, %v7343
      %v7345 = vpop.f32.mrb[0].mxu0
      %v7346 = vadd.f32 %v6993, %v7345
      %v7347 = vpop.f32.mrb[0].mxu0
      %v7348 = vadd.f32 %v6995, %v7347
      %7349 = vmatprep.mubr.bf16.mxu0 %v6353
      %7350 = vmatmul.mubr.bf16.gmra.mrb[0].mxu0 %v6352
      %v7351 = vpop.f32.mrb[0].mxu0
      %v7352 = vadd.f32 %v6999, %v7351
      %v7353 = vpop.f32.mrb[0].mxu0
      %v7354 = vadd.f32 %v7001, %v7353
      %v7355 = vpop.f32.mrb[0].mxu0
      %v7356 = vadd.f32 %v7003, %v7355
      %v7357 = vpop.f32.mrb[0].mxu0
      %v7358 = vadd.f32 %v7005, %v7357
      %7359 = vmatprep.mubr.bf16.mxu0 %v6357
      %7360 = vmatmul.mubr.bf16.gmra.mrb[0].mxu0 %v6356
      %v7361 = vpop.f32.mrb[0].mxu0
      %v7362 = vadd.f32 %v7009, %v7361
      %v7363 = vpop.f32.mrb[0].mxu0
      %v7364 = vadd.f32 %v7011, %v7363
      %v7365 = vpop.f32.mrb[0].mxu0
      %v7366 = vadd.f32 %v7013, %v7365
      %v7367 = vpop.f32.mrb[0].mxu0
      %v7368 = vadd.f32 %v7015, %v7367
      %7369 = vmatprep.mubr.bf16.mxu0 %v6361
      %7370 = vmatmul.mubr.bf16.gmra.mrb[0].mxu0 %v6360
      %v7371 = vpop.f32.mrb[0].mxu0
      %v7372 = vadd.f32 %v7019, %v7371
      %v7373 = vpop.f32.mrb[0].mxu0
      %v7374 = vadd.f32 %v7021, %v7373
      %v7375 = vpop.f32.mrb[0].mxu0
      %v7376 = vadd.f32 %v7023, %v7375
      %v7377 = vpop.f32.mrb[0].mxu0
      %v7378 = vadd.f32 %v7025, %v7377
      %7379 = vmatprep.mubr.bf16.mxu0 %v6365
      %7380 = vmatmul.mubr.bf16.gmra.mrb[0].mxu0 %v6364
      %v7381 = vpop.f32.mrb[0].mxu0
      %v7382 = vadd.f32 %v7029, %v7381
      %v7383 = vpop.f32.mrb[0].mxu0
      %v7384 = vadd.f32 %v7031, %v7383
      %v7385 = vpop.f32.mrb[0].mxu0
      %v7386 = vadd.f32 %v7033, %v7385
      %v7387 = vpop.f32.mrb[0].mxu0
      %v7388 = vadd.f32 %v7035, %v7387
      %7389 = vmatprep.mubr.bf16.mxu0 %v6369
      %7390 = vmatmul.mubr.bf16.gmra.mrb[0].mxu0 %v6368
      %v7391 = vpop.f32.mrb[0].mxu0
      %v7392 = vadd.f32 %v7039, %v7391
      %v7393 = vpop.f32.mrb[0].mxu0
      %v7394 = vadd.f32 %v7041, %v7393
      %v7395 = vpop.f32.mrb[0].mxu0
      %v7396 = vadd.f32 %v7043, %v7395
      %v7397 = vpop.f32.mrb[0].mxu0
      %v7398 = vadd.f32 %v7045, %v7397
      %7399 = vmatprep.mubr.bf16.mxu0 %v6373
      %7400 = vmatmul.mubr.bf16.gmra.mrb[0].mxu0 %v6372
      %v7401 = vpop.f32.mrb[0].mxu0
      %v7402 = vadd.f32 %v7049, %v7401
      %v7403 = vpop.f32.mrb[0].mxu0
      %v7404 = vadd.f32 %v7051, %v7403
      %v7405 = vpop.f32.mrb[0].mxu0
      %v7406 = vadd.f32 %v7053, %v7405
      %v7407 = vpop.f32.mrb[0].mxu0
      %v7408 = vadd.f32 %v7055, %v7407
      %7409 = vmatprep.mubr.bf16.mxu0 %v6377
      %7410 = vmatmul.mubr.bf16.gmra.mrb[0].mxu0 %v6376
      %v7411 = vpop.f32.mrb[0].mxu0
      %v7412 = vadd.f32 %v7059, %v7411
      %v7413 = vpop.f32.mrb[0].mxu0
      %v7414 = vadd.f32 %v7061, %v7413
      %v7415 = vpop.f32.mrb[0].mxu0
      %v7416 = vadd.f32 %v7063, %v7415
      %v7417 = vpop.f32.mrb[0].mxu0
      %v7418 = vadd.f32 %v7065, %v7417
      %7419 = vmatprep.mubr.bf16.mxu0 %v6381
      %7420 = vmatmul.mubr.bf16.gmra.mrb[0].mxu0 %v6380
      %v7421 = vpop.f32.mrb[0].mxu0
      %v7422 = vadd.f32 %v7069, %v7421
      %v7423 = vpop.f32.mrb[0].mxu0
      %v7424 = vadd.f32 %v7071, %v7423
      %v7425 = vpop.f32.mrb[0].mxu0
      %v7426 = vadd.f32 %v7073, %v7425
      %v7427 = vpop.f32.mrb[0].mxu0
      %v7428 = vadd.f32 %v7075, %v7427
      %7429 = vmatprep.mubr.bf16.mxu0 %v6385
      %7430 = vmatmul.mubr.bf16.gmra.mrb[0].mxu0 %v6384
      %v7431 = vpop.f32.mrb[0].mxu0
      %v7432 = vadd.f32 %v7079, %v7431
      %v7433 = vpop.f32.mrb[0].mxu0
      %v7434 = vadd.f32 %v7081, %v7433
      %v7435 = vpop.f32.mrb[0].mxu0
      %v7436 = vadd.f32 %v7083, %v7435
      %v7437 = vpop.f32.mrb[0].mxu0
      %v7438 = vadd.f32 %v7085, %v7437
      %7439 = vmatprep.mubr.bf16.mxu0 %v6389
      %7440 = vmatmul.mubr.bf16.gmra.mrb[0].mxu0 %v6388
      %v7441 = vpop.f32.mrb[0].mxu0
      %v7442 = vadd.f32 %v7089, %v7441
      %v7443 = vpop.f32.mrb[0].mxu0
      %v7444 = vadd.f32 %v7091, %v7443
      %v7445 = vpop.f32.mrb[0].mxu0
      %v7446 = vadd.f32 %v7093, %v7445
      %v7447 = vpop.f32.mrb[0].mxu0
      %v7448 = vadd.f32 %v7095, %v7447
      %7449 = vmatprep.mubr.bf16.mxu0 %v6393
      %7450 = vmatmul.mubr.bf16.gmra.mrb[0].mxu0 %v6392
      %v7451 = vpop.f32.mrb[0].mxu0
      %v7452 = vadd.f32 %v7099, %v7451
      %v7453 = vpop.f32.mrb[0].mxu0
      %v7454 = vadd.f32 %v7101, %v7453
      %v7455 = vpop.f32.mrb[0].mxu0
      %v7456 = vadd.f32 %v7103, %v7455
      %v7457 = vpop.f32.mrb[0].mxu0
      %v7458 = vadd.f32 %v7105, %v7457
      %7459 = vmatprep.mubr.bf16.mxu0 %v6397
      %7460 = vmatmul.mubr.bf16.gmra.mrb[0].mxu0 %v6396
      %v7461 = vpop.f32.mrb[0].mxu0
      %v7462 = vadd.f32 %v7109, %v7461
      %v7463 = vpop.f32.mrb[0].mxu0
      %v7464 = vadd.f32 %v7111, %v7463
      %v7465 = vpop.f32.mrb[0].mxu0
      %v7466 = vadd.f32 %v7113, %v7465
      %v7467 = vpop.f32.mrb[0].mxu0
      %v7468 = vadd.f32 %v7115, %v7467
      %7469 = vmatprep.mubr.bf16.mxu0 %v6401
      %7470 = vmatmul.mubr.bf16.gmra.mrb[0].mxu0 %v6400
      %v7471 = vpop.f32.mrb[0].mxu0
      %v7472 = vadd.f32 %v7119, %v7471
      %v7473 = vpop.f32.mrb[0].mxu0
      %v7474 = vadd.f32 %v7121, %v7473
      %v7475 = vpop.f32.mrb[0].mxu0
      %v7476 = vadd.f32 %v7123, %v7475
      %v7477 = vpop.f32.mrb[0].mxu0
      %v7478 = vadd.f32 %v7125, %v7477
      %7479 = vmatprep.mubr.bf16.mxu0 %v6405
      %7480 = vmatmul.mubr.bf16.gmra.mrb[0].mxu0 %v6404
      %v7481 = vpop.f32.mrb[0].mxu0
      %v7482 = vadd.f32 %v7129, %v7481
      %v7483 = vpop.f32.mrb[0].mxu0
      %v7484 = vadd.f32 %v7131, %v7483
      %v7485 = vpop.f32.mrb[0].mxu0
      %v7486 = vadd.f32 %v7133, %v7485
      %v7487 = vpop.f32.mrb[0].mxu0
      %v7488 = vadd.f32 %v7135, %v7487
      %7489 = vmatprep.mubr.bf16.mxu0 %v6409
      %7490 = vmatmul.mubr.bf16.gmra.mrb[0].mxu0 %v6408
      %v7491 = vpop.f32.mrb[0].mxu0
      %v7492 = vadd.f32 %v7139, %v7491
      %v7493 = vpop.f32.mrb[0].mxu0
      %v7494 = vadd.f32 %v7141, %v7493
      %v7495 = vpop.f32.mrb[0].mxu0
      %v7496 = vadd.f32 %v7143, %v7495
      %v7497 = vpop.f32.mrb[0].mxu0
      %v7498 = vadd.f32 %v7145, %v7497
      %7499 = vmatprep.mubr.bf16.mxu0 %v6413
      %7500 = vmatmul.mubr.bf16.gmra.mrb[0].mxu0 %v6412
      %v7501 = vpop.f32.mrb[0].mxu0
      %v7502 = vadd.f32 %v7149, %v7501
      %v7503 = vpop.f32.mrb[0].mxu0
      %v7504 = vadd.f32 %v7151, %v7503
      %v7505 = vpop.f32.mrb[0].mxu0
      %v7506 = vadd.f32 %v7153, %v7505
      %v7507 = vpop.f32.mrb[0].mxu0
      %v7508 = vadd.f32 %v7155, %v7507
      %7509 = vmatprep.mubr.bf16.mxu0 %v6417
      %7510 = vmatmul.mubr.bf16.gmra.mrb[0].mxu0 %v6416
      %v7511 = vpop.f32.mrb[0].mxu0
      %v7512 = vadd.f32 %v7159, %v7511
      %v7513 = vpop.f32.mrb[0].mxu0
      %v7514 = vadd.f32 %v7161, %v7513
      %v7515 = vpop.f32.mrb[0].mxu0
      %v7516 = vadd.f32 %v7163, %v7515
      %v7517 = vpop.f32.mrb[0].mxu0
      %v7518 = vadd.f32 %v7165, %v7517
      %7519 = vdwg.mxu0
      %v7520 = vmul.f32 %v7202, %v7202
      %v7521 = vmul.f32 %v7204, %v7204
      %v7522 = vmul.f32 %v7206, %v7206
      %v7523 = vmul.f32 %v7208, %v7208
      %v7524 = vmul.f32 %v7212, %v7212
      %v7525 = vmul.f32 %v7214, %v7214
      %v7526 = vmul.f32 %v7216, %v7216
      %v7527 = vmul.f32 %v7218, %v7218
      %v7528 = vmul.f32 %v7222, %v7222
      %v7529 = vmul.f32 %v7224, %v7224
      %v7530 = vmul.f32 %v7226, %v7226
      %v7531 = vmul.f32 %v7228, %v7228
      %v7532 = vmul.f32 %v7232, %v7232
      %v7533 = vmul.f32 %v7234, %v7234
      %v7534 = vmul.f32 %v7236, %v7236
      %v7535 = vmul.f32 %v7238, %v7238
      %v7536 = vmul.f32 %v7242, %v7242
      %v7537 = vmul.f32 %v7244, %v7244
      %v7538 = vmul.f32 %v7246, %v7246
      %v7539 = vmul.f32 %v7248, %v7248
      %v7540 = vmul.f32 %v7252, %v7252
      %v7541 = vmul.f32 %v7254, %v7254
      %v7542 = vmul.f32 %v7256, %v7256
      %v7543 = vmul.f32 %v7258, %v7258
      %v7544 = vmul.f32 %v7262, %v7262
      %v7545 = vmul.f32 %v7264, %v7264
      %v7546 = vmul.f32 %v7266, %v7266
      %v7547 = vmul.f32 %v7268, %v7268
      %v7548 = vmul.f32 %v7272, %v7272
      %v7549 = vmul.f32 %v7274, %v7274
      %v7550 = vmul.f32 %v7276, %v7276
      %v7551 = vmul.f32 %v7278, %v7278
      %v7552 = vmul.f32 %v7282, %v7282
      %v7553 = vmul.f32 %v7284, %v7284
      %v7554 = vmul.f32 %v7286, %v7286
      %v7555 = vmul.f32 %v7288, %v7288
      %v7556 = vmul.f32 %v7292, %v7292
      %v7557 = vmul.f32 %v7294, %v7294
      %v7558 = vmul.f32 %v7296, %v7296
      %v7559 = vmul.f32 %v7298, %v7298
      %v7560 = vmul.f32 %v7302, %v7302
      %v7561 = vmul.f32 %v7304, %v7304
      %v7562 = vmul.f32 %v7306, %v7306
      %v7563 = vmul.f32 %v7308, %v7308
      %v7564 = vmul.f32 %v7312, %v7312
      %v7565 = vmul.f32 %v7314, %v7314
      %v7566 = vmul.f32 %v7316, %v7316
      %v7567 = vmul.f32 %v7318, %v7318
      %v7568 = vmul.f32 %v7322, %v7322
      %v7569 = vmul.f32 %v7324, %v7324
      %v7570 = vmul.f32 %v7326, %v7326
      %v7571 = vmul.f32 %v7328, %v7328
      %v7572 = vmul.f32 %v7332, %v7332
      %v7573 = vmul.f32 %v7334, %v7334
      %v7574 = vmul.f32 %v7336, %v7336
      %v7575 = vmul.f32 %v7338, %v7338
      %v7576 = vmul.f32 %v7342, %v7342
      %v7577 = vmul.f32 %v7344, %v7344
      %v7578 = vmul.f32 %v7346, %v7346
      %v7579 = vmul.f32 %v7348, %v7348
      %v7580 = vmul.f32 %v7352, %v7352
      %v7581 = vmul.f32 %v7354, %v7354
      %v7582 = vmul.f32 %v7356, %v7356
      %v7583 = vmul.f32 %v7358, %v7358
      %v7584 = vmul.f32 %v7362, %v7362
      %v7585 = vmul.f32 %v7364, %v7364
      %v7586 = vmul.f32 %v7366, %v7366
      %v7587 = vmul.f32 %v7368, %v7368
      %v7588 = vmul.f32 %v7372, %v7372
      %v7589 = vmul.f32 %v7374, %v7374
      %v7590 = vmul.f32 %v7376, %v7376
      %v7591 = vmul.f32 %v7378, %v7378
      %v7592 = vmul.f32 %v7382, %v7382
      %v7593 = vmul.f32 %v7384, %v7384
      %v7594 = vmul.f32 %v7386, %v7386
      %v7595 = vmul.f32 %v7388, %v7388
      %v7596 = vmul.f32 %v7392, %v7392
      %v7597 = vmul.f32 %v7394, %v7394
      %v7598 = vmul.f32 %v7396, %v7396
      %v7599 = vmul.f32 %v7398, %v7398
      %v7600 = vmul.f32 %v7402, %v7402
      %v7601 = vmul.f32 %v7404, %v7404
      %v7602 = vmul.f32 %v7406, %v7406
      %v7603 = vmul.f32 %v7408, %v7408
      %v7604 = vmul.f32 %v7412, %v7412
      %v7605 = vmul.f32 %v7414, %v7414
      %v7606 = vmul.f32 %v7416, %v7416
      %v7607 = vmul.f32 %v7418, %v7418
      %v7608 = vmul.f32 %v7422, %v7422
      %v7609 = vmul.f32 %v7424, %v7424
      %v7610 = vmul.f32 %v7426, %v7426
      %v7611 = vmul.f32 %v7428, %v7428
      %v7612 = vmul.f32 %v7432, %v7432
      %v7613 = vmul.f32 %v7434, %v7434
      %v7614 = vmul.f32 %v7436, %v7436
      %v7615 = vmul.f32 %v7438, %v7438
      %v7616 = vmul.f32 %v7442, %v7442
      %v7617 = vmul.f32 %v7444, %v7444
      %v7618 = vmul.f32 %v7446, %v7446
      %v7619 = vmul.f32 %v7448, %v7448
      %v7620 = vmul.f32 %v7452, %v7452
      %v7621 = vmul.f32 %v7454, %v7454
      %v7622 = vmul.f32 %v7456, %v7456
      %v7623 = vmul.f32 %v7458, %v7458
      %v7624 = vmul.f32 %v7462, %v7462
      %v7625 = vmul.f32 %v7464, %v7464
      %v7626 = vmul.f32 %v7466, %v7466
      %v7627 = vmul.f32 %v7468, %v7468
      %v7628 = vmul.f32 %v7472, %v7472
      %v7629 = vmul.f32 %v7474, %v7474
      %v7630 = vmul.f32 %v7476, %v7476
      %v7631 = vmul.f32 %v7478, %v7478
      %v7632 = vmul.f32 %v7482, %v7482
      %v7633 = vmul.f32 %v7484, %v7484
      %v7634 = vmul.f32 %v7486, %v7486
      %v7635 = vmul.f32 %v7488, %v7488
      %v7636 = vmul.f32 %v7492, %v7492
      %v7637 = vmul.f32 %v7494, %v7494
      %v7638 = vmul.f32 %v7496, %v7496
      %v7639 = vmul.f32 %v7498, %v7498
      %v7640 = vmul.f32 %v7502, %v7502
      %v7641 = vmul.f32 %v7504, %v7504
      %v7642 = vmul.f32 %v7506, %v7506
      %v7643 = vmul.f32 %v7508, %v7508
      %v7644 = vmul.f32 %v7512, %v7512
      %v7645 = vmul.f32 %v7514, %v7514
      %v7646 = vmul.f32 %v7516, %v7516
      %v7647 = vmul.f32 %v7518, %v7518
      %v7648 = vadd.f32 %v7520, %v7521
      %7649 = vadd.xlane.f32.xlu0 %v7648
      %v7650 = vpop.xlane.xlu0 %7649
      %v7651 = vadd.f32 %v7522, %v7523
      %7652 = vadd.xlane.f32.xlu0 %v7651
      %v7653 = vpop.xlane.xlu0 %7652
      %v7654 = vadd.f32 %v7524, %v7525
      %7655 = vadd.xlane.f32.xlu0 %v7654
      %v7656 = vpop.xlane.xlu0 %7655
      %v7657 = vadd.f32 %v7526, %v7527
      %7658 = vadd.xlane.f32.xlu0 %v7657
      %v7659 = vpop.xlane.xlu0 %7658
      %v7660 = vadd.f32 %v7528, %v7529
      %7661 = vadd.xlane.f32.xlu0 %v7660
      %v7662 = vpop.xlane.xlu0 %7661
      %v7663 = vadd.f32 %v7530, %v7531
      %7664 = vadd.xlane.f32.xlu0 %v7663
      %v7665 = vpop.xlane.xlu0 %7664
      %v7666 = vadd.f32 %v7532, %v7533
      %7667 = vadd.xlane.f32.xlu0 %v7666
      %v7668 = vpop.xlane.xlu0 %7667
      %v7669 = vadd.f32 %v7534, %v7535
      %7670 = vadd.xlane.f32.xlu0 %v7669
      %v7671 = vpop.xlane.xlu0 %7670
      %v7672 = vadd.f32 %v7536, %v7537
      %7673 = vadd.xlane.f32.xlu0 %v7672
      %v7674 = vpop.xlane.xlu0 %7673
      %v7675 = vadd.f32 %v7538, %v7539
      %7676 = vadd.xlane.f32.xlu0 %v7675
      %v7677 = vpop.xlane.xlu0 %7676
      %v7678 = vadd.f32 %v7540, %v7541
      %7679 = vadd.xlane.f32.xlu0 %v7678
      %v7680 = vpop.xlane.xlu0 %7679
      %v7681 = vadd.f32 %v7542, %v7543
      %7682 = vadd.xlane.f32.xlu0 %v7681
      %v7683 = vpop.xlane.xlu0 %7682
      %v7684 = vadd.f32 %v7544, %v7545
      %7685 = vadd.xlane.f32.xlu0 %v7684
      %v7686 = vpop.xlane.xlu0 %7685
      %v7687 = vadd.f32 %v7546, %v7547
      %7688 = vadd.xlane.f32.xlu0 %v7687
      %v7689 = vpop.xlane.xlu0 %7688
      %v7690 = vadd.f32 %v7548, %v7549
      %7691 = vadd.xlane.f32.xlu0 %v7690
      %v7692 = vpop.xlane.xlu0 %7691
      %v7693 = vadd.f32 %v7550, %v7551
      %7694 = vadd.xlane.f32.xlu0 %v7693
      %v7695 = vpop.xlane.xlu0 %7694
      %v7696 = vadd.f32 %v7552, %v7553
      %7697 = vadd.xlane.f32.xlu0 %v7696
      %v7698 = vpop.xlane.xlu0 %7697
      %v7699 = vadd.f32 %v7554, %v7555
      %7700 = vadd.xlane.f32.xlu0 %v7699
      %v7701 = vpop.xlane.xlu0 %7700
      %v7702 = vadd.f32 %v7556, %v7557
      %7703 = vadd.xlane.f32.xlu0 %v7702
      %v7704 = vpop.xlane.xlu0 %7703
      %v7705 = vadd.f32 %v7558, %v7559
      %7706 = vadd.xlane.f32.xlu0 %v7705
      %v7707 = vpop.xlane.xlu0 %7706
      %v7708 = vadd.f32 %v7560, %v7561
      %7709 = vadd.xlane.f32.xlu0 %v7708
      %v7710 = vpop.xlane.xlu0 %7709
      %v7711 = vadd.f32 %v7562, %v7563
      %7712 = vadd.xlane.f32.xlu0 %v7711
      %v7713 = vpop.xlane.xlu0 %7712
      %v7714 = vadd.f32 %v7564, %v7565
      %7715 = vadd.xlane.f32.xlu0 %v7714
      %v7716 = vpop.xlane.xlu0 %7715
      %v7717 = vadd.f32 %v7566, %v7567
      %7718 = vadd.xlane.f32.xlu0 %v7717
      %v7719 = vpop.xlane.xlu0 %7718
      %v7720 = vadd.f32 %v7568, %v7569
      %7721 = vadd.xlane.f32.xlu0 %v7720
      %v7722 = vpop.xlane.xlu0 %7721
      %v7723 = vadd.f32 %v7570, %v7571
      %7724 = vadd.xlane.f32.xlu0 %v7723
      %v7725 = vpop.xlane.xlu0 %7724
      %v7726 = vadd.f32 %v7572, %v7573
      %7727 = vadd.xlane.f32.xlu0 %v7726
      %v7728 = vpop.xlane.xlu0 %7727
      %v7729 = vadd.f32 %v7574, %v7575
      %7730 = vadd.xlane.f32.xlu0 %v7729
      %v7731 = vpop.xlane.xlu0 %7730
      %v7732 = vadd.f32 %v7576, %v7577
      %7733 = vadd.xlane.f32.xlu0 %v7732
      %v7734 = vpop.xlane.xlu0 %7733
      %v7735 = vadd.f32 %v7578, %v7579
      %7736 = vadd.xlane.f32.xlu0 %v7735
      %v7737 = vpop.xlane.xlu0 %7736
      %v7738 = vadd.f32 %v7580, %v7581
      %7739 = vadd.xlane.f32.xlu0 %v7738
      %v7740 = vpop.xlane.xlu0 %7739
      %v7741 = vadd.f32 %v7582, %v7583
      %7742 = vadd.xlane.f32.xlu0 %v7741
      %v7743 = vpop.xlane.xlu0 %7742
      %v7744 = vadd.f32 %v7584, %v7585
      %7745 = vadd.xlane.f32.xlu0 %v7744
      %v7746 = vpop.xlane.xlu0 %7745
      %v7747 = vadd.f32 %v7586, %v7587
      %7748 = vadd.xlane.f32.xlu0 %v7747
      %v7749 = vpop.xlane.xlu0 %7748
      %v7750 = vadd.f32 %v7588, %v7589
      %7751 = vadd.xlane.f32.xlu0 %v7750
      %v7752 = vpop.xlane.xlu0 %7751
      %v7753 = vadd.f32 %v7590, %v7591
      %7754 = vadd.xlane.f32.xlu0 %v7753
      %v7755 = vpop.xlane.xlu0 %7754
      %v7756 = vadd.f32 %v7592, %v7593
      %7757 = vadd.xlane.f32.xlu0 %v7756
      %v7758 = vpop.xlane.xlu0 %7757
      %v7759 = vadd.f32 %v7594, %v7595
      %7760 = vadd.xlane.f32.xlu0 %v7759
      %v7761 = vpop.xlane.xlu0 %7760
      %v7762 = vadd.f32 %v7596, %v7597
      %7763 = vadd.xlane.f32.xlu0 %v7762
      %v7764 = vpop.xlane.xlu0 %7763
      %v7765 = vadd.f32 %v7598, %v7599
      %7766 = vadd.xlane.f32.xlu0 %v7765
      %v7767 = vpop.xlane.xlu0 %7766
      %v7768 = vadd.f32 %v7600, %v7601
      %7769 = vadd.xlane.f32.xlu0 %v7768
      %v7770 = vpop.xlane.xlu0 %7769
      %v7771 = vadd.f32 %v7602, %v7603
      %7772 = vadd.xlane.f32.xlu0 %v7771
      %v7773 = vpop.xlane.xlu0 %7772
      %v7774 = vadd.f32 %v7604, %v7605
      %7775 = vadd.xlane.f32.xlu0 %v7774
      %v7776 = vpop.xlane.xlu0 %7775
      %v7777 = vadd.f32 %v7606, %v7607
      %7778 = vadd.xlane.f32.xlu0 %v7777
      %v7779 = vpop.xlane.xlu0 %7778
      %v7780 = vadd.f32 %v7608, %v7609
      %7781 = vadd.xlane.f32.xlu0 %v7780
      %v7782 = vpop.xlane.xlu0 %7781
      %v7783 = vadd.f32 %v7610, %v7611
      %7784 = vadd.xlane.f32.xlu0 %v7783
      %v7785 = vpop.xlane.xlu0 %7784
      %v7786 = vadd.f32 %v7612, %v7613
      %7787 = vadd.xlane.f32.xlu0 %v7786
      %v7788 = vpop.xlane.xlu0 %7787
      %v7789 = vadd.f32 %v7614, %v7615
      %7790 = vadd.xlane.f32.xlu0 %v7789
      %v7791 = vpop.xlane.xlu0 %7790
      %v7792 = vadd.f32 %v7616, %v7617
      %7793 = vadd.xlane.f32.xlu0 %v7792
      %v7794 = vpop.xlane.xlu0 %7793
      %v7795 = vadd.f32 %v7618, %v7619
      %7796 = vadd.xlane.f32.xlu0 %v7795
      %v7797 = vpop.xlane.xlu0 %7796
      %v7798 = vadd.f32 %v7620, %v7621
      %7799 = vadd.xlane.f32.xlu0 %v7798
      %v7800 = vpop.xlane.xlu0 %7799
      %v7801 = vadd.f32 %v7622, %v7623
      %7802 = vadd.xlane.f32.xlu0 %v7801
      %v7803 = vpop.xlane.xlu0 %7802
      %v7804 = vadd.f32 %v7624, %v7625
      %7805 = vadd.xlane.f32.xlu0 %v7804
      %v7806 = vpop.xlane.xlu0 %7805
      %v7807 = vadd.f32 %v7626, %v7627
      %7808 = vadd.xlane.f32.xlu0 %v7807
      %v7809 = vpop.xlane.xlu0 %7808
      %v7810 = vadd.f32 %v7628, %v7629
      %7811 = vadd.xlane.f32.xlu0 %v7810
      %v7812 = vpop.xlane.xlu0 %7811
      %v7813 = vadd.f32 %v7630, %v7631
      %7814 = vadd.xlane.f32.xlu0 %v7813
      %v7815 = vpop.xlane.xlu0 %7814
      %v7816 = vadd.f32 %v7632, %v7633
      %7817 = vadd.xlane.f32.xlu0 %v7816
      %v7818 = vpop.xlane.xlu0 %7817
      %v7819 = vadd.f32 %v7634, %v7635
      %7820 = vadd.xlane.f32.xlu0 %v7819
      %v7821 = vpop.xlane.xlu0 %7820
      %v7822 = vadd.f32 %v7636, %v7637
      %7823 = vadd.xlane.f32.xlu0 %v7822
      %v7824 = vpop.xlane.xlu0 %7823
      %v7825 = vadd.f32 %v7638, %v7639
      %7826 = vadd.xlane.f32.xlu0 %v7825
      %v7827 = vpop.xlane.xlu0 %7826
      %v7828 = vadd.f32 %v7640, %v7641
      %7829 = vadd.xlane.f32.xlu0 %v7828
      %v7830 = vpop.xlane.xlu0 %7829
      %v7831 = vadd.f32 %v7642, %v7643
      %7832 = vadd.xlane.f32.xlu0 %v7831
      %v7833 = vpop.xlane.xlu0 %7832
      %v7834 = vadd.f32 %v7644, %v7645
      %7835 = vadd.xlane.f32.xlu0 %v7834
      %v7836 = vpop.xlane.xlu0 %7835
      %v7837 = vadd.f32 %v7646, %v7647
      %7838 = vadd.xlane.f32.xlu0 %v7837
      %v7839 = vpop.xlane.xlu0 %7838
      %v7840 = vmax.f32 %v7650, 1e-24
      %v7841 = vmax.f32 %v7653, 1e-24
      %v7842 = vmax.f32 %v7656, 1e-24
      %v7843 = vmax.f32 %v7659, 1e-24
      %v7844 = vmax.f32 %v7662, 1e-24
      %v7845 = vmax.f32 %v7665, 1e-24
      %v7846 = vmax.f32 %v7668, 1e-24
      %v7847 = vmax.f32 %v7671, 1e-24
      %v7848 = vmax.f32 %v7674, 1e-24
      %v7849 = vmax.f32 %v7677, 1e-24
      %v7850 = vmax.f32 %v7680, 1e-24
      %v7851 = vmax.f32 %v7683, 1e-24
      %v7852 = vmax.f32 %v7686, 1e-24
      %v7853 = vmax.f32 %v7689, 1e-24
      %v7854 = vmax.f32 %v7692, 1e-24
      %v7855 = vmax.f32 %v7695, 1e-24
      %v7856 = vmax.f32 %v7698, 1e-24
      %v7857 = vmax.f32 %v7701, 1e-24
      %v7858 = vmax.f32 %v7704, 1e-24
      %v7859 = vmax.f32 %v7707, 1e-24
      %v7860 = vmax.f32 %v7710, 1e-24
      %v7861 = vmax.f32 %v7713, 1e-24
      %v7862 = vmax.f32 %v7716, 1e-24
      %v7863 = vmax.f32 %v7719, 1e-24
      %v7864 = vmax.f32 %v7722, 1e-24
      %v7865 = vmax.f32 %v7725, 1e-24
      %v7866 = vmax.f32 %v7728, 1e-24
      %v7867 = vmax.f32 %v7731, 1e-24
      %v7868 = vmax.f32 %v7734, 1e-24
      %v7869 = vmax.f32 %v7737, 1e-24
      %v7870 = vmax.f32 %v7740, 1e-24
      %v7871 = vmax.f32 %v7743, 1e-24
      %v7872 = vmax.f32 %v7746, 1e-24
      %v7873 = vmax.f32 %v7749, 1e-24
      %v7874 = vmax.f32 %v7752, 1e-24
      %v7875 = vmax.f32 %v7755, 1e-24
      %v7876 = vmax.f32 %v7758, 1e-24
      %v7877 = vmax.f32 %v7761, 1e-24
      %v7878 = vmax.f32 %v7764, 1e-24
      %v7879 = vmax.f32 %v7767, 1e-24
      %v7880 = vmax.f32 %v7770, 1e-24
      %v7881 = vmax.f32 %v7773, 1e-24
      %v7882 = vmax.f32 %v7776, 1e-24
      %v7883 = vmax.f32 %v7779, 1e-24
      %v7884 = vmax.f32 %v7782, 1e-24
      %v7885 = vmax.f32 %v7785, 1e-24
      %v7886 = vmax.f32 %v7788, 1e-24
      %v7887 = vmax.f32 %v7791, 1e-24
      %v7888 = vmax.f32 %v7794, 1e-24
      %v7889 = vmax.f32 %v7797, 1e-24
      %v7890 = vmax.f32 %v7800, 1e-24
      %v7891 = vmax.f32 %v7803, 1e-24
      %v7892 = vmax.f32 %v7806, 1e-24
      %v7893 = vmax.f32 %v7809, 1e-24
      %v7894 = vmax.f32 %v7812, 1e-24
      %v7895 = vmax.f32 %v7815, 1e-24
      %v7896 = vmax.f32 %v7818, 1e-24
      %v7897 = vmax.f32 %v7821, 1e-24
      %v7898 = vmax.f32 %v7824, 1e-24
      %v7899 = vmax.f32 %v7827, 1e-24
      %v7900 = vmax.f32 %v7830, 1e-24
      %v7901 = vmax.f32 %v7833, 1e-24
      %v7902 = vmax.f32 %v7836, 1e-24
      %v7903 = vmax.f32 %v7839, 1e-24
      %v7904 = vrsqrt.pop %v7840
      %v7905 = vrsqrt.pop %v7841
      %v7906 = vrsqrt.pop %v7842
      %v7907 = vrsqrt.pop %v7843
      %v7908 = vrsqrt.pop %v7844
      %v7909 = vrsqrt.pop %v7845
      %v7910 = vrsqrt.pop %v7846
      %v7911 = vrsqrt.pop %v7847
      %v7912 = vrsqrt.pop %v7848
      %v7913 = vrsqrt.pop %v7849
      %v7914 = vrsqrt.pop %v7850
      %v7915 = vrsqrt.pop %v7851
      %v7916 = vrsqrt.pop %v7852
      %v7917 = vrsqrt.pop %v7853
      %v7918 = vrsqrt.pop %v7854
      %v7919 = vrsqrt.pop %v7855
      %v7920 = vrsqrt.pop %v7856
      %v7921 = vrsqrt.pop %v7857
      %v7922 = vrsqrt.pop %v7858
      %v7923 = vrsqrt.pop %v7859
      %v7924 = vrsqrt.pop %v7860
      %v7925 = vrsqrt.pop %v7861
      %v7926 = vrsqrt.pop %v7862
      %v7927 = vrsqrt.pop %v7863
      %v7928 = vrsqrt.pop %v7864
      %v7929 = vrsqrt.pop %v7865
      %v7930 = vrsqrt.pop %v7866
      %v7931 = vrsqrt.pop %v7867
      %v7932 = vrsqrt.pop %v7868
      %v7933 = vrsqrt.pop %v7869
      %v7934 = vrsqrt.pop %v7870
      %v7935 = vrsqrt.pop %v7871
      %v7936 = vrsqrt.pop %v7872
      %v7937 = vrsqrt.pop %v7873
      %v7938 = vrsqrt.pop %v7874
      %v7939 = vrsqrt.pop %v7875
      %v7940 = vrsqrt.pop %v7876
      %v7941 = vrsqrt.pop %v7877
      %v7942 = vrsqrt.pop %v7878
      %v7943 = vrsqrt.pop %v7879
      %v7944 = vrsqrt.pop %v7880
      %v7945 = vrsqrt.pop %v7881
      %v7946 = vrsqrt.pop %v7882
      %v7947 = vrsqrt.pop %v7883
      %v7948 = vrsqrt.pop %v7884
      %v7949 = vrsqrt.pop %v7885
      %v7950 = vrsqrt.pop %v7886
      %v7951 = vrsqrt.pop %v7887
      %v7952 = vrsqrt.pop %v7888
      %v7953 = vrsqrt.pop %v7889
      %v7954 = vrsqrt.pop %v7890
      %v7955 = vrsqrt.pop %v7891
      %v7956 = vrsqrt.pop %v7892
      %v7957 = vrsqrt.pop %v7893
      %v7958 = vrsqrt.pop %v7894
      %v7959 = vrsqrt.pop %v7895
      %v7960 = vrsqrt.pop %v7896
      %v7961 = vrsqrt.pop %v7897
      %v7962 = vrsqrt.pop %v7898
      %v7963 = vrsqrt.pop %v7899
      %v7964 = vrsqrt.pop %v7900
      %v7965 = vrsqrt.pop %v7901
      %v7966 = vrsqrt.pop %v7902
      %v7967 = vrsqrt.pop %v7903
      %v7968 = vmul.f32 %v7202, %v7904
      %v7969 = vmul.f32 %v7204, %v7904
      %v7970 = vmul.f32 %v7206, %v7905
      %v7971 = vmul.f32 %v7208, %v7905
      %v7972 = vmul.f32 %v7212, %v7906
      %v7973 = vmul.f32 %v7214, %v7906
      %v7974 = vmul.f32 %v7216, %v7907
      %v7975 = vmul.f32 %v7218, %v7907
      %v7976 = vmul.f32 %v7222, %v7908
      %v7977 = vmul.f32 %v7224, %v7908
      %v7978 = vmul.f32 %v7226, %v7909
      %v7979 = vmul.f32 %v7228, %v7909
      %v7980 = vmul.f32 %v7232, %v7910
      %v7981 = vmul.f32 %v7234, %v7910
      %v7982 = vmul.f32 %v7236, %v7911
      %v7983 = vmul.f32 %v7238, %v7911
      %v7984 = vmul.f32 %v7242, %v7912
      %v7985 = vmul.f32 %v7244, %v7912
      %v7986 = vmul.f32 %v7246, %v7913
      %v7987 = vmul.f32 %v7248, %v7913
      %v7988 = vmul.f32 %v7252, %v7914
      %v7989 = vmul.f32 %v7254, %v7914
      %v7990 = vmul.f32 %v7256, %v7915
      %v7991 = vmul.f32 %v7258, %v7915
      %v7992 = vmul.f32 %v7262, %v7916
      %v7993 = vmul.f32 %v7264, %v7916
      %v7994 = vmul.f32 %v7266, %v7917
      %v7995 = vmul.f32 %v7268, %v7917
      %v7996 = vmul.f32 %v7272, %v7918
      %v7997 = vmul.f32 %v7274, %v7918
      %v7998 = vmul.f32 %v7276, %v7919
      %v7999 = vmul.f32 %v7278, %v7919
      %v8000 = vmul.f32 %v7282, %v7920
      %v8001 = vmul.f32 %v7284, %v7920
      %v8002 = vmul.f32 %v7286, %v7921
      %v8003 = vmul.f32 %v7288, %v7921
      %v8004 = vmul.f32 %v7292, %v7922
      %v8005 = vmul.f32 %v7294, %v7922
      %v8006 = vmul.f32 %v7296, %v7923
      %v8007 = vmul.f32 %v7298, %v7923
      %v8008 = vmul.f32 %v7302, %v7924
      %v8009 = vmul.f32 %v7304, %v7924
      %v8010 = vmul.f32 %v7306, %v7925
      %v8011 = vmul.f32 %v7308, %v7925
      %v8012 = vmul.f32 %v7312, %v7926
      %v8013 = vmul.f32 %v7314, %v7926
      %v8014 = vmul.f32 %v7316, %v7927
      %v8015 = vmul.f32 %v7318, %v7927
      %v8016 = vmul.f32 %v7322, %v7928
      %v8017 = vmul.f32 %v7324, %v7928
      %v8018 = vmul.f32 %v7326, %v7929
      %v8019 = vmul.f32 %v7328, %v7929
      %v8020 = vmul.f32 %v7332, %v7930
      %v8021 = vmul.f32 %v7334, %v7930
      %v8022 = vmul.f32 %v7336, %v7931
      %v8023 = vmul.f32 %v7338, %v7931
      %v8024 = vmul.f32 %v7342, %v7932
      %v8025 = vmul.f32 %v7344, %v7932
      %v8026 = vmul.f32 %v7346, %v7933
      %v8027 = vmul.f32 %v7348, %v7933
      %v8028 = vmul.f32 %v7352, %v7934
      %v8029 = vmul.f32 %v7354, %v7934
      %v8030 = vmul.f32 %v7356, %v7935
      %v8031 = vmul.f32 %v7358, %v7935
      %v8032 = vmul.f32 %v7362, %v7936
      %v8033 = vmul.f32 %v7364, %v7936
      %v8034 = vmul.f32 %v7366, %v7937
      %v8035 = vmul.f32 %v7368, %v7937
      %v8036 = vmul.f32 %v7372, %v7938
      %v8037 = vmul.f32 %v7374, %v7938
      %v8038 = vmul.f32 %v7376, %v7939
      %v8039 = vmul.f32 %v7378, %v7939
      %v8040 = vmul.f32 %v7382, %v7940
      %v8041 = vmul.f32 %v7384, %v7940
      %v8042 = vmul.f32 %v7386, %v7941
      %v8043 = vmul.f32 %v7388, %v7941
      %v8044 = vmul.f32 %v7392, %v7942
      %v8045 = vmul.f32 %v7394, %v7942
      %v8046 = vmul.f32 %v7396, %v7943
      %v8047 = vmul.f32 %v7398, %v7943
      %v8048 = vmul.f32 %v7402, %v7944
      %v8049 = vmul.f32 %v7404, %v7944
      %v8050 = vmul.f32 %v7406, %v7945
      %v8051 = vmul.f32 %v7408, %v7945
      %v8052 = vmul.f32 %v7412, %v7946
      %v8053 = vmul.f32 %v7414, %v7946
      %v8054 = vmul.f32 %v7416, %v7947
      %v8055 = vmul.f32 %v7418, %v7947
      %v8056 = vmul.f32 %v7422, %v7948
      %v8057 = vmul.f32 %v7424, %v7948
      %v8058 = vmul.f32 %v7426, %v7949
      %v8059 = vmul.f32 %v7428, %v7949
      %v8060 = vmul.f32 %v7432, %v7950
      %v8061 = vmul.f32 %v7434, %v7950
      %v8062 = vmul.f32 %v7436, %v7951
      %v8063 = vmul.f32 %v7438, %v7951
      %v8064 = vmul.f32 %v7442, %v7952
      %v8065 = vmul.f32 %v7444, %v7952
      %v8066 = vmul.f32 %v7446, %v7953
      %v8067 = vmul.f32 %v7448, %v7953
      %v8068 = vmul.f32 %v7452, %v7954
      %v8069 = vmul.f32 %v7454, %v7954
      %v8070 = vmul.f32 %v7456, %v7955
      %v8071 = vmul.f32 %v7458, %v7955
      %v8072 = vmul.f32 %v7462, %v7956
      %v8073 = vmul.f32 %v7464, %v7956
      %v8074 = vmul.f32 %v7466, %v7957
      %v8075 = vmul.f32 %v7468, %v7957
      %v8076 = vmul.f32 %v7472, %v7958
      %v8077 = vmul.f32 %v7474, %v7958
      %v8078 = vmul.f32 %v7476, %v7959
      %v8079 = vmul.f32 %v7478, %v7959
      %v8080 = vmul.f32 %v7482, %v7960
      %v8081 = vmul.f32 %v7484, %v7960
      %v8082 = vmul.f32 %v7486, %v7961
      %v8083 = vmul.f32 %v7488, %v7961
      %v8084 = vmul.f32 %v7492, %v7962
      %v8085 = vmul.f32 %v7494, %v7962
      %v8086 = vmul.f32 %v7496, %v7963
      %v8087 = vmul.f32 %v7498, %v7963
      %v8088 = vmul.f32 %v7502, %v7964
      %v8089 = vmul.f32 %v7504, %v7964
      %v8090 = vmul.f32 %v7506, %v7965
      %v8091 = vmul.f32 %v7508, %v7965
      %v8092 = vmul.f32 %v7512, %v7966
      %v8093 = vmul.f32 %v7514, %v7966
      %v8094 = vmul.f32 %v7516, %v7967
      %v8095 = vmul.f32 %v7518, %v7967
      %v8096 = vpack.c.bf16 %v7970, %v7968
      %v8097 = vpack.c.bf16 %v7971, %v7969
      %v8098 = vpack.c.bf16 %v7974, %v7972
      %v8099 = vpack.c.bf16 %v7975, %v7973
      %v8100 = vpack.c.bf16 %v7978, %v7976
      %v8101 = vpack.c.bf16 %v7979, %v7977
      %v8102 = vpack.c.bf16 %v7982, %v7980
      %v8103 = vpack.c.bf16 %v7983, %v7981
      %v8104 = vpack.c.bf16 %v7986, %v7984
      %v8105 = vpack.c.bf16 %v7987, %v7985
      %v8106 = vpack.c.bf16 %v7990, %v7988
      %v8107 = vpack.c.bf16 %v7991, %v7989
      %v8108 = vpack.c.bf16 %v7994, %v7992
      %v8109 = vpack.c.bf16 %v7995, %v7993
      %v8110 = vpack.c.bf16 %v7998, %v7996
      %v8111 = vpack.c.bf16 %v7999, %v7997
      %v8112 = vpack.c.bf16 %v8002, %v8000
      %v8113 = vpack.c.bf16 %v8003, %v8001
      %v8114 = vpack.c.bf16 %v8006, %v8004
      %v8115 = vpack.c.bf16 %v8007, %v8005
      %v8116 = vpack.c.bf16 %v8010, %v8008
      %v8117 = vpack.c.bf16 %v8011, %v8009
      %v8118 = vpack.c.bf16 %v8014, %v8012
      %v8119 = vpack.c.bf16 %v8015, %v8013
      %v8120 = vpack.c.bf16 %v8018, %v8016
      %v8121 = vpack.c.bf16 %v8019, %v8017
      %v8122 = vpack.c.bf16 %v8022, %v8020
      %v8123 = vpack.c.bf16 %v8023, %v8021
      %v8124 = vpack.c.bf16 %v8026, %v8024
      %v8125 = vpack.c.bf16 %v8027, %v8025
      %v8126 = vpack.c.bf16 %v8030, %v8028
      %v8127 = vpack.c.bf16 %v8031, %v8029
      %v8128 = vpack.c.bf16 %v8034, %v8032
      %v8129 = vpack.c.bf16 %v8035, %v8033
      %v8130 = vpack.c.bf16 %v8038, %v8036
      %v8131 = vpack.c.bf16 %v8039, %v8037
      %v8132 = vpack.c.bf16 %v8042, %v8040
      %v8133 = vpack.c.bf16 %v8043, %v8041
      %v8134 = vpack.c.bf16 %v8046, %v8044
      %v8135 = vpack.c.bf16 %v8047, %v8045
      %v8136 = vpack.c.bf16 %v8050, %v8048
      %v8137 = vpack.c.bf16 %v8051, %v8049
      %v8138 = vpack.c.bf16 %v8054, %v8052
      %v8139 = vpack.c.bf16 %v8055, %v8053
      %v8140 = vpack.c.bf16 %v8058, %v8056
      %v8141 = vpack.c.bf16 %v8059, %v8057
      %v8142 = vpack.c.bf16 %v8062, %v8060
      %v8143 = vpack.c.bf16 %v8063, %v8061
      %v8144 = vpack.c.bf16 %v8066, %v8064
      %v8145 = vpack.c.bf16 %v8067, %v8065
      %v8146 = vpack.c.bf16 %v8070, %v8068
      %v8147 = vpack.c.bf16 %v8071, %v8069
      %v8148 = vpack.c.bf16 %v8074, %v8072
      %v8149 = vpack.c.bf16 %v8075, %v8073
      %v8150 = vpack.c.bf16 %v8078, %v8076
      %v8151 = vpack.c.bf16 %v8079, %v8077
      %v8152 = vpack.c.bf16 %v8082, %v8080
      %v8153 = vpack.c.bf16 %v8083, %v8081
      %v8154 = vpack.c.bf16 %v8086, %v8084
      %v8155 = vpack.c.bf16 %v8087, %v8085
      %v8156 = vpack.c.bf16 %v8090, %v8088
      %v8157 = vpack.c.bf16 %v8091, %v8089
      %v8158 = vpack.c.bf16 %v8094, %v8092
      %v8159 = vpack.c.bf16 %v8095, %v8093
      %8160 = vst [vmem:[#allocation2] sm:$0xff] %v8096
      %8161 = vst [vmem:[#allocation2 + $0x8] sm:$0xff] %v8097
      %8162 = vst [vmem:[#allocation2 + $0x10] sm:$0xff] %v8098
      %8163 = vst [vmem:[#allocation2 + $0x18] sm:$0xff] %v8099
      %8164 = vst [vmem:[#allocation2 + $0x20] sm:$0xff] %v8100
      %8165 = vst [vmem:[#allocation2 + $0x28] sm:$0xff] %v8101
      %8166 = vst [vmem:[#allocation2 + $0x30] sm:$0xff] %v8102
      %8167 = vst [vmem:[#allocation2 + $0x38] sm:$0xff] %v8103
      %8168 = vst [vmem:[#allocation2 + $0x40] sm:$0xff] %v8104
      %8169 = vst [vmem:[#allocation2 + $0x48] sm:$0xff] %v8105
      %8170 = vst [vmem:[#allocation2 + $0x50] sm:$0xff] %v8106
      %8171 = vst [vmem:[#allocation2 + $0x58] sm:$0xff] %v8107
      %8172 = vst [vmem:[#allocation2 + $0x60] sm:$0xff] %v8108
      %8173 = vst [vmem:[#allocation2 + $0x68] sm:$0xff] %v8109
      %8174 = vst [vmem:[#allocation2 + $0x70] sm:$0xff] %v8110
      %8175 = vst [vmem:[#allocation2 + $0x78] sm:$0xff] %v8111
      %8176 = vst [vmem:[#allocation2 + $0x80] sm:$0xff] %v8112
      %8177 = vst [vmem:[#allocation2 + $0x88] sm:$0xff] %v8113
      %8178 = vst [vmem:[#allocation2 + $0x90] sm:$0xff] %v8114
      %8179 = vst [vmem:[#allocation2 + $0x98] sm:$0xff] %v8115
      %8180 = vst [vmem:[#allocation2 + $0xa0] sm:$0xff] %v8116
      %8181 = vst [vmem:[#allocation2 + $0xa8] sm:$0xff] %v8117
      %8182 = vst [vmem:[#allocation2 + $0xb0] sm:$0xff] %v8118
      %8183 = vst [vmem:[#allocation2 + $0xb8] sm:$0xff] %v8119
      %8184 = vst [vmem:[#allocation2 + $0xc0] sm:$0xff] %v8120
      %8185 = vst [vmem:[#allocation2 + $0xc8] sm:$0xff] %v8121
      %8186 = vst [vmem:[#allocation2 + $0xd0] sm:$0xff] %v8122
      %8187 = vst [vmem:[#allocation2 + $0xd8] sm:$0xff] %v8123
      %8188 = vst [vmem:[#allocation2 + $0xe0] sm:$0xff] %v8124
      %8189 = vst [vmem:[#allocation2 + $0xe8] sm:$0xff] %v8125
      %8190 = vst [vmem:[#allocation2 + $0xf0] sm:$0xff] %v8126
      %8191 = vst [vmem:[#allocation2 + $0xf8] sm:$0xff] %v8127
      %8192 = vst [vmem:[#allocation2 + $0x100] sm:$0xff] %v8128
      %8193 = vst [vmem:[#allocation2 + $0x108] sm:$0xff] %v8129
      %8194 = vst [vmem:[#allocation2 + $0x110] sm:$0xff] %v8130
      %8195 = vst [vmem:[#allocation2 + $0x118] sm:$0xff] %v8131
      %8196 = vst [vmem:[#allocation2 + $0x120] sm:$0xff] %v8132
      %8197 = vst [vmem:[#allocation2 + $0x128] sm:$0xff] %v8133
      %8198 = vst [vmem:[#allocation2 + $0x130] sm:$0xff] %v8134
      %8199 = vst [vmem:[#allocation2 + $0x138] sm:$0xff] %v8135
      %8200 = vst [vmem:[#allocation2 + $0x140] sm:$0xff] %v8136
      %8201 = vst [vmem:[#allocation2 + $0x148] sm:$0xff] %v8137
      %8202 = vst [vmem:[#allocation2 + $0x150] sm:$0xff] %v8138
      %8203 = vst [vmem:[#allocation2 + $0x158] sm:$0xff] %v8139
      %8204 = vst [vmem:[#allocation2 + $0x160] sm:$0xff] %v8140
      %8205 = vst [vmem:[#allocation2 + $0x168] sm:$0xff] %v8141
      %8206 = vst [vmem:[#allocation2 + $0x170] sm:$0xff] %v8142
      %8207 = vst [vmem:[#allocation2 + $0x178] sm:$0xff] %v8143
      %8208 = vst [vmem:[#allocation2 + $0x180] sm:$0xff] %v8144
      %8209 = vst [vmem:[#allocation2 + $0x188] sm:$0xff] %v8145
      %8210 = vst [vmem:[#allocation2 + $0x190] sm:$0xff] %v8146
      %8211 = vst [vmem:[#allocation2 + $0x198] sm:$0xff] %v8147
      %8212 = vst [vmem:[#allocation2 + $0x1a0] sm:$0xff] %v8148
      %8213 = vst [vmem:[#allocation2 + $0x1a8] sm:$0xff] %v8149
      %8214 = vst [vmem:[#allocation2 + $0x1b0] sm:$0xff] %v8150
      %8215 = vst [vmem:[#allocation2 + $0x1b8] sm:$0xff] %v8151
      %8216 = vst [vmem:[#allocation2 + $0x1c0] sm:$0xff] %v8152
      %8217 = vst [vmem:[#allocation2 + $0x1c8] sm:$0xff] %v8153
      %8218 = vst [vmem:[#allocation2 + $0x1d0] sm:$0xff] %v8154
      %8219 = vst [vmem:[#allocation2 + $0x1d8] sm:$0xff] %v8155
      %8220 = vst [vmem:[#allocation2 + $0x1e0] sm:$0xff] %v8156
      %8221 = vst [vmem:[#allocation2 + $0x1e8] sm:$0xff] %v8157
      %8222 = vst [vmem:[#allocation2 + $0x1f0] sm:$0xff] %v8158
      %8223 = vst [vmem:[#allocation2 + $0x1f8] sm:$0xff] %v8159
    $region61: #{projection_head_forward.1} parent=1 // pred_fallthru
      _
    %v8224 = vld [vmem:[#allocation2] sm:$0xff]
    %v8225 = vld [vmem:[#allocation2 + $0x8] sm:$0xff]
    %v8226 = vld [vmem:[#allocation2 + $0x10] sm:$0xff]
    %v8227 = vld [vmem:[#allocation2 + $0x18] sm:$0xff]
    %v8228 = vld [vmem:[#allocation2 + $0x20] sm:$0xff]
    %v8229 = vld [vmem:[#allocation2 + $0x28] sm:$0xff]
    %v8230 = vld [vmem:[#allocation2 + $0x30] sm:$0xff]
    %v8231 = vld [vmem:[#allocation2 + $0x38] sm:$0xff]
    %v8232 = vld [vmem:[#allocation2 + $0x40] sm:$0xff]
    %v8233 = vld [vmem:[#allocation2 + $0x48] sm:$0xff]
    %v8234 = vld [vmem:[#allocation2 + $0x50] sm:$0xff]
    %v8235 = vld [vmem:[#allocation2 + $0x58] sm:$0xff]
    %v8236 = vld [vmem:[#allocation2 + $0x60] sm:$0xff]
    %v8237 = vld [vmem:[#allocation2 + $0x68] sm:$0xff]
    %v8238 = vld [vmem:[#allocation2 + $0x70] sm:$0xff]
    %v8239 = vld [vmem:[#allocation2 + $0x78] sm:$0xff]
    %v8240 = vld [vmem:[#allocation2 + $0x80] sm:$0xff]
    %v8241 = vld [vmem:[#allocation2 + $0x88] sm:$0xff]
    %v8242 = vld [vmem:[#allocation2 + $0x90] sm:$0xff]
    %v8243 = vld [vmem:[#allocation2 + $0x98] sm:$0xff]
    %v8244 = vld [vmem:[#allocation2 + $0xa0] sm:$0xff]
    %v8245 = vld [vmem:[#allocation2 + $0xa8] sm:$0xff]
    %v8246 = vld [vmem:[#allocation2 + $0xb0] sm:$0xff]
    %v8247 = vld [vmem:[#allocation2 + $0xb8] sm:$0xff]
    %v8248 = vld [vmem:[#allocation2 + $0xc0] sm:$0xff]
    %v8249 = vld [vmem:[#allocation2 + $0xc8] sm:$0xff]
    %v8250 = vld [vmem:[#allocation2 + $0xd0] sm:$0xff]
    %v8251 = vld [vmem:[#allocation2 + $0xd8] sm:$0xff]
    %v8252 = vld [vmem:[#allocation2 + $0xe0] sm:$0xff]
    %v8253 = vld [vmem:[#allocation2 + $0xe8] sm:$0xff]
    %v8254 = vld [vmem:[#allocation2 + $0xf0] sm:$0xff]
    %v8255 = vld [vmem:[#allocation2 + $0xf8] sm:$0xff]
    %v8256 = vld [vmem:[#allocation2 + $0x100] sm:$0xff]
    %v8257 = vld [vmem:[#allocation2 + $0x108] sm:$0xff]
    %v8258 = vld [vmem:[#allocation2 + $0x110] sm:$0xff]
    %v8259 = vld [vmem:[#allocation2 + $0x118] sm:$0xff]
    %v8260 = vld [vmem:[#allocation2 + $0x120] sm:$0xff]
    %v8261 = vld [vmem:[#allocation2 + $0x128] sm:$0xff]
    %v8262 = vld [vmem:[#allocation2 + $0x130] sm:$0xff]
    %v8263 = vld [vmem:[#allocation2 + $0x138] sm:$0xff]
    %v8264 = vld [vmem:[#allocation2 + $0x140] sm:$0xff]
    %v8265 = vld [vmem:[#allocation2 + $0x148] sm:$0xff]
    %v8266 = vld [vmem:[#allocation2 + $0x150] sm:$0xff]
    %v8267 = vld [vmem:[#allocation2 + $0x158] sm:$0xff]
    %v8268 = vld [vmem:[#allocation2 + $0x160] sm:$0xff]
    %v8269 = vld [vmem:[#allocation2 + $0x168] sm:$0xff]
    %v8270 = vld [vmem:[#allocation2 + $0x170] sm:$0xff]
    %v8271 = vld [vmem:[#allocation2 + $0x178] sm:$0xff]
    %v8272 = vld [vmem:[#allocation2 + $0x180] sm:$0xff]
    %v8273 = vld [vmem:[#allocation2 + $0x188] sm:$0xff]
    %v8274 = vld [vmem:[#allocation2 + $0x190] sm:$0xff]
    %v8275 = vld [vmem:[#allocation2 + $0x198] sm:$0xff]
    %v8276 = vld [vmem:[#allocation2 + $0x1a0] sm:$0xff]
    %v8277 = vld [vmem:[#allocation2 + $0x1a8] sm:$0xff]
    %v8278 = vld [vmem:[#allocation2 + $0x1b0] sm:$0xff]
    %v8279 = vld [vmem:[#allocation2 + $0x1b8] sm:$0xff]
    %v8280 = vld [vmem:[#allocation2 + $0x1c0] sm:$0xff]
    %v8281 = vld [vmem:[#allocation2 + $0x1c8] sm:$0xff]
    %v8282 = vld [vmem:[#allocation2 + $0x1d0] sm:$0xff]
    %v8283 = vld [vmem:[#allocation2 + $0x1d8] sm:$0xff]
    %v8284 = vld [vmem:[#allocation2 + $0x1e0] sm:$0xff]
    %v8285 = vld [vmem:[#allocation2 + $0x1e8] sm:$0xff]
    %v8286 = vld [vmem:[#allocation2 + $0x1f0] sm:$0xff]
    %v8287 = vld [vmem:[#allocation2 + $0x1f8] sm:$0xff]
    %v8288 = vld [vmem:[#allocation8] sm:$0xff]
    %v8289 = vld [vmem:[#allocation8 + $0x8] sm:$0xff]
    %v8290 = vld [vmem:[#allocation8 + $0x10] sm:$0xff]
    %v8291 = vld [vmem:[#allocation8 + $0x18] sm:$0xff]
    %v8292 = vld [vmem:[#allocation8 + $0x20] sm:$0xff]
    %v8293 = vld [vmem:[#allocation8 + $0x28] sm:$0xff]
    %v8294 = vld [vmem:[#allocation8 + $0x30] sm:$0xff]
    %v8295 = vld [vmem:[#allocation8 + $0x38] sm:$0xff]
    %v8296 = vld [vmem:[#allocation8 + $0x40] sm:$0xff]
    %v8297 = vld [vmem:[#allocation8 + $0x48] sm:$0xff]
    %v8298 = vld [vmem:[#allocation8 + $0x50] sm:$0xff]
    %v8299 = vld [vmem:[#allocation8 + $0x58] sm:$0xff]
    %v8300 = vld [vmem:[#allocation8 + $0x60] sm:$0xff]
    %v8301 = vld [vmem:[#allocation8 + $0x68] sm:$0xff]
    %v8302 = vld [vmem:[#allocation8 + $0x70] sm:$0xff]
    %v8303 = vld [vmem:[#allocation8 + $0x78] sm:$0xff]
    %v8304 = vld [vmem:[#allocation8 + $0x80] sm:$0xff]
    %v8305 = vld [vmem:[#allocation8 + $0x88] sm:$0xff]
    %v8306 = vld [vmem:[#allocation8 + $0x90] sm:$0xff]
    %v8307 = vld [vmem:[#allocation8 + $0x98] sm:$0xff]
    %v8308 = vld [vmem:[#allocation8 + $0xa0] sm:$0xff]
    %v8309 = vld [vmem:[#allocation8 + $0xa8] sm:$0xff]
    %v8310 = vld [vmem:[#allocation8 + $0xb0] sm:$0xff]
    %v8311 = vld [vmem:[#allocation8 + $0xb8] sm:$0xff]
    %v8312 = vld [vmem:[#allocation8 + $0xc0] sm:$0xff]
    %v8313 = vld [vmem:[#allocation8 + $0xc8] sm:$0xff]
    %v8314 = vld [vmem:[#allocation8 + $0xd0] sm:$0xff]
    %v8315 = vld [vmem:[#allocation8 + $0xd8] sm:$0xff]
    %v8316 = vld [vmem:[#allocation8 + $0xe0] sm:$0xff]
    %v8317 = vld [vmem:[#allocation8 + $0xe8] sm:$0xff]
    %v8318 = vld [vmem:[#allocation8 + $0xf0] sm:$0xff]
    %v8319 = vld [vmem:[#allocation8 + $0xf8] sm:$0xff]
    %v8320 = vld [vmem:[#allocation10] sm:$0x3]
    %v8322 = vlaneseq
    %v8323 = vshrl.u32 %v8322, 7
    %v8324 = vsub.s32 0, %v8323
    %v8325 = vrot.slane %v8320, %v8324
    %v8326 = vlaneseq
    %v8327 = vshrl.u32 %v8326, 7
    %v8328 = vsub.s32 1, %v8327
    %v8329 = vrot.slane %v8320, %v8328
    %v8364 = vunpack.c.l.b16 %v8288
    %v8365 = vunpack.c.h.b16 %v8288
    %v8366 = vunpack.c.l.b16 %v8289
    %v8367 = vunpack.c.h.b16 %v8289
    %v8368 = vunpack.c.l.b16 %v8290
    %v8369 = vunpack.c.h.b16 %v8290
    %v8370 = vunpack.c.l.b16 %v8291
    %v8371 = vunpack.c.h.b16 %v8291
    %v8372 = vunpack.c.l.b16 %v8292
    %v8373 = vunpack.c.h.b16 %v8292
    %v8374 = vunpack.c.l.b16 %v8293
    %v8375 = vunpack.c.h.b16 %v8293
    %v8376 = vunpack.c.l.b16 %v8294
    %v8377 = vunpack.c.h.b16 %v8294
    %v8378 = vunpack.c.l.b16 %v8295
    %v8379 = vunpack.c.h.b16 %v8295
    %v8380 = vunpack.c.l.b16 %v8296
    %v8381 = vunpack.c.h.b16 %v8296
    %v8382 = vunpack.c.l.b16 %v8297
    %v8383 = vunpack.c.h.b16 %v8297
    %v8384 = vunpack.c.l.b16 %v8298
    %v8385 = vunpack.c.h.b16 %v8298
    %v8386 = vunpack.c.l.b16 %v8299
    %v8387 = vunpack.c.h.b16 %v8299
    %v8388 = vunpack.c.l.b16 %v8300
    %v8389 = vunpack.c.h.b16 %v8300
    %v8390 = vunpack.c.l.b16 %v8301
    %v8391 = vunpack.c.h.b16 %v8301
    %v8392 = vunpack.c.l.b16 %v8302
    %v8393 = vunpack.c.h.b16 %v8302
    %v8394 = vunpack.c.l.b16 %v8303
    %v8395 = vunpack.c.h.b16 %v8303
    %v8396 = vunpack.c.l.b16 %v8304
    %v8397 = vunpack.c.h.b16 %v8304
    %v8398 = vunpack.c.l.b16 %v8305
    %v8399 = vunpack.c.h.b16 %v8305
    %v8400 = vunpack.c.l.b16 %v8306
    %v8401 = vunpack.c.h.b16 %v8306
    %v8402 = vunpack.c.l.b16 %v8307
    %v8403 = vunpack.c.h.b16 %v8307
    %v8404 = vunpack.c.l.b16 %v8308
    %v8405 = vunpack.c.h.b16 %v8308
    %v8406 = vunpack.c.l.b16 %v8309
    %v8407 = vunpack.c.h.b16 %v8309
    %v8408 = vunpack.c.l.b16 %v8310
    %v8409 = vunpack.c.h.b16 %v8310
    %v8410 = vunpack.c.l.b16 %v8311
    %v8411 = vunpack.c.h.b16 %v8311
    %v8412 = vunpack.c.l.b16 %v8312
    %v8413 = vunpack.c.h.b16 %v8312
    %v8414 = vunpack.c.l.b16 %v8313
    %v8415 = vunpack.c.h.b16 %v8313
    %v8416 = vunpack.c.l.b16 %v8314
    %v8417 = vunpack.c.h.b16 %v8314
    %v8418 = vunpack.c.l.b16 %v8315
    %v8419 = vunpack.c.h.b16 %v8315
    %v8420 = vunpack.c.l.b16 %v8316
    %v8421 = vunpack.c.h.b16 %v8316
    %v8422 = vunpack.c.l.b16 %v8317
    %v8423 = vunpack.c.h.b16 %v8317
    %v8424 = vunpack.c.l.b16 %v8318
    %v8425 = vunpack.c.h.b16 %v8318
    %v8426 = vunpack.c.l.b16 %v8319
    %v8427 = vunpack.c.h.b16 %v8319
    %v8428 = vpack.c.b16 %v8366, %v8364
    %v8429 = vpack.c.b16 %v8367, %v8365
    %v8430 = vpack.c.b16 %v8370, %v8368
    %v8431 = vpack.c.b16 %v8371, %v8369
    %v8432 = vpack.c.b16 %v8374, %v8372
    %v8433 = vpack.c.b16 %v8375, %v8373
    %v8434 = vpack.c.b16 %v8378, %v8376
    %v8435 = vpack.c.b16 %v8379, %v8377
    %v8436 = vpack.c.b16 %v8382, %v8380
    %v8437 = vpack.c.b16 %v8383, %v8381
    %v8438 = vpack.c.b16 %v8386, %v8384
    %v8439 = vpack.c.b16 %v8387, %v8385
    %v8440 = vpack.c.b16 %v8390, %v8388
    %v8441 = vpack.c.b16 %v8391, %v8389
    %v8442 = vpack.c.b16 %v8394, %v8392
    %v8443 = vpack.c.b16 %v8395, %v8393
    %v8444 = vpack.c.b16 %v8398, %v8396
    %v8445 = vpack.c.b16 %v8399, %v8397
    %v8446 = vpack.c.b16 %v8402, %v8400
    %v8447 = vpack.c.b16 %v8403, %v8401
    %v8448 = vpack.c.b16 %v8406, %v8404
    %v8449 = vpack.c.b16 %v8407, %v8405
    %v8450 = vpack.c.b16 %v8410, %v8408
    %v8451 = vpack.c.b16 %v8411, %v8409
    %v8452 = vpack.c.b16 %v8414, %v8412
    %v8453 = vpack.c.b16 %v8415, %v8413
    %v8454 = vpack.c.b16 %v8418, %v8416
    %v8455 = vpack.c.b16 %v8419, %v8417
    %v8456 = vpack.c.b16 %v8422, %v8420
    %v8457 = vpack.c.b16 %v8423, %v8421
    %v8458 = vpack.c.b16 %v8426, %v8424
    %v8459 = vpack.c.b16 %v8427, %v8425
    %8492 = vmatprep.subr.bf16.mxu0 %v8429
    %8493 = vmatpush1.bf16.msra.mxu0 %v8428
    %8494 = vmatprep.subr.bf16.mxu0 %v8431
    %8495 = vmatpush1.bf16.msra.mxu0 %v8430
    %8496 = vmatprep.subr.bf16.mxu0 %v8433
    %8497 = vmatpush1.bf16.msra.mxu0 %v8432
    %8498 = vmatprep.subr.bf16.mxu0 %v8435
    %8499 = vmatpush1.bf16.msra.mxu0 %v8434
    %8500 = vmatprep.subr.bf16.mxu0 %v8437
    %8501 = vmatpush1.bf16.msra.mxu0 %v8436
    %8502 = vmatprep.subr.bf16.mxu0 %v8439
    %8503 = vmatpush1.bf16.msra.mxu0 %v8438
    %8504 = vmatprep.subr.bf16.mxu0 %v8441
    %8505 = vmatpush1.bf16.msra.mxu0 %v8440
    %8506 = vmatprep.subr.bf16.mxu0 %v8443
    %8507 = vmatpush1.bf16.msra.mxu0 %v8442
    %8508 = vmatprep.subr.bf16.mxu0 %v8445
    %8509 = vmatpush1.bf16.msra.mxu0 %v8444
    %8510 = vmatprep.subr.bf16.mxu0 %v8447
    %8511 = vmatpush1.bf16.msra.mxu0 %v8446
    %8512 = vmatprep.subr.bf16.mxu0 %v8449
    %8513 = vmatpush1.bf16.msra.mxu0 %v8448
    %8514 = vmatprep.subr.bf16.mxu0 %v8451
    %8515 = vmatpush1.bf16.msra.mxu0 %v8450
    %8516 = vmatprep.subr.bf16.mxu0 %v8453
    %8517 = vmatpush1.bf16.msra.mxu0 %v8452
    %8518 = vmatprep.subr.bf16.mxu0 %v8455
    %8519 = vmatpush1.bf16.msra.mxu0 %v8454
    %8520 = vmatprep.subr.bf16.mxu0 %v8457
    %8521 = vmatpush1.bf16.msra.mxu0 %v8456
    %8522 = vmatprep.subr.bf16.mxu0 %v8459
    %8523 = vmatpush1.bf16.msra.mxu0 %v8458
    %8524 = vmatprep.mubr.bf16.mxu0 %v8225
    %8525 = vmatmul.mubr.bf16.gmra.mrb[0].mxu0 %v8224
    %v8526 = vpop.f32.mrb[0].mxu0
    %v8527 = vadd.f32 %v8325, %v8526
    %v8528 = vpop.f32.mrb[0].mxu0
    %v8529 = vadd.f32 %v8329, %v8528
    %v8530 = vpop.f32.mrb[0].mxu0
    %v8531 = vadd.f32 %v8325, %v8530
    %v8532 = vpop.f32.mrb[0].mxu0
    %v8533 = vadd.f32 %v8329, %v8532
    %8534 = vmatprep.mubr.bf16.mxu0 %v8227
    %8535 = vmatmul.mubr.bf16.gmra.mrb[0].mxu0 %v8226
    %v8536 = vpop.f32.mrb[0].mxu0
    %v8537 = vadd.f32 %v8325, %v8536
    %v8538 = vpop.f32.mrb[0].mxu0
    %v8539 = vadd.f32 %v8329, %v8538
    %v8540 = vpop.f32.mrb[0].mxu0
    %v8541 = vadd.f32 %v8325, %v8540
    %v8542 = vpop.f32.mrb[0].mxu0
    %v8543 = vadd.f32 %v8329, %v8542
    %8544 = vmatprep.mubr.bf16.mxu0 %v8229
    %8545 = vmatmul.mubr.bf16.gmra.mrb[0].mxu0 %v8228
    %v8546 = vpop.f32.mrb[0].mxu0
    %v8547 = vadd.f32 %v8325, %v8546
    %v8548 = vpop.f32.mrb[0].mxu0
    %v8549 = vadd.f32 %v8329, %v8548
    %v8550 = vpop.f32.mrb[0].mxu0
    %v8551 = vadd.f32 %v8325, %v8550
    %v8552 = vpop.f32.mrb[0].mxu0
    %v8553 = vadd.f32 %v8329, %v8552
    %8554 = vmatprep.mubr.bf16.mxu0 %v8231
    %8555 = vmatmul.mubr.bf16.gmra.mrb[0].mxu0 %v8230
    %v8556 = vpop.f32.mrb[0].mxu0
    %v8557 = vadd.f32 %v8325, %v8556
    %v8558 = vpop.f32.mrb[0].mxu0
    %v8559 = vadd.f32 %v8329, %v8558
    %v8560 = vpop.f32.mrb[0].mxu0
    %v8561 = vadd.f32 %v8325, %v8560
    %v8562 = vpop.f32.mrb[0].mxu0
    %v8563 = vadd.f32 %v8329, %v8562
    %8564 = vmatprep.mubr.bf16.mxu0 %v8233
    %8565 = vmatmul.mubr.bf16.gmra.mrb[0].mxu0 %v8232
    %v8566 = vpop.f32.mrb[0].mxu0
    %v8567 = vadd.f32 %v8325, %v8566
    %v8568 = vpop.f32.mrb[0].mxu0
    %v8569 = vadd.f32 %v8329, %v8568
    %v8570 = vpop.f32.mrb[0].mxu0
    %v8571 = vadd.f32 %v8325, %v8570
    %v8572 = vpop.f32.mrb[0].mxu0
    %v8573 = vadd.f32 %v8329, %v8572
    %8574 = vmatprep.mubr.bf16.mxu0 %v8235
    %8575 = vmatmul.mubr.bf16.gmra.mrb[0].mxu0 %v8234
    %v8576 = vpop.f32.mrb[0].mxu0
    %v8577 = vadd.f32 %v8325, %v8576
    %v8578 = vpop.f32.mrb[0].mxu0
    %v8579 = vadd.f32 %v8329, %v8578
    %v8580 = vpop.f32.mrb[0].mxu0
    %v8581 = vadd.f32 %v8325, %v8580
    %v8582 = vpop.f32.mrb[0].mxu0
    %v8583 = vadd.f32 %v8329, %v8582
    %8584 = vmatprep.mubr.bf16.mxu0 %v8237
    %8585 = vmatmul.mubr.bf16.gmra.mrb[0].mxu0 %v8236
    %v8586 = vpop.f32.mrb[0].mxu0
    %v8587 = vadd.f32 %v8325, %v8586
    %v8588 = vpop.f32.mrb[0].mxu0
    %v8589 = vadd.f32 %v8329, %v8588
    %v8590 = vpop.f32.mrb[0].mxu0
    %v8591 = vadd.f32 %v8325, %v8590
    %v8592 = vpop.f32.mrb[0].mxu0
    %v8593 = vadd.f32 %v8329, %v8592
    %8594 = vmatprep.mubr.bf16.mxu0 %v8239
    %8595 = vmatmul.mubr.bf16.gmra.mrb[0].mxu0 %v8238
    %v8596 = vpop.f32.mrb[0].mxu0
    %v8597 = vadd.f32 %v8325, %v8596
    %v8598 = vpop.f32.mrb[0].mxu0
    %v8599 = vadd.f32 %v8329, %v8598
    %v8600 = vpop.f32.mrb[0].mxu0
    %v8601 = vadd.f32 %v8325, %v8600
    %v8602 = vpop.f32.mrb[0].mxu0
    %v8603 = vadd.f32 %v8329, %v8602
    %8604 = vmatprep.mubr.bf16.mxu0 %v8241
    %8605 = vmatmul.mubr.bf16.gmra.mrb[0].mxu0 %v8240
    %v8606 = vpop.f32.mrb[0].mxu0
    %v8607 = vadd.f32 %v8325, %v8606
    %v8608 = vpop.f32.mrb[0].mxu0
    %v8609 = vadd.f32 %v8329, %v8608
    %v8610 = vpop.f32.mrb[0].mxu0
    %v8611 = vadd.f32 %v8325, %v8610
    %v8612 = vpop.f32.mrb[0].mxu0
    %v8613 = vadd.f32 %v8329, %v8612
    %8614 = vmatprep.mubr.bf16.mxu0 %v8243
    %8615 = vmatmul.mubr.bf16.gmra.mrb[0].mxu0 %v8242
    %v8616 = vpop.f32.mrb[0].mxu0
    %v8617 = vadd.f32 %v8325, %v8616
    %v8618 = vpop.f32.mrb[0].mxu0
    %v8619 = vadd.f32 %v8329, %v8618
    %v8620 = vpop.f32.mrb[0].mxu0
    %v8621 = vadd.f32 %v8325, %v8620
    %v8622 = vpop.f32.mrb[0].mxu0
    %v8623 = vadd.f32 %v8329, %v8622
    %8624 = vmatprep.mubr.bf16.mxu0 %v8245
    %8625 = vmatmul.mubr.bf16.gmra.mrb[0].mxu0 %v8244
    %v8626 = vpop.f32.mrb[0].mxu0
    %v8627 = vadd.f32 %v8325, %v8626
    %v8628 = vpop.f32.mrb[0].mxu0
    %v8629 = vadd.f32 %v8329, %v8628
    %v8630 = vpop.f32.mrb[0].mxu0
    %v8631 = vadd.f32 %v8325, %v8630
    %v8632 = vpop.f32.mrb[0].mxu0
    %v8633 = vadd.f32 %v8329, %v8632
    %8634 = vmatprep.mubr.bf16.mxu0 %v8247
    %8635 = vmatmul.mubr.bf16.gmra.mrb[0].mxu0 %v8246
    %v8636 = vpop.f32.mrb[0].mxu0
    %v8637 = vadd.f32 %v8325, %v8636
    %v8638 = vpop.f32.mrb[0].mxu0
    %v8639 = vadd.f32 %v8329, %v8638
    %v8640 = vpop.f32.mrb[0].mxu0
    %v8641 = vadd.f32 %v8325, %v8640
    %v8642 = vpop.f32.mrb[0].mxu0
    %v8643 = vadd.f32 %v8329, %v8642
    %8644 = vmatprep.mubr.bf16.mxu0 %v8249
    %8645 = vmatmul.mubr.bf16.gmra.mrb[0].mxu0 %v8248
    %v8646 = vpop.f32.mrb[0].mxu0
    %v8647 = vadd.f32 %v8325, %v8646
    %v8648 = vpop.f32.mrb[0].mxu0
    %v8649 = vadd.f32 %v8329, %v8648
    %v8650 = vpop.f32.mrb[0].mxu0
    %v8651 = vadd.f32 %v8325, %v8650
    %v8652 = vpop.f32.mrb[0].mxu0
    %v8653 = vadd.f32 %v8329, %v8652
    %8654 = vmatprep.mubr.bf16.mxu0 %v8251
    %8655 = vmatmul.mubr.bf16.gmra.mrb[0].mxu0 %v8250
    %v8656 = vpop.f32.mrb[0].mxu0
    %v8657 = vadd.f32 %v8325, %v8656
    %v8658 = vpop.f32.mrb[0].mxu0
    %v8659 = vadd.f32 %v8329, %v8658
    %v8660 = vpop.f32.mrb[0].mxu0
    %v8661 = vadd.f32 %v8325, %v8660
    %v8662 = vpop.f32.mrb[0].mxu0
    %v8663 = vadd.f32 %v8329, %v8662
    %8664 = vmatprep.mubr.bf16.mxu0 %v8253
    %8665 = vmatmul.mubr.bf16.gmra.mrb[0].mxu0 %v8252
    %v8666 = vpop.f32.mrb[0].mxu0
    %v8667 = vadd.f32 %v8325, %v8666
    %v8668 = vpop.f32.mrb[0].mxu0
    %v8669 = vadd.f32 %v8329, %v8668
    %v8670 = vpop.f32.mrb[0].mxu0
    %v8671 = vadd.f32 %v8325, %v8670
    %v8672 = vpop.f32.mrb[0].mxu0
    %v8673 = vadd.f32 %v8329, %v8672
    %8674 = vmatprep.mubr.bf16.mxu0 %v8255
    %8675 = vmatmul.mubr.bf16.gmra.mrb[0].mxu0 %v8254
    %v8676 = vpop.f32.mrb[0].mxu0
    %v8677 = vadd.f32 %v8325, %v8676
    %v8678 = vpop.f32.mrb[0].mxu0
    %v8679 = vadd.f32 %v8329, %v8678
    %v8680 = vpop.f32.mrb[0].mxu0
    %v8681 = vadd.f32 %v8325, %v8680
    %v8682 = vpop.f32.mrb[0].mxu0
    %v8683 = vadd.f32 %v8329, %v8682
    %8684 = vmatprep.mubr.bf16.mxu0 %v8257
    %8685 = vmatmul.mubr.bf16.gmra.mrb[0].mxu0 %v8256
    %v8686 = vpop.f32.mrb[0].mxu0
    %v8687 = vadd.f32 %v8325, %v8686
    %v8688 = vpop.f32.mrb[0].mxu0
    %v8689 = vadd.f32 %v8329, %v8688
    %v8690 = vpop.f32.mrb[0].mxu0
    %v8691 = vadd.f32 %v8325, %v8690
    %v8692 = vpop.f32.mrb[0].mxu0
    %v8693 = vadd.f32 %v8329, %v8692
    %8694 = vmatprep.mubr.bf16.mxu0 %v8259
    %8695 = vmatmul.mubr.bf16.gmra.mrb[0].mxu0 %v8258
    %v8696 = vpop.f32.mrb[0].mxu0
    %v8697 = vadd.f32 %v8325, %v8696
    %v8698 = vpop.f32.mrb[0].mxu0
    %v8699 = vadd.f32 %v8329, %v8698
    %v8700 = vpop.f32.mrb[0].mxu0
    %v8701 = vadd.f32 %v8325, %v8700
    %v8702 = vpop.f32.mrb[0].mxu0
    %v8703 = vadd.f32 %v8329, %v8702
    %8704 = vmatprep.mubr.bf16.mxu0 %v8261
    %8705 = vmatmul.mubr.bf16.gmra.mrb[0].mxu0 %v8260
    %v8706 = vpop.f32.mrb[0].mxu0
    %v8707 = vadd.f32 %v8325, %v8706
    %v8708 = vpop.f32.mrb[0].mxu0
    %v8709 = vadd.f32 %v8329, %v8708
    %v8710 = vpop.f32.mrb[0].mxu0
    %v8711 = vadd.f32 %v8325, %v8710
    %v8712 = vpop.f32.mrb[0].mxu0
    %v8713 = vadd.f32 %v8329, %v8712
    %8714 = vmatprep.mubr.bf16.mxu0 %v8263
    %8715 = vmatmul.mubr.bf16.gmra.mrb[0].mxu0 %v8262
    %v8716 = vpop.f32.mrb[0].mxu0
    %v8717 = vadd.f32 %v8325, %v8716
    %v8718 = vpop.f32.mrb[0].mxu0
    %v8719 = vadd.f32 %v8329, %v8718
    %v8720 = vpop.f32.mrb[0].mxu0
    %v8721 = vadd.f32 %v8325, %v8720
    %v8722 = vpop.f32.mrb[0].mxu0
    %v8723 = vadd.f32 %v8329, %v8722
    %8724 = vmatprep.mubr.bf16.mxu0 %v8265
    %8725 = vmatmul.mubr.bf16.gmra.mrb[0].mxu0 %v8264
    %v8726 = vpop.f32.mrb[0].mxu0
    %v8727 = vadd.f32 %v8325, %v8726
    %v8728 = vpop.f32.mrb[0].mxu0
    %v8729 = vadd.f32 %v8329, %v8728
    %v8730 = vpop.f32.mrb[0].mxu0
    %v8731 = vadd.f32 %v8325, %v8730
    %v8732 = vpop.f32.mrb[0].mxu0
    %v8733 = vadd.f32 %v8329, %v8732
    %8734 = vmatprep.mubr.bf16.mxu0 %v8267
    %8735 = vmatmul.mubr.bf16.gmra.mrb[0].mxu0 %v8266
    %v8736 = vpop.f32.mrb[0].mxu0
    %v8737 = vadd.f32 %v8325, %v8736
    %v8738 = vpop.f32.mrb[0].mxu0
    %v8739 = vadd.f32 %v8329, %v8738
    %v8740 = vpop.f32.mrb[0].mxu0
    %v8741 = vadd.f32 %v8325, %v8740
    %v8742 = vpop.f32.mrb[0].mxu0
    %v8743 = vadd.f32 %v8329, %v8742
    %8744 = vmatprep.mubr.bf16.mxu0 %v8269
    %8745 = vmatmul.mubr.bf16.gmra.mrb[0].mxu0 %v8268
    %v8746 = vpop.f32.mrb[0].mxu0
    %v8747 = vadd.f32 %v8325, %v8746
    %v8748 = vpop.f32.mrb[0].mxu0
    %v8749 = vadd.f32 %v8329, %v8748
    %v8750 = vpop.f32.mrb[0].mxu0
    %v8751 = vadd.f32 %v8325, %v8750
    %v8752 = vpop.f32.mrb[0].mxu0
    %v8753 = vadd.f32 %v8329, %v8752
    %8754 = vmatprep.mubr.bf16.mxu0 %v8271
    %8755 = vmatmul.mubr.bf16.gmra.mrb[0].mxu0 %v8270
    %v8756 = vpop.f32.mrb[0].mxu0
    %v8757 = vadd.f32 %v8325, %v8756
    %v8758 = vpop.f32.mrb[0].mxu0
    %v8759 = vadd.f32 %v8329, %v8758
    %v8760 = vpop.f32.mrb[0].mxu0
    %v8761 = vadd.f32 %v8325, %v8760
    %v8762 = vpop.f32.mrb[0].mxu0
    %v8763 = vadd.f32 %v8329, %v8762
    %8764 = vmatprep.mubr.bf16.mxu0 %v8273
    %8765 = vmatmul.mubr.bf16.gmra.mrb[0].mxu0 %v8272
    %v8766 = vpop.f32.mrb[0].mxu0
    %v8767 = vadd.f32 %v8325, %v8766
    %v8768 = vpop.f32.mrb[0].mxu0
    %v8769 = vadd.f32 %v8329, %v8768
    %v8770 = vpop.f32.mrb[0].mxu0
    %v8771 = vadd.f32 %v8325, %v8770
    %v8772 = vpop.f32.mrb[0].mxu0
    %v8773 = vadd.f32 %v8329, %v8772
    %8774 = vmatprep.mubr.bf16.mxu0 %v8275
    %8775 = vmatmul.mubr.bf16.gmra.mrb[0].mxu0 %v8274
    %v8776 = vpop.f32.mrb[0].mxu0
    %v8777 = vadd.f32 %v8325, %v8776
    %v8778 = vpop.f32.mrb[0].mxu0
    %v8779 = vadd.f32 %v8329, %v8778
    %v8780 = vpop.f32.mrb[0].mxu0
    %v8781 = vadd.f32 %v8325, %v8780
    %v8782 = vpop.f32.mrb[0].mxu0
    %v8783 = vadd.f32 %v8329, %v8782
    %8784 = vmatprep.mubr.bf16.mxu0 %v8277
    %8785 = vmatmul.mubr.bf16.gmra.mrb[0].mxu0 %v8276
    %v8786 = vpop.f32.mrb[0].mxu0
    %v8787 = vadd.f32 %v8325, %v8786
    %v8788 = vpop.f32.mrb[0].mxu0
    %v8789 = vadd.f32 %v8329, %v8788
    %v8790 = vpop.f32.mrb[0].mxu0
    %v8791 = vadd.f32 %v8325, %v8790
    %v8792 = vpop.f32.mrb[0].mxu0
    %v8793 = vadd.f32 %v8329, %v8792
    %8794 = vmatprep.mubr.bf16.mxu0 %v8279
    %8795 = vmatmul.mubr.bf16.gmra.mrb[0].mxu0 %v8278
    %v8796 = vpop.f32.mrb[0].mxu0
    %v8797 = vadd.f32 %v8325, %v8796
    %v8798 = vpop.f32.mrb[0].mxu0
    %v8799 = vadd.f32 %v8329, %v8798
    %v8800 = vpop.f32.mrb[0].mxu0
    %v8801 = vadd.f32 %v8325, %v8800
    %v8802 = vpop.f32.mrb[0].mxu0
    %v8803 = vadd.f32 %v8329, %v8802
    %8804 = vmatprep.mubr.bf16.mxu0 %v8281
    %8805 = vmatmul.mubr.bf16.gmra.mrb[0].mxu0 %v8280
    %v8806 = vpop.f32.mrb[0].mxu0
    %v8807 = vadd.f32 %v8325, %v8806
    %v8808 = vpop.f32.mrb[0].mxu0
    %v8809 = vadd.f32 %v8329, %v8808
    %v8810 = vpop.f32.mrb[0].mxu0
    %v8811 = vadd.f32 %v8325, %v8810
    %v8812 = vpop.f32.mrb[0].mxu0
    %v8813 = vadd.f32 %v8329, %v8812
    %8814 = vmatprep.mubr.bf16.mxu0 %v8283
    %8815 = vmatmul.mubr.bf16.gmra.mrb[0].mxu0 %v8282
    %v8816 = vpop.f32.mrb[0].mxu0
    %v8817 = vadd.f32 %v8325, %v8816
    %v8818 = vpop.f32.mrb[0].mxu0
    %v8819 = vadd.f32 %v8329, %v8818
    %v8820 = vpop.f32.mrb[0].mxu0
    %v8821 = vadd.f32 %v8325, %v8820
    %v8822 = vpop.f32.mrb[0].mxu0
    %v8823 = vadd.f32 %v8329, %v8822
    %8824 = vmatprep.mubr.bf16.mxu0 %v8285
    %8825 = vmatmul.mubr.bf16.gmra.mrb[0].mxu0 %v8284
    %v8826 = vpop.f32.mrb[0].mxu0
    %v8827 = vadd.f32 %v8325, %v8826
    %v8828 = vpop.f32.mrb[0].mxu0
    %v8829 = vadd.f32 %v8329, %v8828
    %v8830 = vpop.f32.mrb[0].mxu0
    %v8831 = vadd.f32 %v8325, %v8830
    %v8832 = vpop.f32.mrb[0].mxu0
    %v8833 = vadd.f32 %v8329, %v8832
    %8834 = vmatprep.mubr.bf16.mxu0 %v8287
    %8835 = vmatmul.mubr.bf16.gmra.mrb[0].mxu0 %v8286
    %v8836 = vpop.f32.mrb[0].mxu0
    %v8837 = vadd.f32 %v8325, %v8836
    %v8838 = vpop.f32.mrb[0].mxu0
    %v8839 = vadd.f32 %v8329, %v8838
    %v8840 = vpop.f32.mrb[0].mxu0
    %v8841 = vadd.f32 %v8325, %v8840
    %v8842 = vpop.f32.mrb[0].mxu0
    %v8843 = vadd.f32 %v8329, %v8842
    %8844 = vdwg.mxu0
    %8845 = vst [vmem:[%s9] sm:$0xff] %v8527
    %8846 = vst [vmem:[%s9 + $0x8] sm:$0xff] %v8529
    %8847 = vst [vmem:[%s9 + $0x10] sm:$0xff] %v8531
    %8848 = vst [vmem:[%s9 + $0x18] sm:$0xff] %v8533
    %8849 = vst [vmem:[%s9 + $0x20] sm:$0xff] %v8537
    %8850 = vst [vmem:[%s9 + $0x28] sm:$0xff] %v8539
    %8851 = vst [vmem:[%s9 + $0x30] sm:$0xff] %v8541
    %8852 = vst [vmem:[%s9 + $0x38] sm:$0xff] %v8543
    %8853 = vst [vmem:[%s9 + $0x40] sm:$0xff] %v8547
    %8854 = vst [vmem:[%s9 + $0x48] sm:$0xff] %v8549
    %8855 = vst [vmem:[%s9 + $0x50] sm:$0xff] %v8551
    %8856 = vst [vmem:[%s9 + $0x58] sm:$0xff] %v8553
    %8857 = vst [vmem:[%s9 + $0x60] sm:$0xff] %v8557
    %8858 = vst [vmem:[%s9 + $0x68] sm:$0xff] %v8559
    %8859 = vst [vmem:[%s9 + $0x70] sm:$0xff] %v8561
    %8860 = vst [vmem:[%s9 + $0x78] sm:$0xff] %v8563
    %8861 = vst [vmem:[%s9 + $0x80] sm:$0xff] %v8567
    %8862 = vst [vmem:[%s9 + $0x88] sm:$0xff] %v8569
    %8863 = vst [vmem:[%s9 + $0x90] sm:$0xff] %v8571
    %8864 = vst [vmem:[%s9 + $0x98] sm:$0xff] %v8573
    %8865 = vst [vmem:[%s9 + $0xa0] sm:$0xff] %v8577
    %8866 = vst [vmem:[%s9 + $0xa8] sm:$0xff] %v8579
    %8867 = vst [vmem:[%s9 + $0xb0] sm:$0xff] %v8581
    %8868 = vst [vmem:[%s9 + $0xb8] sm:$0xff] %v8583
    %8869 = vst [vmem:[%s9 + $0xc0] sm:$0xff] %v8587
    %8870 = vst [vmem:[%s9 + $0xc8] sm:$0xff] %v8589
    %8871 = vst [vmem:[%s9 + $0xd0] sm:$0xff] %v8591
    %8872 = vst [vmem:[%s9 + $0xd8] sm:$0xff] %v8593
    %8873 = vst [vmem:[%s9 + $0xe0] sm:$0xff] %v8597
    %8874 = vst [vmem:[%s9 + $0xe8] sm:$0xff] %v8599
    %8875 = vst [vmem:[%s9 + $0xf0] sm:$0xff] %v8601
    %8876 = vst [vmem:[%s9 + $0xf8] sm:$0xff] %v8603
    %8877 = vst [vmem:[%s9 + $0x100] sm:$0xff] %v8607
    %8878 = vst [vmem:[%s9 + $0x108] sm:$0xff] %v8609
    %8879 = vst [vmem:[%s9 + $0x110] sm:$0xff] %v8611
    %8880 = vst [vmem:[%s9 + $0x118] sm:$0xff] %v8613
    %8881 = vst [vmem:[%s9 + $0x120] sm:$0xff] %v8617
    %8882 = vst [vmem:[%s9 + $0x128] sm:$0xff] %v8619
    %8883 = vst [vmem:[%s9 + $0x130] sm:$0xff] %v8621
    %8884 = vst [vmem:[%s9 + $0x138] sm:$0xff] %v8623
    %8885 = vst [vmem:[%s9 + $0x140] sm:$0xff] %v8627
    %8886 = vst [vmem:[%s9 + $0x148] sm:$0xff] %v8629
    %8887 = vst [vmem:[%s9 + $0x150] sm:$0xff] %v8631
    %8888 = vst [vmem:[%s9 + $0x158] sm:$0xff] %v8633
    %8889 = vst [vmem:[%s9 + $0x160] sm:$0xff] %v8637
    %8890 = vst [vmem:[%s9 + $0x168] sm:$0xff] %v8639
    %8891 = vst [vmem:[%s9 + $0x170] sm:$0xff] %v8641
    %8892 = vst [vmem:[%s9 + $0x178] sm:$0xff] %v8643
    %8893 = vst [vmem:[%s9 + $0x180] sm:$0xff] %v8647
    %8894 = vst [vmem:[%s9 + $0x188] sm:$0xff] %v8649
    %8895 = vst [vmem:[%s9 + $0x190] sm:$0xff] %v8651
    %8896 = vst [vmem:[%s9 + $0x198] sm:$0xff] %v8653
    %8897 = vst [vmem:[%s9 + $0x1a0] sm:$0xff] %v8657
    %8898 = vst [vmem:[%s9 + $0x1a8] sm:$0xff] %v8659
    %8899 = vst [vmem:[%s9 + $0x1b0] sm:$0xff] %v8661
    %8900 = vst [vmem:[%s9 + $0x1b8] sm:$0xff] %v8663
    %8901 = vst [vmem:[%s9 + $0x1c0] sm:$0xff] %v8667
    %8902 = vst [vmem:[%s9 + $0x1c8] sm:$0xff] %v8669
    %8903 = vst [vmem:[%s9 + $0x1d0] sm:$0xff] %v8671
    %8904 = vst [vmem:[%s9 + $0x1d8] sm:$0xff] %v8673
    %8905 = vst [vmem:[%s9 + $0x1e0] sm:$0xff] %v8677
    %8906 = vst [vmem:[%s9 + $0x1e8] sm:$0xff] %v8679
    %8907 = vst [vmem:[%s9 + $0x1f0] sm:$0xff] %v8681
    %8908 = vst [vmem:[%s9 + $0x1f8] sm:$0xff] %v8683
    %8909 = vst [vmem:[%s9 + $0x200] sm:$0xff] %v8687
    %8910 = vst [vmem:[%s9 + $0x208] sm:$0xff] %v8689
    %8911 = vst [vmem:[%s9 + $0x210] sm:$0xff] %v8691
    %8912 = vst [vmem:[%s9 + $0x218] sm:$0xff] %v8693
    %8913 = vst [vmem:[%s9 + $0x220] sm:$0xff] %v8697
    %8914 = vst [vmem:[%s9 + $0x228] sm:$0xff] %v8699
    %8915 = vst [vmem:[%s9 + $0x230] sm:$0xff] %v8701
    %8916 = vst [vmem:[%s9 + $0x238] sm:$0xff] %v8703
    %8917 = vst [vmem:[%s9 + $0x240] sm:$0xff] %v8707
    %8918 = vst [vmem:[%s9 + $0x248] sm:$0xff] %v8709
    %8919 = vst [vmem:[%s9 + $0x250] sm:$0xff] %v8711
    %8920 = vst [vmem:[%s9 + $0x258] sm:$0xff] %v8713
    %8921 = vst [vmem:[%s9 + $0x260] sm:$0xff] %v8717
    %8922 = vst [vmem:[%s9 + $0x268] sm:$0xff] %v8719
    %8923 = vst [vmem:[%s9 + $0x270] sm:$0xff] %v8721
    %8924 = vst [vmem:[%s9 + $0x278] sm:$0xff] %v8723
    %8925 = vst [vmem:[%s9 + $0x280] sm:$0xff] %v8727
    %8926 = vst [vmem:[%s9 + $0x288] sm:$0xff] %v8729
    %8927 = vst [vmem:[%s9 + $0x290] sm:$0xff] %v8731
    %8928 = vst [vmem:[%s9 + $0x298] sm:$0xff] %v8733
    %8929 = vst [vmem:[%s9 + $0x2a0] sm:$0xff] %v8737
    %8930 = vst [vmem:[%s9 + $0x2a8] sm:$0xff] %v8739
    %8931 = vst [vmem:[%s9 + $0x2b0] sm:$0xff] %v8741
    %8932 = vst [vmem:[%s9 + $0x2b8] sm:$0xff] %v8743
    %8933 = vst [vmem:[%s9 + $0x2c0] sm:$0xff] %v8747
    %8934 = vst [vmem:[%s9 + $0x2c8] sm:$0xff] %v8749
    %8935 = vst [vmem:[%s9 + $0x2d0] sm:$0xff] %v8751
    %8936 = vst [vmem:[%s9 + $0x2d8] sm:$0xff] %v8753
    %8937 = vst [vmem:[%s9 + $0x2e0] sm:$0xff] %v8757
    %8938 = vst [vmem:[%s9 + $0x2e8] sm:$0xff] %v8759
    %8939 = vst [vmem:[%s9 + $0x2f0] sm:$0xff] %v8761
    %8940 = vst [vmem:[%s9 + $0x2f8] sm:$0xff] %v8763
    %8941 = vst [vmem:[%s9 + $0x300] sm:$0xff] %v8767
    %8942 = vst [vmem:[%s9 + $0x308] sm:$0xff] %v8769
    %8943 = vst [vmem:[%s9 + $0x310] sm:$0xff] %v8771
    %8944 = vst [vmem:[%s9 + $0x318] sm:$0xff] %v8773
    %8945 = vst [vmem:[%s9 + $0x320] sm:$0xff] %v8777
    %8946 = vst [vmem:[%s9 + $0x328] sm:$0xff] %v8779
    %8947 = vst [vmem:[%s9 + $0x330] sm:$0xff] %v8781
    %8948 = vst [vmem:[%s9 + $0x338] sm:$0xff] %v8783
    %8949 = vst [vmem:[%s9 + $0x340] sm:$0xff] %v8787
    %8950 = vst [vmem:[%s9 + $0x348] sm:$0xff] %v8789
    %8951 = vst [vmem:[%s9 + $0x350] sm:$0xff] %v8791
    %8952 = vst [vmem:[%s9 + $0x358] sm:$0xff] %v8793
    %8953 = vst [vmem:[%s9 + $0x360] sm:$0xff] %v8797
    %8954 = vst [vmem:[%s9 + $0x368] sm:$0xff] %v8799
    %8955 = vst [vmem:[%s9 + $0x370] sm:$0xff] %v8801
    %8956 = vst [vmem:[%s9 + $0x378] sm:$0xff] %v8803
    %8957 = vst [vmem:[%s9 + $0x380] sm:$0xff] %v8807
    %8958 = vst [vmem:[%s9 + $0x388] sm:$0xff] %v8809
    %8959 = vst [vmem:[%s9 + $0x390] sm:$0xff] %v8811
    %8960 = vst [vmem:[%s9 + $0x398] sm:$0xff] %v8813
    %8961 = vst [vmem:[%s9 + $0x3a0] sm:$0xff] %v8817
    %8962 = vst [vmem:[%s9 + $0x3a8] sm:$0xff] %v8819
    %8963 = vst [vmem:[%s9 + $0x3b0] sm:$0xff] %v8821
    %8964 = vst [vmem:[%s9 + $0x3b8] sm:$0xff] %v8823
    %8965 = vst [vmem:[%s9 + $0x3c0] sm:$0xff] %v8827
    %8966 = vst [vmem:[%s9 + $0x3c8] sm:$0xff] %v8829
    %8967 = vst [vmem:[%s9 + $0x3d0] sm:$0xff] %v8831
    %8968 = vst [vmem:[%s9 + $0x3d8] sm:$0xff] %v8833
    %8969 = vst [vmem:[%s9 + $0x3e0] sm:$0xff] %v8837
    %8970 = vst [vmem:[%s9 + $0x3e8] sm:$0xff] %v8839
    %8971 = vst [vmem:[%s9 + $0x3f0] sm:$0xff] %v8841
    %8972 = vst [vmem:[%s9 + $0x3f8] sm:$0xff] %v8843
    // Predicated region
    $region62: #{projection_head_forward.1} parent=1 // pred_check
      _
    $region63: #{projection_head_forward.1} parent=1 // pred_check_branch
      %8974 = sbr.rel (0) target = $region65
    $region64: #{projection_head_forward.1} parent=1 // pred_region
      _
    $region65: #{projection_head_forward.1} parent=1 // pred_fallthru
      _
    // Predicated region
    $region66: #{projection_head_forward.1} parent=1 // pred_check
      _
    $region67: #{projection_head_forward.1} parent=1 // pred_check_branch
      %8976 = sbr.rel (0) target = $region69
    $region68: #{projection_head_forward.1} parent=1 // pred_region
      _
    $region69: #{projection_head_forward.1} parent=1 // pred_fallthru
      _
    %8977 = vsyncpa [#allocation4], 1
    %8978 = vsyncpa [#allocation6], 1
    %8979 = vsyncpa [#allocation9], 1

</llo_original>
